<compile_context>
chip_gen: v7x
topology: tpu7x:2x2x1
jax: 0.10.0
libtpu: 0.0.40
codegen_flags: <defaults>
</compile_context>

<pallas_src>
import functools

import jax
import jax.numpy as jnp
from jax.experimental import pallas as pl
from jax.experimental.pallas import tpu as pltpu

EPS = 1e-5  # PyTorch BatchNorm2d default eps


def _round_up(v, m):
    return ((v + m - 1) // m) * m


# --------------------------------------------------------------------------
# Fused kernel: the full recurrence (t+1 x [Conv3x3 + BN + ReLU] with the
# residual add) for one batch element, intermediates kept in VMEM.
# --------------------------------------------------------------------------
def _recurrent_block_kernel(x_ref, w_ref, scale_ref, shift_ref, o_ref,
                            zpad_ref, *, t):
    # x_ref:     (1, H+2, W+2, Cp) f32  spatially zero-padded, channel-padded x
    # w_ref:     (3, 3*Cp, Cp)     bf16 packed weight: [dh][dw*Cp + cin, cout]
    # scale_ref: (1, Cp) f32  shift_ref: (1, Cp) f32  (folded BN + conv bias)
    # o_ref:     (1, H, W, Cp) f32
    # zpad_ref:  (H+2, W+2, Cp) bf16 scratch: conv input of the current step
    hp2, wp2, cp = zpad_ref.shape
    H, W = hp2 - 2, wp2 - 2

    scale = scale_ref[...]
    shift = shift_ref[...]

    def conv_bn_relu():
        z = zpad_ref[...]                                   # (H+2, W+2, Cp) bf16
        acc = jnp.zeros((H * W, cp), jnp.float32)
        for dh in range(3):                                 # vertical taps
            rows = z[dh:dh + H]                             # (H, W+2, Cp)
            # gather the three horizontal taps in VMEM -> (H*W, 3*Cp)
            patch = jnp.concatenate(
                [rows[:, 0:W, :], rows[:, 1:W + 1, :], rows[:, 2:W + 2, :]],
                axis=-1).reshape(H * W, 3 * cp)
            acc = acc + jnp.dot(patch, w_ref[dh],
                                preferred_element_type=jnp.float32)
        y = jnp.maximum(acc * scale + shift, 0.0)
        return y.reshape(H, W, cp)

    # z = x ; borders of zpad are written only here and stay exactly 0.
    zpad_ref[...] = x_ref[0].astype(zpad_ref.dtype)
    y = conv_bn_relu()                                      # x1 = conv(x)
    for _ in range(t):
        x_int = x_ref[0, 1:H + 1, 1:W + 1, :]               # (H, W, Cp) f32
        zpad_ref[1:H + 1, 1:W + 1, :] = (x_int + y).astype(zpad_ref.dtype)
        y = conv_bn_relu()                                  # x1 = conv(x + x1)

    o_ref[...] = y.reshape(1, H, W, cp).astype(o_ref.dtype)


def recurrent_block_fused(x_pad, w_packed, scale, shift, *, t):
    """x_pad: (N, H+2, W+2, Cp) f32 (Cp % 128 == 0).  Returns (N, H, W, Cp) f32."""
    N, hp2, wp2, Cp = x_pad.shape
    H, W = hp2 - 2, wp2 - 2
    assert Cp % 128 == 0 and w_packed.shape == (3, 3 * Cp, Cp)

    flops = (t + 1) * 2 * N * H * W * (9 * Cp) * Cp
    bytes_accessed = (x_pad.size * 4 + w_packed.size * 2
                      + (scale.size + shift.size) * 4
                      + N * H * W * Cp * 4)

    kernel = functools.partial(_recurrent_block_kernel, t=t)
    return pl.pallas_call(
        kernel,
        out_shape=jax.ShapeDtypeStruct((N, H, W, Cp), jnp.float32),
        grid=(N,),
        in_specs=[
            pl.BlockSpec((1, hp2, wp2, Cp), lambda b: (b, 0, 0, 0)),
            pl.BlockSpec((3, 3 * Cp, Cp), lambda b: (0, 0, 0)),
            pl.BlockSpec((1, Cp), lambda b: (0, 0)),
            pl.BlockSpec((1, Cp), lambda b: (0, 0)),
        ],
        out_specs=pl.BlockSpec((1, H, W, Cp), lambda b: (b, 0, 0, 0)),
        scratch_shapes=[pltpu.VMEM((hp2, wp2, Cp), jnp.bfloat16)],
        compiler_params=pltpu.CompilerParams(
            dimension_semantics=("parallel",),
            vmem_limit_bytes=48 * 1024 * 1024,
        ),
        cost_estimate=pl.CostEstimate(flops=flops, transcendentals=0,
                                      bytes_accessed=bytes_accessed),
    )(x_pad, w_packed, scale, shift)


# --------------------------------------------------------------------------
# Parameters (shapes match nn.Conv2d(ch,ch,3) + nn.BatchNorm2d(ch))
# --------------------------------------------------------------------------
def init_params(key, ch):
    kw, kb = jax.random.split(key, 2)
    fan_in = 9 * ch
    w = jax.random.normal(kw, (ch, ch, 3, 3), jnp.float32) * jnp.sqrt(
        2.0 / fan_in)
    b = 0.1 * jax.random.normal(kb, (ch,), jnp.float32)
    return {
        "w": w, "b": b,
        "gamma": jnp.ones((ch,), jnp.float32),      # fresh BatchNorm2d weight
        "beta": jnp.zeros((ch,), jnp.float32),      # fresh BatchNorm2d bias
        "mean": jnp.zeros((ch,), jnp.float32),      # running_mean
        "var": jnp.ones((ch,), jnp.float32),        # running_var
    }


def pack_params(p, Cp):
    """Pack conv weight + folded BN affine into kernel layout, channel-padded."""
    ch = p["w"].shape[0]
    wt = jnp.transpose(p["w"], (2, 3, 1, 0))                # (kh, kw, cin, cout)
    wt = jnp.pad(wt, ((0, 0), (0, 0), (0, Cp - ch), (0, Cp - ch)))
    w_packed = wt.reshape(3, 3 * Cp, Cp).astype(jnp.bfloat16)

    scale = p["gamma"] / jnp.sqrt(p["var"] + EPS)
    shift = p["beta"] + (p["b"] - p["mean"]) * scale
    scale = jnp.pad(scale, (0, Cp - ch), constant_values=1.0).reshape(1, Cp)
    shift = jnp.pad(shift, (0, Cp - ch)).reshape(1, Cp)     # pad 0 -> relu(0)=0
    return w_packed, scale.astype(jnp.float32), shift.astype(jnp.float32)


# --------------------------------------------------------------------------
# Recurrent_block forward (same dataflow as the PyTorch module)
# --------------------------------------------------------------------------
def recurrent_block_forward(params, x_nchw, t=2):
    x = jnp.transpose(x_nchw, (0, 2, 3, 1)).astype(jnp.float32)   # NCHW->NHWC
    N, H, W, C = x.shape
    Cp = _round_up(C, 128)
    x_pad = jnp.pad(x, ((0, 0), (1, 1), (1, 1), (0, Cp - C)))
    w_packed, scale, shift = pack_params(params, Cp)
    out = recurrent_block_fused(x_pad, w_packed, scale, shift, t=t)
    return jnp.transpose(out[..., :C], (0, 3, 1, 2))              # NHWC->NCHW


# --------------------------------------------------------------------------
# Pure-JAX reference (same eval-mode BN fold) for a correctness check
# --------------------------------------------------------------------------
def recurrent_block_reference(params, x_nchw, t=2):
    x = jnp.transpose(x_nchw, (0, 2, 3, 1)).astype(jnp.float32)
    w_hwio = jnp.transpose(params["w"], (2, 3, 1, 0))
    scale = params["gamma"] / jnp.sqrt(params["var"] + EPS)
    shift = params["beta"] + (params["b"] - params["mean"]) * scale

    def conv(z):
        y = jax.lax.conv_general_dilated(
            z, w_hwio, window_strides=(1, 1), padding=((1, 1), (1, 1)),
            dimension_numbers=("NHWC", "HWIO", "NHWC"))
        return jnp.maximum(y * scale + shift, 0.0)

    x1 = None
    for i in range(t):
        if i == 0:
            x1 = conv(x)
        x1 = conv(x + x1)
    return jnp.transpose(x1, (0, 3, 1, 2))


if __name__ == "__main__":
    key = jax.random.PRNGKey(0)
    kp, kx = jax.random.split(key)
    ch = 4                                     # Recurrent_block(ch_out=4, t=2)
    params = init_params(kp, ch)
    x = jax.random.normal(kx, (2, ch, 16, 16), jnp.float32)

    fwd = jax.jit(recurrent_block_forward)
    out = jax.block_until_ready(fwd(params, x))
    assert out.shape == (2, ch, 16, 16), out.shape
    assert bool(jnp.all(jnp.isfinite(out)))

    ref = jax.block_until_ready(jax.jit(recurrent_block_reference)(params, x))
    err = float(jnp.max(jnp.abs(out - ref)) / (jnp.max(jnp.abs(ref)) + 1e-6))
    assert err < 5e-2, f"mismatch vs reference: rel-to-max err = {err}"

    print("KERNEL_OK")
</pallas_src>

<mosaic_0001>
module attributes {stable_mosaic.version = 11 : i64} {
  func.func @_recurrent_block_kernel(%arg0: i32, %arg1: memref<1x18x18x128xf32, #tpu.memory_space<vmem>>, %arg2: memref<3x384x128xbf16, #tpu.memory_space<vmem>>, %arg3: memref<1x128xf32, #tpu.memory_space<vmem>>, %arg4: memref<1x128xf32, #tpu.memory_space<vmem>>, %arg5: memref<1x16x16x128xf32, #tpu.memory_space<vmem>>, %arg6: memref<18x18x128xbf16, #tpu.memory_space<vmem>>) attributes {dimension_semantics = [#tpu.dimension_semantics<parallel>], iteration_bounds = array<i64: 2>, scalar_prefetch = 0 : i64, scratch_operands = 1 : i64, tpu.core_type = #tpu.core_type<tc>, window_params = [{transform_indices = @transform_0, window_bounds = array<i64: 1, 18, 18, 128>}, {pipeline_mode = #tpu.pipeline_mode<synchronous>, transform_indices = @transform_1, window_bounds = array<i64: 3, 384, 128>}, {pipeline_mode = #tpu.pipeline_mode<synchronous>, transform_indices = @transform_2, window_bounds = array<i64: 1, 128>}, {pipeline_mode = #tpu.pipeline_mode<synchronous>, transform_indices = @transform_3, window_bounds = array<i64: 1, 128>}, {transform_indices = @transform_4, window_bounds = array<i64: 1, 16, 16, 128>}]} {
    %c0 = arith.constant 0 : index
    %c0_0 = arith.constant 0 : index
    %0 = vector.load %arg3[%c0, %c0_0] : memref<1x128xf32, #tpu.memory_space<vmem>>, vector<1x128xf32>
    %c0_1 = arith.constant 0 : index
    %c0_2 = arith.constant 0 : index
    %1 = vector.load %arg4[%c0_1, %c0_2] : memref<1x128xf32, #tpu.memory_space<vmem>>, vector<1x128xf32>
    %c0_3 = arith.constant 0 : index
    %c0_4 = arith.constant 0 : index
    %c0_5 = arith.constant 0 : index
    %c0_6 = arith.constant 0 : index
    %2 = vector.load %arg1[%c0_3, %c0_4, %c0_5, %c0_6] : memref<1x18x18x128xf32, #tpu.memory_space<vmem>>, vector<1x18x18x128xf32>
    %3 = vector.shape_cast %2 : vector<1x18x18x128xf32> to vector<18x18x128xf32>
    %4 = arith.truncf %3 : vector<18x18x128xf32> to vector<18x18x128xbf16>
    %c0_7 = arith.constant 0 : index
    %c0_8 = arith.constant 0 : index
    %c0_9 = arith.constant 0 : index
    %5 = vector.load %arg6[%c0_7, %c0_8, %c0_9] : memref<18x18x128xbf16, #tpu.memory_space<vmem>>, vector<18x18x128xbf16>
    tpu.vector_store %arg6[%c0_7, %c0_8, %c0_9], %4 {strides = array<i32>} : memref<18x18x128xbf16, #tpu.memory_space<vmem>>, vector<18x18x128xbf16>,
    %c0_10 = arith.constant 0 : index
    %c0_11 = arith.constant 0 : index
    %c0_12 = arith.constant 0 : index
    %6 = vector.load %arg6[%c0_10, %c0_11, %c0_12] : memref<18x18x128xbf16, #tpu.memory_space<vmem>>, vector<18x18x128xbf16>
    %cst = arith.constant 0.000000e+00 : f32
    %7 = vector.broadcast %cst : f32 to vector<256x128xf32>
    %8 = vector.extract_strided_slice %6 {offsets = [0, 0, 0], sizes = [16, 18, 128], strides = [1, 1, 1]} : vector<18x18x128xbf16> to vector<16x18x128xbf16>
    %9 = vector.extract_strided_slice %8 {offsets = [0, 0, 0], sizes = [16, 16, 128], strides = [1, 1, 1]} : vector<16x18x128xbf16> to vector<16x16x128xbf16>
    %10 = vector.extract_strided_slice %8 {offsets = [0, 1, 0], sizes = [16, 16, 128], strides = [1, 1, 1]} : vector<16x18x128xbf16> to vector<16x16x128xbf16>
    %11 = vector.extract_strided_slice %8 {offsets = [0, 2, 0], sizes = [16, 16, 128], strides = [1, 1, 1]} : vector<16x18x128xbf16> to vector<16x16x128xbf16>
    %12 = tpu.concatenate %9, %10, %11 in 2 : vector<16x16x128xbf16>, vector<16x16x128xbf16>, vector<16x16x128xbf16> -> vector<16x16x384xbf16>
    %13 = vector.shape_cast %12 : vector<16x16x384xbf16> to vector<256x384xbf16>
    %c0_13 = arith.constant 0 : index
    %c0_14 = arith.constant 0 : index
    %c0_15 = arith.constant 0 : index
    %14 = vector.load %arg2[%c0_13, %c0_14, %c0_15] : memref<3x384x128xbf16, #tpu.memory_space<vmem>>, vector<1x384x128xbf16>
    %15 = vector.shape_cast %14 : vector<1x384x128xbf16> to vector<384x128xbf16>
    %cst_16 = arith.constant dense<0.000000e+00> : vector<256x128xf32>
    %16 = tpu.matmul %13, %15, %cst_16 {dimension_numbers = #tpu.dot_dimension_numbers<[1], [0], [0], [1], [0, 0, 1, 1], [], []>} : vector<256x384xbf16>, vector<384x128xbf16>, vector<256x128xf32> -> vector<256x128xf32>
    %17 = arith.addf %7, %16 : vector<256x128xf32>
    %18 = vector.extract_strided_slice %6 {offsets = [1, 0, 0], sizes = [16, 18, 128], strides = [1, 1, 1]} : vector<18x18x128xbf16> to vector<16x18x128xbf16>
    %19 = vector.extract_strided_slice %18 {offsets = [0, 0, 0], sizes = [16, 16, 128], strides = [1, 1, 1]} : vector<16x18x128xbf16> to vector<16x16x128xbf16>
    %20 = vector.extract_strided_slice %18 {offsets = [0, 1, 0], sizes = [16, 16, 128], strides = [1, 1, 1]} : vector<16x18x128xbf16> to vector<16x16x128xbf16>
    %21 = vector.extract_strided_slice %18 {offsets = [0, 2, 0], sizes = [16, 16, 128], strides = [1, 1, 1]} : vector<16x18x128xbf16> to vector<16x16x128xbf16>
    %22 = tpu.concatenate %19, %20, %21 in 2 : vector<16x16x128xbf16>, vector<16x16x128xbf16>, vector<16x16x128xbf16> -> vector<16x16x384xbf16>
    %23 = vector.shape_cast %22 : vector<16x16x384xbf16> to vector<256x384xbf16>
    %c1 = arith.constant 1 : index
    %c0_17 = arith.constant 0 : index
    %c0_18 = arith.constant 0 : index
    %24 = vector.load %arg2[%c1, %c0_17, %c0_18] : memref<3x384x128xbf16, #tpu.memory_space<vmem>>, vector<1x384x128xbf16>
    %25 = vector.shape_cast %24 : vector<1x384x128xbf16> to vector<384x128xbf16>
    %cst_19 = arith.constant dense<0.000000e+00> : vector<256x128xf32>
    %26 = tpu.matmul %23, %25, %cst_19 {dimension_numbers = #tpu.dot_dimension_numbers<[1], [0], [0], [1], [0, 0, 1, 1], [], []>} : vector<256x384xbf16>, vector<384x128xbf16>, vector<256x128xf32> -> vector<256x128xf32>
    %27 = arith.addf %17, %26 : vector<256x128xf32>
    %28 = vector.extract_strided_slice %6 {offsets = [2, 0, 0], sizes = [16, 18, 128], strides = [1, 1, 1]} : vector<18x18x128xbf16> to vector<16x18x128xbf16>
    %29 = vector.extract_strided_slice %28 {offsets = [0, 0, 0], sizes = [16, 16, 128], strides = [1, 1, 1]} : vector<16x18x128xbf16> to vector<16x16x128xbf16>
    %30 = vector.extract_strided_slice %28 {offsets = [0, 1, 0], sizes = [16, 16, 128], strides = [1, 1, 1]} : vector<16x18x128xbf16> to vector<16x16x128xbf16>
    %31 = vector.extract_strided_slice %28 {offsets = [0, 2, 0], sizes = [16, 16, 128], strides = [1, 1, 1]} : vector<16x18x128xbf16> to vector<16x16x128xbf16>
    %32 = tpu.concatenate %29, %30, %31 in 2 : vector<16x16x128xbf16>, vector<16x16x128xbf16>, vector<16x16x128xbf16> -> vector<16x16x384xbf16>
    %33 = vector.shape_cast %32 : vector<16x16x384xbf16> to vector<256x384xbf16>
    %c2 = arith.constant 2 : index
    %c0_20 = arith.constant 0 : index
    %c0_21 = arith.constant 0 : index
    %34 = vector.load %arg2[%c2, %c0_20, %c0_21] : memref<3x384x128xbf16, #tpu.memory_space<vmem>>, vector<1x384x128xbf16>
    %35 = vector.shape_cast %34 : vector<1x384x128xbf16> to vector<384x128xbf16>
    %cst_22 = arith.constant dense<0.000000e+00> : vector<256x128xf32>
    %36 = tpu.matmul %33, %35, %cst_22 {dimension_numbers = #tpu.dot_dimension_numbers<[1], [0], [0], [1], [0, 0, 1, 1], [], []>} : vector<256x384xbf16>, vector<384x128xbf16>, vector<256x128xf32> -> vector<256x128xf32>
    %37 = arith.addf %27, %36 : vector<256x128xf32>
    %38 = vector.broadcast %0 : vector<1x128xf32> to vector<256x128xf32>
    %39 = arith.mulf %37, %38 : vector<256x128xf32>
    %40 = vector.broadcast %1 : vector<1x128xf32> to vector<256x128xf32>
    %41 = arith.addf %39, %40 : vector<256x128xf32>
    %cst_23 = arith.constant 0.000000e+00 : f32
    %42 = vector.broadcast %cst_23 : f32 to vector<256x128xf32>
    %43 = arith.maximumf %41, %42 : vector<256x128xf32>
    %44 = vector.shape_cast %43 : vector<256x128xf32> to vector<16x16x128xf32>
    %c0_24 = arith.constant 0 : index
    %c1_25 = arith.constant 1 : index
    %c1_26 = arith.constant 1 : index
    %c0_27 = arith.constant 0 : index
    %45 = vector.load %arg1[%c0_24, %c1_25, %c1_26, %c0_27] : memref<1x18x18x128xf32, #tpu.memory_space<vmem>>, vector<1x16x16x128xf32>
    %46 = vector.shape_cast %45 : vector<1x16x16x128xf32> to vector<16x16x128xf32>
    %47 = arith.addf %46, %44 : vector<16x16x128xf32>
    %48 = arith.truncf %47 : vector<16x16x128xf32> to vector<16x16x128xbf16>
    %c1_28 = arith.constant 1 : index
    %c1_29 = arith.constant 1 : index
    %c0_30 = arith.constant 0 : index
    %49 = vector.load %arg6[%c1_28, %c1_29, %c0_30] : memref<18x18x128xbf16, #tpu.memory_space<vmem>>, vector<16x16x128xbf16>
    tpu.vector_store %arg6[%c1_28, %c1_29, %c0_30], %48 {strides = array<i32>} : memref<18x18x128xbf16, #tpu.memory_space<vmem>>, vector<16x16x128xbf16>,
    %c0_31 = arith.constant 0 : index
    %c0_32 = arith.constant 0 : index
    %c0_33 = arith.constant 0 : index
    %50 = vector.load %arg6[%c0_31, %c0_32, %c0_33] : memref<18x18x128xbf16, #tpu.memory_space<vmem>>, vector<18x18x128xbf16>
    %cst_34 = arith.constant 0.000000e+00 : f32
    %51 = vector.broadcast %cst_34 : f32 to vector<256x128xf32>
    %52 = vector.extract_strided_slice %50 {offsets = [0, 0, 0], sizes = [16, 18, 128], strides = [1, 1, 1]} : vector<18x18x128xbf16> to vector<16x18x128xbf16>
    %53 = vector.extract_strided_slice %52 {offsets = [0, 0, 0], sizes = [16, 16, 128], strides = [1, 1, 1]} : vector<16x18x128xbf16> to vector<16x16x128xbf16>
    %54 = vector.extract_strided_slice %52 {offsets = [0, 1, 0], sizes = [16, 16, 128], strides = [1, 1, 1]} : vector<16x18x128xbf16> to vector<16x16x128xbf16>
    %55 = vector.extract_strided_slice %52 {offsets = [0, 2, 0], sizes = [16, 16, 128], strides = [1, 1, 1]} : vector<16x18x128xbf16> to vector<16x16x128xbf16>
    %56 = tpu.concatenate %53, %54, %55 in 2 : vector<16x16x128xbf16>, vector<16x16x128xbf16>, vector<16x16x128xbf16> -> vector<16x16x384xbf16>
    %57 = vector.shape_cast %56 : vector<16x16x384xbf16> to vector<256x384xbf16>
    %c0_35 = arith.constant 0 : index
    %c0_36 = arith.constant 0 : index
    %c0_37 = arith.constant 0 : index
    %58 = vector.load %arg2[%c0_35, %c0_36, %c0_37] : memref<3x384x128xbf16, #tpu.memory_space<vmem>>, vector<1x384x128xbf16>
    %59 = vector.shape_cast %58 : vector<1x384x128xbf16> to vector<384x128xbf16>
    %cst_38 = arith.constant dense<0.000000e+00> : vector<256x128xf32>
    %60 = tpu.matmul %57, %59, %cst_38 {dimension_numbers = #tpu.dot_dimension_numbers<[1], [0], [0], [1], [0, 0, 1, 1], [], []>} : vector<256x384xbf16>, vector<384x128xbf16>, vector<256x128xf32> -> vector<256x128xf32>
    %61 = arith.addf %51, %60 : vector<256x128xf32>
    %62 = vector.extract_strided_slice %50 {offsets = [1, 0, 0], sizes = [16, 18, 128], strides = [1, 1, 1]} : vector<18x18x128xbf16> to vector<16x18x128xbf16>
    %63 = vector.extract_strided_slice %62 {offsets = [0, 0, 0], sizes = [16, 16, 128], strides = [1, 1, 1]} : vector<16x18x128xbf16> to vector<16x16x128xbf16>
    %64 = vector.extract_strided_slice %62 {offsets = [0, 1, 0], sizes = [16, 16, 128], strides = [1, 1, 1]} : vector<16x18x128xbf16> to vector<16x16x128xbf16>
    %65 = vector.extract_strided_slice %62 {offsets = [0, 2, 0], sizes = [16, 16, 128], strides = [1, 1, 1]} : vector<16x18x128xbf16> to vector<16x16x128xbf16>
    %66 = tpu.concatenate %63, %64, %65 in 2 : vector<16x16x128xbf16>, vector<16x16x128xbf16>, vector<16x16x128xbf16> -> vector<16x16x384xbf16>
    %67 = vector.shape_cast %66 : vector<16x16x384xbf16> to vector<256x384xbf16>
    %c1_39 = arith.constant 1 : index
    %c0_40 = arith.constant 0 : index
    %c0_41 = arith.constant 0 : index
    %68 = vector.load %arg2[%c1_39, %c0_40, %c0_41] : memref<3x384x128xbf16, #tpu.memory_space<vmem>>, vector<1x384x128xbf16>
    %69 = vector.shape_cast %68 : vector<1x384x128xbf16> to vector<384x128xbf16>
    %cst_42 = arith.constant dense<0.000000e+00> : vector<256x128xf32>
    %70 = tpu.matmul %67, %69, %cst_42 {dimension_numbers = #tpu.dot_dimension_numbers<[1], [0], [0], [1], [0, 0, 1, 1], [], []>} : vector<256x384xbf16>, vector<384x128xbf16>, vector<256x128xf32> -> vector<256x128xf32>
    %71 = arith.addf %61, %70 : vector<256x128xf32>
    %72 = vector.extract_strided_slice %50 {offsets = [2, 0, 0], sizes = [16, 18, 128], strides = [1, 1, 1]} : vector<18x18x128xbf16> to vector<16x18x128xbf16>
    %73 = vector.extract_strided_slice %72 {offsets = [0, 0, 0], sizes = [16, 16, 128], strides = [1, 1, 1]} : vector<16x18x128xbf16> to vector<16x16x128xbf16>
    %74 = vector.extract_strided_slice %72 {offsets = [0, 1, 0], sizes = [16, 16, 128], strides = [1, 1, 1]} : vector<16x18x128xbf16> to vector<16x16x128xbf16>
    %75 = vector.extract_strided_slice %72 {offsets = [0, 2, 0], sizes = [16, 16, 128], strides = [1, 1, 1]} : vector<16x18x128xbf16> to vector<16x16x128xbf16>
    %76 = tpu.concatenate %73, %74, %75 in 2 : vector<16x16x128xbf16>, vector<16x16x128xbf16>, vector<16x16x128xbf16> -> vector<16x16x384xbf16>
    %77 = vector.shape_cast %76 : vector<16x16x384xbf16> to vector<256x384xbf16>
    %c2_43 = arith.constant 2 : index
    %c0_44 = arith.constant 0 : index
    %c0_45 = arith.constant 0 : index
    %78 = vector.load %arg2[%c2_43, %c0_44, %c0_45] : memref<3x384x128xbf16, #tpu.memory_space<vmem>>, vector<1x384x128xbf16>
    %79 = vector.shape_cast %78 : vector<1x384x128xbf16> to vector<384x128xbf16>
    %cst_46 = arith.constant dense<0.000000e+00> : vector<256x128xf32>
    %80 = tpu.matmul %77, %79, %cst_46 {dimension_numbers = #tpu.dot_dimension_numbers<[1], [0], [0], [1], [0, 0, 1, 1], [], []>} : vector<256x384xbf16>, vector<384x128xbf16>, vector<256x128xf32> -> vector<256x128xf32>
    %81 = arith.addf %71, %80 : vector<256x128xf32>
    %82 = vector.broadcast %0 : vector<1x128xf32> to vector<256x128xf32>
    %83 = arith.mulf %81, %82 : vector<256x128xf32>
    %84 = vector.broadcast %1 : vector<1x128xf32> to vector<256x128xf32>
    %85 = arith.addf %83, %84 : vector<256x128xf32>
    %cst_47 = arith.constant 0.000000e+00 : f32
    %86 = vector.broadcast %cst_47 : f32 to vector<256x128xf32>
    %87 = arith.maximumf %85, %86 : vector<256x128xf32>
    %88 = vector.shape_cast %87 : vector<256x128xf32> to vector<16x16x128xf32>
    %c0_48 = arith.constant 0 : index
    %c1_49 = arith.constant 1 : index
    %c1_50 = arith.constant 1 : index
    %c0_51 = arith.constant 0 : index
    %89 = vector.load %arg1[%c0_48, %c1_49, %c1_50, %c0_51] : memref<1x18x18x128xf32, #tpu.memory_space<vmem>>, vector<1x16x16x128xf32>
    %90 = vector.shape_cast %89 : vector<1x16x16x128xf32> to vector<16x16x128xf32>
    %91 = arith.addf %90, %88 : vector<16x16x128xf32>
    %92 = arith.truncf %91 : vector<16x16x128xf32> to vector<16x16x128xbf16>
    %c1_52 = arith.constant 1 : index
    %c1_53 = arith.constant 1 : index
    %c0_54 = arith.constant 0 : index
    %93 = vector.load %arg6[%c1_52, %c1_53, %c0_54] : memref<18x18x128xbf16, #tpu.memory_space<vmem>>, vector<16x16x128xbf16>
    tpu.vector_store %arg6[%c1_52, %c1_53, %c0_54], %92 {strides = array<i32>} : memref<18x18x128xbf16, #tpu.memory_space<vmem>>, vector<16x16x128xbf16>,
    %c0_55 = arith.constant 0 : index
    %c0_56 = arith.constant 0 : index
    %c0_57 = arith.constant 0 : index
    %94 = vector.load %arg6[%c0_55, %c0_56, %c0_57] : memref<18x18x128xbf16, #tpu.memory_space<vmem>>, vector<18x18x128xbf16>
    %cst_58 = arith.constant 0.000000e+00 : f32
    %95 = vector.broadcast %cst_58 : f32 to vector<256x128xf32>
    %96 = vector.extract_strided_slice %94 {offsets = [0, 0, 0], sizes = [16, 18, 128], strides = [1, 1, 1]} : vector<18x18x128xbf16> to vector<16x18x128xbf16>
    %97 = vector.extract_strided_slice %96 {offsets = [0, 0, 0], sizes = [16, 16, 128], strides = [1, 1, 1]} : vector<16x18x128xbf16> to vector<16x16x128xbf16>
    %98 = vector.extract_strided_slice %96 {offsets = [0, 1, 0], sizes = [16, 16, 128], strides = [1, 1, 1]} : vector<16x18x128xbf16> to vector<16x16x128xbf16>
    %99 = vector.extract_strided_slice %96 {offsets = [0, 2, 0], sizes = [16, 16, 128], strides = [1, 1, 1]} : vector<16x18x128xbf16> to vector<16x16x128xbf16>
    %100 = tpu.concatenate %97, %98, %99 in 2 : vector<16x16x128xbf16>, vector<16x16x128xbf16>, vector<16x16x128xbf16> -> vector<16x16x384xbf16>
    %101 = vector.shape_cast %100 : vector<16x16x384xbf16> to vector<256x384xbf16>
    %c0_59 = arith.constant 0 : index
    %c0_60 = arith.constant 0 : index
    %c0_61 = arith.constant 0 : index
    %102 = vector.load %arg2[%c0_59, %c0_60, %c0_61] : memref<3x384x128xbf16, #tpu.memory_space<vmem>>, vector<1x384x128xbf16>
    %103 = vector.shape_cast %102 : vector<1x384x128xbf16> to vector<384x128xbf16>
    %cst_62 = arith.constant dense<0.000000e+00> : vector<256x128xf32>
    %104 = tpu.matmul %101, %103, %cst_62 {dimension_numbers = #tpu.dot_dimension_numbers<[1], [0], [0], [1], [0, 0, 1, 1], [], []>} : vector<256x384xbf16>, vector<384x128xbf16>, vector<256x128xf32> -> vector<256x128xf32>
    %105 = arith.addf %95, %104 : vector<256x128xf32>
    %106 = vector.extract_strided_slice %94 {offsets = [1, 0, 0], sizes = [16, 18, 128], strides = [1, 1, 1]} : vector<18x18x128xbf16> to vector<16x18x128xbf16>
    %107 = vector.extract_strided_slice %106 {offsets = [0, 0, 0], sizes = [16, 16, 128], strides = [1, 1, 1]} : vector<16x18x128xbf16> to vector<16x16x128xbf16>
    %108 = vector.extract_strided_slice %106 {offsets = [0, 1, 0], sizes = [16, 16, 128], strides = [1, 1, 1]} : vector<16x18x128xbf16> to vector<16x16x128xbf16>
    %109 = vector.extract_strided_slice %106 {offsets = [0, 2, 0], sizes = [16, 16, 128], strides = [1, 1, 1]} : vector<16x18x128xbf16> to vector<16x16x128xbf16>
    %110 = tpu.concatenate %107, %108, %109 in 2 : vector<16x16x128xbf16>, vector<16x16x128xbf16>, vector<16x16x128xbf16> -> vector<16x16x384xbf16>
    %111 = vector.shape_cast %110 : vector<16x16x384xbf16> to vector<256x384xbf16>
    %c1_63 = arith.constant 1 : index
    %c0_64 = arith.constant 0 : index
    %c0_65 = arith.constant 0 : index
    %112 = vector.load %arg2[%c1_63, %c0_64, %c0_65] : memref<3x384x128xbf16, #tpu.memory_space<vmem>>, vector<1x384x128xbf16>
    %113 = vector.shape_cast %112 : vector<1x384x128xbf16> to vector<384x128xbf16>
    %cst_66 = arith.constant dense<0.000000e+00> : vector<256x128xf32>
    %114 = tpu.matmul %111, %113, %cst_66 {dimension_numbers = #tpu.dot_dimension_numbers<[1], [0], [0], [1], [0, 0, 1, 1], [], []>} : vector<256x384xbf16>, vector<384x128xbf16>, vector<256x128xf32> -> vector<256x128xf32>
    %115 = arith.addf %105, %114 : vector<256x128xf32>
    %116 = vector.extract_strided_slice %94 {offsets = [2, 0, 0], sizes = [16, 18, 128], strides = [1, 1, 1]} : vector<18x18x128xbf16> to vector<16x18x128xbf16>
    %117 = vector.extract_strided_slice %116 {offsets = [0, 0, 0], sizes = [16, 16, 128], strides = [1, 1, 1]} : vector<16x18x128xbf16> to vector<16x16x128xbf16>
    %118 = vector.extract_strided_slice %116 {offsets = [0, 1, 0], sizes = [16, 16, 128], strides = [1, 1, 1]} : vector<16x18x128xbf16> to vector<16x16x128xbf16>
    %119 = vector.extract_strided_slice %116 {offsets = [0, 2, 0], sizes = [16, 16, 128], strides = [1, 1, 1]} : vector<16x18x128xbf16> to vector<16x16x128xbf16>
    %120 = tpu.concatenate %117, %118, %119 in 2 : vector<16x16x128xbf16>, vector<16x16x128xbf16>, vector<16x16x128xbf16> -> vector<16x16x384xbf16>
    %121 = vector.shape_cast %120 : vector<16x16x384xbf16> to vector<256x384xbf16>
    %c2_67 = arith.constant 2 : index
    %c0_68 = arith.constant 0 : index
    %c0_69 = arith.constant 0 : index
    %122 = vector.load %arg2[%c2_67, %c0_68, %c0_69] : memref<3x384x128xbf16, #tpu.memory_space<vmem>>, vector<1x384x128xbf16>
    %123 = vector.shape_cast %122 : vector<1x384x128xbf16> to vector<384x128xbf16>
    %cst_70 = arith.constant dense<0.000000e+00> : vector<256x128xf32>
    %124 = tpu.matmul %121, %123, %cst_70 {dimension_numbers = #tpu.dot_dimension_numbers<[1], [0], [0], [1], [0, 0, 1, 1], [], []>} : vector<256x384xbf16>, vector<384x128xbf16>, vector<256x128xf32> -> vector<256x128xf32>
    %125 = arith.addf %115, %124 : vector<256x128xf32>
    %126 = vector.broadcast %0 : vector<1x128xf32> to vector<256x128xf32>
    %127 = arith.mulf %125, %126 : vector<256x128xf32>
    %128 = vector.broadcast %1 : vector<1x128xf32> to vector<256x128xf32>
    %129 = arith.addf %127, %128 : vector<256x128xf32>
    %cst_71 = arith.constant 0.000000e+00 : f32
    %130 = vector.broadcast %cst_71 : f32 to vector<256x128xf32>
    %131 = arith.maximumf %129, %130 : vector<256x128xf32>
    %132 = vector.shape_cast %131 : vector<256x128xf32> to vector<16x16x128xf32>
    %133 = vector.shape_cast %132 : vector<16x16x128xf32> to vector<1x16x16x128xf32>
    %c0_72 = arith.constant 0 : index
    %c0_73 = arith.constant 0 : index
    %c0_74 = arith.constant 0 : index
    %c0_75 = arith.constant 0 : index
    %134 = vector.load %arg5[%c0_72, %c0_73, %c0_74, %c0_75] : memref<1x16x16x128xf32, #tpu.memory_space<vmem>>, vector<1x16x16x128xf32>
    tpu.vector_store %arg5[%c0_72, %c0_73, %c0_74, %c0_75], %133 {strides = array<i32>} : memref<1x16x16x128xf32, #tpu.memory_space<vmem>>, vector<1x16x16x128xf32>,
    return
  }
  func.func @transform_0(%arg0: i32) -> (i32, i32, i32, i32) {
    %c0_i32 = arith.constant 0 : i32
    %c0_i32_0 = arith.constant 0 : i32
    %c0_i32_1 = arith.constant 0 : i32
    %c0_i32_2 = arith.constant 0 : i32
    return %arg0, %c0_i32, %c0_i32_0, %c0_i32_1 : i32, i32, i32, i32
  }
  func.func @transform_1(%arg0: i32) -> (i32, i32, i32) {
    %c0_i32 = arith.constant 0 : i32
    %c0_i32_0 = arith.constant 0 : i32
    %c0_i32_1 = arith.constant 0 : i32
    %c0_i32_2 = arith.constant 0 : i32
    return %c0_i32, %c0_i32_0, %c0_i32_1 : i32, i32, i32
  }
  func.func @transform_2(%arg0: i32) -> (i32, i32) {
    %c0_i32 = arith.constant 0 : i32
    %c0_i32_0 = arith.constant 0 : i32
    %c0_i32_1 = arith.constant 0 : i32
    return %c0_i32, %c0_i32_0 : i32, i32
  }
  func.func @transform_3(%arg0: i32) -> (i32, i32) {
    %c0_i32 = arith.constant 0 : i32
    %c0_i32_0 = arith.constant 0 : i32
    %c0_i32_1 = arith.constant 0 : i32
    return %c0_i32, %c0_i32_0 : i32, i32
  }
  func.func @transform_4(%arg0: i32) -> (i32, i32, i32, i32) {
    %c0_i32 = arith.constant 0 : i32
    %c0_i32_0 = arith.constant 0 : i32
    %c0_i32_1 = arith.constant 0 : i32
    %c0_i32_2 = arith.constant 0 : i32
    return %arg0, %c0_i32, %c0_i32_0, %c0_i32_1 : i32, i32, i32, i32
  }
}

</mosaic_0001>

<llo_original>
// kernel: recurrent_block_forward.1
$region0: #{recurrent_block_forward.1}
  #allocation0 [shape = 'u32[]', space=smem, size = 0x4, offset = 0x4, fixed_abs, tag = 'smem constant byte address 0x4 - core index']
  #allocation1 [shape = 'u32[144,128]{1,0:T(1,128)}', space=vmem, size = 0x12000, scoped, tag = 'internal scratch']
  #allocation2 [shape = 'bf16[18,18,128]{2,1,0:T(8,128)(2,1)}', space=vmem, size = 0x1b000, scoped, tag = 'scratch operand']
  %s0 = inlined_call_operand.vmem [shape: f32[2,18,18,128], index: 0, kind: input, shape index: {}]
  %s1 = inlined_call_operand.vmem [shape: bf16[3,384,128], index: 1, kind: input, shape index: {}]
  %s2 = inlined_call_operand.vmem [shape: f32[1,128], index: 2, kind: input, shape index: {}]
  %s3 = inlined_call_operand.vmem [shape: f32[1,128], index: 3, kind: input, shape index: {}]
  %s4 = inlined_call_operand.vmem [shape: f32[2,16,16,128], index: 4, kind: output, shape index: {}]
  %s5 = sld [smem:[#allocation0]]
  $region49: #{recurrent_block_forward.1} parent=0
    _
  %s7 = ssub.s32 1, %s5
  %s8 = scalar_select 0, %s7, %s5
  loop: start=0, step=1, limit=4
  $region2: #{recurrent_block_forward.1} parent=0 // loop_pre_header
    _
  $region3: #{recurrent_block_forward.1} parent=0 // loop_header
    %s10 = sphi 0, %s14
    %p11 = scmp.ge.s32.totalorder %s10, 4
    %s20 = sphi 0, %s22
    %s23 = sphi 0, %s20
    %s24 = sphi 0, %s23
    %s40 = sphi 0, %s24
    %s44 = sphi 0, %s44
    %s46 = sphi 0, %s44
    %s47 = sphi 0, %s46
    %s61 = sphi 0, %s47
    %s65 = sphi 0, %s65
    %s67 = sphi 0, %s65
    %s68 = sphi 0, %s67
    %s82 = sphi 0, %s68
    %s86 = sphi 0, %s86
    %s88 = sphi 0, %s86
    %s89 = sphi 0, %s88
    %s103 = sphi 0, %s89
    %s109 = sphi 0, %s111
    %s112 = sphi 0, %s109
    %s113 = sphi 0, %s112
    %s129 = sphi 0, %s113
  $region4: #{recurrent_block_forward.1} parent=0 // loop_header_branch
    %13 = sbr.rel (%p11) target = $region8
  $region5: #{recurrent_block_forward.1} parent=0 // loop_body
    %s15 = ssub.s32 %s10, 1
    %s16 = ssub.s32 %s10, 2
    %s17 = sadd.s32 %s10, 1
    %s18 = ssub.s32 %s10, %s17
    %p19 = scmp.eq.s32.totalorder %s18, 0
    %s21 = sadd.s32 %s20, 1
    %s22 = scalar_select %p19, %s20, %s21
    %p25 = pneg %p19
    %p26 = scmp.eq.s32.totalorder %s10, 1
    %p27 = por %p25, %p26
    %p28 = scmp.ne.s32.totalorder %s20, %s23
    %p29 = scmp.eq.s32.totalorder %s10, 0
    %p30 = por %p28, %p29
    %p31 = scmp.ne.s32.totalorder %s20, %s23
    %p32 = scmp.eq.s32.totalorder %s15, 1
    %p33 = por %p31, %p32
    %p34 = scmp.ne.s32.totalorder %s23, %s24
    %p35 = scmp.eq.s32.totalorder %s15, 0
    %p36 = por %p34, %p35
    %p37 = scmp.ne.s32.totalorder %s23, %s24
    %p38 = scmp.eq.s32.totalorder %s16, 1
    %p39 = por %p37, %p38
    %p41 = scmp.ne.s32.totalorder %s24, %s40
    %p42 = scmp.eq.s32.totalorder %s16, 0
    %p43 = por %p41, %p42
    %s45 = sadd.s32 %s44, 1
    %p48 = scmp.eq.s32.totalorder %s10, 1
    %p49 = scmp.ne.s32.totalorder %s44, %s46
    %p50 = scmp.eq.s32.totalorder %s10, 0
    %p51 = por %p49, %p50
    %p52 = scmp.ne.s32.totalorder %s44, %s46
    %p53 = scmp.eq.s32.totalorder %s15, 1
    %p54 = por %p52, %p53
    %p55 = scmp.ne.s32.totalorder %s46, %s47
    %p56 = scmp.eq.s32.totalorder %s15, 0
    %p57 = por %p55, %p56
    %p58 = scmp.ne.s32.totalorder %s46, %s47
    %p59 = scmp.eq.s32.totalorder %s16, 1
    %p60 = por %p58, %p59
    %p62 = scmp.ne.s32.totalorder %s47, %s61
    %p63 = scmp.eq.s32.totalorder %s16, 0
    %p64 = por %p62, %p63
    %s66 = sadd.s32 %s65, 1
    %p69 = scmp.eq.s32.totalorder %s10, 1
    %p70 = scmp.ne.s32.totalorder %s65, %s67
    %p71 = scmp.eq.s32.totalorder %s10, 0
    %p72 = por %p70, %p71
    %p73 = scmp.ne.s32.totalorder %s65, %s67
    %p74 = scmp.eq.s32.totalorder %s15, 1
    %p75 = por %p73, %p74
    %p76 = scmp.ne.s32.totalorder %s67, %s68
    %p77 = scmp.eq.s32.totalorder %s15, 0
    %p78 = por %p76, %p77
    %p79 = scmp.ne.s32.totalorder %s67, %s68
    %p80 = scmp.eq.s32.totalorder %s16, 1
    %p81 = por %p79, %p80
    %p83 = scmp.ne.s32.totalorder %s68, %s82
    %p84 = scmp.eq.s32.totalorder %s16, 0
    %p85 = por %p83, %p84
    %s87 = sadd.s32 %s86, 1
    %p90 = scmp.eq.s32.totalorder %s10, 1
    %p91 = scmp.ne.s32.totalorder %s86, %s88
    %p92 = scmp.eq.s32.totalorder %s10, 0
    %p93 = por %p91, %p92
    %p94 = scmp.ne.s32.totalorder %s86, %s88
    %p95 = scmp.eq.s32.totalorder %s15, 1
    %p96 = por %p94, %p95
    %p97 = scmp.ne.s32.totalorder %s88, %s89
    %p98 = scmp.eq.s32.totalorder %s15, 0
    %p99 = por %p97, %p98
    %p100 = scmp.ne.s32.totalorder %s88, %s89
    %p101 = scmp.eq.s32.totalorder %s16, 1
    %p102 = por %p100, %p101
    %p104 = scmp.ne.s32.totalorder %s89, %s103
    %p105 = scmp.eq.s32.totalorder %s16, 0
    %p106 = por %p104, %p105
    %s107 = ssub.s32 %s10, %s17
    %p108 = scmp.eq.s32.totalorder %s107, 0
    %s110 = sadd.s32 %s109, 1
    %s111 = scalar_select %p108, %s109, %s110
    %p114 = pneg %p108
    %p115 = scmp.eq.s32.totalorder %s10, 1
    %p116 = por %p114, %p115
    %p117 = scmp.ne.s32.totalorder %s109, %s112
    %p118 = scmp.eq.s32.totalorder %s10, 0
    %p119 = por %p117, %p118
    %p120 = scmp.ne.s32.totalorder %s109, %s112
    %p121 = scmp.eq.s32.totalorder %s15, 1
    %p122 = por %p120, %p121
    %p123 = scmp.ne.s32.totalorder %s112, %s113
    %p124 = scmp.eq.s32.totalorder %s15, 0
    %p125 = por %p123, %p124
    %p126 = scmp.ne.s32.totalorder %s112, %s113
    %p127 = scmp.eq.s32.totalorder %s16, 1
    %p128 = por %p126, %p127
    %p130 = scmp.ne.s32.totalorder %s113, %s129
    %p131 = scmp.eq.s32.totalorder %s16, 0
    %p132 = por %p130, %p131
    %p133 = scmp.le.s32.totalorder 1, %s10
    %p134 = scmp.lt.s32.totalorder %s10, 3
    %p135 = pnand %p133, %p134
    %p136 = pneg %p135
    // Predicated region
    $region9: #{recurrent_block_forward.1} parent=5 // pred_check
      _
    $region10: #{recurrent_block_forward.1} parent=5 // pred_check_branch
      %138 = sbr.rel (%p135) target = $region12
    $region11: #{recurrent_block_forward.1} parent=5 // pred_region
      %s139 = ssub.s32 %s10, 1
      // Predicated region
      $region13: #{recurrent_block_forward.1} parent=11 // pred_check
        %p140 = pneg %p57
      $region14: #{recurrent_block_forward.1} parent=11 // pred_check_branch
        %142 = sbr.rel (%p140) target = $region16
      $region15: #{recurrent_block_forward.1} parent=11 // pred_region
        _
      $region16: #{recurrent_block_forward.1} parent=11 // pred_fallthru
        _
      // Predicated region
      $region17: #{recurrent_block_forward.1} parent=11 // pred_check
        %p143 = pneg %p78
      $region18: #{recurrent_block_forward.1} parent=11 // pred_check_branch
        %145 = sbr.rel (%p143) target = $region20
      $region19: #{recurrent_block_forward.1} parent=11 // pred_region
        _
      $region20: #{recurrent_block_forward.1} parent=11 // pred_fallthru
        _
      // Predicated region
      $region21: #{recurrent_block_forward.1} parent=11 // pred_check
        %p146 = pneg %p99
      $region22: #{recurrent_block_forward.1} parent=11 // pred_check_branch
        %148 = sbr.rel (%p146) target = $region24
      $region23: #{recurrent_block_forward.1} parent=11 // pred_region
        _
      $region24: #{recurrent_block_forward.1} parent=11 // pred_fallthru
        _
    $region12: #{recurrent_block_forward.1} parent=5 // pred_fallthru
      _
    %p149 = scmp.lt.s32.totalorder %s10, 2
    // Predicated region
    $region25: #{recurrent_block_forward.1} parent=5 // pred_check
      %p150 = pneg %p149
    $region26: #{recurrent_block_forward.1} parent=5 // pred_check_branch
      %152 = sbr.rel (%p150) target = $region28
    $region27: #{recurrent_block_forward.1} parent=5 // pred_region
      // Predicated region
      $region29: #{recurrent_block_forward.1} parent=27 // pred_check
        %p153 = pneg %p30
      $region30: #{recurrent_block_forward.1} parent=27 // pred_check_branch
        %155 = sbr.rel (%p153) target = $region32
      $region31: #{recurrent_block_forward.1} parent=27 // pred_region
        %p156 = scmp.lt.s32.totalorder %s10, 1
        %s157 = scalar_select %p156, %s10, 1
        %s158 = smul.addr %s157, 54
        %s159 = smul.addr %s158, 8
        %s160 = scalar_lea.vmem %s0, %s159
      $region32: #{recurrent_block_forward.1} parent=27 // pred_fallthru
        _
    $region28: #{recurrent_block_forward.1} parent=5 // pred_fallthru
      _
    %p161 = scmp.le.s32.totalorder 1, %s10
    %p162 = scmp.lt.s32.totalorder %s10, 3
    %p163 = pnand %p161, %p162
    %p164 = pneg %p163
    // Predicated region
    $region33: #{recurrent_block_forward.1} parent=5 // pred_check
      _
    $region34: #{recurrent_block_forward.1} parent=5 // pred_check_branch
      %166 = sbr.rel (%p163) target = $region36
    $region35: #{recurrent_block_forward.1} parent=5 // pred_region
      %s167 = ssub.s32 %s10, 1
      %p168 = scmp.lt.s32.totalorder %s15, 1
      %s169 = scalar_select %p168, %s15, 1
      %s170 = smul.addr %s169, 54
      %s171 = smul.addr %s170, 8
      %s172 = scalar_lea.vmem %s0, %s171
      %p173 = pneg %p36
      %p174 = pneg %p33
      %p175 = pneg %p57
      %p176 = pneg %p54
      %p177 = pneg %p78
      %p178 = pneg %p75
      %p179 = pneg %p99
      %p180 = pneg %p96
      %p181 = pneg %p125
      %p182 = pneg %p122
      %p183 = scmp.lt.s32.totalorder %s15, 1
      %s184 = scalar_select %p183, %s15, 1
      %s185 = smul.addr %s184, 32
      %s186 = smul.addr %s185, 8
      %s187 = scalar_lea.vmem %s4, %s186
      %p188 = scmp.lt.s32.totalorder %s15, 1
      %s189 = scalar_select %p188, %s15, 1
      %s190 = smul.addr %s189, 54
      %s191 = smul.addr %s190, 8
      %s192 = scalar_lea.vmem %s0, %s191
      %p193 = scmp.lt.s32.totalorder %s15, 1
      %s194 = scalar_select %p193, %s15, 1
      %s195 = smul.addr %s194, 32
      %s196 = smul.addr %s195, 8
      %s197 = scalar_lea.vmem %s4, %s196
      %v199 = vld [vmem:[%s2] sm:$0x1]
      %v200 = vld [vmem:[%s3] sm:$0x1]
      %v201 = vld [vmem:[%s192] sm:$0xff]
      %v202 = vld [vmem:[%s192 + $0x8] sm:$0xff]
      %v203 = vld [vmem:[%s192 + $0x10] sm:$0x3]
      %v204 = vld [vmem:[%s192 + $0x18] sm:$0xff]
      %v205 = vld [vmem:[%s192 + $0x20] sm:$0xff]
      %v206 = vld [vmem:[%s192 + $0x28] sm:$0x3]
      %v207 = vld [vmem:[%s192 + $0x30] sm:$0xff]
      %v208 = vld [vmem:[%s192 + $0x38] sm:$0xff]
      %v209 = vld [vmem:[%s192 + $0x40] sm:$0x3]
      %v210 = vld [vmem:[%s192 + $0x48] sm:$0xff]
      %v211 = vld [vmem:[%s192 + $0x50] sm:$0xff]
      %v212 = vld [vmem:[%s192 + $0x58] sm:$0x3]
      %v213 = vld [vmem:[%s192 + $0x60] sm:$0xff]
      %v214 = vld [vmem:[%s192 + $0x68] sm:$0xff]
      %v215 = vld [vmem:[%s192 + $0x70] sm:$0x3]
      %v216 = vld [vmem:[%s192 + $0x78] sm:$0xff]
      %v217 = vld [vmem:[%s192 + $0x80] sm:$0xff]
      %v218 = vld [vmem:[%s192 + $0x88] sm:$0x3]
      %v219 = vld [vmem:[%s192 + $0x90] sm:$0xff]
      %v220 = vld [vmem:[%s192 + $0x98] sm:$0xff]
      %v221 = vld [vmem:[%s192 + $0xa0] sm:$0x3]
      %v222 = vld [vmem:[%s192 + $0xa8] sm:$0xff]
      %v223 = vld [vmem:[%s192 + $0xb0] sm:$0xff]
      %v224 = vld [vmem:[%s192 + $0xb8] sm:$0x3]
      %v225 = vld [vmem:[%s192 + $0xc0] sm:$0xff]
      %v226 = vld [vmem:[%s192 + $0xc8] sm:$0xff]
      %v227 = vld [vmem:[%s192 + $0xd0] sm:$0x3]
      %v228 = vld [vmem:[%s192 + $0xd8] sm:$0xff]
      %v229 = vld [vmem:[%s192 + $0xe0] sm:$0xff]
      %v230 = vld [vmem:[%s192 + $0xe8] sm:$0x3]
      %v231 = vld [vmem:[%s192 + $0xf0] sm:$0xff]
      %v232 = vld [vmem:[%s192 + $0xf8] sm:$0xff]
      %v233 = vld [vmem:[%s192 + $0x100] sm:$0x3]
      %v234 = vld [vmem:[%s192 + $0x108] sm:$0xff]
      %v235 = vld [vmem:[%s192 + $0x110] sm:$0xff]
      %v236 = vld [vmem:[%s192 + $0x118] sm:$0x3]
      %v237 = vld [vmem:[%s192 + $0x120] sm:$0xff]
      %v238 = vld [vmem:[%s192 + $0x128] sm:$0xff]
      %v239 = vld [vmem:[%s192 + $0x130] sm:$0x3]
      %v240 = vld [vmem:[%s192 + $0x138] sm:$0xff]
      %v241 = vld [vmem:[%s192 + $0x140] sm:$0xff]
      %v242 = vld [vmem:[%s192 + $0x148] sm:$0x3]
      %v243 = vld [vmem:[%s192 + $0x150] sm:$0xff]
      %v244 = vld [vmem:[%s192 + $0x158] sm:$0xff]
      %v245 = vld [vmem:[%s192 + $0x160] sm:$0x3]
      %v246 = vld [vmem:[%s192 + $0x168] sm:$0xff]
      %v247 = vld [vmem:[%s192 + $0x170] sm:$0xff]
      %v248 = vld [vmem:[%s192 + $0x178] sm:$0x3]
      %v249 = vld [vmem:[%s192 + $0x180] sm:$0xff]
      %v250 = vld [vmem:[%s192 + $0x188] sm:$0xff]
      %v251 = vld [vmem:[%s192 + $0x190] sm:$0x3]
      %v252 = vld [vmem:[%s192 + $0x198] sm:$0xff]
      %v253 = vld [vmem:[%s192 + $0x1a0] sm:$0xff]
      %v254 = vld [vmem:[%s192 + $0x1a8] sm:$0x3]
      %v255 = vpack.c.bf16 %v202, %v201
      %v256 = vpack.c.bf16 %v203, %v203
      %v257 = vpack.c.bf16 %v205, %v204
      %v258 = vpack.c.bf16 %v206, %v206
      %v259 = vpack.c.bf16 %v208, %v207
      %v260 = vpack.c.bf16 %v209, %v209
      %v261 = vpack.c.bf16 %v211, %v210
      %v262 = vpack.c.bf16 %v212, %v212
      %v263 = vpack.c.bf16 %v214, %v213
      %v264 = vpack.c.bf16 %v215, %v215
      %v265 = vpack.c.bf16 %v217, %v216
      %v266 = vpack.c.bf16 %v218, %v218
      %v267 = vpack.c.bf16 %v220, %v219
      %v268 = vpack.c.bf16 %v221, %v221
      %v269 = vpack.c.bf16 %v223, %v222
      %v270 = vpack.c.bf16 %v224, %v224
      %v271 = vpack.c.bf16 %v226, %v225
      %v272 = vpack.c.bf16 %v227, %v227
      %v273 = vpack.c.bf16 %v229, %v228
      %v274 = vpack.c.bf16 %v230, %v230
      %v275 = vpack.c.bf16 %v232, %v231
      %v276 = vpack.c.bf16 %v233, %v233
      %v277 = vpack.c.bf16 %v235, %v234
      %v278 = vpack.c.bf16 %v236, %v236
      %v279 = vpack.c.bf16 %v238, %v237
      %v280 = vpack.c.bf16 %v239, %v239
      %v281 = vpack.c.bf16 %v241, %v240
      %v282 = vpack.c.bf16 %v242, %v242
      %v283 = vpack.c.bf16 %v244, %v243
      %v284 = vpack.c.bf16 %v245, %v245
      %v285 = vpack.c.bf16 %v247, %v246
      %v286 = vpack.c.bf16 %v248, %v248
      %v287 = vpack.c.bf16 %v250, %v249
      %v288 = vpack.c.bf16 %v251, %v251
      %v289 = vpack.c.bf16 %v253, %v252
      %v290 = vpack.c.bf16 %v254, %v254
      %v327 = vunpack.c.l.b16 %v255
      %v328 = vunpack.c.h.b16 %v255
      %v329 = vunpack.c.l.b16 %v256
      %v330 = vunpack.c.l.b16 %v257
      %v331 = vunpack.c.h.b16 %v257
      %v332 = vunpack.c.l.b16 %v258
      %v333 = vunpack.c.l.b16 %v259
      %v334 = vunpack.c.h.b16 %v259
      %v335 = vunpack.c.l.b16 %v260
      %v336 = vunpack.c.l.b16 %v261
      %v337 = vunpack.c.h.b16 %v261
      %v338 = vunpack.c.l.b16 %v262
      %v339 = vunpack.c.l.b16 %v263
      %v340 = vunpack.c.h.b16 %v263
      %v341 = vunpack.c.l.b16 %v264
      %v342 = vunpack.c.l.b16 %v265
      %v343 = vunpack.c.h.b16 %v265
      %v344 = vunpack.c.l.b16 %v266
      %v345 = vunpack.c.l.b16 %v267
      %v346 = vunpack.c.h.b16 %v267
      %v347 = vunpack.c.l.b16 %v268
      %v348 = vunpack.c.l.b16 %v269
      %v349 = vunpack.c.h.b16 %v269
      %v350 = vunpack.c.l.b16 %v270
      %v351 = vunpack.c.l.b16 %v271
      %v352 = vunpack.c.h.b16 %v271
      %v353 = vunpack.c.l.b16 %v272
      %v354 = vunpack.c.l.b16 %v273
      %v355 = vunpack.c.h.b16 %v273
      %v356 = vunpack.c.l.b16 %v274
      %v357 = vunpack.c.l.b16 %v275
      %v358 = vunpack.c.h.b16 %v275
      %v359 = vunpack.c.l.b16 %v276
      %v360 = vunpack.c.l.b16 %v277
      %v361 = vunpack.c.h.b16 %v277
      %v362 = vunpack.c.l.b16 %v278
      %v363 = vunpack.c.l.b16 %v279
      %v364 = vunpack.c.h.b16 %v279
      %v365 = vunpack.c.l.b16 %v280
      %v366 = vunpack.c.l.b16 %v281
      %v367 = vunpack.c.h.b16 %v281
      %v368 = vunpack.c.l.b16 %v282
      %v369 = vunpack.c.l.b16 %v283
      %v370 = vunpack.c.h.b16 %v283
      %v371 = vunpack.c.l.b16 %v284
      %v372 = vunpack.c.l.b16 %v285
      %v373 = vunpack.c.h.b16 %v285
      %v374 = vunpack.c.l.b16 %v286
      %v375 = vunpack.c.l.b16 %v287
      %v376 = vunpack.c.h.b16 %v287
      %v377 = vunpack.c.l.b16 %v288
      %v378 = vunpack.c.l.b16 %v289
      %v379 = vunpack.c.h.b16 %v289
      %v380 = vunpack.c.l.b16 %v290
      %v381 = vpack.c.b16 %v327, %v327
      %v382 = vpack.c.b16 %v328, %v328
      %v383 = vpack.c.b16 %v329, %v329
      %v384 = vpack.c.b16 %v330, %v330
      %v385 = vpack.c.b16 %v331, %v331
      %v386 = vpack.c.b16 %v332, %v332
      %v387 = vpack.c.b16 %v333, %v333
      %v388 = vpack.c.b16 %v334, %v334
      %v389 = vpack.c.b16 %v335, %v335
      %v390 = vpack.c.b16 %v336, %v336
      %v391 = vpack.c.b16 %v337, %v337
      %v392 = vpack.c.b16 %v338, %v338
      %v393 = vpack.c.b16 %v339, %v339
      %v394 = vpack.c.b16 %v340, %v340
      %v395 = vpack.c.b16 %v341, %v341
      %v396 = vpack.c.b16 %v342, %v342
      %v397 = vpack.c.b16 %v343, %v343
      %v398 = vpack.c.b16 %v344, %v344
      %v399 = vpack.c.b16 %v345, %v345
      %v400 = vpack.c.b16 %v346, %v346
      %v401 = vpack.c.b16 %v347, %v347
      %v402 = vpack.c.b16 %v348, %v348
      %v403 = vpack.c.b16 %v349, %v349
      %v404 = vpack.c.b16 %v350, %v350
      %v405 = vpack.c.b16 %v351, %v351
      %v406 = vpack.c.b16 %v352, %v352
      %v407 = vpack.c.b16 %v353, %v353
      %v408 = vpack.c.b16 %v354, %v354
      %v409 = vpack.c.b16 %v355, %v355
      %v410 = vpack.c.b16 %v356, %v356
      %v411 = vpack.c.b16 %v357, %v357
      %v412 = vpack.c.b16 %v358, %v358
      %v413 = vpack.c.b16 %v359, %v359
      %v414 = vpack.c.b16 %v360, %v360
      %v415 = vpack.c.b16 %v361, %v361
      %v416 = vpack.c.b16 %v362, %v362
      %v417 = vpack.c.b16 %v363, %v363
      %v418 = vpack.c.b16 %v364, %v364
      %v419 = vpack.c.b16 %v365, %v365
      %v420 = vpack.c.b16 %v366, %v366
      %v421 = vpack.c.b16 %v367, %v367
      %v422 = vpack.c.b16 %v368, %v368
      %v423 = vpack.c.b16 %v369, %v369
      %v424 = vpack.c.b16 %v370, %v370
      %v425 = vpack.c.b16 %v371, %v371
      %v426 = vpack.c.b16 %v372, %v372
      %v427 = vpack.c.b16 %v373, %v373
      %v428 = vpack.c.b16 %v374, %v374
      %v429 = vpack.c.b16 %v375, %v375
      %v430 = vpack.c.b16 %v376, %v376
      %v431 = vpack.c.b16 %v377, %v377
      %v432 = vpack.c.b16 %v378, %v378
      %v433 = vpack.c.b16 %v379, %v379
      %v434 = vpack.c.b16 %v380, %v380
      %489 = vst [vmem:[#allocation2] sm:$0xf] %v381
      %490 = vst [vmem:[#allocation2 + $0x4] sm:$0xf] %v382
      %491 = vst [vmem:[#allocation2 + $0x8] sm:$0x1] %v383
      %492 = vst [vmem:[#allocation2 + $0xc] sm:$0xf] %v384
      %493 = vst [vmem:[#allocation2 + $0x10] sm:$0xf] %v385
      %494 = vst [vmem:[#allocation2 + $0x14] sm:$0x1] %v386
      %495 = vst [vmem:[#allocation2 + $0x18] sm:$0xf] %v387
      %496 = vst [vmem:[#allocation2 + $0x1c] sm:$0xf] %v388
      %497 = vst [vmem:[#allocation2 + $0x20] sm:$0x1] %v389
      %498 = vst [vmem:[#allocation2 + $0x24] sm:$0xf] %v390
      %499 = vst [vmem:[#allocation2 + $0x28] sm:$0xf] %v391
      %500 = vst [vmem:[#allocation2 + $0x2c] sm:$0x1] %v392
      %501 = vst [vmem:[#allocation2 + $0x30] sm:$0xf] %v393
      %502 = vst [vmem:[#allocation2 + $0x34] sm:$0xf] %v394
      %503 = vst [vmem:[#allocation2 + $0x38] sm:$0x1] %v395
      %504 = vst [vmem:[#allocation2 + $0x3c] sm:$0xf] %v396
      %505 = vst [vmem:[#allocation2 + $0x40] sm:$0xf] %v397
      %506 = vst [vmem:[#allocation2 + $0x44] sm:$0x1] %v398
      %507 = vst [vmem:[#allocation2 + $0x48] sm:$0xf] %v399
      %508 = vst [vmem:[#allocation2 + $0x4c] sm:$0xf] %v400
      %509 = vst [vmem:[#allocation2 + $0x50] sm:$0x1] %v401
      %510 = vst [vmem:[#allocation2 + $0x54] sm:$0xf] %v402
      %511 = vst [vmem:[#allocation2 + $0x58] sm:$0xf] %v403
      %512 = vst [vmem:[#allocation2 + $0x5c] sm:$0x1] %v404
      %513 = vst [vmem:[#allocation2 + $0x60] sm:$0xf] %v405
      %514 = vst [vmem:[#allocation2 + $0x64] sm:$0xf] %v406
      %515 = vst [vmem:[#allocation2 + $0x68] sm:$0x1] %v407
      %516 = vst [vmem:[#allocation2 + $0x6c] sm:$0xf] %v408
      %517 = vst [vmem:[#allocation2 + $0x70] sm:$0xf] %v409
      %518 = vst [vmem:[#allocation2 + $0x74] sm:$0x1] %v410
      %519 = vst [vmem:[#allocation2 + $0x78] sm:$0xf] %v411
      %520 = vst [vmem:[#allocation2 + $0x7c] sm:$0xf] %v412
      %521 = vst [vmem:[#allocation2 + $0x80] sm:$0x1] %v413
      %522 = vst [vmem:[#allocation2 + $0x84] sm:$0xf] %v414
      %523 = vst [vmem:[#allocation2 + $0x88] sm:$0xf] %v415
      %524 = vst [vmem:[#allocation2 + $0x8c] sm:$0x1] %v416
      %525 = vst [vmem:[#allocation2 + $0x90] sm:$0xf] %v417
      %526 = vst [vmem:[#allocation2 + $0x94] sm:$0xf] %v418
      %527 = vst [vmem:[#allocation2 + $0x98] sm:$0x1] %v419
      %528 = vst [vmem:[#allocation2 + $0x9c] sm:$0xf] %v420
      %529 = vst [vmem:[#allocation2 + $0xa0] sm:$0xf] %v421
      %530 = vst [vmem:[#allocation2 + $0xa4] sm:$0x1] %v422
      %531 = vst [vmem:[#allocation2 + $0xa8] sm:$0xf] %v423
      %532 = vst [vmem:[#allocation2 + $0xac] sm:$0xf] %v424
      %533 = vst [vmem:[#allocation2 + $0xb0] sm:$0x1] %v425
      %534 = vst [vmem:[#allocation2 + $0xb4] sm:$0xf] %v426
      %535 = vst [vmem:[#allocation2 + $0xb8] sm:$0xf] %v427
      %536 = vst [vmem:[#allocation2 + $0xbc] sm:$0x1] %v428
      %537 = vst [vmem:[#allocation2 + $0xc0] sm:$0xf] %v429
      %538 = vst [vmem:[#allocation2 + $0xc4] sm:$0xf] %v430
      %539 = vst [vmem:[#allocation2 + $0xc8] sm:$0x1] %v431
      %540 = vst [vmem:[#allocation2 + $0xcc] sm:$0xf] %v432
      %541 = vst [vmem:[#allocation2 + $0xd0] sm:$0xf] %v433
      %542 = vst [vmem:[#allocation2 + $0xd4] sm:$0x1] %v434
      %v543 = vld [vmem:[#allocation2] sm:$0xf]
      %v544 = vld [vmem:[#allocation2 + $0x4] sm:$0xf]
      %v545 = vld [vmem:[#allocation2 + $0x8] sm:$0x1]
      %v546 = vld [vmem:[#allocation2 + $0xc] sm:$0xf]
      %v547 = vld [vmem:[#allocation2 + $0x10] sm:$0xf]
      %v548 = vld [vmem:[#allocation2 + $0x14] sm:$0x1]
      %v549 = vld [vmem:[#allocation2 + $0x18] sm:$0xf]
      %v550 = vld [vmem:[#allocation2 + $0x1c] sm:$0xf]
      %v551 = vld [vmem:[#allocation2 + $0x20] sm:$0x1]
      %v552 = vld [vmem:[#allocation2 + $0x24] sm:$0xf]
      %v553 = vld [vmem:[#allocation2 + $0x28] sm:$0xf]
      %v554 = vld [vmem:[#allocation2 + $0x2c] sm:$0x1]
      %v555 = vld [vmem:[#allocation2 + $0x30] sm:$0xf]
      %v556 = vld [vmem:[#allocation2 + $0x34] sm:$0xf]
      %v557 = vld [vmem:[#allocation2 + $0x38] sm:$0x1]
      %v558 = vld [vmem:[#allocation2 + $0x3c] sm:$0xf]
      %v559 = vld [vmem:[#allocation2 + $0x40] sm:$0xf]
      %v560 = vld [vmem:[#allocation2 + $0x44] sm:$0x1]
      %v561 = vld [vmem:[#allocation2 + $0x48] sm:$0xf]
      %v562 = vld [vmem:[#allocation2 + $0x4c] sm:$0xf]
      %v563 = vld [vmem:[#allocation2 + $0x50] sm:$0x1]
      %v564 = vld [vmem:[#allocation2 + $0x54] sm:$0xf]
      %v565 = vld [vmem:[#allocation2 + $0x58] sm:$0xf]
      %v566 = vld [vmem:[#allocation2 + $0x5c] sm:$0x1]
      %v567 = vld [vmem:[#allocation2 + $0x60] sm:$0xf]
      %v568 = vld [vmem:[#allocation2 + $0x64] sm:$0xf]
      %v569 = vld [vmem:[#allocation2 + $0x68] sm:$0x1]
      %v570 = vld [vmem:[#allocation2 + $0x6c] sm:$0xf]
      %v571 = vld [vmem:[#allocation2 + $0x70] sm:$0xf]
      %v572 = vld [vmem:[#allocation2 + $0x74] sm:$0x1]
      %v573 = vld [vmem:[#allocation2 + $0x78] sm:$0xf]
      %v574 = vld [vmem:[#allocation2 + $0x7c] sm:$0xf]
      %v575 = vld [vmem:[#allocation2 + $0x80] sm:$0x1]
      %v576 = vld [vmem:[#allocation2 + $0x84] sm:$0xf]
      %v577 = vld [vmem:[#allocation2 + $0x88] sm:$0xf]
      %v578 = vld [vmem:[#allocation2 + $0x8c] sm:$0x1]
      %v579 = vld [vmem:[#allocation2 + $0x90] sm:$0xf]
      %v580 = vld [vmem:[#allocation2 + $0x94] sm:$0xf]
      %v581 = vld [vmem:[#allocation2 + $0x98] sm:$0x1]
      %v582 = vld [vmem:[#allocation2 + $0x9c] sm:$0xf]
      %v583 = vld [vmem:[#allocation2 + $0xa0] sm:$0xf]
      %v584 = vld [vmem:[#allocation2 + $0xa4] sm:$0x1]
      %v585 = vld [vmem:[#allocation2 + $0xa8] sm:$0xf]
      %v586 = vld [vmem:[#allocation2 + $0xac] sm:$0xf]
      %v587 = vld [vmem:[#allocation2 + $0xb0] sm:$0x1]
      %v588 = vld [vmem:[#allocation2 + $0xb4] sm:$0xf]
      %v589 = vld [vmem:[#allocation2 + $0xb8] sm:$0xf]
      %v590 = vld [vmem:[#allocation2 + $0xbc] sm:$0x1]
      %v591 = vld [vmem:[#allocation2 + $0xc0] sm:$0xf]
      %v592 = vld [vmem:[#allocation2 + $0xc4] sm:$0xf]
      %v593 = vld [vmem:[#allocation2 + $0xc8] sm:$0x1]
      %v594 = vld [vmem:[#allocation2 + $0xcc] sm:$0xf]
      %v595 = vld [vmem:[#allocation2 + $0xd0] sm:$0xf]
      %v596 = vld [vmem:[#allocation2 + $0xd4] sm:$0x1]
      %v629 = vunpack.c.l.b16 %v543
      %v630 = vunpack.c.l.b16 %v544
      %v631 = vunpack.c.l.b16 %v546
      %v632 = vunpack.c.l.b16 %v547
      %v633 = vunpack.c.l.b16 %v549
      %v634 = vunpack.c.l.b16 %v550
      %v635 = vunpack.c.l.b16 %v552
      %v636 = vunpack.c.l.b16 %v553
      %v637 = vunpack.c.l.b16 %v555
      %v638 = vunpack.c.l.b16 %v556
      %v639 = vunpack.c.l.b16 %v558
      %v640 = vunpack.c.l.b16 %v559
      %v641 = vunpack.c.l.b16 %v561
      %v642 = vunpack.c.l.b16 %v562
      %v643 = vunpack.c.l.b16 %v564
      %v644 = vunpack.c.l.b16 %v565
      %v645 = vunpack.c.l.b16 %v567
      %v646 = vunpack.c.l.b16 %v568
      %v647 = vunpack.c.l.b16 %v570
      %v648 = vunpack.c.l.b16 %v571
      %v649 = vunpack.c.l.b16 %v573
      %v650 = vunpack.c.l.b16 %v574
      %v651 = vunpack.c.l.b16 %v576
      %v652 = vunpack.c.l.b16 %v577
      %v653 = vunpack.c.l.b16 %v579
      %v654 = vunpack.c.l.b16 %v580
      %v655 = vunpack.c.l.b16 %v582
      %v656 = vunpack.c.l.b16 %v583
      %v657 = vunpack.c.l.b16 %v585
      %v658 = vunpack.c.l.b16 %v586
      %v659 = vunpack.c.l.b16 %v588
      %v660 = vunpack.c.l.b16 %v589
      %v661 = vpack.c.b16 %v630, %v629
      %v662 = vpack.c.b16 %v632, %v631
      %v663 = vpack.c.b16 %v634, %v633
      %v664 = vpack.c.b16 %v636, %v635
      %v665 = vpack.c.b16 %v638, %v637
      %v666 = vpack.c.b16 %v640, %v639
      %v667 = vpack.c.b16 %v642, %v641
      %v668 = vpack.c.b16 %v644, %v643
      %v669 = vpack.c.b16 %v646, %v645
      %v670 = vpack.c.b16 %v648, %v647
      %v671 = vpack.c.b16 %v650, %v649
      %v672 = vpack.c.b16 %v652, %v651
      %v673 = vpack.c.b16 %v654, %v653
      %v674 = vpack.c.b16 %v656, %v655
      %v675 = vpack.c.b16 %v658, %v657
      %v676 = vpack.c.b16 %v660, %v659
      %v709 = vunpack.c.l.b16 %v545
      %v710 = vunpack.c.l.b16 %v548
      %v711 = vunpack.c.l.b16 %v551
      %v712 = vunpack.c.l.b16 %v554
      %v713 = vunpack.c.l.b16 %v557
      %v714 = vunpack.c.l.b16 %v560
      %v715 = vunpack.c.l.b16 %v563
      %v716 = vunpack.c.l.b16 %v566
      %v717 = vunpack.c.l.b16 %v569
      %v718 = vunpack.c.l.b16 %v572
      %v719 = vunpack.c.l.b16 %v575
      %v720 = vunpack.c.l.b16 %v578
      %v721 = vunpack.c.l.b16 %v581
      %v722 = vunpack.c.l.b16 %v584
      %v723 = vunpack.c.l.b16 %v587
      %v724 = vunpack.c.l.b16 %v590
      %v725 = vpack.c.b16 %v709, %v709
      %v726 = vpack.c.b16 %v710, %v710
      %v727 = vpack.c.b16 %v711, %v711
      %v728 = vpack.c.b16 %v712, %v712
      %v729 = vpack.c.b16 %v713, %v713
      %v730 = vpack.c.b16 %v714, %v714
      %v731 = vpack.c.b16 %v715, %v715
      %v732 = vpack.c.b16 %v716, %v716
      %v733 = vpack.c.b16 %v717, %v717
      %v734 = vpack.c.b16 %v718, %v718
      %v735 = vpack.c.b16 %v719, %v719
      %v736 = vpack.c.b16 %v720, %v720
      %v737 = vpack.c.b16 %v721, %v721
      %v738 = vpack.c.b16 %v722, %v722
      %v739 = vpack.c.b16 %v723, %v723
      %v740 = vpack.c.b16 %v724, %v724
      %vm741 = vsmask.f32 7424
      %v743 = vshrl.u32 %v661, 16
      %v745 = vshll.u32 %v661, 16
      %v747 = vrot.slane %v745, 1
      %v748 = vor.u32 %v743, %v747
      %v750 = vshll.u32 %v725, 16
      %v752 = vrot.slane %v750, 1
      %v753 = vsel %vm741, %v748, %v752
      %v755 = vshrl.u32 %v662, 16
      %v757 = vshll.u32 %v662, 16
      %v759 = vrot.slane %v757, 1
      %v760 = vor.u32 %v755, %v759
      %v762 = vshll.u32 %v726, 16
      %v764 = vrot.slane %v762, 1
      %v765 = vsel %vm741, %v760, %v764
      %v767 = vshrl.u32 %v663, 16
      %v769 = vshll.u32 %v663, 16
      %v771 = vrot.slane %v769, 1
      %v772 = vor.u32 %v767, %v771
      %v774 = vshll.u32 %v727, 16
      %v776 = vrot.slane %v774, 1
      %v777 = vsel %vm741, %v772, %v776
      %v779 = vshrl.u32 %v664, 16
      %v781 = vshll.u32 %v664, 16
      %v783 = vrot.slane %v781, 1
      %v784 = vor.u32 %v779, %v783
      %v786 = vshll.u32 %v728, 16
      %v788 = vrot.slane %v786, 1
      %v789 = vsel %vm741, %v784, %v788
      %v791 = vshrl.u32 %v665, 16
      %v793 = vshll.u32 %v665, 16
      %v795 = vrot.slane %v793, 1
      %v796 = vor.u32 %v791, %v795
      %v798 = vshll.u32 %v729, 16
      %v800 = vrot.slane %v798, 1
      %v801 = vsel %vm741, %v796, %v800
      %v803 = vshrl.u32 %v666, 16
      %v805 = vshll.u32 %v666, 16
      %v807 = vrot.slane %v805, 1
      %v808 = vor.u32 %v803, %v807
      %v810 = vshll.u32 %v730, 16
      %v812 = vrot.slane %v810, 1
      %v813 = vsel %vm741, %v808, %v812
      %v815 = vshrl.u32 %v667, 16
      %v817 = vshll.u32 %v667, 16
      %v819 = vrot.slane %v817, 1
      %v820 = vor.u32 %v815, %v819
      %v822 = vshll.u32 %v731, 16
      %v824 = vrot.slane %v822, 1
      %v825 = vsel %vm741, %v820, %v824
      %v827 = vshrl.u32 %v668, 16
      %v829 = vshll.u32 %v668, 16
      %v831 = vrot.slane %v829, 1
      %v832 = vor.u32 %v827, %v831
      %v834 = vshll.u32 %v732, 16
      %v836 = vrot.slane %v834, 1
      %v837 = vsel %vm741, %v832, %v836
      %v839 = vshrl.u32 %v669, 16
      %v841 = vshll.u32 %v669, 16
      %v843 = vrot.slane %v841, 1
      %v844 = vor.u32 %v839, %v843
      %v846 = vshll.u32 %v733, 16
      %v848 = vrot.slane %v846, 1
      %v849 = vsel %vm741, %v844, %v848
      %v851 = vshrl.u32 %v670, 16
      %v853 = vshll.u32 %v670, 16
      %v855 = vrot.slane %v853, 1
      %v856 = vor.u32 %v851, %v855
      %v858 = vshll.u32 %v734, 16
      %v860 = vrot.slane %v858, 1
      %v861 = vsel %vm741, %v856, %v860
      %v863 = vshrl.u32 %v671, 16
      %v865 = vshll.u32 %v671, 16
      %v867 = vrot.slane %v865, 1
      %v868 = vor.u32 %v863, %v867
      %v870 = vshll.u32 %v735, 16
      %v872 = vrot.slane %v870, 1
      %v873 = vsel %vm741, %v868, %v872
      %v875 = vshrl.u32 %v672, 16
      %v877 = vshll.u32 %v672, 16
      %v879 = vrot.slane %v877, 1
      %v880 = vor.u32 %v875, %v879
      %v882 = vshll.u32 %v736, 16
      %v884 = vrot.slane %v882, 1
      %v885 = vsel %vm741, %v880, %v884
      %v887 = vshrl.u32 %v673, 16
      %v889 = vshll.u32 %v673, 16
      %v891 = vrot.slane %v889, 1
      %v892 = vor.u32 %v887, %v891
      %v894 = vshll.u32 %v737, 16
      %v896 = vrot.slane %v894, 1
      %v897 = vsel %vm741, %v892, %v896
      %v899 = vshrl.u32 %v674, 16
      %v901 = vshll.u32 %v674, 16
      %v903 = vrot.slane %v901, 1
      %v904 = vor.u32 %v899, %v903
      %v906 = vshll.u32 %v738, 16
      %v908 = vrot.slane %v906, 1
      %v909 = vsel %vm741, %v904, %v908
      %v911 = vshrl.u32 %v675, 16
      %v913 = vshll.u32 %v675, 16
      %v915 = vrot.slane %v913, 1
      %v916 = vor.u32 %v911, %v915
      %v918 = vshll.u32 %v739, 16
      %v920 = vrot.slane %v918, 1
      %v921 = vsel %vm741, %v916, %v920
      %v923 = vshrl.u32 %v676, 16
      %v925 = vshll.u32 %v676, 16
      %v927 = vrot.slane %v925, 1
      %v928 = vor.u32 %v923, %v927
      %v930 = vshll.u32 %v740, 16
      %v932 = vrot.slane %v930, 1
      %v933 = vsel %vm741, %v928, %v932
      %vm950 = vcmask 1046528
      %v951 = vrot.slane %v661, 1
      %v952 = vrot.slane %v725, 1
      %v953 = vsel %vm950, %v951, %v952
      %v954 = vrot.slane %v662, 1
      %v955 = vrot.slane %v726, 1
      %v956 = vsel %vm950, %v954, %v955
      %v957 = vrot.slane %v663, 1
      %v958 = vrot.slane %v727, 1
      %v959 = vsel %vm950, %v957, %v958
      %v960 = vrot.slane %v664, 1
      %v961 = vrot.slane %v728, 1
      %v962 = vsel %vm950, %v960, %v961
      %v963 = vrot.slane %v665, 1
      %v964 = vrot.slane %v729, 1
      %v965 = vsel %vm950, %v963, %v964
      %v966 = vrot.slane %v666, 1
      %v967 = vrot.slane %v730, 1
      %v968 = vsel %vm950, %v966, %v967
      %v969 = vrot.slane %v667, 1
      %v970 = vrot.slane %v731, 1
      %v971 = vsel %vm950, %v969, %v970
      %v972 = vrot.slane %v668, 1
      %v973 = vrot.slane %v732, 1
      %v974 = vsel %vm950, %v972, %v973
      %v975 = vrot.slane %v669, 1
      %v976 = vrot.slane %v733, 1
      %v977 = vsel %vm950, %v975, %v976
      %v978 = vrot.slane %v670, 1
      %v979 = vrot.slane %v734, 1
      %v980 = vsel %vm950, %v978, %v979
      %v981 = vrot.slane %v671, 1
      %v982 = vrot.slane %v735, 1
      %v983 = vsel %vm950, %v981, %v982
      %v984 = vrot.slane %v672, 1
      %v985 = vrot.slane %v736, 1
      %v986 = vsel %vm950, %v984, %v985
      %v987 = vrot.slane %v673, 1
      %v988 = vrot.slane %v737, 1
      %v989 = vsel %vm950, %v987, %v988
      %v990 = vrot.slane %v674, 1
      %v991 = vrot.slane %v738, 1
      %v992 = vsel %vm950, %v990, %v991
      %v993 = vrot.slane %v675, 1
      %v994 = vrot.slane %v739, 1
      %v995 = vsel %vm950, %v993, %v994
      %v996 = vrot.slane %v676, 1
      %v997 = vrot.slane %v740, 1
      %v998 = vsel %vm950, %v996, %v997
      %v1015 = vld [vmem:[%s1] sm:$0xf]
      %v1016 = vld [vmem:[%s1 + $0x4] sm:$0xf]
      %v1017 = vld [vmem:[%s1 + $0x8] sm:$0xf]
      %v1018 = vld [vmem:[%s1 + $0xc] sm:$0xf]
      %v1019 = vld [vmem:[%s1 + $0x10] sm:$0xf]
      %v1020 = vld [vmem:[%s1 + $0x14] sm:$0xf]
      %v1021 = vld [vmem:[%s1 + $0x18] sm:$0xf]
      %v1022 = vld [vmem:[%s1 + $0x1c] sm:$0xf]
      %v1023 = vld [vmem:[%s1 + $0x20] sm:$0xf]
      %v1024 = vld [vmem:[%s1 + $0x24] sm:$0xf]
      %v1025 = vld [vmem:[%s1 + $0x28] sm:$0xf]
      %v1026 = vld [vmem:[%s1 + $0x2c] sm:$0xf]
      %v1027 = vld [vmem:[%s1 + $0x30] sm:$0xf]
      %v1028 = vld [vmem:[%s1 + $0x34] sm:$0xf]
      %v1029 = vld [vmem:[%s1 + $0x38] sm:$0xf]
      %v1030 = vld [vmem:[%s1 + $0x3c] sm:$0xf]
      %v1031 = vld [vmem:[%s1 + $0x40] sm:$0xf]
      %v1032 = vld [vmem:[%s1 + $0x44] sm:$0xf]
      %v1033 = vld [vmem:[%s1 + $0x48] sm:$0xf]
      %v1034 = vld [vmem:[%s1 + $0x4c] sm:$0xf]
      %v1035 = vld [vmem:[%s1 + $0x50] sm:$0xf]
      %v1036 = vld [vmem:[%s1 + $0x54] sm:$0xf]
      %v1037 = vld [vmem:[%s1 + $0x58] sm:$0xf]
      %v1038 = vld [vmem:[%s1 + $0x5c] sm:$0xf]
      %v1039 = vld [vmem:[%s1 + $0x60] sm:$0xf]
      %v1040 = vld [vmem:[%s1 + $0x64] sm:$0xf]
      %v1041 = vld [vmem:[%s1 + $0x68] sm:$0xf]
      %v1042 = vld [vmem:[%s1 + $0x6c] sm:$0xf]
      %v1043 = vld [vmem:[%s1 + $0x70] sm:$0xf]
      %v1044 = vld [vmem:[%s1 + $0x74] sm:$0xf]
      %v1045 = vld [vmem:[%s1 + $0x78] sm:$0xf]
      %v1046 = vld [vmem:[%s1 + $0x7c] sm:$0xf]
      %v1047 = vld [vmem:[%s1 + $0x80] sm:$0xf]
      %v1048 = vld [vmem:[%s1 + $0x84] sm:$0xf]
      %v1049 = vld [vmem:[%s1 + $0x88] sm:$0xf]
      %v1050 = vld [vmem:[%s1 + $0x8c] sm:$0xf]
      %v1051 = vld [vmem:[%s1 + $0x90] sm:$0xf]
      %v1052 = vld [vmem:[%s1 + $0x94] sm:$0xf]
      %v1053 = vld [vmem:[%s1 + $0x98] sm:$0xf]
      %v1054 = vld [vmem:[%s1 + $0x9c] sm:$0xf]
      %v1055 = vld [vmem:[%s1 + $0xa0] sm:$0xf]
      %v1056 = vld [vmem:[%s1 + $0xa4] sm:$0xf]
      %v1057 = vld [vmem:[%s1 + $0xa8] sm:$0xf]
      %v1058 = vld [vmem:[%s1 + $0xac] sm:$0xf]
      %v1059 = vld [vmem:[%s1 + $0xb0] sm:$0xf]
      %v1060 = vld [vmem:[%s1 + $0xb4] sm:$0xf]
      %v1061 = vld [vmem:[%s1 + $0xb8] sm:$0xf]
      %v1062 = vld [vmem:[%s1 + $0xbc] sm:$0xf]
      %v1065 = vunpack.c.l.b16 %v591
      %v1066 = vunpack.c.l.b16 %v592
      %v1067 = vpack.c.b16 %v1066, %v1065
      %v1070 = vunpack.c.l.b16 %v593
      %v1071 = vpack.c.b16 %v1070, %v1070
      %v1073 = vshrl.u32 %v1067, 16
      %v1075 = vshll.u32 %v1067, 16
      %v1077 = vrot.slane %v1075, 1
      %v1078 = vor.u32 %v1073, %v1077
      %v1080 = vshll.u32 %v1071, 16
      %v1082 = vrot.slane %v1080, 1
      %v1083 = vsel %vm741, %v1078, %v1082
      %v1085 = vrot.slane %v1067, 1
      %v1086 = vrot.slane %v1071, 1
      %v1087 = vsel %vm950, %v1085, %v1086
      %s1089 = scalar_lea.vmem %s1, 192
      %v1090 = vld [vmem:[%s1089] sm:$0xf]
      %v1091 = vld [vmem:[%s1089 + $0x4] sm:$0xf]
      %v1092 = vld [vmem:[%s1089 + $0x8] sm:$0xf]
      %v1093 = vld [vmem:[%s1089 + $0xc] sm:$0xf]
      %v1094 = vld [vmem:[%s1089 + $0x10] sm:$0xf]
      %v1095 = vld [vmem:[%s1089 + $0x14] sm:$0xf]
      %v1096 = vld [vmem:[%s1089 + $0x18] sm:$0xf]
      %v1097 = vld [vmem:[%s1089 + $0x1c] sm:$0xf]
      %v1098 = vld [vmem:[%s1089 + $0x20] sm:$0xf]
      %v1099 = vld [vmem:[%s1089 + $0x24] sm:$0xf]
      %v1100 = vld [vmem:[%s1089 + $0x28] sm:$0xf]
      %v1101 = vld [vmem:[%s1089 + $0x2c] sm:$0xf]
      %v1102 = vld [vmem:[%s1089 + $0x30] sm:$0xf]
      %v1103 = vld [vmem:[%s1089 + $0x34] sm:$0xf]
      %v1104 = vld [vmem:[%s1089 + $0x38] sm:$0xf]
      %v1105 = vld [vmem:[%s1089 + $0x3c] sm:$0xf]
      %v1106 = vld [vmem:[%s1089 + $0x40] sm:$0xf]
      %v1107 = vld [vmem:[%s1089 + $0x44] sm:$0xf]
      %v1108 = vld [vmem:[%s1089 + $0x48] sm:$0xf]
      %v1109 = vld [vmem:[%s1089 + $0x4c] sm:$0xf]
      %v1110 = vld [vmem:[%s1089 + $0x50] sm:$0xf]
      %v1111 = vld [vmem:[%s1089 + $0x54] sm:$0xf]
      %v1112 = vld [vmem:[%s1089 + $0x58] sm:$0xf]
      %v1113 = vld [vmem:[%s1089 + $0x5c] sm:$0xf]
      %v1114 = vld [vmem:[%s1089 + $0x60] sm:$0xf]
      %v1115 = vld [vmem:[%s1089 + $0x64] sm:$0xf]
      %v1116 = vld [vmem:[%s1089 + $0x68] sm:$0xf]
      %v1117 = vld [vmem:[%s1089 + $0x6c] sm:$0xf]
      %v1118 = vld [vmem:[%s1089 + $0x70] sm:$0xf]
      %v1119 = vld [vmem:[%s1089 + $0x74] sm:$0xf]
      %v1120 = vld [vmem:[%s1089 + $0x78] sm:$0xf]
      %v1121 = vld [vmem:[%s1089 + $0x7c] sm:$0xf]
      %v1122 = vld [vmem:[%s1089 + $0x80] sm:$0xf]
      %v1123 = vld [vmem:[%s1089 + $0x84] sm:$0xf]
      %v1124 = vld [vmem:[%s1089 + $0x88] sm:$0xf]
      %v1125 = vld [vmem:[%s1089 + $0x8c] sm:$0xf]
      %v1126 = vld [vmem:[%s1089 + $0x90] sm:$0xf]
      %v1127 = vld [vmem:[%s1089 + $0x94] sm:$0xf]
      %v1128 = vld [vmem:[%s1089 + $0x98] sm:$0xf]
      %v1129 = vld [vmem:[%s1089 + $0x9c] sm:$0xf]
      %v1130 = vld [vmem:[%s1089 + $0xa0] sm:$0xf]
      %v1131 = vld [vmem:[%s1089 + $0xa4] sm:$0xf]
      %v1132 = vld [vmem:[%s1089 + $0xa8] sm:$0xf]
      %v1133 = vld [vmem:[%s1089 + $0xac] sm:$0xf]
      %v1134 = vld [vmem:[%s1089 + $0xb0] sm:$0xf]
      %v1135 = vld [vmem:[%s1089 + $0xb4] sm:$0xf]
      %v1136 = vld [vmem:[%s1089 + $0xb8] sm:$0xf]
      %v1137 = vld [vmem:[%s1089 + $0xbc] sm:$0xf]
      %v1186 = vunpack.c.l.b16 %v1090
      %v1187 = vunpack.c.l.b16 %v1091
      %v1188 = vunpack.c.l.b16 %v1092
      %v1189 = vunpack.c.l.b16 %v1093
      %v1190 = vunpack.c.l.b16 %v1094
      %v1191 = vunpack.c.l.b16 %v1095
      %v1192 = vunpack.c.l.b16 %v1096
      %v1193 = vunpack.c.l.b16 %v1097
      %v1194 = vunpack.c.l.b16 %v1098
      %v1195 = vunpack.c.l.b16 %v1099
      %v1196 = vunpack.c.l.b16 %v1100
      %v1197 = vunpack.c.l.b16 %v1101
      %v1198 = vunpack.c.l.b16 %v1102
      %v1199 = vunpack.c.l.b16 %v1103
      %v1200 = vunpack.c.l.b16 %v1104
      %v1201 = vunpack.c.l.b16 %v1105
      %v1202 = vunpack.c.l.b16 %v1106
      %v1203 = vunpack.c.l.b16 %v1107
      %v1204 = vunpack.c.l.b16 %v1108
      %v1205 = vunpack.c.l.b16 %v1109
      %v1206 = vunpack.c.l.b16 %v1110
      %v1207 = vunpack.c.l.b16 %v1111
      %v1208 = vunpack.c.l.b16 %v1112
      %v1209 = vunpack.c.l.b16 %v1113
      %v1210 = vunpack.c.l.b16 %v1114
      %v1211 = vunpack.c.l.b16 %v1115
      %v1212 = vunpack.c.l.b16 %v1116
      %v1213 = vunpack.c.l.b16 %v1117
      %v1214 = vunpack.c.l.b16 %v1118
      %v1215 = vunpack.c.l.b16 %v1119
      %v1216 = vunpack.c.l.b16 %v1120
      %v1217 = vunpack.c.l.b16 %v1121
      %v1218 = vunpack.c.l.b16 %v1122
      %v1219 = vunpack.c.l.b16 %v1123
      %v1220 = vunpack.c.l.b16 %v1124
      %v1221 = vunpack.c.l.b16 %v1125
      %v1222 = vunpack.c.l.b16 %v1126
      %v1223 = vunpack.c.l.b16 %v1127
      %v1224 = vunpack.c.l.b16 %v1128
      %v1225 = vunpack.c.l.b16 %v1129
      %v1226 = vunpack.c.l.b16 %v1130
      %v1227 = vunpack.c.l.b16 %v1131
      %v1228 = vunpack.c.l.b16 %v1132
      %v1229 = vunpack.c.l.b16 %v1133
      %v1230 = vunpack.c.l.b16 %v1134
      %v1231 = vunpack.c.l.b16 %v1135
      %v1232 = vunpack.c.l.b16 %v1136
      %v1233 = vunpack.c.l.b16 %v1137
      %v1234 = vpack.c.b16 %v1187, %v1186
      %v1235 = vpack.c.b16 %v1189, %v1188
      %v1236 = vpack.c.b16 %v1191, %v1190
      %v1237 = vpack.c.b16 %v1193, %v1192
      %v1238 = vpack.c.b16 %v1195, %v1194
      %v1239 = vpack.c.b16 %v1197, %v1196
      %v1240 = vpack.c.b16 %v1199, %v1198
      %v1241 = vpack.c.b16 %v1201, %v1200
      %v1242 = vpack.c.b16 %v1203, %v1202
      %v1243 = vpack.c.b16 %v1205, %v1204
      %v1244 = vpack.c.b16 %v1207, %v1206
      %v1245 = vpack.c.b16 %v1209, %v1208
      %v1246 = vpack.c.b16 %v1211, %v1210
      %v1247 = vpack.c.b16 %v1213, %v1212
      %v1248 = vpack.c.b16 %v1215, %v1214
      %v1249 = vpack.c.b16 %v1217, %v1216
      %v1250 = vpack.c.b16 %v1219, %v1218
      %v1251 = vpack.c.b16 %v1221, %v1220
      %v1252 = vpack.c.b16 %v1223, %v1222
      %v1253 = vpack.c.b16 %v1225, %v1224
      %v1254 = vpack.c.b16 %v1227, %v1226
      %v1255 = vpack.c.b16 %v1229, %v1228
      %v1256 = vpack.c.b16 %v1231, %v1230
      %v1257 = vpack.c.b16 %v1233, %v1232
      %1282 = vmatprep.subr.bf16.mxu0 0
      %1283 = vmatpush1.bf16.msra.mxu0 %v1234
      %1284 = vmatprep.subr.bf16.mxu0 0
      %1285 = vmatpush1.bf16.msra.mxu0 %v1235
      %1286 = vmatprep.subr.bf16.mxu0 0
      %1287 = vmatpush1.bf16.msra.mxu0 %v1236
      %1288 = vmatprep.subr.bf16.mxu0 0
      %1289 = vmatpush1.bf16.msra.mxu0 %v1237
      %1290 = vmatprep.subr.bf16.mxu0 0
      %1291 = vmatpush1.bf16.msra.mxu0 %v1238
      %1292 = vmatprep.subr.bf16.mxu0 0
      %1293 = vmatpush1.bf16.msra.mxu0 %v1239
      %1294 = vmatprep.subr.bf16.mxu0 0
      %1295 = vmatpush1.bf16.msra.mxu0 %v1240
      %1296 = vmatprep.subr.bf16.mxu0 0
      %1297 = vmatpush1.bf16.msra.mxu0 %v1241
      %1298 = vmatprep.subr.bf16.mxu0 0
      %1299 = vmatpush1.bf16.msra.mxu0 %v1242
      %1300 = vmatprep.subr.bf16.mxu0 0
      %1301 = vmatpush1.bf16.msra.mxu0 %v1243
      %1302 = vmatprep.subr.bf16.mxu0 0
      %1303 = vmatpush1.bf16.msra.mxu0 %v1244
      %1304 = vmatprep.subr.bf16.mxu0 0
      %1305 = vmatpush1.bf16.msra.mxu0 %v1245
      %1306 = vmatprep.subr.bf16.mxu0 0
      %1307 = vmatpush1.bf16.msra.mxu0 %v1246
      %1308 = vmatprep.subr.bf16.mxu0 0
      %1309 = vmatpush1.bf16.msra.mxu0 %v1247
      %1310 = vmatprep.subr.bf16.mxu0 0
      %1311 = vmatpush1.bf16.msra.mxu0 %v1248
      %1312 = vmatprep.subr.bf16.mxu0 0
      %1313 = vmatpush1.bf16.msra.mxu0 %v1249
      %1314 = vmatprep.mubr.bf16.mxu0 %v765
      %1315 = vmatmul.mubr.bf16.gmra.mrb[0].mxu0 %v662
      %v1316 = vpop.f32.mrb[0].mxu0
      %v1317 = vadd.f32 0.0, %v1316
      %v1318 = vpop.f32.mrb[0].mxu0
      %v1319 = vpop.f32.mrb[0].mxu0
      %v1320 = vadd.f32 0.0, %v1319
      %v1321 = vpop.f32.mrb[0].mxu0
      %1322 = vmatprep.mubr.bf16.mxu0 %v777
      %1323 = vmatmul.mubr.bf16.gmra.mrb[0].mxu0 %v663
      %v1324 = vpop.f32.mrb[0].mxu0
      %v1325 = vadd.f32 0.0, %v1324
      %v1326 = vpop.f32.mrb[0].mxu0
      %v1327 = vpop.f32.mrb[0].mxu0
      %v1328 = vadd.f32 0.0, %v1327
      %v1329 = vpop.f32.mrb[0].mxu0
      %1330 = vmatprep.mubr.bf16.mxu0 %v789
      %1331 = vmatmul.mubr.bf16.gmra.mrb[0].mxu0 %v664
      %v1332 = vpop.f32.mrb[0].mxu0
      %v1333 = vadd.f32 0.0, %v1332
      %v1334 = vpop.f32.mrb[0].mxu0
      %v1335 = vpop.f32.mrb[0].mxu0
      %v1336 = vadd.f32 0.0, %v1335
      %v1337 = vpop.f32.mrb[0].mxu0
      %1338 = vmatprep.mubr.bf16.mxu0 %v801
      %1339 = vmatmul.mubr.bf16.gmra.mrb[0].mxu0 %v665
      %v1340 = vpop.f32.mrb[0].mxu0
      %v1341 = vadd.f32 0.0, %v1340
      %v1342 = vpop.f32.mrb[0].mxu0
      %v1343 = vpop.f32.mrb[0].mxu0
      %v1344 = vadd.f32 0.0, %v1343
      %v1345 = vpop.f32.mrb[0].mxu0
      %1346 = vmatprep.mubr.bf16.mxu0 %v813
      %1347 = vmatmul.mubr.bf16.gmra.mrb[0].mxu0 %v666
      %v1348 = vpop.f32.mrb[0].mxu0
      %v1349 = vadd.f32 0.0, %v1348
      %v1350 = vpop.f32.mrb[0].mxu0
      %v1351 = vpop.f32.mrb[0].mxu0
      %v1352 = vadd.f32 0.0, %v1351
      %v1353 = vpop.f32.mrb[0].mxu0
      %1354 = vmatprep.mubr.bf16.mxu0 %v825
      %1355 = vmatmul.mubr.bf16.gmra.mrb[0].mxu0 %v667
      %v1356 = vpop.f32.mrb[0].mxu0
      %v1357 = vadd.f32 0.0, %v1356
      %v1358 = vpop.f32.mrb[0].mxu0
      %v1359 = vpop.f32.mrb[0].mxu0
      %v1360 = vadd.f32 0.0, %v1359
      %v1361 = vpop.f32.mrb[0].mxu0
      %1362 = vmatprep.mubr.bf16.mxu0 %v837
      %1363 = vmatmul.mubr.bf16.gmra.mrb[0].mxu0 %v668
      %v1364 = vpop.f32.mrb[0].mxu0
      %v1365 = vadd.f32 0.0, %v1364
      %v1366 = vpop.f32.mrb[0].mxu0
      %v1367 = vpop.f32.mrb[0].mxu0
      %v1368 = vadd.f32 0.0, %v1367
      %v1369 = vpop.f32.mrb[0].mxu0
      %1370 = vmatprep.mubr.bf16.mxu0 %v849
      %1371 = vmatmul.mubr.bf16.gmra.mrb[0].mxu0 %v669
      %v1372 = vpop.f32.mrb[0].mxu0
      %v1373 = vadd.f32 0.0, %v1372
      %v1374 = vpop.f32.mrb[0].mxu0
      %v1375 = vpop.f32.mrb[0].mxu0
      %v1376 = vadd.f32 0.0, %v1375
      %v1377 = vpop.f32.mrb[0].mxu0
      %1378 = vmatprep.mubr.bf16.mxu0 %v861
      %1379 = vmatmul.mubr.bf16.gmra.mrb[0].mxu0 %v670
      %v1380 = vpop.f32.mrb[0].mxu0
      %v1381 = vadd.f32 0.0, %v1380
      %v1382 = vpop.f32.mrb[0].mxu0
      %v1383 = vpop.f32.mrb[0].mxu0
      %v1384 = vadd.f32 0.0, %v1383
      %v1385 = vpop.f32.mrb[0].mxu0
      %1386 = vmatprep.mubr.bf16.mxu0 %v873
      %1387 = vmatmul.mubr.bf16.gmra.mrb[0].mxu0 %v671
      %v1388 = vpop.f32.mrb[0].mxu0
      %v1389 = vadd.f32 0.0, %v1388
      %v1390 = vpop.f32.mrb[0].mxu0
      %v1391 = vpop.f32.mrb[0].mxu0
      %v1392 = vadd.f32 0.0, %v1391
      %v1393 = vpop.f32.mrb[0].mxu0
      %1394 = vmatprep.mubr.bf16.mxu0 %v885
      %1395 = vmatmul.mubr.bf16.gmra.mrb[0].mxu0 %v672
      %v1396 = vpop.f32.mrb[0].mxu0
      %v1397 = vadd.f32 0.0, %v1396
      %v1398 = vpop.f32.mrb[0].mxu0
      %v1399 = vpop.f32.mrb[0].mxu0
      %v1400 = vadd.f32 0.0, %v1399
      %v1401 = vpop.f32.mrb[0].mxu0
      %1402 = vmatprep.mubr.bf16.mxu0 %v897
      %1403 = vmatmul.mubr.bf16.gmra.mrb[0].mxu0 %v673
      %v1404 = vpop.f32.mrb[0].mxu0
      %v1405 = vadd.f32 0.0, %v1404
      %v1406 = vpop.f32.mrb[0].mxu0
      %v1407 = vpop.f32.mrb[0].mxu0
      %v1408 = vadd.f32 0.0, %v1407
      %v1409 = vpop.f32.mrb[0].mxu0
      %1410 = vmatprep.mubr.bf16.mxu0 %v909
      %1411 = vmatmul.mubr.bf16.gmra.mrb[0].mxu0 %v674
      %v1412 = vpop.f32.mrb[0].mxu0
      %v1413 = vadd.f32 0.0, %v1412
      %v1414 = vpop.f32.mrb[0].mxu0
      %v1415 = vpop.f32.mrb[0].mxu0
      %v1416 = vadd.f32 0.0, %v1415
      %v1417 = vpop.f32.mrb[0].mxu0
      %1418 = vmatprep.mubr.bf16.mxu0 %v921
      %1419 = vmatmul.mubr.bf16.gmra.mrb[0].mxu0 %v675
      %v1420 = vpop.f32.mrb[0].mxu0
      %v1421 = vadd.f32 0.0, %v1420
      %v1422 = vpop.f32.mrb[0].mxu0
      %v1423 = vpop.f32.mrb[0].mxu0
      %v1424 = vadd.f32 0.0, %v1423
      %v1425 = vpop.f32.mrb[0].mxu0
      %1426 = vmatprep.mubr.bf16.mxu0 %v933
      %1427 = vmatmul.mubr.bf16.gmra.mrb[0].mxu0 %v676
      %v1428 = vpop.f32.mrb[0].mxu0
      %v1429 = vadd.f32 0.0, %v1428
      %v1430 = vpop.f32.mrb[0].mxu0
      %v1431 = vpop.f32.mrb[0].mxu0
      %v1432 = vadd.f32 0.0, %v1431
      %v1433 = vpop.f32.mrb[0].mxu0
      %1434 = vmatprep.mubr.bf16.mxu0 %v1083
      %1435 = vmatmul.mubr.bf16.gmra.mrb[0].mxu0 %v1067
      %v1436 = vpop.f32.mrb[0].mxu0
      %v1437 = vadd.f32 0.0, %v1436
      %v1438 = vpop.f32.mrb[0].mxu0
      %v1439 = vpop.f32.mrb[0].mxu0
      %v1440 = vadd.f32 0.0, %v1439
      %v1441 = vpop.f32.mrb[0].mxu0
      %1442 = vdwg.mxu0
      %1443 = vmatprep.subr.bf16.mxu0 0
      %1444 = vmatpush1.bf16.msra.mxu0 %v1250
      %1445 = vmatprep.subr.bf16.mxu0 0
      %1446 = vmatpush1.bf16.msra.mxu0 %v1251
      %1447 = vmatprep.subr.bf16.mxu0 0
      %1448 = vmatpush1.bf16.msra.mxu0 %v1252
      %1449 = vmatprep.subr.bf16.mxu0 0
      %1450 = vmatpush1.bf16.msra.mxu0 %v1253
      %1451 = vmatprep.subr.bf16.mxu0 0
      %1452 = vmatpush1.bf16.msra.mxu0 %v1254
      %1453 = vmatprep.subr.bf16.mxu0 0
      %1454 = vmatpush1.bf16.msra.mxu0 %v1255
      %1455 = vmatprep.subr.bf16.mxu0 0
      %1456 = vmatpush1.bf16.msra.mxu0 %v1256
      %1457 = vmatprep.subr.bf16.mxu0 0
      %1458 = vmatpush1.bf16.msra.mxu0 %v1257
      %1459 = vmatprep.subr.bf16.mxu0 0
      %1460 = vmatpush1.bf16.msra.mxu0 0
      %1461 = vmatprep.subr.bf16.mxu0 0
      %1462 = vmatpush1.bf16.msra.mxu0 0
      %1463 = vmatprep.subr.bf16.mxu0 0
      %1464 = vmatpush1.bf16.msra.mxu0 0
      %1465 = vmatprep.subr.bf16.mxu0 0
      %1466 = vmatpush1.bf16.msra.mxu0 0
      %1467 = vmatprep.subr.bf16.mxu0 0
      %1468 = vmatpush1.bf16.msra.mxu0 0
      %1469 = vmatprep.subr.bf16.mxu0 0
      %1470 = vmatpush1.bf16.msra.mxu0 0
      %1471 = vmatprep.subr.bf16.mxu0 0
      %1472 = vmatpush1.bf16.msra.mxu0 0
      %1473 = vmatprep.subr.bf16.mxu0 0
      %1474 = vmatpush1.bf16.msra.mxu0 0
      %1475 = vmatprep.mubr.bf16.mxu0 0
      %1476 = vmatmul.mubr.bf16.gmra.mrb[0].mxu0 %v956
      %v1477 = vpop.f32.mrb[0].mxu0
      %v1478 = vadd.f32 %v1317, %v1477
      %v1479 = vpop.f32.mrb[0].mxu0
      %v1480 = vpop.f32.mrb[0].mxu0
      %v1481 = vadd.f32 %v1320, %v1480
      %v1482 = vpop.f32.mrb[0].mxu0
      %1483 = vmatprep.mubr.bf16.mxu0 0
      %1484 = vmatmul.mubr.bf16.gmra.mrb[0].mxu0 %v959
      %v1485 = vpop.f32.mrb[0].mxu0
      %v1486 = vadd.f32 %v1325, %v1485
      %v1487 = vpop.f32.mrb[0].mxu0
      %v1488 = vpop.f32.mrb[0].mxu0
      %v1489 = vadd.f32 %v1328, %v1488
      %v1490 = vpop.f32.mrb[0].mxu0
      %1491 = vmatprep.mubr.bf16.mxu0 0
      %1492 = vmatmul.mubr.bf16.gmra.mrb[0].mxu0 %v962
      %v1493 = vpop.f32.mrb[0].mxu0
      %v1494 = vadd.f32 %v1333, %v1493
      %v1495 = vpop.f32.mrb[0].mxu0
      %v1496 = vpop.f32.mrb[0].mxu0
      %v1497 = vadd.f32 %v1336, %v1496
      %v1498 = vpop.f32.mrb[0].mxu0
      %1499 = vmatprep.mubr.bf16.mxu0 0
      %1500 = vmatmul.mubr.bf16.gmra.mrb[0].mxu0 %v965
      %v1501 = vpop.f32.mrb[0].mxu0
      %v1502 = vadd.f32 %v1341, %v1501
      %v1503 = vpop.f32.mrb[0].mxu0
      %v1504 = vpop.f32.mrb[0].mxu0
      %v1505 = vadd.f32 %v1344, %v1504
      %v1506 = vpop.f32.mrb[0].mxu0
      %1507 = vmatprep.mubr.bf16.mxu0 0
      %1508 = vmatmul.mubr.bf16.gmra.mrb[0].mxu0 %v968
      %v1509 = vpop.f32.mrb[0].mxu0
      %v1510 = vadd.f32 %v1349, %v1509
      %v1511 = vpop.f32.mrb[0].mxu0
      %v1512 = vpop.f32.mrb[0].mxu0
      %v1513 = vadd.f32 %v1352, %v1512
      %v1514 = vpop.f32.mrb[0].mxu0
      %1515 = vmatprep.mubr.bf16.mxu0 0
      %1516 = vmatmul.mubr.bf16.gmra.mrb[0].mxu0 %v971
      %v1517 = vpop.f32.mrb[0].mxu0
      %v1518 = vadd.f32 %v1357, %v1517
      %v1519 = vpop.f32.mrb[0].mxu0
      %v1520 = vpop.f32.mrb[0].mxu0
      %v1521 = vadd.f32 %v1360, %v1520
      %v1522 = vpop.f32.mrb[0].mxu0
      %1523 = vmatprep.mubr.bf16.mxu0 0
      %1524 = vmatmul.mubr.bf16.gmra.mrb[0].mxu0 %v974
      %v1525 = vpop.f32.mrb[0].mxu0
      %v1526 = vadd.f32 %v1365, %v1525
      %v1527 = vpop.f32.mrb[0].mxu0
      %v1528 = vpop.f32.mrb[0].mxu0
      %v1529 = vadd.f32 %v1368, %v1528
      %v1530 = vpop.f32.mrb[0].mxu0
      %1531 = vmatprep.mubr.bf16.mxu0 0
      %1532 = vmatmul.mubr.bf16.gmra.mrb[0].mxu0 %v977
      %v1533 = vpop.f32.mrb[0].mxu0
      %v1534 = vadd.f32 %v1373, %v1533
      %v1535 = vpop.f32.mrb[0].mxu0
      %v1536 = vpop.f32.mrb[0].mxu0
      %v1537 = vadd.f32 %v1376, %v1536
      %v1538 = vpop.f32.mrb[0].mxu0
      %1539 = vmatprep.mubr.bf16.mxu0 0
      %1540 = vmatmul.mubr.bf16.gmra.mrb[0].mxu0 %v980
      %v1541 = vpop.f32.mrb[0].mxu0
      %v1542 = vadd.f32 %v1381, %v1541
      %v1543 = vpop.f32.mrb[0].mxu0
      %v1544 = vpop.f32.mrb[0].mxu0
      %v1545 = vadd.f32 %v1384, %v1544
      %v1546 = vpop.f32.mrb[0].mxu0
      %1547 = vmatprep.mubr.bf16.mxu0 0
      %1548 = vmatmul.mubr.bf16.gmra.mrb[0].mxu0 %v983
      %v1549 = vpop.f32.mrb[0].mxu0
      %v1550 = vadd.f32 %v1389, %v1549
      %v1551 = vpop.f32.mrb[0].mxu0
      %v1552 = vpop.f32.mrb[0].mxu0
      %v1553 = vadd.f32 %v1392, %v1552
      %v1554 = vpop.f32.mrb[0].mxu0
      %1555 = vmatprep.mubr.bf16.mxu0 0
      %1556 = vmatmul.mubr.bf16.gmra.mrb[0].mxu0 %v986
      %v1557 = vpop.f32.mrb[0].mxu0
      %v1558 = vadd.f32 %v1397, %v1557
      %v1559 = vpop.f32.mrb[0].mxu0
      %v1560 = vpop.f32.mrb[0].mxu0
      %v1561 = vadd.f32 %v1400, %v1560
      %v1562 = vpop.f32.mrb[0].mxu0
      %1563 = vmatprep.mubr.bf16.mxu0 0
      %1564 = vmatmul.mubr.bf16.gmra.mrb[0].mxu0 %v989
      %v1565 = vpop.f32.mrb[0].mxu0
      %v1566 = vadd.f32 %v1405, %v1565
      %v1567 = vpop.f32.mrb[0].mxu0
      %v1568 = vpop.f32.mrb[0].mxu0
      %v1569 = vadd.f32 %v1408, %v1568
      %v1570 = vpop.f32.mrb[0].mxu0
      %1571 = vmatprep.mubr.bf16.mxu0 0
      %1572 = vmatmul.mubr.bf16.gmra.mrb[0].mxu0 %v992
      %v1573 = vpop.f32.mrb[0].mxu0
      %v1574 = vadd.f32 %v1413, %v1573
      %v1575 = vpop.f32.mrb[0].mxu0
      %v1576 = vpop.f32.mrb[0].mxu0
      %v1577 = vadd.f32 %v1416, %v1576
      %v1578 = vpop.f32.mrb[0].mxu0
      %1579 = vmatprep.mubr.bf16.mxu0 0
      %1580 = vmatmul.mubr.bf16.gmra.mrb[0].mxu0 %v995
      %v1581 = vpop.f32.mrb[0].mxu0
      %v1582 = vadd.f32 %v1421, %v1581
      %v1583 = vpop.f32.mrb[0].mxu0
      %v1584 = vpop.f32.mrb[0].mxu0
      %v1585 = vadd.f32 %v1424, %v1584
      %v1586 = vpop.f32.mrb[0].mxu0
      %1587 = vmatprep.mubr.bf16.mxu0 0
      %1588 = vmatmul.mubr.bf16.gmra.mrb[0].mxu0 %v998
      %v1589 = vpop.f32.mrb[0].mxu0
      %v1590 = vadd.f32 %v1429, %v1589
      %v1591 = vpop.f32.mrb[0].mxu0
      %v1592 = vpop.f32.mrb[0].mxu0
      %v1593 = vadd.f32 %v1432, %v1592
      %v1594 = vpop.f32.mrb[0].mxu0
      %1595 = vmatprep.mubr.bf16.mxu0 0
      %1596 = vmatmul.mubr.bf16.gmra.mrb[0].mxu0 %v1087
      %v1597 = vpop.f32.mrb[0].mxu0
      %v1598 = vadd.f32 %v1437, %v1597
      %v1599 = vpop.f32.mrb[0].mxu0
      %v1600 = vpop.f32.mrb[0].mxu0
      %v1601 = vadd.f32 %v1440, %v1600
      %v1602 = vpop.f32.mrb[0].mxu0
      %1603 = vdwg.mxu0
      %v1652 = vunpack.c.l.b16 %v1015
      %v1653 = vunpack.c.l.b16 %v1016
      %v1654 = vunpack.c.l.b16 %v1017
      %v1655 = vunpack.c.l.b16 %v1018
      %v1656 = vunpack.c.l.b16 %v1019
      %v1657 = vunpack.c.l.b16 %v1020
      %v1658 = vunpack.c.l.b16 %v1021
      %v1659 = vunpack.c.l.b16 %v1022
      %v1660 = vunpack.c.l.b16 %v1023
      %v1661 = vunpack.c.l.b16 %v1024
      %v1662 = vunpack.c.l.b16 %v1025
      %v1663 = vunpack.c.l.b16 %v1026
      %v1664 = vunpack.c.l.b16 %v1027
      %v1665 = vunpack.c.l.b16 %v1028
      %v1666 = vunpack.c.l.b16 %v1029
      %v1667 = vunpack.c.l.b16 %v1030
      %v1668 = vunpack.c.l.b16 %v1031
      %v1669 = vunpack.c.l.b16 %v1032
      %v1670 = vunpack.c.l.b16 %v1033
      %v1671 = vunpack.c.l.b16 %v1034
      %v1672 = vunpack.c.l.b16 %v1035
      %v1673 = vunpack.c.l.b16 %v1036
      %v1674 = vunpack.c.l.b16 %v1037
      %v1675 = vunpack.c.l.b16 %v1038
      %v1676 = vunpack.c.l.b16 %v1039
      %v1677 = vunpack.c.l.b16 %v1040
      %v1678 = vunpack.c.l.b16 %v1041
      %v1679 = vunpack.c.l.b16 %v1042
      %v1680 = vunpack.c.l.b16 %v1043
      %v1681 = vunpack.c.l.b16 %v1044
      %v1682 = vunpack.c.l.b16 %v1045
      %v1683 = vunpack.c.l.b16 %v1046
      %v1684 = vunpack.c.l.b16 %v1047
      %v1685 = vunpack.c.l.b16 %v1048
      %v1686 = vunpack.c.l.b16 %v1049
      %v1687 = vunpack.c.l.b16 %v1050
      %v1688 = vunpack.c.l.b16 %v1051
      %v1689 = vunpack.c.l.b16 %v1052
      %v1690 = vunpack.c.l.b16 %v1053
      %v1691 = vunpack.c.l.b16 %v1054
      %v1692 = vunpack.c.l.b16 %v1055
      %v1693 = vunpack.c.l.b16 %v1056
      %v1694 = vunpack.c.l.b16 %v1057
      %v1695 = vunpack.c.l.b16 %v1058
      %v1696 = vunpack.c.l.b16 %v1059
      %v1697 = vunpack.c.l.b16 %v1060
      %v1698 = vunpack.c.l.b16 %v1061
      %v1699 = vunpack.c.l.b16 %v1062
      %v1700 = vpack.c.b16 %v1653, %v1652
      %v1701 = vpack.c.b16 %v1655, %v1654
      %v1702 = vpack.c.b16 %v1657, %v1656
      %v1703 = vpack.c.b16 %v1659, %v1658
      %v1704 = vpack.c.b16 %v1661, %v1660
      %v1705 = vpack.c.b16 %v1663, %v1662
      %v1706 = vpack.c.b16 %v1665, %v1664
      %v1707 = vpack.c.b16 %v1667, %v1666
      %v1708 = vpack.c.b16 %v1669, %v1668
      %v1709 = vpack.c.b16 %v1671, %v1670
      %v1710 = vpack.c.b16 %v1673, %v1672
      %v1711 = vpack.c.b16 %v1675, %v1674
      %v1712 = vpack.c.b16 %v1677, %v1676
      %v1713 = vpack.c.b16 %v1679, %v1678
      %v1714 = vpack.c.b16 %v1681, %v1680
      %v1715 = vpack.c.b16 %v1683, %v1682
      %v1716 = vpack.c.b16 %v1685, %v1684
      %v1717 = vpack.c.b16 %v1687, %v1686
      %v1718 = vpack.c.b16 %v1689, %v1688
      %v1719 = vpack.c.b16 %v1691, %v1690
      %v1720 = vpack.c.b16 %v1693, %v1692
      %v1721 = vpack.c.b16 %v1695, %v1694
      %v1722 = vpack.c.b16 %v1697, %v1696
      %v1723 = vpack.c.b16 %v1699, %v1698
      %1748 = vmatprep.subr.bf16.mxu0 0
      %1749 = vmatpush1.bf16.msra.mxu0 %v1700
      %1750 = vmatprep.subr.bf16.mxu0 0
      %1751 = vmatpush1.bf16.msra.mxu0 %v1701
      %1752 = vmatprep.subr.bf16.mxu0 0
      %1753 = vmatpush1.bf16.msra.mxu0 %v1702
      %1754 = vmatprep.subr.bf16.mxu0 0
      %1755 = vmatpush1.bf16.msra.mxu0 %v1703
      %1756 = vmatprep.subr.bf16.mxu0 0
      %1757 = vmatpush1.bf16.msra.mxu0 %v1704
      %1758 = vmatprep.subr.bf16.mxu0 0
      %1759 = vmatpush1.bf16.msra.mxu0 %v1705
      %1760 = vmatprep.subr.bf16.mxu0 0
      %1761 = vmatpush1.bf16.msra.mxu0 %v1706
      %1762 = vmatprep.subr.bf16.mxu0 0
      %1763 = vmatpush1.bf16.msra.mxu0 %v1707
      %1764 = vmatprep.subr.bf16.mxu0 0
      %1765 = vmatpush1.bf16.msra.mxu0 %v1708
      %1766 = vmatprep.subr.bf16.mxu0 0
      %1767 = vmatpush1.bf16.msra.mxu0 %v1709
      %1768 = vmatprep.subr.bf16.mxu0 0
      %1769 = vmatpush1.bf16.msra.mxu0 %v1710
      %1770 = vmatprep.subr.bf16.mxu0 0
      %1771 = vmatpush1.bf16.msra.mxu0 %v1711
      %1772 = vmatprep.subr.bf16.mxu0 0
      %1773 = vmatpush1.bf16.msra.mxu0 %v1712
      %1774 = vmatprep.subr.bf16.mxu0 0
      %1775 = vmatpush1.bf16.msra.mxu0 %v1713
      %1776 = vmatprep.subr.bf16.mxu0 0
      %1777 = vmatpush1.bf16.msra.mxu0 %v1714
      %1778 = vmatprep.subr.bf16.mxu0 0
      %1779 = vmatpush1.bf16.msra.mxu0 %v1715
      %1780 = vmatprep.mubr.bf16.mxu0 %v753
      %1781 = vmatmul.mubr.bf16.gmra.mrb[0].mxu0 %v661
      %v1782 = vpop.f32.mrb[0].mxu0
      %v1783 = vadd.f32 %v1478, %v1782
      %v1784 = vpop.f32.mrb[0].mxu0
      %v1785 = vpop.f32.mrb[0].mxu0
      %v1786 = vadd.f32 %v1481, %v1785
      %v1787 = vpop.f32.mrb[0].mxu0
      %1788 = vmatprep.mubr.bf16.mxu0 %v765
      %1789 = vmatmul.mubr.bf16.gmra.mrb[0].mxu0 %v662
      %v1790 = vpop.f32.mrb[0].mxu0
      %v1791 = vadd.f32 %v1486, %v1790
      %v1792 = vpop.f32.mrb[0].mxu0
      %v1793 = vpop.f32.mrb[0].mxu0
      %v1794 = vadd.f32 %v1489, %v1793
      %v1795 = vpop.f32.mrb[0].mxu0
      %1796 = vmatprep.mubr.bf16.mxu0 %v777
      %1797 = vmatmul.mubr.bf16.gmra.mrb[0].mxu0 %v663
      %v1798 = vpop.f32.mrb[0].mxu0
      %v1799 = vadd.f32 %v1494, %v1798
      %v1800 = vpop.f32.mrb[0].mxu0
      %v1801 = vpop.f32.mrb[0].mxu0
      %v1802 = vadd.f32 %v1497, %v1801
      %v1803 = vpop.f32.mrb[0].mxu0
      %1804 = vmatprep.mubr.bf16.mxu0 %v789
      %1805 = vmatmul.mubr.bf16.gmra.mrb[0].mxu0 %v664
      %v1806 = vpop.f32.mrb[0].mxu0
      %v1807 = vadd.f32 %v1502, %v1806
      %v1808 = vpop.f32.mrb[0].mxu0
      %v1809 = vpop.f32.mrb[0].mxu0
      %v1810 = vadd.f32 %v1505, %v1809
      %v1811 = vpop.f32.mrb[0].mxu0
      %1812 = vmatprep.mubr.bf16.mxu0 %v801
      %1813 = vmatmul.mubr.bf16.gmra.mrb[0].mxu0 %v665
      %v1814 = vpop.f32.mrb[0].mxu0
      %v1815 = vadd.f32 %v1510, %v1814
      %v1816 = vpop.f32.mrb[0].mxu0
      %v1817 = vpop.f32.mrb[0].mxu0
      %v1818 = vadd.f32 %v1513, %v1817
      %v1819 = vpop.f32.mrb[0].mxu0
      %1820 = vmatprep.mubr.bf16.mxu0 %v813
      %1821 = vmatmul.mubr.bf16.gmra.mrb[0].mxu0 %v666
      %v1822 = vpop.f32.mrb[0].mxu0
      %v1823 = vadd.f32 %v1518, %v1822
      %v1824 = vpop.f32.mrb[0].mxu0
      %v1825 = vpop.f32.mrb[0].mxu0
      %v1826 = vadd.f32 %v1521, %v1825
      %v1827 = vpop.f32.mrb[0].mxu0
      %1828 = vmatprep.mubr.bf16.mxu0 %v825
      %1829 = vmatmul.mubr.bf16.gmra.mrb[0].mxu0 %v667
      %v1830 = vpop.f32.mrb[0].mxu0
      %v1831 = vadd.f32 %v1526, %v1830
      %v1832 = vpop.f32.mrb[0].mxu0
      %v1833 = vpop.f32.mrb[0].mxu0
      %v1834 = vadd.f32 %v1529, %v1833
      %v1835 = vpop.f32.mrb[0].mxu0
      %1836 = vmatprep.mubr.bf16.mxu0 %v837
      %1837 = vmatmul.mubr.bf16.gmra.mrb[0].mxu0 %v668
      %v1838 = vpop.f32.mrb[0].mxu0
      %v1839 = vadd.f32 %v1534, %v1838
      %v1840 = vpop.f32.mrb[0].mxu0
      %v1841 = vpop.f32.mrb[0].mxu0
      %v1842 = vadd.f32 %v1537, %v1841
      %v1843 = vpop.f32.mrb[0].mxu0
      %1844 = vmatprep.mubr.bf16.mxu0 %v849
      %1845 = vmatmul.mubr.bf16.gmra.mrb[0].mxu0 %v669
      %v1846 = vpop.f32.mrb[0].mxu0
      %v1847 = vadd.f32 %v1542, %v1846
      %v1848 = vpop.f32.mrb[0].mxu0
      %v1849 = vpop.f32.mrb[0].mxu0
      %v1850 = vadd.f32 %v1545, %v1849
      %v1851 = vpop.f32.mrb[0].mxu0
      %1852 = vmatprep.mubr.bf16.mxu0 %v861
      %1853 = vmatmul.mubr.bf16.gmra.mrb[0].mxu0 %v670
      %v1854 = vpop.f32.mrb[0].mxu0
      %v1855 = vadd.f32 %v1550, %v1854
      %v1856 = vpop.f32.mrb[0].mxu0
      %v1857 = vpop.f32.mrb[0].mxu0
      %v1858 = vadd.f32 %v1553, %v1857
      %v1859 = vpop.f32.mrb[0].mxu0
      %1860 = vmatprep.mubr.bf16.mxu0 %v873
      %1861 = vmatmul.mubr.bf16.gmra.mrb[0].mxu0 %v671
      %v1862 = vpop.f32.mrb[0].mxu0
      %v1863 = vadd.f32 %v1558, %v1862
      %v1864 = vpop.f32.mrb[0].mxu0
      %v1865 = vpop.f32.mrb[0].mxu0
      %v1866 = vadd.f32 %v1561, %v1865
      %v1867 = vpop.f32.mrb[0].mxu0
      %1868 = vmatprep.mubr.bf16.mxu0 %v885
      %1869 = vmatmul.mubr.bf16.gmra.mrb[0].mxu0 %v672
      %v1870 = vpop.f32.mrb[0].mxu0
      %v1871 = vadd.f32 %v1566, %v1870
      %v1872 = vpop.f32.mrb[0].mxu0
      %v1873 = vpop.f32.mrb[0].mxu0
      %v1874 = vadd.f32 %v1569, %v1873
      %v1875 = vpop.f32.mrb[0].mxu0
      %1876 = vmatprep.mubr.bf16.mxu0 %v897
      %1877 = vmatmul.mubr.bf16.gmra.mrb[0].mxu0 %v673
      %v1878 = vpop.f32.mrb[0].mxu0
      %v1879 = vadd.f32 %v1574, %v1878
      %v1880 = vpop.f32.mrb[0].mxu0
      %v1881 = vpop.f32.mrb[0].mxu0
      %v1882 = vadd.f32 %v1577, %v1881
      %v1883 = vpop.f32.mrb[0].mxu0
      %1884 = vmatprep.mubr.bf16.mxu0 %v909
      %1885 = vmatmul.mubr.bf16.gmra.mrb[0].mxu0 %v674
      %v1886 = vpop.f32.mrb[0].mxu0
      %v1887 = vadd.f32 %v1582, %v1886
      %v1888 = vpop.f32.mrb[0].mxu0
      %v1889 = vpop.f32.mrb[0].mxu0
      %v1890 = vadd.f32 %v1585, %v1889
      %v1891 = vpop.f32.mrb[0].mxu0
      %1892 = vmatprep.mubr.bf16.mxu0 %v921
      %1893 = vmatmul.mubr.bf16.gmra.mrb[0].mxu0 %v675
      %v1894 = vpop.f32.mrb[0].mxu0
      %v1895 = vadd.f32 %v1590, %v1894
      %v1896 = vpop.f32.mrb[0].mxu0
      %v1897 = vpop.f32.mrb[0].mxu0
      %v1898 = vadd.f32 %v1593, %v1897
      %v1899 = vpop.f32.mrb[0].mxu0
      %1900 = vmatprep.mubr.bf16.mxu0 %v933
      %1901 = vmatmul.mubr.bf16.gmra.mrb[0].mxu0 %v676
      %v1902 = vpop.f32.mrb[0].mxu0
      %v1903 = vadd.f32 %v1598, %v1902
      %v1904 = vpop.f32.mrb[0].mxu0
      %v1905 = vpop.f32.mrb[0].mxu0
      %v1906 = vadd.f32 %v1601, %v1905
      %v1907 = vpop.f32.mrb[0].mxu0
      %1908 = vdwg.mxu0
      %1909 = vmatprep.subr.bf16.mxu0 0
      %1910 = vmatpush1.bf16.msra.mxu0 %v1716
      %1911 = vmatprep.subr.bf16.mxu0 0
      %1912 = vmatpush1.bf16.msra.mxu0 %v1717
      %1913 = vmatprep.subr.bf16.mxu0 0
      %1914 = vmatpush1.bf16.msra.mxu0 %v1718
      %1915 = vmatprep.subr.bf16.mxu0 0
      %1916 = vmatpush1.bf16.msra.mxu0 %v1719
      %1917 = vmatprep.subr.bf16.mxu0 0
      %1918 = vmatpush1.bf16.msra.mxu0 %v1720
      %1919 = vmatprep.subr.bf16.mxu0 0
      %1920 = vmatpush1.bf16.msra.mxu0 %v1721
      %1921 = vmatprep.subr.bf16.mxu0 0
      %1922 = vmatpush1.bf16.msra.mxu0 %v1722
      %1923 = vmatprep.subr.bf16.mxu0 0
      %1924 = vmatpush1.bf16.msra.mxu0 %v1723
      %1925 = vmatprep.subr.bf16.mxu0 0
      %1926 = vmatpush1.bf16.msra.mxu0 0
      %1927 = vmatprep.subr.bf16.mxu0 0
      %1928 = vmatpush1.bf16.msra.mxu0 0
      %1929 = vmatprep.subr.bf16.mxu0 0
      %1930 = vmatpush1.bf16.msra.mxu0 0
      %1931 = vmatprep.subr.bf16.mxu0 0
      %1932 = vmatpush1.bf16.msra.mxu0 0
      %1933 = vmatprep.subr.bf16.mxu0 0
      %1934 = vmatpush1.bf16.msra.mxu0 0
      %1935 = vmatprep.subr.bf16.mxu0 0
      %1936 = vmatpush1.bf16.msra.mxu0 0
      %1937 = vmatprep.subr.bf16.mxu0 0
      %1938 = vmatpush1.bf16.msra.mxu0 0
      %1939 = vmatprep.subr.bf16.mxu0 0
      %1940 = vmatpush1.bf16.msra.mxu0 0
      %1941 = vmatprep.mubr.bf16.mxu0 0
      %1942 = vmatmul.mubr.bf16.gmra.mrb[0].mxu0 %v953
      %v1943 = vpop.f32.mrb[0].mxu0
      %v1944 = vadd.f32 %v1783, %v1943
      %v1945 = vpop.f32.mrb[0].mxu0
      %v1946 = vpop.f32.mrb[0].mxu0
      %v1947 = vadd.f32 %v1786, %v1946
      %v1948 = vpop.f32.mrb[0].mxu0
      %1949 = vmatprep.mubr.bf16.mxu0 0
      %1950 = vmatmul.mubr.bf16.gmra.mrb[0].mxu0 %v956
      %v1951 = vpop.f32.mrb[0].mxu0
      %v1952 = vadd.f32 %v1791, %v1951
      %v1953 = vpop.f32.mrb[0].mxu0
      %v1954 = vpop.f32.mrb[0].mxu0
      %v1955 = vadd.f32 %v1794, %v1954
      %v1956 = vpop.f32.mrb[0].mxu0
      %1957 = vmatprep.mubr.bf16.mxu0 0
      %1958 = vmatmul.mubr.bf16.gmra.mrb[0].mxu0 %v959
      %v1959 = vpop.f32.mrb[0].mxu0
      %v1960 = vadd.f32 %v1799, %v1959
      %v1961 = vpop.f32.mrb[0].mxu0
      %v1962 = vpop.f32.mrb[0].mxu0
      %v1963 = vadd.f32 %v1802, %v1962
      %v1964 = vpop.f32.mrb[0].mxu0
      %1965 = vmatprep.mubr.bf16.mxu0 0
      %1966 = vmatmul.mubr.bf16.gmra.mrb[0].mxu0 %v962
      %v1967 = vpop.f32.mrb[0].mxu0
      %v1968 = vadd.f32 %v1807, %v1967
      %v1969 = vpop.f32.mrb[0].mxu0
      %v1970 = vpop.f32.mrb[0].mxu0
      %v1971 = vadd.f32 %v1810, %v1970
      %v1972 = vpop.f32.mrb[0].mxu0
      %1973 = vmatprep.mubr.bf16.mxu0 0
      %1974 = vmatmul.mubr.bf16.gmra.mrb[0].mxu0 %v965
      %v1975 = vpop.f32.mrb[0].mxu0
      %v1976 = vadd.f32 %v1815, %v1975
      %v1977 = vpop.f32.mrb[0].mxu0
      %v1978 = vpop.f32.mrb[0].mxu0
      %v1979 = vadd.f32 %v1818, %v1978
      %v1980 = vpop.f32.mrb[0].mxu0
      %1981 = vmatprep.mubr.bf16.mxu0 0
      %1982 = vmatmul.mubr.bf16.gmra.mrb[0].mxu0 %v968
      %v1983 = vpop.f32.mrb[0].mxu0
      %v1984 = vadd.f32 %v1823, %v1983
      %v1985 = vpop.f32.mrb[0].mxu0
      %v1986 = vpop.f32.mrb[0].mxu0
      %v1987 = vadd.f32 %v1826, %v1986
      %v1988 = vpop.f32.mrb[0].mxu0
      %1989 = vmatprep.mubr.bf16.mxu0 0
      %1990 = vmatmul.mubr.bf16.gmra.mrb[0].mxu0 %v971
      %v1991 = vpop.f32.mrb[0].mxu0
      %v1992 = vadd.f32 %v1831, %v1991
      %v1993 = vpop.f32.mrb[0].mxu0
      %v1994 = vpop.f32.mrb[0].mxu0
      %v1995 = vadd.f32 %v1834, %v1994
      %v1996 = vpop.f32.mrb[0].mxu0
      %1997 = vmatprep.mubr.bf16.mxu0 0
      %1998 = vmatmul.mubr.bf16.gmra.mrb[0].mxu0 %v974
      %v1999 = vpop.f32.mrb[0].mxu0
      %v2000 = vadd.f32 %v1839, %v1999
      %v2001 = vpop.f32.mrb[0].mxu0
      %v2002 = vpop.f32.mrb[0].mxu0
      %v2003 = vadd.f32 %v1842, %v2002
      %v2004 = vpop.f32.mrb[0].mxu0
      %2005 = vmatprep.mubr.bf16.mxu0 0
      %2006 = vmatmul.mubr.bf16.gmra.mrb[0].mxu0 %v977
      %v2007 = vpop.f32.mrb[0].mxu0
      %v2008 = vadd.f32 %v1847, %v2007
      %v2009 = vpop.f32.mrb[0].mxu0
      %v2010 = vpop.f32.mrb[0].mxu0
      %v2011 = vadd.f32 %v1850, %v2010
      %v2012 = vpop.f32.mrb[0].mxu0
      %2013 = vmatprep.mubr.bf16.mxu0 0
      %2014 = vmatmul.mubr.bf16.gmra.mrb[0].mxu0 %v980
      %v2015 = vpop.f32.mrb[0].mxu0
      %v2016 = vadd.f32 %v1855, %v2015
      %v2017 = vpop.f32.mrb[0].mxu0
      %v2018 = vpop.f32.mrb[0].mxu0
      %v2019 = vadd.f32 %v1858, %v2018
      %v2020 = vpop.f32.mrb[0].mxu0
      %2021 = vmatprep.mubr.bf16.mxu0 0
      %2022 = vmatmul.mubr.bf16.gmra.mrb[0].mxu0 %v983
      %v2023 = vpop.f32.mrb[0].mxu0
      %v2024 = vadd.f32 %v1863, %v2023
      %v2025 = vpop.f32.mrb[0].mxu0
      %v2026 = vpop.f32.mrb[0].mxu0
      %v2027 = vadd.f32 %v1866, %v2026
      %v2028 = vpop.f32.mrb[0].mxu0
      %2029 = vmatprep.mubr.bf16.mxu0 0
      %2030 = vmatmul.mubr.bf16.gmra.mrb[0].mxu0 %v986
      %v2031 = vpop.f32.mrb[0].mxu0
      %v2032 = vadd.f32 %v1871, %v2031
      %v2033 = vpop.f32.mrb[0].mxu0
      %v2034 = vpop.f32.mrb[0].mxu0
      %v2035 = vadd.f32 %v1874, %v2034
      %v2036 = vpop.f32.mrb[0].mxu0
      %2037 = vmatprep.mubr.bf16.mxu0 0
      %2038 = vmatmul.mubr.bf16.gmra.mrb[0].mxu0 %v989
      %v2039 = vpop.f32.mrb[0].mxu0
      %v2040 = vadd.f32 %v1879, %v2039
      %v2041 = vpop.f32.mrb[0].mxu0
      %v2042 = vpop.f32.mrb[0].mxu0
      %v2043 = vadd.f32 %v1882, %v2042
      %v2044 = vpop.f32.mrb[0].mxu0
      %2045 = vmatprep.mubr.bf16.mxu0 0
      %2046 = vmatmul.mubr.bf16.gmra.mrb[0].mxu0 %v992
      %v2047 = vpop.f32.mrb[0].mxu0
      %v2048 = vadd.f32 %v1887, %v2047
      %v2049 = vpop.f32.mrb[0].mxu0
      %v2050 = vpop.f32.mrb[0].mxu0
      %v2051 = vadd.f32 %v1890, %v2050
      %v2052 = vpop.f32.mrb[0].mxu0
      %2053 = vmatprep.mubr.bf16.mxu0 0
      %2054 = vmatmul.mubr.bf16.gmra.mrb[0].mxu0 %v995
      %v2055 = vpop.f32.mrb[0].mxu0
      %v2056 = vadd.f32 %v1895, %v2055
      %v2057 = vpop.f32.mrb[0].mxu0
      %v2058 = vpop.f32.mrb[0].mxu0
      %v2059 = vadd.f32 %v1898, %v2058
      %v2060 = vpop.f32.mrb[0].mxu0
      %2061 = vmatprep.mubr.bf16.mxu0 0
      %2062 = vmatmul.mubr.bf16.gmra.mrb[0].mxu0 %v998
      %v2063 = vpop.f32.mrb[0].mxu0
      %v2064 = vadd.f32 %v1903, %v2063
      %v2065 = vpop.f32.mrb[0].mxu0
      %v2066 = vpop.f32.mrb[0].mxu0
      %v2067 = vadd.f32 %v1906, %v2066
      %v2068 = vpop.f32.mrb[0].mxu0
      %2069 = vdwg.mxu0
      %v2072 = vunpack.c.l.b16 %v594
      %v2073 = vunpack.c.l.b16 %v595
      %v2074 = vpack.c.b16 %v2073, %v2072
      %v2077 = vunpack.c.l.b16 %v596
      %v2078 = vpack.c.b16 %v2077, %v2077
      %v2080 = vshrl.u32 %v2074, 16
      %v2082 = vshll.u32 %v2074, 16
      %v2084 = vrot.slane %v2082, 1
      %v2085 = vor.u32 %v2080, %v2084
      %v2087 = vshll.u32 %v2078, 16
      %v2089 = vrot.slane %v2087, 1
      %v2090 = vsel %vm741, %v2085, %v2089
      %v2092 = vrot.slane %v2074, 1
      %v2093 = vrot.slane %v2078, 1
      %v2094 = vsel %vm950, %v2092, %v2093
      %s2096 = scalar_lea.vmem %s1, 384
      %v2097 = vld [vmem:[%s2096] sm:$0xf]
      %v2098 = vld [vmem:[%s2096 + $0x4] sm:$0xf]
      %v2099 = vld [vmem:[%s2096 + $0x8] sm:$0xf]
      %v2100 = vld [vmem:[%s2096 + $0xc] sm:$0xf]
      %v2101 = vld [vmem:[%s2096 + $0x10] sm:$0xf]
      %v2102 = vld [vmem:[%s2096 + $0x14] sm:$0xf]
      %v2103 = vld [vmem:[%s2096 + $0x18] sm:$0xf]
      %v2104 = vld [vmem:[%s2096 + $0x1c] sm:$0xf]
      %v2105 = vld [vmem:[%s2096 + $0x20] sm:$0xf]
      %v2106 = vld [vmem:[%s2096 + $0x24] sm:$0xf]
      %v2107 = vld [vmem:[%s2096 + $0x28] sm:$0xf]
      %v2108 = vld [vmem:[%s2096 + $0x2c] sm:$0xf]
      %v2109 = vld [vmem:[%s2096 + $0x30] sm:$0xf]
      %v2110 = vld [vmem:[%s2096 + $0x34] sm:$0xf]
      %v2111 = vld [vmem:[%s2096 + $0x38] sm:$0xf]
      %v2112 = vld [vmem:[%s2096 + $0x3c] sm:$0xf]
      %v2113 = vld [vmem:[%s2096 + $0x40] sm:$0xf]
      %v2114 = vld [vmem:[%s2096 + $0x44] sm:$0xf]
      %v2115 = vld [vmem:[%s2096 + $0x48] sm:$0xf]
      %v2116 = vld [vmem:[%s2096 + $0x4c] sm:$0xf]
      %v2117 = vld [vmem:[%s2096 + $0x50] sm:$0xf]
      %v2118 = vld [vmem:[%s2096 + $0x54] sm:$0xf]
      %v2119 = vld [vmem:[%s2096 + $0x58] sm:$0xf]
      %v2120 = vld [vmem:[%s2096 + $0x5c] sm:$0xf]
      %v2121 = vld [vmem:[%s2096 + $0x60] sm:$0xf]
      %v2122 = vld [vmem:[%s2096 + $0x64] sm:$0xf]
      %v2123 = vld [vmem:[%s2096 + $0x68] sm:$0xf]
      %v2124 = vld [vmem:[%s2096 + $0x6c] sm:$0xf]
      %v2125 = vld [vmem:[%s2096 + $0x70] sm:$0xf]
      %v2126 = vld [vmem:[%s2096 + $0x74] sm:$0xf]
      %v2127 = vld [vmem:[%s2096 + $0x78] sm:$0xf]
      %v2128 = vld [vmem:[%s2096 + $0x7c] sm:$0xf]
      %v2129 = vld [vmem:[%s2096 + $0x80] sm:$0xf]
      %v2130 = vld [vmem:[%s2096 + $0x84] sm:$0xf]
      %v2131 = vld [vmem:[%s2096 + $0x88] sm:$0xf]
      %v2132 = vld [vmem:[%s2096 + $0x8c] sm:$0xf]
      %v2133 = vld [vmem:[%s2096 + $0x90] sm:$0xf]
      %v2134 = vld [vmem:[%s2096 + $0x94] sm:$0xf]
      %v2135 = vld [vmem:[%s2096 + $0x98] sm:$0xf]
      %v2136 = vld [vmem:[%s2096 + $0x9c] sm:$0xf]
      %v2137 = vld [vmem:[%s2096 + $0xa0] sm:$0xf]
      %v2138 = vld [vmem:[%s2096 + $0xa4] sm:$0xf]
      %v2139 = vld [vmem:[%s2096 + $0xa8] sm:$0xf]
      %v2140 = vld [vmem:[%s2096 + $0xac] sm:$0xf]
      %v2141 = vld [vmem:[%s2096 + $0xb0] sm:$0xf]
      %v2142 = vld [vmem:[%s2096 + $0xb4] sm:$0xf]
      %v2143 = vld [vmem:[%s2096 + $0xb8] sm:$0xf]
      %v2144 = vld [vmem:[%s2096 + $0xbc] sm:$0xf]
      %v2193 = vunpack.c.l.b16 %v2097
      %v2194 = vunpack.c.l.b16 %v2098
      %v2195 = vunpack.c.l.b16 %v2099
      %v2196 = vunpack.c.l.b16 %v2100
      %v2197 = vunpack.c.l.b16 %v2101
      %v2198 = vunpack.c.l.b16 %v2102
      %v2199 = vunpack.c.l.b16 %v2103
      %v2200 = vunpack.c.l.b16 %v2104
      %v2201 = vunpack.c.l.b16 %v2105
      %v2202 = vunpack.c.l.b16 %v2106
      %v2203 = vunpack.c.l.b16 %v2107
      %v2204 = vunpack.c.l.b16 %v2108
      %v2205 = vunpack.c.l.b16 %v2109
      %v2206 = vunpack.c.l.b16 %v2110
      %v2207 = vunpack.c.l.b16 %v2111
      %v2208 = vunpack.c.l.b16 %v2112
      %v2209 = vunpack.c.l.b16 %v2113
      %v2210 = vunpack.c.l.b16 %v2114
      %v2211 = vunpack.c.l.b16 %v2115
      %v2212 = vunpack.c.l.b16 %v2116
      %v2213 = vunpack.c.l.b16 %v2117
      %v2214 = vunpack.c.l.b16 %v2118
      %v2215 = vunpack.c.l.b16 %v2119
      %v2216 = vunpack.c.l.b16 %v2120
      %v2217 = vunpack.c.l.b16 %v2121
      %v2218 = vunpack.c.l.b16 %v2122
      %v2219 = vunpack.c.l.b16 %v2123
      %v2220 = vunpack.c.l.b16 %v2124
      %v2221 = vunpack.c.l.b16 %v2125
      %v2222 = vunpack.c.l.b16 %v2126
      %v2223 = vunpack.c.l.b16 %v2127
      %v2224 = vunpack.c.l.b16 %v2128
      %v2225 = vunpack.c.l.b16 %v2129
      %v2226 = vunpack.c.l.b16 %v2130
      %v2227 = vunpack.c.l.b16 %v2131
      %v2228 = vunpack.c.l.b16 %v2132
      %v2229 = vunpack.c.l.b16 %v2133
      %v2230 = vunpack.c.l.b16 %v2134
      %v2231 = vunpack.c.l.b16 %v2135
      %v2232 = vunpack.c.l.b16 %v2136
      %v2233 = vunpack.c.l.b16 %v2137
      %v2234 = vunpack.c.l.b16 %v2138
      %v2235 = vunpack.c.l.b16 %v2139
      %v2236 = vunpack.c.l.b16 %v2140
      %v2237 = vunpack.c.l.b16 %v2141
      %v2238 = vunpack.c.l.b16 %v2142
      %v2239 = vunpack.c.l.b16 %v2143
      %v2240 = vunpack.c.l.b16 %v2144
      %v2241 = vpack.c.b16 %v2194, %v2193
      %v2242 = vpack.c.b16 %v2196, %v2195
      %v2243 = vpack.c.b16 %v2198, %v2197
      %v2244 = vpack.c.b16 %v2200, %v2199
      %v2245 = vpack.c.b16 %v2202, %v2201
      %v2246 = vpack.c.b16 %v2204, %v2203
      %v2247 = vpack.c.b16 %v2206, %v2205
      %v2248 = vpack.c.b16 %v2208, %v2207
      %v2249 = vpack.c.b16 %v2210, %v2209
      %v2250 = vpack.c.b16 %v2212, %v2211
      %v2251 = vpack.c.b16 %v2214, %v2213
      %v2252 = vpack.c.b16 %v2216, %v2215
      %v2253 = vpack.c.b16 %v2218, %v2217
      %v2254 = vpack.c.b16 %v2220, %v2219
      %v2255 = vpack.c.b16 %v2222, %v2221
      %v2256 = vpack.c.b16 %v2224, %v2223
      %v2257 = vpack.c.b16 %v2226, %v2225
      %v2258 = vpack.c.b16 %v2228, %v2227
      %v2259 = vpack.c.b16 %v2230, %v2229
      %v2260 = vpack.c.b16 %v2232, %v2231
      %v2261 = vpack.c.b16 %v2234, %v2233
      %v2262 = vpack.c.b16 %v2236, %v2235
      %v2263 = vpack.c.b16 %v2238, %v2237
      %v2264 = vpack.c.b16 %v2240, %v2239
      %2289 = vmatprep.subr.bf16.mxu0 0
      %2290 = vmatpush1.bf16.msra.mxu0 %v2241
      %2291 = vmatprep.subr.bf16.mxu0 0
      %2292 = vmatpush1.bf16.msra.mxu0 %v2242
      %2293 = vmatprep.subr.bf16.mxu0 0
      %2294 = vmatpush1.bf16.msra.mxu0 %v2243
      %2295 = vmatprep.subr.bf16.mxu0 0
      %2296 = vmatpush1.bf16.msra.mxu0 %v2244
      %2297 = vmatprep.subr.bf16.mxu0 0
      %2298 = vmatpush1.bf16.msra.mxu0 %v2245
      %2299 = vmatprep.subr.bf16.mxu0 0
      %2300 = vmatpush1.bf16.msra.mxu0 %v2246
      %2301 = vmatprep.subr.bf16.mxu0 0
      %2302 = vmatpush1.bf16.msra.mxu0 %v2247
      %2303 = vmatprep.subr.bf16.mxu0 0
      %2304 = vmatpush1.bf16.msra.mxu0 %v2248
      %2305 = vmatprep.subr.bf16.mxu0 0
      %2306 = vmatpush1.bf16.msra.mxu0 %v2249
      %2307 = vmatprep.subr.bf16.mxu0 0
      %2308 = vmatpush1.bf16.msra.mxu0 %v2250
      %2309 = vmatprep.subr.bf16.mxu0 0
      %2310 = vmatpush1.bf16.msra.mxu0 %v2251
      %2311 = vmatprep.subr.bf16.mxu0 0
      %2312 = vmatpush1.bf16.msra.mxu0 %v2252
      %2313 = vmatprep.subr.bf16.mxu0 0
      %2314 = vmatpush1.bf16.msra.mxu0 %v2253
      %2315 = vmatprep.subr.bf16.mxu0 0
      %2316 = vmatpush1.bf16.msra.mxu0 %v2254
      %2317 = vmatprep.subr.bf16.mxu0 0
      %2318 = vmatpush1.bf16.msra.mxu0 %v2255
      %2319 = vmatprep.subr.bf16.mxu0 0
      %2320 = vmatpush1.bf16.msra.mxu0 %v2256
      %2321 = vmatprep.mubr.bf16.mxu0 %v777
      %2322 = vmatmul.mubr.bf16.gmra.mrb[0].mxu0 %v663
      %v2323 = vpop.f32.mrb[0].mxu0
      %v2324 = vadd.f32 0.0, %v2323
      %v2325 = vpop.f32.mrb[0].mxu0
      %v2326 = vpop.f32.mrb[0].mxu0
      %v2327 = vadd.f32 0.0, %v2326
      %v2328 = vpop.f32.mrb[0].mxu0
      %2329 = vmatprep.mubr.bf16.mxu0 %v789
      %2330 = vmatmul.mubr.bf16.gmra.mrb[0].mxu0 %v664
      %v2331 = vpop.f32.mrb[0].mxu0
      %v2332 = vadd.f32 0.0, %v2331
      %v2333 = vpop.f32.mrb[0].mxu0
      %v2334 = vpop.f32.mrb[0].mxu0
      %v2335 = vadd.f32 0.0, %v2334
      %v2336 = vpop.f32.mrb[0].mxu0
      %2337 = vmatprep.mubr.bf16.mxu0 %v801
      %2338 = vmatmul.mubr.bf16.gmra.mrb[0].mxu0 %v665
      %v2339 = vpop.f32.mrb[0].mxu0
      %v2340 = vadd.f32 0.0, %v2339
      %v2341 = vpop.f32.mrb[0].mxu0
      %v2342 = vpop.f32.mrb[0].mxu0
      %v2343 = vadd.f32 0.0, %v2342
      %v2344 = vpop.f32.mrb[0].mxu0
      %2345 = vmatprep.mubr.bf16.mxu0 %v813
      %2346 = vmatmul.mubr.bf16.gmra.mrb[0].mxu0 %v666
      %v2347 = vpop.f32.mrb[0].mxu0
      %v2348 = vadd.f32 0.0, %v2347
      %v2349 = vpop.f32.mrb[0].mxu0
      %v2350 = vpop.f32.mrb[0].mxu0
      %v2351 = vadd.f32 0.0, %v2350
      %v2352 = vpop.f32.mrb[0].mxu0
      %2353 = vmatprep.mubr.bf16.mxu0 %v825
      %2354 = vmatmul.mubr.bf16.gmra.mrb[0].mxu0 %v667
      %v2355 = vpop.f32.mrb[0].mxu0
      %v2356 = vadd.f32 0.0, %v2355
      %v2357 = vpop.f32.mrb[0].mxu0
      %v2358 = vpop.f32.mrb[0].mxu0
      %v2359 = vadd.f32 0.0, %v2358
      %v2360 = vpop.f32.mrb[0].mxu0
      %2361 = vmatprep.mubr.bf16.mxu0 %v837
      %2362 = vmatmul.mubr.bf16.gmra.mrb[0].mxu0 %v668
      %v2363 = vpop.f32.mrb[0].mxu0
      %v2364 = vadd.f32 0.0, %v2363
      %v2365 = vpop.f32.mrb[0].mxu0
      %v2366 = vpop.f32.mrb[0].mxu0
      %v2367 = vadd.f32 0.0, %v2366
      %v2368 = vpop.f32.mrb[0].mxu0
      %2369 = vmatprep.mubr.bf16.mxu0 %v849
      %2370 = vmatmul.mubr.bf16.gmra.mrb[0].mxu0 %v669
      %v2371 = vpop.f32.mrb[0].mxu0
      %v2372 = vadd.f32 0.0, %v2371
      %v2373 = vpop.f32.mrb[0].mxu0
      %v2374 = vpop.f32.mrb[0].mxu0
      %v2375 = vadd.f32 0.0, %v2374
      %v2376 = vpop.f32.mrb[0].mxu0
      %2377 = vmatprep.mubr.bf16.mxu0 %v861
      %2378 = vmatmul.mubr.bf16.gmra.mrb[0].mxu0 %v670
      %v2379 = vpop.f32.mrb[0].mxu0
      %v2380 = vadd.f32 0.0, %v2379
      %v2381 = vpop.f32.mrb[0].mxu0
      %v2382 = vpop.f32.mrb[0].mxu0
      %v2383 = vadd.f32 0.0, %v2382
      %v2384 = vpop.f32.mrb[0].mxu0
      %2385 = vmatprep.mubr.bf16.mxu0 %v873
      %2386 = vmatmul.mubr.bf16.gmra.mrb[0].mxu0 %v671
      %v2387 = vpop.f32.mrb[0].mxu0
      %v2388 = vadd.f32 0.0, %v2387
      %v2389 = vpop.f32.mrb[0].mxu0
      %v2390 = vpop.f32.mrb[0].mxu0
      %v2391 = vadd.f32 0.0, %v2390
      %v2392 = vpop.f32.mrb[0].mxu0
      %2393 = vmatprep.mubr.bf16.mxu0 %v885
      %2394 = vmatmul.mubr.bf16.gmra.mrb[0].mxu0 %v672
      %v2395 = vpop.f32.mrb[0].mxu0
      %v2396 = vadd.f32 0.0, %v2395
      %v2397 = vpop.f32.mrb[0].mxu0
      %v2398 = vpop.f32.mrb[0].mxu0
      %v2399 = vadd.f32 0.0, %v2398
      %v2400 = vpop.f32.mrb[0].mxu0
      %2401 = vmatprep.mubr.bf16.mxu0 %v897
      %2402 = vmatmul.mubr.bf16.gmra.mrb[0].mxu0 %v673
      %v2403 = vpop.f32.mrb[0].mxu0
      %v2404 = vadd.f32 0.0, %v2403
      %v2405 = vpop.f32.mrb[0].mxu0
      %v2406 = vpop.f32.mrb[0].mxu0
      %v2407 = vadd.f32 0.0, %v2406
      %v2408 = vpop.f32.mrb[0].mxu0
      %2409 = vmatprep.mubr.bf16.mxu0 %v909
      %2410 = vmatmul.mubr.bf16.gmra.mrb[0].mxu0 %v674
      %v2411 = vpop.f32.mrb[0].mxu0
      %v2412 = vadd.f32 0.0, %v2411
      %v2413 = vpop.f32.mrb[0].mxu0
      %v2414 = vpop.f32.mrb[0].mxu0
      %v2415 = vadd.f32 0.0, %v2414
      %v2416 = vpop.f32.mrb[0].mxu0
      %2417 = vmatprep.mubr.bf16.mxu0 %v921
      %2418 = vmatmul.mubr.bf16.gmra.mrb[0].mxu0 %v675
      %v2419 = vpop.f32.mrb[0].mxu0
      %v2420 = vadd.f32 0.0, %v2419
      %v2421 = vpop.f32.mrb[0].mxu0
      %v2422 = vpop.f32.mrb[0].mxu0
      %v2423 = vadd.f32 0.0, %v2422
      %v2424 = vpop.f32.mrb[0].mxu0
      %2425 = vmatprep.mubr.bf16.mxu0 %v933
      %2426 = vmatmul.mubr.bf16.gmra.mrb[0].mxu0 %v676
      %v2427 = vpop.f32.mrb[0].mxu0
      %v2428 = vadd.f32 0.0, %v2427
      %v2429 = vpop.f32.mrb[0].mxu0
      %v2430 = vpop.f32.mrb[0].mxu0
      %v2431 = vadd.f32 0.0, %v2430
      %v2432 = vpop.f32.mrb[0].mxu0
      %2433 = vmatprep.mubr.bf16.mxu0 %v1083
      %2434 = vmatmul.mubr.bf16.gmra.mrb[0].mxu0 %v1067
      %v2435 = vpop.f32.mrb[0].mxu0
      %v2436 = vadd.f32 0.0, %v2435
      %v2437 = vpop.f32.mrb[0].mxu0
      %v2438 = vpop.f32.mrb[0].mxu0
      %v2439 = vadd.f32 0.0, %v2438
      %v2440 = vpop.f32.mrb[0].mxu0
      %2441 = vmatprep.mubr.bf16.mxu0 %v2090
      %2442 = vmatmul.mubr.bf16.gmra.mrb[0].mxu0 %v2074
      %v2443 = vpop.f32.mrb[0].mxu0
      %v2444 = vadd.f32 0.0, %v2443
      %v2445 = vpop.f32.mrb[0].mxu0
      %v2446 = vpop.f32.mrb[0].mxu0
      %v2447 = vadd.f32 0.0, %v2446
      %v2448 = vpop.f32.mrb[0].mxu0
      %2449 = vdwg.mxu0
      %2450 = vmatprep.subr.bf16.mxu0 0
      %2451 = vmatpush1.bf16.msra.mxu0 %v2257
      %2452 = vmatprep.subr.bf16.mxu0 0
      %2453 = vmatpush1.bf16.msra.mxu0 %v2258
      %2454 = vmatprep.subr.bf16.mxu0 0
      %2455 = vmatpush1.bf16.msra.mxu0 %v2259
      %2456 = vmatprep.subr.bf16.mxu0 0
      %2457 = vmatpush1.bf16.msra.mxu0 %v2260
      %2458 = vmatprep.subr.bf16.mxu0 0
      %2459 = vmatpush1.bf16.msra.mxu0 %v2261
      %2460 = vmatprep.subr.bf16.mxu0 0
      %2461 = vmatpush1.bf16.msra.mxu0 %v2262
      %2462 = vmatprep.subr.bf16.mxu0 0
      %2463 = vmatpush1.bf16.msra.mxu0 %v2263
      %2464 = vmatprep.subr.bf16.mxu0 0
      %2465 = vmatpush1.bf16.msra.mxu0 %v2264
      %2466 = vmatprep.subr.bf16.mxu0 0
      %2467 = vmatpush1.bf16.msra.mxu0 0
      %2468 = vmatprep.subr.bf16.mxu0 0
      %2469 = vmatpush1.bf16.msra.mxu0 0
      %2470 = vmatprep.subr.bf16.mxu0 0
      %2471 = vmatpush1.bf16.msra.mxu0 0
      %2472 = vmatprep.subr.bf16.mxu0 0
      %2473 = vmatpush1.bf16.msra.mxu0 0
      %2474 = vmatprep.subr.bf16.mxu0 0
      %2475 = vmatpush1.bf16.msra.mxu0 0
      %2476 = vmatprep.subr.bf16.mxu0 0
      %2477 = vmatpush1.bf16.msra.mxu0 0
      %2478 = vmatprep.subr.bf16.mxu0 0
      %2479 = vmatpush1.bf16.msra.mxu0 0
      %2480 = vmatprep.subr.bf16.mxu0 0
      %2481 = vmatpush1.bf16.msra.mxu0 0
      %2482 = vmatprep.mubr.bf16.mxu0 0
      %2483 = vmatmul.mubr.bf16.gmra.mrb[0].mxu0 %v959
      %v2484 = vpop.f32.mrb[0].mxu0
      %v2485 = vadd.f32 %v2324, %v2484
      %v2486 = vpop.f32.mrb[0].mxu0
      %v2487 = vpop.f32.mrb[0].mxu0
      %v2488 = vadd.f32 %v2327, %v2487
      %v2489 = vpop.f32.mrb[0].mxu0
      %2490 = vmatprep.mubr.bf16.mxu0 0
      %2491 = vmatmul.mubr.bf16.gmra.mrb[0].mxu0 %v962
      %v2492 = vpop.f32.mrb[0].mxu0
      %v2493 = vadd.f32 %v2332, %v2492
      %v2494 = vpop.f32.mrb[0].mxu0
      %v2495 = vpop.f32.mrb[0].mxu0
      %v2496 = vadd.f32 %v2335, %v2495
      %v2497 = vpop.f32.mrb[0].mxu0
      %2498 = vmatprep.mubr.bf16.mxu0 0
      %2499 = vmatmul.mubr.bf16.gmra.mrb[0].mxu0 %v965
      %v2500 = vpop.f32.mrb[0].mxu0
      %v2501 = vadd.f32 %v2340, %v2500
      %v2502 = vpop.f32.mrb[0].mxu0
      %v2503 = vpop.f32.mrb[0].mxu0
      %v2504 = vadd.f32 %v2343, %v2503
      %v2505 = vpop.f32.mrb[0].mxu0
      %2506 = vmatprep.mubr.bf16.mxu0 0
      %2507 = vmatmul.mubr.bf16.gmra.mrb[0].mxu0 %v968
      %v2508 = vpop.f32.mrb[0].mxu0
      %v2509 = vadd.f32 %v2348, %v2508
      %v2510 = vpop.f32.mrb[0].mxu0
      %v2511 = vpop.f32.mrb[0].mxu0
      %v2512 = vadd.f32 %v2351, %v2511
      %v2513 = vpop.f32.mrb[0].mxu0
      %2514 = vmatprep.mubr.bf16.mxu0 0
      %2515 = vmatmul.mubr.bf16.gmra.mrb[0].mxu0 %v971
      %v2516 = vpop.f32.mrb[0].mxu0
      %v2517 = vadd.f32 %v2356, %v2516
      %v2518 = vpop.f32.mrb[0].mxu0
      %v2519 = vpop.f32.mrb[0].mxu0
      %v2520 = vadd.f32 %v2359, %v2519
      %v2521 = vpop.f32.mrb[0].mxu0
      %2522 = vmatprep.mubr.bf16.mxu0 0
      %2523 = vmatmul.mubr.bf16.gmra.mrb[0].mxu0 %v974
      %v2524 = vpop.f32.mrb[0].mxu0
      %v2525 = vadd.f32 %v2364, %v2524
      %v2526 = vpop.f32.mrb[0].mxu0
      %v2527 = vpop.f32.mrb[0].mxu0
      %v2528 = vadd.f32 %v2367, %v2527
      %v2529 = vpop.f32.mrb[0].mxu0
      %2530 = vmatprep.mubr.bf16.mxu0 0
      %2531 = vmatmul.mubr.bf16.gmra.mrb[0].mxu0 %v977
      %v2532 = vpop.f32.mrb[0].mxu0
      %v2533 = vadd.f32 %v2372, %v2532
      %v2534 = vpop.f32.mrb[0].mxu0
      %v2535 = vpop.f32.mrb[0].mxu0
      %v2536 = vadd.f32 %v2375, %v2535
      %v2537 = vpop.f32.mrb[0].mxu0
      %2538 = vmatprep.mubr.bf16.mxu0 0
      %2539 = vmatmul.mubr.bf16.gmra.mrb[0].mxu0 %v980
      %v2540 = vpop.f32.mrb[0].mxu0
      %v2541 = vadd.f32 %v2380, %v2540
      %v2542 = vpop.f32.mrb[0].mxu0
      %v2543 = vpop.f32.mrb[0].mxu0
      %v2544 = vadd.f32 %v2383, %v2543
      %v2545 = vpop.f32.mrb[0].mxu0
      %2546 = vmatprep.mubr.bf16.mxu0 0
      %2547 = vmatmul.mubr.bf16.gmra.mrb[0].mxu0 %v983
      %v2548 = vpop.f32.mrb[0].mxu0
      %v2549 = vadd.f32 %v2388, %v2548
      %v2550 = vpop.f32.mrb[0].mxu0
      %v2551 = vpop.f32.mrb[0].mxu0
      %v2552 = vadd.f32 %v2391, %v2551
      %v2553 = vpop.f32.mrb[0].mxu0
      %2554 = vmatprep.mubr.bf16.mxu0 0
      %2555 = vmatmul.mubr.bf16.gmra.mrb[0].mxu0 %v986
      %v2556 = vpop.f32.mrb[0].mxu0
      %v2557 = vadd.f32 %v2396, %v2556
      %v2558 = vpop.f32.mrb[0].mxu0
      %v2559 = vpop.f32.mrb[0].mxu0
      %v2560 = vadd.f32 %v2399, %v2559
      %v2561 = vpop.f32.mrb[0].mxu0
      %2562 = vmatprep.mubr.bf16.mxu0 0
      %2563 = vmatmul.mubr.bf16.gmra.mrb[0].mxu0 %v989
      %v2564 = vpop.f32.mrb[0].mxu0
      %v2565 = vadd.f32 %v2404, %v2564
      %v2566 = vpop.f32.mrb[0].mxu0
      %v2567 = vpop.f32.mrb[0].mxu0
      %v2568 = vadd.f32 %v2407, %v2567
      %v2569 = vpop.f32.mrb[0].mxu0
      %2570 = vmatprep.mubr.bf16.mxu0 0
      %2571 = vmatmul.mubr.bf16.gmra.mrb[0].mxu0 %v992
      %v2572 = vpop.f32.mrb[0].mxu0
      %v2573 = vadd.f32 %v2412, %v2572
      %v2574 = vpop.f32.mrb[0].mxu0
      %v2575 = vpop.f32.mrb[0].mxu0
      %v2576 = vadd.f32 %v2415, %v2575
      %v2577 = vpop.f32.mrb[0].mxu0
      %2578 = vmatprep.mubr.bf16.mxu0 0
      %2579 = vmatmul.mubr.bf16.gmra.mrb[0].mxu0 %v995
      %v2580 = vpop.f32.mrb[0].mxu0
      %v2581 = vadd.f32 %v2420, %v2580
      %v2582 = vpop.f32.mrb[0].mxu0
      %v2583 = vpop.f32.mrb[0].mxu0
      %v2584 = vadd.f32 %v2423, %v2583
      %v2585 = vpop.f32.mrb[0].mxu0
      %2586 = vmatprep.mubr.bf16.mxu0 0
      %2587 = vmatmul.mubr.bf16.gmra.mrb[0].mxu0 %v998
      %v2588 = vpop.f32.mrb[0].mxu0
      %v2589 = vadd.f32 %v2428, %v2588
      %v2590 = vpop.f32.mrb[0].mxu0
      %v2591 = vpop.f32.mrb[0].mxu0
      %v2592 = vadd.f32 %v2431, %v2591
      %v2593 = vpop.f32.mrb[0].mxu0
      %2594 = vmatprep.mubr.bf16.mxu0 0
      %2595 = vmatmul.mubr.bf16.gmra.mrb[0].mxu0 %v1087
      %v2596 = vpop.f32.mrb[0].mxu0
      %v2597 = vadd.f32 %v2436, %v2596
      %v2598 = vpop.f32.mrb[0].mxu0
      %v2599 = vpop.f32.mrb[0].mxu0
      %v2600 = vadd.f32 %v2439, %v2599
      %v2601 = vpop.f32.mrb[0].mxu0
      %2602 = vmatprep.mubr.bf16.mxu0 0
      %2603 = vmatmul.mubr.bf16.gmra.mrb[0].mxu0 %v2094
      %v2604 = vpop.f32.mrb[0].mxu0
      %v2605 = vadd.f32 %v2444, %v2604
      %v2606 = vpop.f32.mrb[0].mxu0
      %v2607 = vpop.f32.mrb[0].mxu0
      %v2608 = vadd.f32 %v2447, %v2607
      %v2609 = vpop.f32.mrb[0].mxu0
      %2610 = vdwg.mxu0
      %v2611 = vadd.f32 %v1944, %v2485
      %v2612 = vadd.f32 %v1947, %v2488
      %v2613 = vadd.f32 %v1952, %v2493
      %v2614 = vadd.f32 %v1955, %v2496
      %v2615 = vadd.f32 %v1960, %v2501
      %v2616 = vadd.f32 %v1963, %v2504
      %v2617 = vadd.f32 %v1968, %v2509
      %v2618 = vadd.f32 %v1971, %v2512
      %v2619 = vadd.f32 %v1976, %v2517
      %v2620 = vadd.f32 %v1979, %v2520
      %v2621 = vadd.f32 %v1984, %v2525
      %v2622 = vadd.f32 %v1987, %v2528
      %v2623 = vadd.f32 %v1992, %v2533
      %v2624 = vadd.f32 %v1995, %v2536
      %v2625 = vadd.f32 %v2000, %v2541
      %v2626 = vadd.f32 %v2003, %v2544
      %v2627 = vadd.f32 %v2008, %v2549
      %v2628 = vadd.f32 %v2011, %v2552
      %v2629 = vadd.f32 %v2016, %v2557
      %v2630 = vadd.f32 %v2019, %v2560
      %v2631 = vadd.f32 %v2024, %v2565
      %v2632 = vadd.f32 %v2027, %v2568
      %v2633 = vadd.f32 %v2032, %v2573
      %v2634 = vadd.f32 %v2035, %v2576
      %v2635 = vadd.f32 %v2040, %v2581
      %v2636 = vadd.f32 %v2043, %v2584
      %v2637 = vadd.f32 %v2048, %v2589
      %v2638 = vadd.f32 %v2051, %v2592
      %v2639 = vadd.f32 %v2056, %v2597
      %v2640 = vadd.f32 %v2059, %v2600
      %v2641 = vadd.f32 %v2064, %v2605
      %v2642 = vadd.f32 %v2067, %v2608
      %v2644 = vlaneseq
      %v2645 = vshrl.u32 %v2644, 7
      %v2646 = vsub.s32 0, %v2645
      %v2647 = vrot.slane %v199, %v2646
      %v2649 = vmul.f32 %v2611, %v2647
      %v2650 = vmul.f32 %v2612, %v2647
      %v2651 = vmul.f32 %v2613, %v2647
      %v2652 = vmul.f32 %v2614, %v2647
      %v2653 = vmul.f32 %v2615, %v2647
      %v2654 = vmul.f32 %v2616, %v2647
      %v2655 = vmul.f32 %v2617, %v2647
      %v2656 = vmul.f32 %v2618, %v2647
      %v2657 = vmul.f32 %v2619, %v2647
      %v2658 = vmul.f32 %v2620, %v2647
      %v2659 = vmul.f32 %v2621, %v2647
      %v2660 = vmul.f32 %v2622, %v2647
      %v2661 = vmul.f32 %v2623, %v2647
      %v2662 = vmul.f32 %v2624, %v2647
      %v2663 = vmul.f32 %v2625, %v2647
      %v2664 = vmul.f32 %v2626, %v2647
      %v2665 = vmul.f32 %v2627, %v2647
      %v2666 = vmul.f32 %v2628, %v2647
      %v2667 = vmul.f32 %v2629, %v2647
      %v2668 = vmul.f32 %v2630, %v2647
      %v2669 = vmul.f32 %v2631, %v2647
      %v2670 = vmul.f32 %v2632, %v2647
      %v2671 = vmul.f32 %v2633, %v2647
      %v2672 = vmul.f32 %v2634, %v2647
      %v2673 = vmul.f32 %v2635, %v2647
      %v2674 = vmul.f32 %v2636, %v2647
      %v2675 = vmul.f32 %v2637, %v2647
      %v2676 = vmul.f32 %v2638, %v2647
      %v2677 = vmul.f32 %v2639, %v2647
      %v2678 = vmul.f32 %v2640, %v2647
      %v2679 = vmul.f32 %v2641, %v2647
      %v2680 = vmul.f32 %v2642, %v2647
      %v2682 = vlaneseq
      %v2683 = vshrl.u32 %v2682, 7
      %v2684 = vsub.s32 0, %v2683
      %v2685 = vrot.slane %v200, %v2684
      %v2687 = vadd.f32 %v2649, %v2685
      %v2688 = vadd.f32 %v2650, %v2685
      %v2689 = vadd.f32 %v2651, %v2685
      %v2690 = vadd.f32 %v2652, %v2685
      %v2691 = vadd.f32 %v2653, %v2685
      %v2692 = vadd.f32 %v2654, %v2685
      %v2693 = vadd.f32 %v2655, %v2685
      %v2694 = vadd.f32 %v2656, %v2685
      %v2695 = vadd.f32 %v2657, %v2685
      %v2696 = vadd.f32 %v2658, %v2685
      %v2697 = vadd.f32 %v2659, %v2685
      %v2698 = vadd.f32 %v2660, %v2685
      %v2699 = vadd.f32 %v2661, %v2685
      %v2700 = vadd.f32 %v2662, %v2685
      %v2701 = vadd.f32 %v2663, %v2685
      %v2702 = vadd.f32 %v2664, %v2685
      %v2703 = vadd.f32 %v2665, %v2685
      %v2704 = vadd.f32 %v2666, %v2685
      %v2705 = vadd.f32 %v2667, %v2685
      %v2706 = vadd.f32 %v2668, %v2685
      %v2707 = vadd.f32 %v2669, %v2685
      %v2708 = vadd.f32 %v2670, %v2685
      %v2709 = vadd.f32 %v2671, %v2685
      %v2710 = vadd.f32 %v2672, %v2685
      %v2711 = vadd.f32 %v2673, %v2685
      %v2712 = vadd.f32 %v2674, %v2685
      %v2713 = vadd.f32 %v2675, %v2685
      %v2714 = vadd.f32 %v2676, %v2685
      %v2715 = vadd.f32 %v2677, %v2685
      %v2716 = vadd.f32 %v2678, %v2685
      %v2717 = vadd.f32 %v2679, %v2685
      %v2718 = vadd.f32 %v2680, %v2685
      %v2719 = vmax.f32 %v2687, 0.0
      %v2720 = vmax.f32 %v2688, 0.0
      %v2721 = vmax.f32 %v2689, 0.0
      %v2722 = vmax.f32 %v2690, 0.0
      %v2723 = vmax.f32 %v2691, 0.0
      %v2724 = vmax.f32 %v2692, 0.0
      %v2725 = vmax.f32 %v2693, 0.0
      %v2726 = vmax.f32 %v2694, 0.0
      %v2727 = vmax.f32 %v2695, 0.0
      %v2728 = vmax.f32 %v2696, 0.0
      %v2729 = vmax.f32 %v2697, 0.0
      %v2730 = vmax.f32 %v2698, 0.0
      %v2731 = vmax.f32 %v2699, 0.0
      %v2732 = vmax.f32 %v2700, 0.0
      %v2733 = vmax.f32 %v2701, 0.0
      %v2734 = vmax.f32 %v2702, 0.0
      %v2735 = vmax.f32 %v2703, 0.0
      %v2736 = vmax.f32 %v2704, 0.0
      %v2737 = vmax.f32 %v2705, 0.0
      %v2738 = vmax.f32 %v2706, 0.0
      %v2739 = vmax.f32 %v2707, 0.0
      %v2740 = vmax.f32 %v2708, 0.0
      %v2741 = vmax.f32 %v2709, 0.0
      %v2742 = vmax.f32 %v2710, 0.0
      %v2743 = vmax.f32 %v2711, 0.0
      %v2744 = vmax.f32 %v2712, 0.0
      %v2745 = vmax.f32 %v2713, 0.0
      %v2746 = vmax.f32 %v2714, 0.0
      %v2747 = vmax.f32 %v2715, 0.0
      %v2748 = vmax.f32 %v2716, 0.0
      %v2749 = vmax.f32 %v2717, 0.0
      %v2750 = vmax.f32 %v2718, 0.0
      %s2751 = scalar_lea.vmem %s192, 24
      %v2752 = vld [vmem:[%s2751 + $0x1] sm:$0xff]
      %v2753 = vld [vmem:[%s2751 + $0x9] sm:$0xff]
      %v2754 = vld [vmem:[%s2751 + $0x19] sm:$0xff]
      %v2755 = vld [vmem:[%s2751 + $0x21] sm:$0xff]
      %v2756 = vld [vmem:[%s2751 + $0x31] sm:$0xff]
      %v2757 = vld [vmem:[%s2751 + $0x39] sm:$0xff]
      %v2758 = vld [vmem:[%s2751 + $0x49] sm:$0xff]
      %v2759 = vld [vmem:[%s2751 + $0x51] sm:$0xff]
      %v2760 = vld [vmem:[%s2751 + $0x61] sm:$0xff]
      %v2761 = vld [vmem:[%s2751 + $0x69] sm:$0xff]
      %v2762 = vld [vmem:[%s2751 + $0x79] sm:$0xff]
      %v2763 = vld [vmem:[%s2751 + $0x81] sm:$0xff]
      %v2764 = vld [vmem:[%s2751 + $0x91] sm:$0xff]
      %v2765 = vld [vmem:[%s2751 + $0x99] sm:$0xff]
      %v2766 = vld [vmem:[%s2751 + $0xa9] sm:$0xff]
      %v2767 = vld [vmem:[%s2751 + $0xb1] sm:$0xff]
      %v2768 = vld [vmem:[%s2751 + $0xc1] sm:$0xff]
      %v2769 = vld [vmem:[%s2751 + $0xc9] sm:$0xff]
      %v2770 = vld [vmem:[%s2751 + $0xd9] sm:$0xff]
      %v2771 = vld [vmem:[%s2751 + $0xe1] sm:$0xff]
      %v2772 = vld [vmem:[%s2751 + $0xf1] sm:$0xff]
      %v2773 = vld [vmem:[%s2751 + $0xf9] sm:$0xff]
      %v2774 = vld [vmem:[%s2751 + $0x109] sm:$0xff]
      %v2775 = vld [vmem:[%s2751 + $0x111] sm:$0xff]
      %v2776 = vld [vmem:[%s2751 + $0x121] sm:$0xff]
      %v2777 = vld [vmem:[%s2751 + $0x129] sm:$0xff]
      %v2778 = vld [vmem:[%s2751 + $0x139] sm:$0xff]
      %v2779 = vld [vmem:[%s2751 + $0x141] sm:$0xff]
      %v2780 = vld [vmem:[%s2751 + $0x151] sm:$0xff]
      %v2781 = vld [vmem:[%s2751 + $0x159] sm:$0xff]
      %v2782 = vld [vmem:[%s2751 + $0x169] sm:$0xff]
      %v2783 = vld [vmem:[%s2751 + $0x171] sm:$0xff]
      %v2784 = vadd.f32 %v2752, %v2719
      %v2785 = vadd.f32 %v2753, %v2720
      %v2786 = vadd.f32 %v2754, %v2721
      %v2787 = vadd.f32 %v2755, %v2722
      %v2788 = vadd.f32 %v2756, %v2723
      %v2789 = vadd.f32 %v2757, %v2724
      %v2790 = vadd.f32 %v2758, %v2725
      %v2791 = vadd.f32 %v2759, %v2726
      %v2792 = vadd.f32 %v2760, %v2727
      %v2793 = vadd.f32 %v2761, %v2728
      %v2794 = vadd.f32 %v2762, %v2729
      %v2795 = vadd.f32 %v2763, %v2730
      %v2796 = vadd.f32 %v2764, %v2731
      %v2797 = vadd.f32 %v2765, %v2732
      %v2798 = vadd.f32 %v2766, %v2733
      %v2799 = vadd.f32 %v2767, %v2734
      %v2800 = vadd.f32 %v2768, %v2735
      %v2801 = vadd.f32 %v2769, %v2736
      %v2802 = vadd.f32 %v2770, %v2737
      %v2803 = vadd.f32 %v2771, %v2738
      %v2804 = vadd.f32 %v2772, %v2739
      %v2805 = vadd.f32 %v2773, %v2740
      %v2806 = vadd.f32 %v2774, %v2741
      %v2807 = vadd.f32 %v2775, %v2742
      %v2808 = vadd.f32 %v2776, %v2743
      %v2809 = vadd.f32 %v2777, %v2744
      %v2810 = vadd.f32 %v2778, %v2745
      %v2811 = vadd.f32 %v2779, %v2746
      %v2812 = vadd.f32 %v2780, %v2747
      %v2813 = vadd.f32 %v2781, %v2748
      %v2814 = vadd.f32 %v2782, %v2749
      %v2815 = vadd.f32 %v2783, %v2750
      %v2816 = vpack.c.bf16 %v2785, %v2784
      %v2817 = vpack.c.bf16 %v2787, %v2786
      %v2818 = vpack.c.bf16 %v2789, %v2788
      %v2819 = vpack.c.bf16 %v2791, %v2790
      %v2820 = vpack.c.bf16 %v2793, %v2792
      %v2821 = vpack.c.bf16 %v2795, %v2794
      %v2822 = vpack.c.bf16 %v2797, %v2796
      %v2823 = vpack.c.bf16 %v2799, %v2798
      %v2824 = vpack.c.bf16 %v2801, %v2800
      %v2825 = vpack.c.bf16 %v2803, %v2802
      %v2826 = vpack.c.bf16 %v2805, %v2804
      %v2827 = vpack.c.bf16 %v2807, %v2806
      %v2828 = vpack.c.bf16 %v2809, %v2808
      %v2829 = vpack.c.bf16 %v2811, %v2810
      %v2830 = vpack.c.bf16 %v2813, %v2812
      %v2831 = vpack.c.bf16 %v2815, %v2814
      %v2848 = vunpack.c.l.b16 %v2816
      %v2849 = vunpack.c.h.b16 %v2816
      %v2850 = vunpack.c.l.b16 %v2817
      %v2851 = vunpack.c.h.b16 %v2817
      %v2852 = vunpack.c.l.b16 %v2818
      %v2853 = vunpack.c.h.b16 %v2818
      %v2854 = vunpack.c.l.b16 %v2819
      %v2855 = vunpack.c.h.b16 %v2819
      %v2856 = vunpack.c.l.b16 %v2820
      %v2857 = vunpack.c.h.b16 %v2820
      %v2858 = vunpack.c.l.b16 %v2821
      %v2859 = vunpack.c.h.b16 %v2821
      %v2860 = vunpack.c.l.b16 %v2822
      %v2861 = vunpack.c.h.b16 %v2822
      %v2862 = vunpack.c.l.b16 %v2823
      %v2863 = vunpack.c.h.b16 %v2823
      %v2864 = vunpack.c.l.b16 %v2824
      %v2865 = vunpack.c.h.b16 %v2824
      %v2866 = vunpack.c.l.b16 %v2825
      %v2867 = vunpack.c.h.b16 %v2825
      %v2868 = vunpack.c.l.b16 %v2826
      %v2869 = vunpack.c.h.b16 %v2826
      %v2870 = vunpack.c.l.b16 %v2827
      %v2871 = vunpack.c.h.b16 %v2827
      %v2872 = vunpack.c.l.b16 %v2828
      %v2873 = vunpack.c.h.b16 %v2828
      %v2874 = vunpack.c.l.b16 %v2829
      %v2875 = vunpack.c.h.b16 %v2829
      %v2876 = vunpack.c.l.b16 %v2830
      %v2877 = vunpack.c.h.b16 %v2830
      %v2878 = vunpack.c.l.b16 %v2831
      %v2879 = vunpack.c.h.b16 %v2831
      %v2880 = vpack.c.b16 %v2848, %v2848
      %v2881 = vpack.c.b16 %v2849, %v2849
      %v2882 = vpack.c.b16 %v2850, %v2850
      %v2883 = vpack.c.b16 %v2851, %v2851
      %v2884 = vpack.c.b16 %v2852, %v2852
      %v2885 = vpack.c.b16 %v2853, %v2853
      %v2886 = vpack.c.b16 %v2854, %v2854
      %v2887 = vpack.c.b16 %v2855, %v2855
      %v2888 = vpack.c.b16 %v2856, %v2856
      %v2889 = vpack.c.b16 %v2857, %v2857
      %v2890 = vpack.c.b16 %v2858, %v2858
      %v2891 = vpack.c.b16 %v2859, %v2859
      %v2892 = vpack.c.b16 %v2860, %v2860
      %v2893 = vpack.c.b16 %v2861, %v2861
      %v2894 = vpack.c.b16 %v2862, %v2862
      %v2895 = vpack.c.b16 %v2863, %v2863
      %v2896 = vpack.c.b16 %v2864, %v2864
      %v2897 = vpack.c.b16 %v2865, %v2865
      %v2898 = vpack.c.b16 %v2866, %v2866
      %v2899 = vpack.c.b16 %v2867, %v2867
      %v2900 = vpack.c.b16 %v2868, %v2868
      %v2901 = vpack.c.b16 %v2869, %v2869
      %v2902 = vpack.c.b16 %v2870, %v2870
      %v2903 = vpack.c.b16 %v2871, %v2871
      %v2904 = vpack.c.b16 %v2872, %v2872
      %v2905 = vpack.c.b16 %v2873, %v2873
      %v2906 = vpack.c.b16 %v2874, %v2874
      %v2907 = vpack.c.b16 %v2875, %v2875
      %v2908 = vpack.c.b16 %v2876, %v2876
      %v2909 = vpack.c.b16 %v2877, %v2877
      %v2910 = vpack.c.b16 %v2878, %v2878
      %v2911 = vpack.c.b16 %v2879, %v2879
      %vm2912 = vsmask.f32 256
      %vm2913 = vsmask.f32 4368
      %vm2914 = vmor %vm2912, %vm2913
      %v2916 = vshrl.u32 %v2880, 16
      %v2918 = vrot.slane %v2916, 7
      %v2919 = vshll.u32 %v2880, 16
      %v2921 = vor.u32 %v2918, %v2919
      %v2922 = vrot.slane %v2918, 4
      %v2924 = vshrl.u32 %v2881, 16
      %v2926 = vrot.slane %v2924, 7
      %v2927 = vshll.u32 %v2881, 16
      %v2929 = vor.u32 %v2926, %v2927
      %v2930 = vsel %vm2914, %v2922, %v2929
      %v2931 = vrot.slane %v2926, 4
      %v2933 = vshrl.u32 %v2882, 16
      %v2935 = vrot.slane %v2933, 7
      %v2936 = vshll.u32 %v2882, 16
      %v2938 = vor.u32 %v2935, %v2936
      %v2939 = vrot.slane %v2935, 4
      %v2941 = vshrl.u32 %v2883, 16
      %v2943 = vrot.slane %v2941, 7
      %v2944 = vshll.u32 %v2883, 16
      %v2946 = vor.u32 %v2943, %v2944
      %v2947 = vsel %vm2914, %v2939, %v2946
      %v2948 = vrot.slane %v2943, 4
      %v2950 = vshrl.u32 %v2884, 16
      %v2952 = vrot.slane %v2950, 7
      %v2953 = vshll.u32 %v2884, 16
      %v2955 = vor.u32 %v2952, %v2953
      %v2956 = vrot.slane %v2952, 4
      %v2958 = vshrl.u32 %v2885, 16
      %v2960 = vrot.slane %v2958, 7
      %v2961 = vshll.u32 %v2885, 16
      %v2963 = vor.u32 %v2960, %v2961
      %v2964 = vsel %vm2914, %v2956, %v2963
      %v2965 = vrot.slane %v2960, 4
      %v2967 = vshrl.u32 %v2886, 16
      %v2969 = vrot.slane %v2967, 7
      %v2970 = vshll.u32 %v2886, 16
      %v2972 = vor.u32 %v2969, %v2970
      %v2973 = vrot.slane %v2969, 4
      %v2975 = vshrl.u32 %v2887, 16
      %v2977 = vrot.slane %v2975, 7
      %v2978 = vshll.u32 %v2887, 16
      %v2980 = vor.u32 %v2977, %v2978
      %v2981 = vsel %vm2914, %v2973, %v2980
      %v2982 = vrot.slane %v2977, 4
      %v2984 = vshrl.u32 %v2888, 16
      %v2986 = vrot.slane %v2984, 7
      %v2987 = vshll.u32 %v2888, 16
      %v2989 = vor.u32 %v2986, %v2987
      %v2990 = vrot.slane %v2986, 4
      %v2992 = vshrl.u32 %v2889, 16
      %v2994 = vrot.slane %v2992, 7
      %v2995 = vshll.u32 %v2889, 16
      %v2997 = vor.u32 %v2994, %v2995
      %v2998 = vsel %vm2914, %v2990, %v2997
      %v2999 = vrot.slane %v2994, 4
      %v3001 = vshrl.u32 %v2890, 16
      %v3003 = vrot.slane %v3001, 7
      %v3004 = vshll.u32 %v2890, 16
      %v3006 = vor.u32 %v3003, %v3004
      %v3007 = vrot.slane %v3003, 4
      %v3009 = vshrl.u32 %v2891, 16
      %v3011 = vrot.slane %v3009, 7
      %v3012 = vshll.u32 %v2891, 16
      %v3014 = vor.u32 %v3011, %v3012
      %v3015 = vsel %vm2914, %v3007, %v3014
      %v3016 = vrot.slane %v3011, 4
      %v3018 = vshrl.u32 %v2892, 16
      %v3020 = vrot.slane %v3018, 7
      %v3021 = vshll.u32 %v2892, 16
      %v3023 = vor.u32 %v3020, %v3021
      %v3024 = vrot.slane %v3020, 4
      %v3026 = vshrl.u32 %v2893, 16
      %v3028 = vrot.slane %v3026, 7
      %v3029 = vshll.u32 %v2893, 16
      %v3031 = vor.u32 %v3028, %v3029
      %v3032 = vsel %vm2914, %v3024, %v3031
      %v3033 = vrot.slane %v3028, 4
      %v3035 = vshrl.u32 %v2894, 16
      %v3037 = vrot.slane %v3035, 7
      %v3038 = vshll.u32 %v2894, 16
      %v3040 = vor.u32 %v3037, %v3038
      %v3041 = vrot.slane %v3037, 4
      %v3043 = vshrl.u32 %v2895, 16
      %v3045 = vrot.slane %v3043, 7
      %v3046 = vshll.u32 %v2895, 16
      %v3048 = vor.u32 %v3045, %v3046
      %v3049 = vsel %vm2914, %v3041, %v3048
      %v3050 = vrot.slane %v3045, 4
      %v3052 = vshrl.u32 %v2896, 16
      %v3054 = vrot.slane %v3052, 7
      %v3055 = vshll.u32 %v2896, 16
      %v3057 = vor.u32 %v3054, %v3055
      %v3058 = vrot.slane %v3054, 4
      %v3060 = vshrl.u32 %v2897, 16
      %v3062 = vrot.slane %v3060, 7
      %v3063 = vshll.u32 %v2897, 16
      %v3065 = vor.u32 %v3062, %v3063
      %v3066 = vsel %vm2914, %v3058, %v3065
      %v3067 = vrot.slane %v3062, 4
      %v3069 = vshrl.u32 %v2898, 16
      %v3071 = vrot.slane %v3069, 7
      %v3072 = vshll.u32 %v2898, 16
      %v3074 = vor.u32 %v3071, %v3072
      %v3075 = vrot.slane %v3071, 4
      %v3077 = vshrl.u32 %v2899, 16
      %v3079 = vrot.slane %v3077, 7
      %v3080 = vshll.u32 %v2899, 16
      %v3082 = vor.u32 %v3079, %v3080
      %v3083 = vsel %vm2914, %v3075, %v3082
      %v3084 = vrot.slane %v3079, 4
      %v3086 = vshrl.u32 %v2900, 16
      %v3088 = vrot.slane %v3086, 7
      %v3089 = vshll.u32 %v2900, 16
      %v3091 = vor.u32 %v3088, %v3089
      %v3092 = vrot.slane %v3088, 4
      %v3094 = vshrl.u32 %v2901, 16
      %v3096 = vrot.slane %v3094, 7
      %v3097 = vshll.u32 %v2901, 16
      %v3099 = vor.u32 %v3096, %v3097
      %v3100 = vsel %vm2914, %v3092, %v3099
      %v3101 = vrot.slane %v3096, 4
      %v3103 = vshrl.u32 %v2902, 16
      %v3105 = vrot.slane %v3103, 7
      %v3106 = vshll.u32 %v2902, 16
      %v3108 = vor.u32 %v3105, %v3106
      %v3109 = vrot.slane %v3105, 4
      %v3111 = vshrl.u32 %v2903, 16
      %v3113 = vrot.slane %v3111, 7
      %v3114 = vshll.u32 %v2903, 16
      %v3116 = vor.u32 %v3113, %v3114
      %v3117 = vsel %vm2914, %v3109, %v3116
      %v3118 = vrot.slane %v3113, 4
      %v3120 = vshrl.u32 %v2904, 16
      %v3122 = vrot.slane %v3120, 7
      %v3123 = vshll.u32 %v2904, 16
      %v3125 = vor.u32 %v3122, %v3123
      %v3126 = vrot.slane %v3122, 4
      %v3128 = vshrl.u32 %v2905, 16
      %v3130 = vrot.slane %v3128, 7
      %v3131 = vshll.u32 %v2905, 16
      %v3133 = vor.u32 %v3130, %v3131
      %v3134 = vsel %vm2914, %v3126, %v3133
      %v3135 = vrot.slane %v3130, 4
      %v3137 = vshrl.u32 %v2906, 16
      %v3139 = vrot.slane %v3137, 7
      %v3140 = vshll.u32 %v2906, 16
      %v3142 = vor.u32 %v3139, %v3140
      %v3143 = vrot.slane %v3139, 4
      %v3145 = vshrl.u32 %v2907, 16
      %v3147 = vrot.slane %v3145, 7
      %v3148 = vshll.u32 %v2907, 16
      %v3150 = vor.u32 %v3147, %v3148
      %v3151 = vsel %vm2914, %v3143, %v3150
      %v3152 = vrot.slane %v3147, 4
      %v3154 = vshrl.u32 %v2908, 16
      %v3156 = vrot.slane %v3154, 7
      %v3157 = vshll.u32 %v2908, 16
      %v3159 = vor.u32 %v3156, %v3157
      %v3160 = vrot.slane %v3156, 4
      %v3162 = vshrl.u32 %v2909, 16
      %v3164 = vrot.slane %v3162, 7
      %v3165 = vshll.u32 %v2909, 16
      %v3167 = vor.u32 %v3164, %v3165
      %v3168 = vsel %vm2914, %v3160, %v3167
      %v3169 = vrot.slane %v3164, 4
      %v3171 = vshrl.u32 %v2910, 16
      %v3173 = vrot.slane %v3171, 7
      %v3174 = vshll.u32 %v2910, 16
      %v3176 = vor.u32 %v3173, %v3174
      %v3177 = vrot.slane %v3173, 4
      %v3179 = vshrl.u32 %v2911, 16
      %v3181 = vrot.slane %v3179, 7
      %v3182 = vshll.u32 %v2911, 16
      %v3184 = vor.u32 %v3181, %v3182
      %v3185 = vsel %vm2914, %v3177, %v3184
      %v3186 = vrot.slane %v3181, 4
      %s3235 = scalar_lea.vmem [#allocation2], 12
      %vm3236 = vcmask 1043456
      %vm3237 = vsmask.f32 7938
      %vm3238 = vmand %vm3236, %vm3237
      %v3239 = vld [vmem:[%s3235] sm:$0xf]
      %v3240 = vsel %vm3238, %v2921, %v3239
      %3241 = vst [vmem:[%s3235] sm:$0xf] %v3240
      %3242 = vst [vmem:[%s3235 + $0x4] sm:$0xf] %v2930
      %vm3243 = vcmask 1040384
      %vm3244 = vmand %vm3243, %vm2912
      %v3245 = vld [vmem:[%s3235 + $0x8] sm:$0x1]
      %v3246 = vsel %vm3244, %v2931, %v3245
      %3247 = vst [vmem:[%s3235 + $0x8] sm:$0x1] %v3246
      %v3248 = vld [vmem:[%s3235 + $0xc] sm:$0xf]
      %v3249 = vsel %vm3238, %v2938, %v3248
      %3250 = vst [vmem:[%s3235 + $0xc] sm:$0xf] %v3249
      %3251 = vst [vmem:[%s3235 + $0x10] sm:$0xf] %v2947
      %v3252 = vld [vmem:[%s3235 + $0x14] sm:$0x1]
      %v3253 = vsel %vm3244, %v2948, %v3252
      %3254 = vst [vmem:[%s3235 + $0x14] sm:$0x1] %v3253
      %v3255 = vld [vmem:[%s3235 + $0x18] sm:$0xf]
      %v3256 = vsel %vm3238, %v2955, %v3255
      %3257 = vst [vmem:[%s3235 + $0x18] sm:$0xf] %v3256
      %3258 = vst [vmem:[%s3235 + $0x1c] sm:$0xf] %v2964
      %v3259 = vld [vmem:[%s3235 + $0x20] sm:$0x1]
      %v3260 = vsel %vm3244, %v2965, %v3259
      %3261 = vst [vmem:[%s3235 + $0x20] sm:$0x1] %v3260
      %v3262 = vld [vmem:[%s3235 + $0x24] sm:$0xf]
      %v3263 = vsel %vm3238, %v2972, %v3262
      %3264 = vst [vmem:[%s3235 + $0x24] sm:$0xf] %v3263
      %3265 = vst [vmem:[%s3235 + $0x28] sm:$0xf] %v2981
      %v3266 = vld [vmem:[%s3235 + $0x2c] sm:$0x1]
      %v3267 = vsel %vm3244, %v2982, %v3266
      %3268 = vst [vmem:[%s3235 + $0x2c] sm:$0x1] %v3267
      %v3269 = vld [vmem:[%s3235 + $0x30] sm:$0xf]
      %v3270 = vsel %vm3238, %v2989, %v3269
      %3271 = vst [vmem:[%s3235 + $0x30] sm:$0xf] %v3270
      %3272 = vst [vmem:[%s3235 + $0x34] sm:$0xf] %v2998
      %v3273 = vld [vmem:[%s3235 + $0x38] sm:$0x1]
      %v3274 = vsel %vm3244, %v2999, %v3273
      %3275 = vst [vmem:[%s3235 + $0x38] sm:$0x1] %v3274
      %v3276 = vld [vmem:[%s3235 + $0x3c] sm:$0xf]
      %v3277 = vsel %vm3238, %v3006, %v3276
      %3278 = vst [vmem:[%s3235 + $0x3c] sm:$0xf] %v3277
      %3279 = vst [vmem:[%s3235 + $0x40] sm:$0xf] %v3015
      %v3280 = vld [vmem:[%s3235 + $0x44] sm:$0x1]
      %v3281 = vsel %vm3244, %v3016, %v3280
      %3282 = vst [vmem:[%s3235 + $0x44] sm:$0x1] %v3281
      %v3283 = vld [vmem:[%s3235 + $0x48] sm:$0xf]
      %v3284 = vsel %vm3238, %v3023, %v3283
      %3285 = vst [vmem:[%s3235 + $0x48] sm:$0xf] %v3284
      %3286 = vst [vmem:[%s3235 + $0x4c] sm:$0xf] %v3032
      %v3287 = vld [vmem:[%s3235 + $0x50] sm:$0x1]
      %v3288 = vsel %vm3244, %v3033, %v3287
      %3289 = vst [vmem:[%s3235 + $0x50] sm:$0x1] %v3288
      %v3290 = vld [vmem:[%s3235 + $0x54] sm:$0xf]
      %v3291 = vsel %vm3238, %v3040, %v3290
      %3292 = vst [vmem:[%s3235 + $0x54] sm:$0xf] %v3291
      %3293 = vst [vmem:[%s3235 + $0x58] sm:$0xf] %v3049
      %v3294 = vld [vmem:[%s3235 + $0x5c] sm:$0x1]
      %v3295 = vsel %vm3244, %v3050, %v3294
      %3296 = vst [vmem:[%s3235 + $0x5c] sm:$0x1] %v3295
      %v3297 = vld [vmem:[%s3235 + $0x60] sm:$0xf]
      %v3298 = vsel %vm3238, %v3057, %v3297
      %3299 = vst [vmem:[%s3235 + $0x60] sm:$0xf] %v3298
      %3300 = vst [vmem:[%s3235 + $0x64] sm:$0xf] %v3066
      %v3301 = vld [vmem:[%s3235 + $0x68] sm:$0x1]
      %v3302 = vsel %vm3244, %v3067, %v3301
      %3303 = vst [vmem:[%s3235 + $0x68] sm:$0x1] %v3302
      %v3304 = vld [vmem:[%s3235 + $0x6c] sm:$0xf]
      %v3305 = vsel %vm3238, %v3074, %v3304
      %3306 = vst [vmem:[%s3235 + $0x6c] sm:$0xf] %v3305
      %3307 = vst [vmem:[%s3235 + $0x70] sm:$0xf] %v3083
      %v3308 = vld [vmem:[%s3235 + $0x74] sm:$0x1]
      %v3309 = vsel %vm3244, %v3084, %v3308
      %3310 = vst [vmem:[%s3235 + $0x74] sm:$0x1] %v3309
      %v3311 = vld [vmem:[%s3235 + $0x78] sm:$0xf]
      %v3312 = vsel %vm3238, %v3091, %v3311
      %3313 = vst [vmem:[%s3235 + $0x78] sm:$0xf] %v3312
      %3314 = vst [vmem:[%s3235 + $0x7c] sm:$0xf] %v3100
      %v3315 = vld [vmem:[%s3235 + $0x80] sm:$0x1]
      %v3316 = vsel %vm3244, %v3101, %v3315
      %3317 = vst [vmem:[%s3235 + $0x80] sm:$0x1] %v3316
      %v3318 = vld [vmem:[%s3235 + $0x84] sm:$0xf]
      %v3319 = vsel %vm3238, %v3108, %v3318
      %3320 = vst [vmem:[%s3235 + $0x84] sm:$0xf] %v3319
      %3321 = vst [vmem:[%s3235 + $0x88] sm:$0xf] %v3117
      %v3322 = vld [vmem:[%s3235 + $0x8c] sm:$0x1]
      %v3323 = vsel %vm3244, %v3118, %v3322
      %3324 = vst [vmem:[%s3235 + $0x8c] sm:$0x1] %v3323
      %v3325 = vld [vmem:[%s3235 + $0x90] sm:$0xf]
      %v3326 = vsel %vm3238, %v3125, %v3325
      %3327 = vst [vmem:[%s3235 + $0x90] sm:$0xf] %v3326
      %3328 = vst [vmem:[%s3235 + $0x94] sm:$0xf] %v3134
      %v3329 = vld [vmem:[%s3235 + $0x98] sm:$0x1]
      %v3330 = vsel %vm3244, %v3135, %v3329
      %3331 = vst [vmem:[%s3235 + $0x98] sm:$0x1] %v3330
      %v3332 = vld [vmem:[%s3235 + $0x9c] sm:$0xf]
      %v3333 = vsel %vm3238, %v3142, %v3332
      %3334 = vst [vmem:[%s3235 + $0x9c] sm:$0xf] %v3333
      %3335 = vst [vmem:[%s3235 + $0xa0] sm:$0xf] %v3151
      %v3336 = vld [vmem:[%s3235 + $0xa4] sm:$0x1]
      %v3337 = vsel %vm3244, %v3152, %v3336
      %3338 = vst [vmem:[%s3235 + $0xa4] sm:$0x1] %v3337
      %v3339 = vld [vmem:[%s3235 + $0xa8] sm:$0xf]
      %v3340 = vsel %vm3238, %v3159, %v3339
      %3341 = vst [vmem:[%s3235 + $0xa8] sm:$0xf] %v3340
      %3342 = vst [vmem:[%s3235 + $0xac] sm:$0xf] %v3168
      %v3343 = vld [vmem:[%s3235 + $0xb0] sm:$0x1]
      %v3344 = vsel %vm3244, %v3169, %v3343
      %3345 = vst [vmem:[%s3235 + $0xb0] sm:$0x1] %v3344
      %v3346 = vld [vmem:[%s3235 + $0xb4] sm:$0xf]
      %v3347 = vsel %vm3238, %v3176, %v3346
      %3348 = vst [vmem:[%s3235 + $0xb4] sm:$0xf] %v3347
      %3349 = vst [vmem:[%s3235 + $0xb8] sm:$0xf] %v3185
      %v3350 = vld [vmem:[%s3235 + $0xbc] sm:$0x1]
      %v3351 = vsel %vm3244, %v3186, %v3350
      %3352 = vst [vmem:[%s3235 + $0xbc] sm:$0x1] %v3351
      %v3353 = vld [vmem:[#allocation2] sm:$0xf]
      %v3354 = vld [vmem:[#allocation2 + $0x4] sm:$0xf]
      %v3355 = vld [vmem:[#allocation2 + $0x8] sm:$0x1]
      %v3356 = vld [vmem:[#allocation2 + $0xc] sm:$0xf]
      %v3357 = vld [vmem:[#allocation2 + $0x10] sm:$0xf]
      %v3358 = vld [vmem:[#allocation2 + $0x14] sm:$0x1]
      %v3359 = vld [vmem:[#allocation2 + $0x18] sm:$0xf]
      %v3360 = vld [vmem:[#allocation2 + $0x1c] sm:$0xf]
      %v3361 = vld [vmem:[#allocation2 + $0x20] sm:$0x1]
      %v3362 = vld [vmem:[#allocation2 + $0x24] sm:$0xf]
      %v3363 = vld [vmem:[#allocation2 + $0x28] sm:$0xf]
      %v3364 = vld [vmem:[#allocation2 + $0x2c] sm:$0x1]
      %v3365 = vld [vmem:[#allocation2 + $0x30] sm:$0xf]
      %v3366 = vld [vmem:[#allocation2 + $0x34] sm:$0xf]
      %v3367 = vld [vmem:[#allocation2 + $0x38] sm:$0x1]
      %v3368 = vld [vmem:[#allocation2 + $0x3c] sm:$0xf]
      %v3369 = vld [vmem:[#allocation2 + $0x40] sm:$0xf]
      %v3370 = vld [vmem:[#allocation2 + $0x44] sm:$0x1]
      %v3371 = vld [vmem:[#allocation2 + $0x48] sm:$0xf]
      %v3372 = vld [vmem:[#allocation2 + $0x4c] sm:$0xf]
      %v3373 = vld [vmem:[#allocation2 + $0x50] sm:$0x1]
      %v3374 = vld [vmem:[#allocation2 + $0x54] sm:$0xf]
      %v3375 = vld [vmem:[#allocation2 + $0x58] sm:$0xf]
      %v3376 = vld [vmem:[#allocation2 + $0x5c] sm:$0x1]
      %v3377 = vld [vmem:[#allocation2 + $0x60] sm:$0xf]
      %v3378 = vld [vmem:[#allocation2 + $0x64] sm:$0xf]
      %v3379 = vld [vmem:[#allocation2 + $0x68] sm:$0x1]
      %v3380 = vld [vmem:[#allocation2 + $0x6c] sm:$0xf]
      %v3381 = vld [vmem:[#allocation2 + $0x70] sm:$0xf]
      %v3382 = vld [vmem:[#allocation2 + $0x74] sm:$0x1]
      %v3383 = vld [vmem:[#allocation2 + $0x78] sm:$0xf]
      %v3384 = vld [vmem:[#allocation2 + $0x7c] sm:$0xf]
      %v3385 = vld [vmem:[#allocation2 + $0x80] sm:$0x1]
      %v3386 = vld [vmem:[#allocation2 + $0x84] sm:$0xf]
      %v3387 = vld [vmem:[#allocation2 + $0x88] sm:$0xf]
      %v3388 = vld [vmem:[#allocation2 + $0x8c] sm:$0x1]
      %v3389 = vld [vmem:[#allocation2 + $0x90] sm:$0xf]
      %v3390 = vld [vmem:[#allocation2 + $0x94] sm:$0xf]
      %v3391 = vld [vmem:[#allocation2 + $0x98] sm:$0x1]
      %v3392 = vld [vmem:[#allocation2 + $0x9c] sm:$0xf]
      %v3393 = vld [vmem:[#allocation2 + $0xa0] sm:$0xf]
      %v3394 = vld [vmem:[#allocation2 + $0xa4] sm:$0x1]
      %v3395 = vld [vmem:[#allocation2 + $0xa8] sm:$0xf]
      %v3396 = vld [vmem:[#allocation2 + $0xac] sm:$0xf]
      %v3397 = vld [vmem:[#allocation2 + $0xb0] sm:$0x1]
      %v3398 = vld [vmem:[#allocation2 + $0xb4] sm:$0xf]
      %v3399 = vld [vmem:[#allocation2 + $0xb8] sm:$0xf]
      %v3400 = vld [vmem:[#allocation2 + $0xbc] sm:$0x1]
      %v3401 = vld [vmem:[#allocation2 + $0xc0] sm:$0xf]
      %v3402 = vld [vmem:[#allocation2 + $0xc4] sm:$0xf]
      %v3403 = vld [vmem:[#allocation2 + $0xc8] sm:$0x1]
      %v3404 = vld [vmem:[#allocation2 + $0xcc] sm:$0xf]
      %v3405 = vld [vmem:[#allocation2 + $0xd0] sm:$0xf]
      %v3406 = vld [vmem:[#allocation2 + $0xd4] sm:$0x1]
      %v3439 = vunpack.c.l.b16 %v3353
      %v3440 = vunpack.c.l.b16 %v3354
      %v3441 = vunpack.c.l.b16 %v3356
      %v3442 = vunpack.c.l.b16 %v3357
      %v3443 = vunpack.c.l.b16 %v3359
      %v3444 = vunpack.c.l.b16 %v3360
      %v3445 = vunpack.c.l.b16 %v3362
      %v3446 = vunpack.c.l.b16 %v3363
      %v3447 = vunpack.c.l.b16 %v3365
      %v3448 = vunpack.c.l.b16 %v3366
      %v3449 = vunpack.c.l.b16 %v3368
      %v3450 = vunpack.c.l.b16 %v3369
      %v3451 = vunpack.c.l.b16 %v3371
      %v3452 = vunpack.c.l.b16 %v3372
      %v3453 = vunpack.c.l.b16 %v3374
      %v3454 = vunpack.c.l.b16 %v3375
      %v3455 = vunpack.c.l.b16 %v3377
      %v3456 = vunpack.c.l.b16 %v3378
      %v3457 = vunpack.c.l.b16 %v3380
      %v3458 = vunpack.c.l.b16 %v3381
      %v3459 = vunpack.c.l.b16 %v3383
      %v3460 = vunpack.c.l.b16 %v3384
      %v3461 = vunpack.c.l.b16 %v3386
      %v3462 = vunpack.c.l.b16 %v3387
      %v3463 = vunpack.c.l.b16 %v3389
      %v3464 = vunpack.c.l.b16 %v3390
      %v3465 = vunpack.c.l.b16 %v3392
      %v3466 = vunpack.c.l.b16 %v3393
      %v3467 = vunpack.c.l.b16 %v3395
      %v3468 = vunpack.c.l.b16 %v3396
      %v3469 = vunpack.c.l.b16 %v3398
      %v3470 = vunpack.c.l.b16 %v3399
      %v3471 = vpack.c.b16 %v3440, %v3439
      %v3472 = vpack.c.b16 %v3442, %v3441
      %v3473 = vpack.c.b16 %v3444, %v3443
      %v3474 = vpack.c.b16 %v3446, %v3445
      %v3475 = vpack.c.b16 %v3448, %v3447
      %v3476 = vpack.c.b16 %v3450, %v3449
      %v3477 = vpack.c.b16 %v3452, %v3451
      %v3478 = vpack.c.b16 %v3454, %v3453
      %v3479 = vpack.c.b16 %v3456, %v3455
      %v3480 = vpack.c.b16 %v3458, %v3457
      %v3481 = vpack.c.b16 %v3460, %v3459
      %v3482 = vpack.c.b16 %v3462, %v3461
      %v3483 = vpack.c.b16 %v3464, %v3463
      %v3484 = vpack.c.b16 %v3466, %v3465
      %v3485 = vpack.c.b16 %v3468, %v3467
      %v3486 = vpack.c.b16 %v3470, %v3469
      %v3519 = vunpack.c.l.b16 %v3355
      %v3520 = vunpack.c.l.b16 %v3358
      %v3521 = vunpack.c.l.b16 %v3361
      %v3522 = vunpack.c.l.b16 %v3364
      %v3523 = vunpack.c.l.b16 %v3367
      %v3524 = vunpack.c.l.b16 %v3370
      %v3525 = vunpack.c.l.b16 %v3373
      %v3526 = vunpack.c.l.b16 %v3376
      %v3527 = vunpack.c.l.b16 %v3379
      %v3528 = vunpack.c.l.b16 %v3382
      %v3529 = vunpack.c.l.b16 %v3385
      %v3530 = vunpack.c.l.b16 %v3388
      %v3531 = vunpack.c.l.b16 %v3391
      %v3532 = vunpack.c.l.b16 %v3394
      %v3533 = vunpack.c.l.b16 %v3397
      %v3534 = vunpack.c.l.b16 %v3400
      %v3535 = vpack.c.b16 %v3519, %v3519
      %v3536 = vpack.c.b16 %v3520, %v3520
      %v3537 = vpack.c.b16 %v3521, %v3521
      %v3538 = vpack.c.b16 %v3522, %v3522
      %v3539 = vpack.c.b16 %v3523, %v3523
      %v3540 = vpack.c.b16 %v3524, %v3524
      %v3541 = vpack.c.b16 %v3525, %v3525
      %v3542 = vpack.c.b16 %v3526, %v3526
      %v3543 = vpack.c.b16 %v3527, %v3527
      %v3544 = vpack.c.b16 %v3528, %v3528
      %v3545 = vpack.c.b16 %v3529, %v3529
      %v3546 = vpack.c.b16 %v3530, %v3530
      %v3547 = vpack.c.b16 %v3531, %v3531
      %v3548 = vpack.c.b16 %v3532, %v3532
      %v3549 = vpack.c.b16 %v3533, %v3533
      %v3550 = vpack.c.b16 %v3534, %v3534
      %v3552 = vshrl.u32 %v3471, 16
      %v3554 = vshll.u32 %v3471, 16
      %v3556 = vrot.slane %v3554, 1
      %v3557 = vor.u32 %v3552, %v3556
      %v3559 = vshll.u32 %v3535, 16
      %v3561 = vrot.slane %v3559, 1
      %v3562 = vsel %vm741, %v3557, %v3561
      %v3564 = vshrl.u32 %v3472, 16
      %v3566 = vshll.u32 %v3472, 16
      %v3568 = vrot.slane %v3566, 1
      %v3569 = vor.u32 %v3564, %v3568
      %v3571 = vshll.u32 %v3536, 16
      %v3573 = vrot.slane %v3571, 1
      %v3574 = vsel %vm741, %v3569, %v3573
      %v3576 = vshrl.u32 %v3473, 16
      %v3578 = vshll.u32 %v3473, 16
      %v3580 = vrot.slane %v3578, 1
      %v3581 = vor.u32 %v3576, %v3580
      %v3583 = vshll.u32 %v3537, 16
      %v3585 = vrot.slane %v3583, 1
      %v3586 = vsel %vm741, %v3581, %v3585
      %v3588 = vshrl.u32 %v3474, 16
      %v3590 = vshll.u32 %v3474, 16
      %v3592 = vrot.slane %v3590, 1
      %v3593 = vor.u32 %v3588, %v3592
      %v3595 = vshll.u32 %v3538, 16
      %v3597 = vrot.slane %v3595, 1
      %v3598 = vsel %vm741, %v3593, %v3597
      %v3600 = vshrl.u32 %v3475, 16
      %v3602 = vshll.u32 %v3475, 16
      %v3604 = vrot.slane %v3602, 1
      %v3605 = vor.u32 %v3600, %v3604
      %v3607 = vshll.u32 %v3539, 16
      %v3609 = vrot.slane %v3607, 1
      %v3610 = vsel %vm741, %v3605, %v3609
      %v3612 = vshrl.u32 %v3476, 16
      %v3614 = vshll.u32 %v3476, 16
      %v3616 = vrot.slane %v3614, 1
      %v3617 = vor.u32 %v3612, %v3616
      %v3619 = vshll.u32 %v3540, 16
      %v3621 = vrot.slane %v3619, 1
      %v3622 = vsel %vm741, %v3617, %v3621
      %v3624 = vshrl.u32 %v3477, 16
      %v3626 = vshll.u32 %v3477, 16
      %v3628 = vrot.slane %v3626, 1
      %v3629 = vor.u32 %v3624, %v3628
      %v3631 = vshll.u32 %v3541, 16
      %v3633 = vrot.slane %v3631, 1
      %v3634 = vsel %vm741, %v3629, %v3633
      %v3636 = vshrl.u32 %v3478, 16
      %v3638 = vshll.u32 %v3478, 16
      %v3640 = vrot.slane %v3638, 1
      %v3641 = vor.u32 %v3636, %v3640
      %v3643 = vshll.u32 %v3542, 16
      %v3645 = vrot.slane %v3643, 1
      %v3646 = vsel %vm741, %v3641, %v3645
      %v3648 = vshrl.u32 %v3479, 16
      %v3650 = vshll.u32 %v3479, 16
      %v3652 = vrot.slane %v3650, 1
      %v3653 = vor.u32 %v3648, %v3652
      %v3655 = vshll.u32 %v3543, 16
      %v3657 = vrot.slane %v3655, 1
      %v3658 = vsel %vm741, %v3653, %v3657
      %v3660 = vshrl.u32 %v3480, 16
      %v3662 = vshll.u32 %v3480, 16
      %v3664 = vrot.slane %v3662, 1
      %v3665 = vor.u32 %v3660, %v3664
      %v3667 = vshll.u32 %v3544, 16
      %v3669 = vrot.slane %v3667, 1
      %v3670 = vsel %vm741, %v3665, %v3669
      %v3672 = vshrl.u32 %v3481, 16
      %v3674 = vshll.u32 %v3481, 16
      %v3676 = vrot.slane %v3674, 1
      %v3677 = vor.u32 %v3672, %v3676
      %v3679 = vshll.u32 %v3545, 16
      %v3681 = vrot.slane %v3679, 1
      %v3682 = vsel %vm741, %v3677, %v3681
      %v3684 = vshrl.u32 %v3482, 16
      %v3686 = vshll.u32 %v3482, 16
      %v3688 = vrot.slane %v3686, 1
      %v3689 = vor.u32 %v3684, %v3688
      %v3691 = vshll.u32 %v3546, 16
      %v3693 = vrot.slane %v3691, 1
      %v3694 = vsel %vm741, %v3689, %v3693
      %v3696 = vshrl.u32 %v3483, 16
      %v3698 = vshll.u32 %v3483, 16
      %v3700 = vrot.slane %v3698, 1
      %v3701 = vor.u32 %v3696, %v3700
      %v3703 = vshll.u32 %v3547, 16
      %v3705 = vrot.slane %v3703, 1
      %v3706 = vsel %vm741, %v3701, %v3705
      %v3708 = vshrl.u32 %v3484, 16
      %v3710 = vshll.u32 %v3484, 16
      %v3712 = vrot.slane %v3710, 1
      %v3713 = vor.u32 %v3708, %v3712
      %v3715 = vshll.u32 %v3548, 16
      %v3717 = vrot.slane %v3715, 1
      %v3718 = vsel %vm741, %v3713, %v3717
      %v3720 = vshrl.u32 %v3485, 16
      %v3722 = vshll.u32 %v3485, 16
      %v3724 = vrot.slane %v3722, 1
      %v3725 = vor.u32 %v3720, %v3724
      %v3727 = vshll.u32 %v3549, 16
      %v3729 = vrot.slane %v3727, 1
      %v3730 = vsel %vm741, %v3725, %v3729
      %v3732 = vshrl.u32 %v3486, 16
      %v3734 = vshll.u32 %v3486, 16
      %v3736 = vrot.slane %v3734, 1
      %v3737 = vor.u32 %v3732, %v3736
      %v3739 = vshll.u32 %v3550, 16
      %v3741 = vrot.slane %v3739, 1
      %v3742 = vsel %vm741, %v3737, %v3741
      %v3759 = vrot.slane %v3471, 1
      %v3760 = vrot.slane %v3535, 1
      %v3761 = vsel %vm950, %v3759, %v3760
      %v3762 = vrot.slane %v3472, 1
      %v3763 = vrot.slane %v3536, 1
      %v3764 = vsel %vm950, %v3762, %v3763
      %v3765 = vrot.slane %v3473, 1
      %v3766 = vrot.slane %v3537, 1
      %v3767 = vsel %vm950, %v3765, %v3766
      %v3768 = vrot.slane %v3474, 1
      %v3769 = vrot.slane %v3538, 1
      %v3770 = vsel %vm950, %v3768, %v3769
      %v3771 = vrot.slane %v3475, 1
      %v3772 = vrot.slane %v3539, 1
      %v3773 = vsel %vm950, %v3771, %v3772
      %v3774 = vrot.slane %v3476, 1
      %v3775 = vrot.slane %v3540, 1
      %v3776 = vsel %vm950, %v3774, %v3775
      %v3777 = vrot.slane %v3477, 1
      %v3778 = vrot.slane %v3541, 1
      %v3779 = vsel %vm950, %v3777, %v3778
      %v3780 = vrot.slane %v3478, 1
      %v3781 = vrot.slane %v3542, 1
      %v3782 = vsel %vm950, %v3780, %v3781
      %v3783 = vrot.slane %v3479, 1
      %v3784 = vrot.slane %v3543, 1
      %v3785 = vsel %vm950, %v3783, %v3784
      %v3786 = vrot.slane %v3480, 1
      %v3787 = vrot.slane %v3544, 1
      %v3788 = vsel %vm950, %v3786, %v3787
      %v3789 = vrot.slane %v3481, 1
      %v3790 = vrot.slane %v3545, 1
      %v3791 = vsel %vm950, %v3789, %v3790
      %v3792 = vrot.slane %v3482, 1
      %v3793 = vrot.slane %v3546, 1
      %v3794 = vsel %vm950, %v3792, %v3793
      %v3795 = vrot.slane %v3483, 1
      %v3796 = vrot.slane %v3547, 1
      %v3797 = vsel %vm950, %v3795, %v3796
      %v3798 = vrot.slane %v3484, 1
      %v3799 = vrot.slane %v3548, 1
      %v3800 = vsel %vm950, %v3798, %v3799
      %v3801 = vrot.slane %v3485, 1
      %v3802 = vrot.slane %v3549, 1
      %v3803 = vsel %vm950, %v3801, %v3802
      %v3804 = vrot.slane %v3486, 1
      %v3805 = vrot.slane %v3550, 1
      %v3806 = vsel %vm950, %v3804, %v3805
      %v3823 = vld [vmem:[%s1] sm:$0xf]
      %v3824 = vld [vmem:[%s1 + $0x4] sm:$0xf]
      %v3825 = vld [vmem:[%s1 + $0x8] sm:$0xf]
      %v3826 = vld [vmem:[%s1 + $0xc] sm:$0xf]
      %v3827 = vld [vmem:[%s1 + $0x10] sm:$0xf]
      %v3828 = vld [vmem:[%s1 + $0x14] sm:$0xf]
      %v3829 = vld [vmem:[%s1 + $0x18] sm:$0xf]
      %v3830 = vld [vmem:[%s1 + $0x1c] sm:$0xf]
      %v3831 = vld [vmem:[%s1 + $0x20] sm:$0xf]
      %v3832 = vld [vmem:[%s1 + $0x24] sm:$0xf]
      %v3833 = vld [vmem:[%s1 + $0x28] sm:$0xf]
      %v3834 = vld [vmem:[%s1 + $0x2c] sm:$0xf]
      %v3835 = vld [vmem:[%s1 + $0x30] sm:$0xf]
      %v3836 = vld [vmem:[%s1 + $0x34] sm:$0xf]
      %v3837 = vld [vmem:[%s1 + $0x38] sm:$0xf]
      %v3838 = vld [vmem:[%s1 + $0x3c] sm:$0xf]
      %v3839 = vld [vmem:[%s1 + $0x40] sm:$0xf]
      %v3840 = vld [vmem:[%s1 + $0x44] sm:$0xf]
      %v3841 = vld [vmem:[%s1 + $0x48] sm:$0xf]
      %v3842 = vld [vmem:[%s1 + $0x4c] sm:$0xf]
      %v3843 = vld [vmem:[%s1 + $0x50] sm:$0xf]
      %v3844 = vld [vmem:[%s1 + $0x54] sm:$0xf]
      %v3845 = vld [vmem:[%s1 + $0x58] sm:$0xf]
      %v3846 = vld [vmem:[%s1 + $0x5c] sm:$0xf]
      %v3847 = vld [vmem:[%s1 + $0x60] sm:$0xf]
      %v3848 = vld [vmem:[%s1 + $0x64] sm:$0xf]
      %v3849 = vld [vmem:[%s1 + $0x68] sm:$0xf]
      %v3850 = vld [vmem:[%s1 + $0x6c] sm:$0xf]
      %v3851 = vld [vmem:[%s1 + $0x70] sm:$0xf]
      %v3852 = vld [vmem:[%s1 + $0x74] sm:$0xf]
      %v3853 = vld [vmem:[%s1 + $0x78] sm:$0xf]
      %v3854 = vld [vmem:[%s1 + $0x7c] sm:$0xf]
      %v3855 = vld [vmem:[%s1 + $0x80] sm:$0xf]
      %v3856 = vld [vmem:[%s1 + $0x84] sm:$0xf]
      %v3857 = vld [vmem:[%s1 + $0x88] sm:$0xf]
      %v3858 = vld [vmem:[%s1 + $0x8c] sm:$0xf]
      %v3859 = vld [vmem:[%s1 + $0x90] sm:$0xf]
      %v3860 = vld [vmem:[%s1 + $0x94] sm:$0xf]
      %v3861 = vld [vmem:[%s1 + $0x98] sm:$0xf]
      %v3862 = vld [vmem:[%s1 + $0x9c] sm:$0xf]
      %v3863 = vld [vmem:[%s1 + $0xa0] sm:$0xf]
      %v3864 = vld [vmem:[%s1 + $0xa4] sm:$0xf]
      %v3865 = vld [vmem:[%s1 + $0xa8] sm:$0xf]
      %v3866 = vld [vmem:[%s1 + $0xac] sm:$0xf]
      %v3867 = vld [vmem:[%s1 + $0xb0] sm:$0xf]
      %v3868 = vld [vmem:[%s1 + $0xb4] sm:$0xf]
      %v3869 = vld [vmem:[%s1 + $0xb8] sm:$0xf]
      %v3870 = vld [vmem:[%s1 + $0xbc] sm:$0xf]
      %v3873 = vunpack.c.l.b16 %v3401
      %v3874 = vunpack.c.l.b16 %v3402
      %v3875 = vpack.c.b16 %v3874, %v3873
      %v3878 = vunpack.c.l.b16 %v3403
      %v3879 = vpack.c.b16 %v3878, %v3878
      %v3881 = vshrl.u32 %v3875, 16
      %v3883 = vshll.u32 %v3875, 16
      %v3885 = vrot.slane %v3883, 1
      %v3886 = vor.u32 %v3881, %v3885
      %v3888 = vshll.u32 %v3879, 16
      %v3890 = vrot.slane %v3888, 1
      %v3891 = vsel %vm741, %v3886, %v3890
      %v3893 = vrot.slane %v3875, 1
      %v3894 = vrot.slane %v3879, 1
      %v3895 = vsel %vm950, %v3893, %v3894
      %v3897 = vld [vmem:[%s1089] sm:$0xf]
      %v3898 = vld [vmem:[%s1089 + $0x4] sm:$0xf]
      %v3899 = vld [vmem:[%s1089 + $0x8] sm:$0xf]
      %v3900 = vld [vmem:[%s1089 + $0xc] sm:$0xf]
      %v3901 = vld [vmem:[%s1089 + $0x10] sm:$0xf]
      %v3902 = vld [vmem:[%s1089 + $0x14] sm:$0xf]
      %v3903 = vld [vmem:[%s1089 + $0x18] sm:$0xf]
      %v3904 = vld [vmem:[%s1089 + $0x1c] sm:$0xf]
      %v3905 = vld [vmem:[%s1089 + $0x20] sm:$0xf]
      %v3906 = vld [vmem:[%s1089 + $0x24] sm:$0xf]
      %v3907 = vld [vmem:[%s1089 + $0x28] sm:$0xf]
      %v3908 = vld [vmem:[%s1089 + $0x2c] sm:$0xf]
      %v3909 = vld [vmem:[%s1089 + $0x30] sm:$0xf]
      %v3910 = vld [vmem:[%s1089 + $0x34] sm:$0xf]
      %v3911 = vld [vmem:[%s1089 + $0x38] sm:$0xf]
      %v3912 = vld [vmem:[%s1089 + $0x3c] sm:$0xf]
      %v3913 = vld [vmem:[%s1089 + $0x40] sm:$0xf]
      %v3914 = vld [vmem:[%s1089 + $0x44] sm:$0xf]
      %v3915 = vld [vmem:[%s1089 + $0x48] sm:$0xf]
      %v3916 = vld [vmem:[%s1089 + $0x4c] sm:$0xf]
      %v3917 = vld [vmem:[%s1089 + $0x50] sm:$0xf]
      %v3918 = vld [vmem:[%s1089 + $0x54] sm:$0xf]
      %v3919 = vld [vmem:[%s1089 + $0x58] sm:$0xf]
      %v3920 = vld [vmem:[%s1089 + $0x5c] sm:$0xf]
      %v3921 = vld [vmem:[%s1089 + $0x60] sm:$0xf]
      %v3922 = vld [vmem:[%s1089 + $0x64] sm:$0xf]
      %v3923 = vld [vmem:[%s1089 + $0x68] sm:$0xf]
      %v3924 = vld [vmem:[%s1089 + $0x6c] sm:$0xf]
      %v3925 = vld [vmem:[%s1089 + $0x70] sm:$0xf]
      %v3926 = vld [vmem:[%s1089 + $0x74] sm:$0xf]
      %v3927 = vld [vmem:[%s1089 + $0x78] sm:$0xf]
      %v3928 = vld [vmem:[%s1089 + $0x7c] sm:$0xf]
      %v3929 = vld [vmem:[%s1089 + $0x80] sm:$0xf]
      %v3930 = vld [vmem:[%s1089 + $0x84] sm:$0xf]
      %v3931 = vld [vmem:[%s1089 + $0x88] sm:$0xf]
      %v3932 = vld [vmem:[%s1089 + $0x8c] sm:$0xf]
      %v3933 = vld [vmem:[%s1089 + $0x90] sm:$0xf]
      %v3934 = vld [vmem:[%s1089 + $0x94] sm:$0xf]
      %v3935 = vld [vmem:[%s1089 + $0x98] sm:$0xf]
      %v3936 = vld [vmem:[%s1089 + $0x9c] sm:$0xf]
      %v3937 = vld [vmem:[%s1089 + $0xa0] sm:$0xf]
      %v3938 = vld [vmem:[%s1089 + $0xa4] sm:$0xf]
      %v3939 = vld [vmem:[%s1089 + $0xa8] sm:$0xf]
      %v3940 = vld [vmem:[%s1089 + $0xac] sm:$0xf]
      %v3941 = vld [vmem:[%s1089 + $0xb0] sm:$0xf]
      %v3942 = vld [vmem:[%s1089 + $0xb4] sm:$0xf]
      %v3943 = vld [vmem:[%s1089 + $0xb8] sm:$0xf]
      %v3944 = vld [vmem:[%s1089 + $0xbc] sm:$0xf]
      %v3993 = vunpack.c.l.b16 %v3897
      %v3994 = vunpack.c.l.b16 %v3898
      %v3995 = vunpack.c.l.b16 %v3899
      %v3996 = vunpack.c.l.b16 %v3900
      %v3997 = vunpack.c.l.b16 %v3901
      %v3998 = vunpack.c.l.b16 %v3902
      %v3999 = vunpack.c.l.b16 %v3903
      %v4000 = vunpack.c.l.b16 %v3904
      %v4001 = vunpack.c.l.b16 %v3905
      %v4002 = vunpack.c.l.b16 %v3906
      %v4003 = vunpack.c.l.b16 %v3907
      %v4004 = vunpack.c.l.b16 %v3908
      %v4005 = vunpack.c.l.b16 %v3909
      %v4006 = vunpack.c.l.b16 %v3910
      %v4007 = vunpack.c.l.b16 %v3911
      %v4008 = vunpack.c.l.b16 %v3912
      %v4009 = vunpack.c.l.b16 %v3913
      %v4010 = vunpack.c.l.b16 %v3914
      %v4011 = vunpack.c.l.b16 %v3915
      %v4012 = vunpack.c.l.b16 %v3916
      %v4013 = vunpack.c.l.b16 %v3917
      %v4014 = vunpack.c.l.b16 %v3918
      %v4015 = vunpack.c.l.b16 %v3919
      %v4016 = vunpack.c.l.b16 %v3920
      %v4017 = vunpack.c.l.b16 %v3921
      %v4018 = vunpack.c.l.b16 %v3922
      %v4019 = vunpack.c.l.b16 %v3923
      %v4020 = vunpack.c.l.b16 %v3924
      %v4021 = vunpack.c.l.b16 %v3925
      %v4022 = vunpack.c.l.b16 %v3926
      %v4023 = vunpack.c.l.b16 %v3927
      %v4024 = vunpack.c.l.b16 %v3928
      %v4025 = vunpack.c.l.b16 %v3929
      %v4026 = vunpack.c.l.b16 %v3930
      %v4027 = vunpack.c.l.b16 %v3931
      %v4028 = vunpack.c.l.b16 %v3932
      %v4029 = vunpack.c.l.b16 %v3933
      %v4030 = vunpack.c.l.b16 %v3934
      %v4031 = vunpack.c.l.b16 %v3935
      %v4032 = vunpack.c.l.b16 %v3936
      %v4033 = vunpack.c.l.b16 %v3937
      %v4034 = vunpack.c.l.b16 %v3938
      %v4035 = vunpack.c.l.b16 %v3939
      %v4036 = vunpack.c.l.b16 %v3940
      %v4037 = vunpack.c.l.b16 %v3941
      %v4038 = vunpack.c.l.b16 %v3942
      %v4039 = vunpack.c.l.b16 %v3943
      %v4040 = vunpack.c.l.b16 %v3944
      %v4041 = vpack.c.b16 %v3994, %v3993
      %v4042 = vpack.c.b16 %v3996, %v3995
      %v4043 = vpack.c.b16 %v3998, %v3997
      %v4044 = vpack.c.b16 %v4000, %v3999
      %v4045 = vpack.c.b16 %v4002, %v4001
      %v4046 = vpack.c.b16 %v4004, %v4003
      %v4047 = vpack.c.b16 %v4006, %v4005
      %v4048 = vpack.c.b16 %v4008, %v4007
      %v4049 = vpack.c.b16 %v4010, %v4009
      %v4050 = vpack.c.b16 %v4012, %v4011
      %v4051 = vpack.c.b16 %v4014, %v4013
      %v4052 = vpack.c.b16 %v4016, %v4015
      %v4053 = vpack.c.b16 %v4018, %v4017
      %v4054 = vpack.c.b16 %v4020, %v4019
      %v4055 = vpack.c.b16 %v4022, %v4021
      %v4056 = vpack.c.b16 %v4024, %v4023
      %v4057 = vpack.c.b16 %v4026, %v4025
      %v4058 = vpack.c.b16 %v4028, %v4027
      %v4059 = vpack.c.b16 %v4030, %v4029
      %v4060 = vpack.c.b16 %v4032, %v4031
      %v4061 = vpack.c.b16 %v4034, %v4033
      %v4062 = vpack.c.b16 %v4036, %v4035
      %v4063 = vpack.c.b16 %v4038, %v4037
      %v4064 = vpack.c.b16 %v4040, %v4039
      %4089 = vmatprep.subr.bf16.mxu0 0
      %4090 = vmatpush1.bf16.msra.mxu0 %v4041
      %4091 = vmatprep.subr.bf16.mxu0 0
      %4092 = vmatpush1.bf16.msra.mxu0 %v4042
      %4093 = vmatprep.subr.bf16.mxu0 0
      %4094 = vmatpush1.bf16.msra.mxu0 %v4043
      %4095 = vmatprep.subr.bf16.mxu0 0
      %4096 = vmatpush1.bf16.msra.mxu0 %v4044
      %4097 = vmatprep.subr.bf16.mxu0 0
      %4098 = vmatpush1.bf16.msra.mxu0 %v4045
      %4099 = vmatprep.subr.bf16.mxu0 0
      %4100 = vmatpush1.bf16.msra.mxu0 %v4046
      %4101 = vmatprep.subr.bf16.mxu0 0
      %4102 = vmatpush1.bf16.msra.mxu0 %v4047
      %4103 = vmatprep.subr.bf16.mxu0 0
      %4104 = vmatpush1.bf16.msra.mxu0 %v4048
      %4105 = vmatprep.subr.bf16.mxu0 0
      %4106 = vmatpush1.bf16.msra.mxu0 %v4049
      %4107 = vmatprep.subr.bf16.mxu0 0
      %4108 = vmatpush1.bf16.msra.mxu0 %v4050
      %4109 = vmatprep.subr.bf16.mxu0 0
      %4110 = vmatpush1.bf16.msra.mxu0 %v4051
      %4111 = vmatprep.subr.bf16.mxu0 0
      %4112 = vmatpush1.bf16.msra.mxu0 %v4052
      %4113 = vmatprep.subr.bf16.mxu0 0
      %4114 = vmatpush1.bf16.msra.mxu0 %v4053
      %4115 = vmatprep.subr.bf16.mxu0 0
      %4116 = vmatpush1.bf16.msra.mxu0 %v4054
      %4117 = vmatprep.subr.bf16.mxu0 0
      %4118 = vmatpush1.bf16.msra.mxu0 %v4055
      %4119 = vmatprep.subr.bf16.mxu0 0
      %4120 = vmatpush1.bf16.msra.mxu0 %v4056
      %4121 = vmatprep.mubr.bf16.mxu0 %v3574
      %4122 = vmatmul.mubr.bf16.gmra.mrb[0].mxu0 %v3472
      %v4123 = vpop.f32.mrb[0].mxu0
      %v4124 = vadd.f32 0.0, %v4123
      %v4125 = vpop.f32.mrb[0].mxu0
      %v4126 = vpop.f32.mrb[0].mxu0
      %v4127 = vadd.f32 0.0, %v4126
      %v4128 = vpop.f32.mrb[0].mxu0
      %4129 = vmatprep.mubr.bf16.mxu0 %v3586
      %4130 = vmatmul.mubr.bf16.gmra.mrb[0].mxu0 %v3473
      %v4131 = vpop.f32.mrb[0].mxu0
      %v4132 = vadd.f32 0.0, %v4131
      %v4133 = vpop.f32.mrb[0].mxu0
      %v4134 = vpop.f32.mrb[0].mxu0
      %v4135 = vadd.f32 0.0, %v4134
      %v4136 = vpop.f32.mrb[0].mxu0
      %4137 = vmatprep.mubr.bf16.mxu0 %v3598
      %4138 = vmatmul.mubr.bf16.gmra.mrb[0].mxu0 %v3474
      %v4139 = vpop.f32.mrb[0].mxu0
      %v4140 = vadd.f32 0.0, %v4139
      %v4141 = vpop.f32.mrb[0].mxu0
      %v4142 = vpop.f32.mrb[0].mxu0
      %v4143 = vadd.f32 0.0, %v4142
      %v4144 = vpop.f32.mrb[0].mxu0
      %4145 = vmatprep.mubr.bf16.mxu0 %v3610
      %4146 = vmatmul.mubr.bf16.gmra.mrb[0].mxu0 %v3475
      %v4147 = vpop.f32.mrb[0].mxu0
      %v4148 = vadd.f32 0.0, %v4147
      %v4149 = vpop.f32.mrb[0].mxu0
      %v4150 = vpop.f32.mrb[0].mxu0
      %v4151 = vadd.f32 0.0, %v4150
      %v4152 = vpop.f32.mrb[0].mxu0
      %4153 = vmatprep.mubr.bf16.mxu0 %v3622
      %4154 = vmatmul.mubr.bf16.gmra.mrb[0].mxu0 %v3476
      %v4155 = vpop.f32.mrb[0].mxu0
      %v4156 = vadd.f32 0.0, %v4155
      %v4157 = vpop.f32.mrb[0].mxu0
      %v4158 = vpop.f32.mrb[0].mxu0
      %v4159 = vadd.f32 0.0, %v4158
      %v4160 = vpop.f32.mrb[0].mxu0
      %4161 = vmatprep.mubr.bf16.mxu0 %v3634
      %4162 = vmatmul.mubr.bf16.gmra.mrb[0].mxu0 %v3477
      %v4163 = vpop.f32.mrb[0].mxu0
      %v4164 = vadd.f32 0.0, %v4163
      %v4165 = vpop.f32.mrb[0].mxu0
      %v4166 = vpop.f32.mrb[0].mxu0
      %v4167 = vadd.f32 0.0, %v4166
      %v4168 = vpop.f32.mrb[0].mxu0
      %4169 = vmatprep.mubr.bf16.mxu0 %v3646
      %4170 = vmatmul.mubr.bf16.gmra.mrb[0].mxu0 %v3478
      %v4171 = vpop.f32.mrb[0].mxu0
      %v4172 = vadd.f32 0.0, %v4171
      %v4173 = vpop.f32.mrb[0].mxu0
      %v4174 = vpop.f32.mrb[0].mxu0
      %v4175 = vadd.f32 0.0, %v4174
      %v4176 = vpop.f32.mrb[0].mxu0
      %4177 = vmatprep.mubr.bf16.mxu0 %v3658
      %4178 = vmatmul.mubr.bf16.gmra.mrb[0].mxu0 %v3479
      %v4179 = vpop.f32.mrb[0].mxu0
      %v4180 = vadd.f32 0.0, %v4179
      %v4181 = vpop.f32.mrb[0].mxu0
      %v4182 = vpop.f32.mrb[0].mxu0
      %v4183 = vadd.f32 0.0, %v4182
      %v4184 = vpop.f32.mrb[0].mxu0
      %4185 = vmatprep.mubr.bf16.mxu0 %v3670
      %4186 = vmatmul.mubr.bf16.gmra.mrb[0].mxu0 %v3480
      %v4187 = vpop.f32.mrb[0].mxu0
      %v4188 = vadd.f32 0.0, %v4187
      %v4189 = vpop.f32.mrb[0].mxu0
      %v4190 = vpop.f32.mrb[0].mxu0
      %v4191 = vadd.f32 0.0, %v4190
      %v4192 = vpop.f32.mrb[0].mxu0
      %4193 = vmatprep.mubr.bf16.mxu0 %v3682
      %4194 = vmatmul.mubr.bf16.gmra.mrb[0].mxu0 %v3481
      %v4195 = vpop.f32.mrb[0].mxu0
      %v4196 = vadd.f32 0.0, %v4195
      %v4197 = vpop.f32.mrb[0].mxu0
      %v4198 = vpop.f32.mrb[0].mxu0
      %v4199 = vadd.f32 0.0, %v4198
      %v4200 = vpop.f32.mrb[0].mxu0
      %4201 = vmatprep.mubr.bf16.mxu0 %v3694
      %4202 = vmatmul.mubr.bf16.gmra.mrb[0].mxu0 %v3482
      %v4203 = vpop.f32.mrb[0].mxu0
      %v4204 = vadd.f32 0.0, %v4203
      %v4205 = vpop.f32.mrb[0].mxu0
      %v4206 = vpop.f32.mrb[0].mxu0
      %v4207 = vadd.f32 0.0, %v4206
      %v4208 = vpop.f32.mrb[0].mxu0
      %4209 = vmatprep.mubr.bf16.mxu0 %v3706
      %4210 = vmatmul.mubr.bf16.gmra.mrb[0].mxu0 %v3483
      %v4211 = vpop.f32.mrb[0].mxu0
      %v4212 = vadd.f32 0.0, %v4211
      %v4213 = vpop.f32.mrb[0].mxu0
      %v4214 = vpop.f32.mrb[0].mxu0
      %v4215 = vadd.f32 0.0, %v4214
      %v4216 = vpop.f32.mrb[0].mxu0
      %4217 = vmatprep.mubr.bf16.mxu0 %v3718
      %4218 = vmatmul.mubr.bf16.gmra.mrb[0].mxu0 %v3484
      %v4219 = vpop.f32.mrb[0].mxu0
      %v4220 = vadd.f32 0.0, %v4219
      %v4221 = vpop.f32.mrb[0].mxu0
      %v4222 = vpop.f32.mrb[0].mxu0
      %v4223 = vadd.f32 0.0, %v4222
      %v4224 = vpop.f32.mrb[0].mxu0
      %4225 = vmatprep.mubr.bf16.mxu0 %v3730
      %4226 = vmatmul.mubr.bf16.gmra.mrb[0].mxu0 %v3485
      %v4227 = vpop.f32.mrb[0].mxu0
      %v4228 = vadd.f32 0.0, %v4227
      %v4229 = vpop.f32.mrb[0].mxu0
      %v4230 = vpop.f32.mrb[0].mxu0
      %v4231 = vadd.f32 0.0, %v4230
      %v4232 = vpop.f32.mrb[0].mxu0
      %4233 = vmatprep.mubr.bf16.mxu0 %v3742
      %4234 = vmatmul.mubr.bf16.gmra.mrb[0].mxu0 %v3486
      %v4235 = vpop.f32.mrb[0].mxu0
      %v4236 = vadd.f32 0.0, %v4235
      %v4237 = vpop.f32.mrb[0].mxu0
      %v4238 = vpop.f32.mrb[0].mxu0
      %v4239 = vadd.f32 0.0, %v4238
      %v4240 = vpop.f32.mrb[0].mxu0
      %4241 = vmatprep.mubr.bf16.mxu0 %v3891
      %4242 = vmatmul.mubr.bf16.gmra.mrb[0].mxu0 %v3875
      %v4243 = vpop.f32.mrb[0].mxu0
      %v4244 = vadd.f32 0.0, %v4243
      %v4245 = vpop.f32.mrb[0].mxu0
      %v4246 = vpop.f32.mrb[0].mxu0
      %v4247 = vadd.f32 0.0, %v4246
      %v4248 = vpop.f32.mrb[0].mxu0
      %4249 = vdwg.mxu0
      %4250 = vmatprep.subr.bf16.mxu0 0
      %4251 = vmatpush1.bf16.msra.mxu0 %v4057
      %4252 = vmatprep.subr.bf16.mxu0 0
      %4253 = vmatpush1.bf16.msra.mxu0 %v4058
      %4254 = vmatprep.subr.bf16.mxu0 0
      %4255 = vmatpush1.bf16.msra.mxu0 %v4059
      %4256 = vmatprep.subr.bf16.mxu0 0
      %4257 = vmatpush1.bf16.msra.mxu0 %v4060
      %4258 = vmatprep.subr.bf16.mxu0 0
      %4259 = vmatpush1.bf16.msra.mxu0 %v4061
      %4260 = vmatprep.subr.bf16.mxu0 0
      %4261 = vmatpush1.bf16.msra.mxu0 %v4062
      %4262 = vmatprep.subr.bf16.mxu0 0
      %4263 = vmatpush1.bf16.msra.mxu0 %v4063
      %4264 = vmatprep.subr.bf16.mxu0 0
      %4265 = vmatpush1.bf16.msra.mxu0 %v4064
      %4266 = vmatprep.subr.bf16.mxu0 0
      %4267 = vmatpush1.bf16.msra.mxu0 0
      %4268 = vmatprep.subr.bf16.mxu0 0
      %4269 = vmatpush1.bf16.msra.mxu0 0
      %4270 = vmatprep.subr.bf16.mxu0 0
      %4271 = vmatpush1.bf16.msra.mxu0 0
      %4272 = vmatprep.subr.bf16.mxu0 0
      %4273 = vmatpush1.bf16.msra.mxu0 0
      %4274 = vmatprep.subr.bf16.mxu0 0
      %4275 = vmatpush1.bf16.msra.mxu0 0
      %4276 = vmatprep.subr.bf16.mxu0 0
      %4277 = vmatpush1.bf16.msra.mxu0 0
      %4278 = vmatprep.subr.bf16.mxu0 0
      %4279 = vmatpush1.bf16.msra.mxu0 0
      %4280 = vmatprep.subr.bf16.mxu0 0
      %4281 = vmatpush1.bf16.msra.mxu0 0
      %4282 = vmatprep.mubr.bf16.mxu0 0
      %4283 = vmatmul.mubr.bf16.gmra.mrb[0].mxu0 %v3764
      %v4284 = vpop.f32.mrb[0].mxu0
      %v4285 = vadd.f32 %v4124, %v4284
      %v4286 = vpop.f32.mrb[0].mxu0
      %v4287 = vpop.f32.mrb[0].mxu0
      %v4288 = vadd.f32 %v4127, %v4287
      %v4289 = vpop.f32.mrb[0].mxu0
      %4290 = vmatprep.mubr.bf16.mxu0 0
      %4291 = vmatmul.mubr.bf16.gmra.mrb[0].mxu0 %v3767
      %v4292 = vpop.f32.mrb[0].mxu0
      %v4293 = vadd.f32 %v4132, %v4292
      %v4294 = vpop.f32.mrb[0].mxu0
      %v4295 = vpop.f32.mrb[0].mxu0
      %v4296 = vadd.f32 %v4135, %v4295
      %v4297 = vpop.f32.mrb[0].mxu0
      %4298 = vmatprep.mubr.bf16.mxu0 0
      %4299 = vmatmul.mubr.bf16.gmra.mrb[0].mxu0 %v3770
      %v4300 = vpop.f32.mrb[0].mxu0
      %v4301 = vadd.f32 %v4140, %v4300
      %v4302 = vpop.f32.mrb[0].mxu0
      %v4303 = vpop.f32.mrb[0].mxu0
      %v4304 = vadd.f32 %v4143, %v4303
      %v4305 = vpop.f32.mrb[0].mxu0
      %4306 = vmatprep.mubr.bf16.mxu0 0
      %4307 = vmatmul.mubr.bf16.gmra.mrb[0].mxu0 %v3773
      %v4308 = vpop.f32.mrb[0].mxu0
      %v4309 = vadd.f32 %v4148, %v4308
      %v4310 = vpop.f32.mrb[0].mxu0
      %v4311 = vpop.f32.mrb[0].mxu0
      %v4312 = vadd.f32 %v4151, %v4311
      %v4313 = vpop.f32.mrb[0].mxu0
      %4314 = vmatprep.mubr.bf16.mxu0 0
      %4315 = vmatmul.mubr.bf16.gmra.mrb[0].mxu0 %v3776
      %v4316 = vpop.f32.mrb[0].mxu0
      %v4317 = vadd.f32 %v4156, %v4316
      %v4318 = vpop.f32.mrb[0].mxu0
      %v4319 = vpop.f32.mrb[0].mxu0
      %v4320 = vadd.f32 %v4159, %v4319
      %v4321 = vpop.f32.mrb[0].mxu0
      %4322 = vmatprep.mubr.bf16.mxu0 0
      %4323 = vmatmul.mubr.bf16.gmra.mrb[0].mxu0 %v3779
      %v4324 = vpop.f32.mrb[0].mxu0
      %v4325 = vadd.f32 %v4164, %v4324
      %v4326 = vpop.f32.mrb[0].mxu0
      %v4327 = vpop.f32.mrb[0].mxu0
      %v4328 = vadd.f32 %v4167, %v4327
      %v4329 = vpop.f32.mrb[0].mxu0
      %4330 = vmatprep.mubr.bf16.mxu0 0
      %4331 = vmatmul.mubr.bf16.gmra.mrb[0].mxu0 %v3782
      %v4332 = vpop.f32.mrb[0].mxu0
      %v4333 = vadd.f32 %v4172, %v4332
      %v4334 = vpop.f32.mrb[0].mxu0
      %v4335 = vpop.f32.mrb[0].mxu0
      %v4336 = vadd.f32 %v4175, %v4335
      %v4337 = vpop.f32.mrb[0].mxu0
      %4338 = vmatprep.mubr.bf16.mxu0 0
      %4339 = vmatmul.mubr.bf16.gmra.mrb[0].mxu0 %v3785
      %v4340 = vpop.f32.mrb[0].mxu0
      %v4341 = vadd.f32 %v4180, %v4340
      %v4342 = vpop.f32.mrb[0].mxu0
      %v4343 = vpop.f32.mrb[0].mxu0
      %v4344 = vadd.f32 %v4183, %v4343
      %v4345 = vpop.f32.mrb[0].mxu0
      %4346 = vmatprep.mubr.bf16.mxu0 0
      %4347 = vmatmul.mubr.bf16.gmra.mrb[0].mxu0 %v3788
      %v4348 = vpop.f32.mrb[0].mxu0
      %v4349 = vadd.f32 %v4188, %v4348
      %v4350 = vpop.f32.mrb[0].mxu0
      %v4351 = vpop.f32.mrb[0].mxu0
      %v4352 = vadd.f32 %v4191, %v4351
      %v4353 = vpop.f32.mrb[0].mxu0
      %4354 = vmatprep.mubr.bf16.mxu0 0
      %4355 = vmatmul.mubr.bf16.gmra.mrb[0].mxu0 %v3791
      %v4356 = vpop.f32.mrb[0].mxu0
      %v4357 = vadd.f32 %v4196, %v4356
      %v4358 = vpop.f32.mrb[0].mxu0
      %v4359 = vpop.f32.mrb[0].mxu0
      %v4360 = vadd.f32 %v4199, %v4359
      %v4361 = vpop.f32.mrb[0].mxu0
      %4362 = vmatprep.mubr.bf16.mxu0 0
      %4363 = vmatmul.mubr.bf16.gmra.mrb[0].mxu0 %v3794
      %v4364 = vpop.f32.mrb[0].mxu0
      %v4365 = vadd.f32 %v4204, %v4364
      %v4366 = vpop.f32.mrb[0].mxu0
      %v4367 = vpop.f32.mrb[0].mxu0
      %v4368 = vadd.f32 %v4207, %v4367
      %v4369 = vpop.f32.mrb[0].mxu0
      %4370 = vmatprep.mubr.bf16.mxu0 0
      %4371 = vmatmul.mubr.bf16.gmra.mrb[0].mxu0 %v3797
      %v4372 = vpop.f32.mrb[0].mxu0
      %v4373 = vadd.f32 %v4212, %v4372
      %v4374 = vpop.f32.mrb[0].mxu0
      %v4375 = vpop.f32.mrb[0].mxu0
      %v4376 = vadd.f32 %v4215, %v4375
      %v4377 = vpop.f32.mrb[0].mxu0
      %4378 = vmatprep.mubr.bf16.mxu0 0
      %4379 = vmatmul.mubr.bf16.gmra.mrb[0].mxu0 %v3800
      %v4380 = vpop.f32.mrb[0].mxu0
      %v4381 = vadd.f32 %v4220, %v4380
      %v4382 = vpop.f32.mrb[0].mxu0
      %v4383 = vpop.f32.mrb[0].mxu0
      %v4384 = vadd.f32 %v4223, %v4383
      %v4385 = vpop.f32.mrb[0].mxu0
      %4386 = vmatprep.mubr.bf16.mxu0 0
      %4387 = vmatmul.mubr.bf16.gmra.mrb[0].mxu0 %v3803
      %v4388 = vpop.f32.mrb[0].mxu0
      %v4389 = vadd.f32 %v4228, %v4388
      %v4390 = vpop.f32.mrb[0].mxu0
      %v4391 = vpop.f32.mrb[0].mxu0
      %v4392 = vadd.f32 %v4231, %v4391
      %v4393 = vpop.f32.mrb[0].mxu0
      %4394 = vmatprep.mubr.bf16.mxu0 0
      %4395 = vmatmul.mubr.bf16.gmra.mrb[0].mxu0 %v3806
      %v4396 = vpop.f32.mrb[0].mxu0
      %v4397 = vadd.f32 %v4236, %v4396
      %v4398 = vpop.f32.mrb[0].mxu0
      %v4399 = vpop.f32.mrb[0].mxu0
      %v4400 = vadd.f32 %v4239, %v4399
      %v4401 = vpop.f32.mrb[0].mxu0
      %4402 = vmatprep.mubr.bf16.mxu0 0
      %4403 = vmatmul.mubr.bf16.gmra.mrb[0].mxu0 %v3895
      %v4404 = vpop.f32.mrb[0].mxu0
      %v4405 = vadd.f32 %v4244, %v4404
      %v4406 = vpop.f32.mrb[0].mxu0
      %v4407 = vpop.f32.mrb[0].mxu0
      %v4408 = vadd.f32 %v4247, %v4407
      %v4409 = vpop.f32.mrb[0].mxu0
      %4410 = vdwg.mxu0
      %v4459 = vunpack.c.l.b16 %v3823
      %v4460 = vunpack.c.l.b16 %v3824
      %v4461 = vunpack.c.l.b16 %v3825
      %v4462 = vunpack.c.l.b16 %v3826
      %v4463 = vunpack.c.l.b16 %v3827
      %v4464 = vunpack.c.l.b16 %v3828
      %v4465 = vunpack.c.l.b16 %v3829
      %v4466 = vunpack.c.l.b16 %v3830
      %v4467 = vunpack.c.l.b16 %v3831
      %v4468 = vunpack.c.l.b16 %v3832
      %v4469 = vunpack.c.l.b16 %v3833
      %v4470 = vunpack.c.l.b16 %v3834
      %v4471 = vunpack.c.l.b16 %v3835
      %v4472 = vunpack.c.l.b16 %v3836
      %v4473 = vunpack.c.l.b16 %v3837
      %v4474 = vunpack.c.l.b16 %v3838
      %v4475 = vunpack.c.l.b16 %v3839
      %v4476 = vunpack.c.l.b16 %v3840
      %v4477 = vunpack.c.l.b16 %v3841
      %v4478 = vunpack.c.l.b16 %v3842
      %v4479 = vunpack.c.l.b16 %v3843
      %v4480 = vunpack.c.l.b16 %v3844
      %v4481 = vunpack.c.l.b16 %v3845
      %v4482 = vunpack.c.l.b16 %v3846
      %v4483 = vunpack.c.l.b16 %v3847
      %v4484 = vunpack.c.l.b16 %v3848
      %v4485 = vunpack.c.l.b16 %v3849
      %v4486 = vunpack.c.l.b16 %v3850
      %v4487 = vunpack.c.l.b16 %v3851
      %v4488 = vunpack.c.l.b16 %v3852
      %v4489 = vunpack.c.l.b16 %v3853
      %v4490 = vunpack.c.l.b16 %v3854
      %v4491 = vunpack.c.l.b16 %v3855
      %v4492 = vunpack.c.l.b16 %v3856
      %v4493 = vunpack.c.l.b16 %v3857
      %v4494 = vunpack.c.l.b16 %v3858
      %v4495 = vunpack.c.l.b16 %v3859
      %v4496 = vunpack.c.l.b16 %v3860
      %v4497 = vunpack.c.l.b16 %v3861
      %v4498 = vunpack.c.l.b16 %v3862
      %v4499 = vunpack.c.l.b16 %v3863
      %v4500 = vunpack.c.l.b16 %v3864
      %v4501 = vunpack.c.l.b16 %v3865
      %v4502 = vunpack.c.l.b16 %v3866
      %v4503 = vunpack.c.l.b16 %v3867
      %v4504 = vunpack.c.l.b16 %v3868
      %v4505 = vunpack.c.l.b16 %v3869
      %v4506 = vunpack.c.l.b16 %v3870
      %v4507 = vpack.c.b16 %v4460, %v4459
      %v4508 = vpack.c.b16 %v4462, %v4461
      %v4509 = vpack.c.b16 %v4464, %v4463
      %v4510 = vpack.c.b16 %v4466, %v4465
      %v4511 = vpack.c.b16 %v4468, %v4467
      %v4512 = vpack.c.b16 %v4470, %v4469
      %v4513 = vpack.c.b16 %v4472, %v4471
      %v4514 = vpack.c.b16 %v4474, %v4473
      %v4515 = vpack.c.b16 %v4476, %v4475
      %v4516 = vpack.c.b16 %v4478, %v4477
      %v4517 = vpack.c.b16 %v4480, %v4479
      %v4518 = vpack.c.b16 %v4482, %v4481
      %v4519 = vpack.c.b16 %v4484, %v4483
      %v4520 = vpack.c.b16 %v4486, %v4485
      %v4521 = vpack.c.b16 %v4488, %v4487
      %v4522 = vpack.c.b16 %v4490, %v4489
      %v4523 = vpack.c.b16 %v4492, %v4491
      %v4524 = vpack.c.b16 %v4494, %v4493
      %v4525 = vpack.c.b16 %v4496, %v4495
      %v4526 = vpack.c.b16 %v4498, %v4497
      %v4527 = vpack.c.b16 %v4500, %v4499
      %v4528 = vpack.c.b16 %v4502, %v4501
      %v4529 = vpack.c.b16 %v4504, %v4503
      %v4530 = vpack.c.b16 %v4506, %v4505
      %4555 = vmatprep.subr.bf16.mxu0 0
      %4556 = vmatpush1.bf16.msra.mxu0 %v4507
      %4557 = vmatprep.subr.bf16.mxu0 0
      %4558 = vmatpush1.bf16.msra.mxu0 %v4508
      %4559 = vmatprep.subr.bf16.mxu0 0
      %4560 = vmatpush1.bf16.msra.mxu0 %v4509
      %4561 = vmatprep.subr.bf16.mxu0 0
      %4562 = vmatpush1.bf16.msra.mxu0 %v4510
      %4563 = vmatprep.subr.bf16.mxu0 0
      %4564 = vmatpush1.bf16.msra.mxu0 %v4511
      %4565 = vmatprep.subr.bf16.mxu0 0
      %4566 = vmatpush1.bf16.msra.mxu0 %v4512
      %4567 = vmatprep.subr.bf16.mxu0 0
      %4568 = vmatpush1.bf16.msra.mxu0 %v4513
      %4569 = vmatprep.subr.bf16.mxu0 0
      %4570 = vmatpush1.bf16.msra.mxu0 %v4514
      %4571 = vmatprep.subr.bf16.mxu0 0
      %4572 = vmatpush1.bf16.msra.mxu0 %v4515
      %4573 = vmatprep.subr.bf16.mxu0 0
      %4574 = vmatpush1.bf16.msra.mxu0 %v4516
      %4575 = vmatprep.subr.bf16.mxu0 0
      %4576 = vmatpush1.bf16.msra.mxu0 %v4517
      %4577 = vmatprep.subr.bf16.mxu0 0
      %4578 = vmatpush1.bf16.msra.mxu0 %v4518
      %4579 = vmatprep.subr.bf16.mxu0 0
      %4580 = vmatpush1.bf16.msra.mxu0 %v4519
      %4581 = vmatprep.subr.bf16.mxu0 0
      %4582 = vmatpush1.bf16.msra.mxu0 %v4520
      %4583 = vmatprep.subr.bf16.mxu0 0
      %4584 = vmatpush1.bf16.msra.mxu0 %v4521
      %4585 = vmatprep.subr.bf16.mxu0 0
      %4586 = vmatpush1.bf16.msra.mxu0 %v4522
      %4587 = vmatprep.mubr.bf16.mxu0 %v3562
      %4588 = vmatmul.mubr.bf16.gmra.mrb[0].mxu0 %v3471
      %v4589 = vpop.f32.mrb[0].mxu0
      %v4590 = vadd.f32 %v4285, %v4589
      %v4591 = vpop.f32.mrb[0].mxu0
      %v4592 = vpop.f32.mrb[0].mxu0
      %v4593 = vadd.f32 %v4288, %v4592
      %v4594 = vpop.f32.mrb[0].mxu0
      %4595 = vmatprep.mubr.bf16.mxu0 %v3574
      %4596 = vmatmul.mubr.bf16.gmra.mrb[0].mxu0 %v3472
      %v4597 = vpop.f32.mrb[0].mxu0
      %v4598 = vadd.f32 %v4293, %v4597
      %v4599 = vpop.f32.mrb[0].mxu0
      %v4600 = vpop.f32.mrb[0].mxu0
      %v4601 = vadd.f32 %v4296, %v4600
      %v4602 = vpop.f32.mrb[0].mxu0
      %4603 = vmatprep.mubr.bf16.mxu0 %v3586
      %4604 = vmatmul.mubr.bf16.gmra.mrb[0].mxu0 %v3473
      %v4605 = vpop.f32.mrb[0].mxu0
      %v4606 = vadd.f32 %v4301, %v4605
      %v4607 = vpop.f32.mrb[0].mxu0
      %v4608 = vpop.f32.mrb[0].mxu0
      %v4609 = vadd.f32 %v4304, %v4608
      %v4610 = vpop.f32.mrb[0].mxu0
      %4611 = vmatprep.mubr.bf16.mxu0 %v3598
      %4612 = vmatmul.mubr.bf16.gmra.mrb[0].mxu0 %v3474
      %v4613 = vpop.f32.mrb[0].mxu0
      %v4614 = vadd.f32 %v4309, %v4613
      %v4615 = vpop.f32.mrb[0].mxu0
      %v4616 = vpop.f32.mrb[0].mxu0
      %v4617 = vadd.f32 %v4312, %v4616
      %v4618 = vpop.f32.mrb[0].mxu0
      %4619 = vmatprep.mubr.bf16.mxu0 %v3610
      %4620 = vmatmul.mubr.bf16.gmra.mrb[0].mxu0 %v3475
      %v4621 = vpop.f32.mrb[0].mxu0
      %v4622 = vadd.f32 %v4317, %v4621
      %v4623 = vpop.f32.mrb[0].mxu0
      %v4624 = vpop.f32.mrb[0].mxu0
      %v4625 = vadd.f32 %v4320, %v4624
      %v4626 = vpop.f32.mrb[0].mxu0
      %4627 = vmatprep.mubr.bf16.mxu0 %v3622
      %4628 = vmatmul.mubr.bf16.gmra.mrb[0].mxu0 %v3476
      %v4629 = vpop.f32.mrb[0].mxu0
      %v4630 = vadd.f32 %v4325, %v4629
      %v4631 = vpop.f32.mrb[0].mxu0
      %v4632 = vpop.f32.mrb[0].mxu0
      %v4633 = vadd.f32 %v4328, %v4632
      %v4634 = vpop.f32.mrb[0].mxu0
      %4635 = vmatprep.mubr.bf16.mxu0 %v3634
      %4636 = vmatmul.mubr.bf16.gmra.mrb[0].mxu0 %v3477
      %v4637 = vpop.f32.mrb[0].mxu0
      %v4638 = vadd.f32 %v4333, %v4637
      %v4639 = vpop.f32.mrb[0].mxu0
      %v4640 = vpop.f32.mrb[0].mxu0
      %v4641 = vadd.f32 %v4336, %v4640
      %v4642 = vpop.f32.mrb[0].mxu0
      %4643 = vmatprep.mubr.bf16.mxu0 %v3646
      %4644 = vmatmul.mubr.bf16.gmra.mrb[0].mxu0 %v3478
      %v4645 = vpop.f32.mrb[0].mxu0
      %v4646 = vadd.f32 %v4341, %v4645
      %v4647 = vpop.f32.mrb[0].mxu0
      %v4648 = vpop.f32.mrb[0].mxu0
      %v4649 = vadd.f32 %v4344, %v4648
      %v4650 = vpop.f32.mrb[0].mxu0
      %4651 = vmatprep.mubr.bf16.mxu0 %v3658
      %4652 = vmatmul.mubr.bf16.gmra.mrb[0].mxu0 %v3479
      %v4653 = vpop.f32.mrb[0].mxu0
      %v4654 = vadd.f32 %v4349, %v4653
      %v4655 = vpop.f32.mrb[0].mxu0
      %v4656 = vpop.f32.mrb[0].mxu0
      %v4657 = vadd.f32 %v4352, %v4656
      %v4658 = vpop.f32.mrb[0].mxu0
      %4659 = vmatprep.mubr.bf16.mxu0 %v3670
      %4660 = vmatmul.mubr.bf16.gmra.mrb[0].mxu0 %v3480
      %v4661 = vpop.f32.mrb[0].mxu0
      %v4662 = vadd.f32 %v4357, %v4661
      %v4663 = vpop.f32.mrb[0].mxu0
      %v4664 = vpop.f32.mrb[0].mxu0
      %v4665 = vadd.f32 %v4360, %v4664
      %v4666 = vpop.f32.mrb[0].mxu0
      %4667 = vmatprep.mubr.bf16.mxu0 %v3682
      %4668 = vmatmul.mubr.bf16.gmra.mrb[0].mxu0 %v3481
      %v4669 = vpop.f32.mrb[0].mxu0
      %v4670 = vadd.f32 %v4365, %v4669
      %v4671 = vpop.f32.mrb[0].mxu0
      %v4672 = vpop.f32.mrb[0].mxu0
      %v4673 = vadd.f32 %v4368, %v4672
      %v4674 = vpop.f32.mrb[0].mxu0
      %4675 = vmatprep.mubr.bf16.mxu0 %v3694
      %4676 = vmatmul.mubr.bf16.gmra.mrb[0].mxu0 %v3482
      %v4677 = vpop.f32.mrb[0].mxu0
      %v4678 = vadd.f32 %v4373, %v4677
      %v4679 = vpop.f32.mrb[0].mxu0
      %v4680 = vpop.f32.mrb[0].mxu0
      %v4681 = vadd.f32 %v4376, %v4680
      %v4682 = vpop.f32.mrb[0].mxu0
      %4683 = vmatprep.mubr.bf16.mxu0 %v3706
      %4684 = vmatmul.mubr.bf16.gmra.mrb[0].mxu0 %v3483
      %v4685 = vpop.f32.mrb[0].mxu0
      %v4686 = vadd.f32 %v4381, %v4685
      %v4687 = vpop.f32.mrb[0].mxu0
      %v4688 = vpop.f32.mrb[0].mxu0
      %v4689 = vadd.f32 %v4384, %v4688
      %v4690 = vpop.f32.mrb[0].mxu0
      %4691 = vmatprep.mubr.bf16.mxu0 %v3718
      %4692 = vmatmul.mubr.bf16.gmra.mrb[0].mxu0 %v3484
      %v4693 = vpop.f32.mrb[0].mxu0
      %v4694 = vadd.f32 %v4389, %v4693
      %v4695 = vpop.f32.mrb[0].mxu0
      %v4696 = vpop.f32.mrb[0].mxu0
      %v4697 = vadd.f32 %v4392, %v4696
      %v4698 = vpop.f32.mrb[0].mxu0
      %4699 = vmatprep.mubr.bf16.mxu0 %v3730
      %4700 = vmatmul.mubr.bf16.gmra.mrb[0].mxu0 %v3485
      %v4701 = vpop.f32.mrb[0].mxu0
      %v4702 = vadd.f32 %v4397, %v4701
      %v4703 = vpop.f32.mrb[0].mxu0
      %v4704 = vpop.f32.mrb[0].mxu0
      %v4705 = vadd.f32 %v4400, %v4704
      %v4706 = vpop.f32.mrb[0].mxu0
      %4707 = vmatprep.mubr.bf16.mxu0 %v3742
      %4708 = vmatmul.mubr.bf16.gmra.mrb[0].mxu0 %v3486
      %v4709 = vpop.f32.mrb[0].mxu0
      %v4710 = vadd.f32 %v4405, %v4709
      %v4711 = vpop.f32.mrb[0].mxu0
      %v4712 = vpop.f32.mrb[0].mxu0
      %v4713 = vadd.f32 %v4408, %v4712
      %v4714 = vpop.f32.mrb[0].mxu0
      %4715 = vdwg.mxu0
      %4716 = vmatprep.subr.bf16.mxu0 0
      %4717 = vmatpush1.bf16.msra.mxu0 %v4523
      %4718 = vmatprep.subr.bf16.mxu0 0
      %4719 = vmatpush1.bf16.msra.mxu0 %v4524
      %4720 = vmatprep.subr.bf16.mxu0 0
      %4721 = vmatpush1.bf16.msra.mxu0 %v4525
      %4722 = vmatprep.subr.bf16.mxu0 0
      %4723 = vmatpush1.bf16.msra.mxu0 %v4526
      %4724 = vmatprep.subr.bf16.mxu0 0
      %4725 = vmatpush1.bf16.msra.mxu0 %v4527
      %4726 = vmatprep.subr.bf16.mxu0 0
      %4727 = vmatpush1.bf16.msra.mxu0 %v4528
      %4728 = vmatprep.subr.bf16.mxu0 0
      %4729 = vmatpush1.bf16.msra.mxu0 %v4529
      %4730 = vmatprep.subr.bf16.mxu0 0
      %4731 = vmatpush1.bf16.msra.mxu0 %v4530
      %4732 = vmatprep.subr.bf16.mxu0 0
      %4733 = vmatpush1.bf16.msra.mxu0 0
      %4734 = vmatprep.subr.bf16.mxu0 0
      %4735 = vmatpush1.bf16.msra.mxu0 0
      %4736 = vmatprep.subr.bf16.mxu0 0
      %4737 = vmatpush1.bf16.msra.mxu0 0
      %4738 = vmatprep.subr.bf16.mxu0 0
      %4739 = vmatpush1.bf16.msra.mxu0 0
      %4740 = vmatprep.subr.bf16.mxu0 0
      %4741 = vmatpush1.bf16.msra.mxu0 0
      %4742 = vmatprep.subr.bf16.mxu0 0
      %4743 = vmatpush1.bf16.msra.mxu0 0
      %4744 = vmatprep.subr.bf16.mxu0 0
      %4745 = vmatpush1.bf16.msra.mxu0 0
      %4746 = vmatprep.subr.bf16.mxu0 0
      %4747 = vmatpush1.bf16.msra.mxu0 0
      %4748 = vmatprep.mubr.bf16.mxu0 0
      %4749 = vmatmul.mubr.bf16.gmra.mrb[0].mxu0 %v3761
      %v4750 = vpop.f32.mrb[0].mxu0
      %v4751 = vadd.f32 %v4590, %v4750
      %v4752 = vpop.f32.mrb[0].mxu0
      %v4753 = vpop.f32.mrb[0].mxu0
      %v4754 = vadd.f32 %v4593, %v4753
      %v4755 = vpop.f32.mrb[0].mxu0
      %4756 = vmatprep.mubr.bf16.mxu0 0
      %4757 = vmatmul.mubr.bf16.gmra.mrb[0].mxu0 %v3764
      %v4758 = vpop.f32.mrb[0].mxu0
      %v4759 = vadd.f32 %v4598, %v4758
      %v4760 = vpop.f32.mrb[0].mxu0
      %v4761 = vpop.f32.mrb[0].mxu0
      %v4762 = vadd.f32 %v4601, %v4761
      %v4763 = vpop.f32.mrb[0].mxu0
      %4764 = vmatprep.mubr.bf16.mxu0 0
      %4765 = vmatmul.mubr.bf16.gmra.mrb[0].mxu0 %v3767
      %v4766 = vpop.f32.mrb[0].mxu0
      %v4767 = vadd.f32 %v4606, %v4766
      %v4768 = vpop.f32.mrb[0].mxu0
      %v4769 = vpop.f32.mrb[0].mxu0
      %v4770 = vadd.f32 %v4609, %v4769
      %v4771 = vpop.f32.mrb[0].mxu0
      %4772 = vmatprep.mubr.bf16.mxu0 0
      %4773 = vmatmul.mubr.bf16.gmra.mrb[0].mxu0 %v3770
      %v4774 = vpop.f32.mrb[0].mxu0
      %v4775 = vadd.f32 %v4614, %v4774
      %v4776 = vpop.f32.mrb[0].mxu0
      %v4777 = vpop.f32.mrb[0].mxu0
      %v4778 = vadd.f32 %v4617, %v4777
      %v4779 = vpop.f32.mrb[0].mxu0
      %4780 = vmatprep.mubr.bf16.mxu0 0
      %4781 = vmatmul.mubr.bf16.gmra.mrb[0].mxu0 %v3773
      %v4782 = vpop.f32.mrb[0].mxu0
      %v4783 = vadd.f32 %v4622, %v4782
      %v4784 = vpop.f32.mrb[0].mxu0
      %v4785 = vpop.f32.mrb[0].mxu0
      %v4786 = vadd.f32 %v4625, %v4785
      %v4787 = vpop.f32.mrb[0].mxu0
      %4788 = vmatprep.mubr.bf16.mxu0 0
      %4789 = vmatmul.mubr.bf16.gmra.mrb[0].mxu0 %v3776
      %v4790 = vpop.f32.mrb[0].mxu0
      %v4791 = vadd.f32 %v4630, %v4790
      %v4792 = vpop.f32.mrb[0].mxu0
      %v4793 = vpop.f32.mrb[0].mxu0
      %v4794 = vadd.f32 %v4633, %v4793
      %v4795 = vpop.f32.mrb[0].mxu0
      %4796 = vmatprep.mubr.bf16.mxu0 0
      %4797 = vmatmul.mubr.bf16.gmra.mrb[0].mxu0 %v3779
      %v4798 = vpop.f32.mrb[0].mxu0
      %v4799 = vadd.f32 %v4638, %v4798
      %v4800 = vpop.f32.mrb[0].mxu0
      %v4801 = vpop.f32.mrb[0].mxu0
      %v4802 = vadd.f32 %v4641, %v4801
      %v4803 = vpop.f32.mrb[0].mxu0
      %4804 = vmatprep.mubr.bf16.mxu0 0
      %4805 = vmatmul.mubr.bf16.gmra.mrb[0].mxu0 %v3782
      %v4806 = vpop.f32.mrb[0].mxu0
      %v4807 = vadd.f32 %v4646, %v4806
      %v4808 = vpop.f32.mrb[0].mxu0
      %v4809 = vpop.f32.mrb[0].mxu0
      %v4810 = vadd.f32 %v4649, %v4809
      %v4811 = vpop.f32.mrb[0].mxu0
      %4812 = vmatprep.mubr.bf16.mxu0 0
      %4813 = vmatmul.mubr.bf16.gmra.mrb[0].mxu0 %v3785
      %v4814 = vpop.f32.mrb[0].mxu0
      %v4815 = vadd.f32 %v4654, %v4814
      %v4816 = vpop.f32.mrb[0].mxu0
      %v4817 = vpop.f32.mrb[0].mxu0
      %v4818 = vadd.f32 %v4657, %v4817
      %v4819 = vpop.f32.mrb[0].mxu0
      %4820 = vmatprep.mubr.bf16.mxu0 0
      %4821 = vmatmul.mubr.bf16.gmra.mrb[0].mxu0 %v3788
      %v4822 = vpop.f32.mrb[0].mxu0
      %v4823 = vadd.f32 %v4662, %v4822
      %v4824 = vpop.f32.mrb[0].mxu0
      %v4825 = vpop.f32.mrb[0].mxu0
      %v4826 = vadd.f32 %v4665, %v4825
      %v4827 = vpop.f32.mrb[0].mxu0
      %4828 = vmatprep.mubr.bf16.mxu0 0
      %4829 = vmatmul.mubr.bf16.gmra.mrb[0].mxu0 %v3791
      %v4830 = vpop.f32.mrb[0].mxu0
      %v4831 = vadd.f32 %v4670, %v4830
      %v4832 = vpop.f32.mrb[0].mxu0
      %v4833 = vpop.f32.mrb[0].mxu0
      %v4834 = vadd.f32 %v4673, %v4833
      %v4835 = vpop.f32.mrb[0].mxu0
      %4836 = vmatprep.mubr.bf16.mxu0 0
      %4837 = vmatmul.mubr.bf16.gmra.mrb[0].mxu0 %v3794
      %v4838 = vpop.f32.mrb[0].mxu0
      %v4839 = vadd.f32 %v4678, %v4838
      %v4840 = vpop.f32.mrb[0].mxu0
      %v4841 = vpop.f32.mrb[0].mxu0
      %v4842 = vadd.f32 %v4681, %v4841
      %v4843 = vpop.f32.mrb[0].mxu0
      %4844 = vmatprep.mubr.bf16.mxu0 0
      %4845 = vmatmul.mubr.bf16.gmra.mrb[0].mxu0 %v3797
      %v4846 = vpop.f32.mrb[0].mxu0
      %v4847 = vadd.f32 %v4686, %v4846
      %v4848 = vpop.f32.mrb[0].mxu0
      %v4849 = vpop.f32.mrb[0].mxu0
      %v4850 = vadd.f32 %v4689, %v4849
      %v4851 = vpop.f32.mrb[0].mxu0
      %4852 = vmatprep.mubr.bf16.mxu0 0
      %4853 = vmatmul.mubr.bf16.gmra.mrb[0].mxu0 %v3800
      %v4854 = vpop.f32.mrb[0].mxu0
      %v4855 = vadd.f32 %v4694, %v4854
      %v4856 = vpop.f32.mrb[0].mxu0
      %v4857 = vpop.f32.mrb[0].mxu0
      %v4858 = vadd.f32 %v4697, %v4857
      %v4859 = vpop.f32.mrb[0].mxu0
      %4860 = vmatprep.mubr.bf16.mxu0 0
      %4861 = vmatmul.mubr.bf16.gmra.mrb[0].mxu0 %v3803
      %v4862 = vpop.f32.mrb[0].mxu0
      %v4863 = vadd.f32 %v4702, %v4862
      %v4864 = vpop.f32.mrb[0].mxu0
      %v4865 = vpop.f32.mrb[0].mxu0
      %v4866 = vadd.f32 %v4705, %v4865
      %v4867 = vpop.f32.mrb[0].mxu0
      %4868 = vmatprep.mubr.bf16.mxu0 0
      %4869 = vmatmul.mubr.bf16.gmra.mrb[0].mxu0 %v3806
      %v4870 = vpop.f32.mrb[0].mxu0
      %v4871 = vadd.f32 %v4710, %v4870
      %v4872 = vpop.f32.mrb[0].mxu0
      %v4873 = vpop.f32.mrb[0].mxu0
      %v4874 = vadd.f32 %v4713, %v4873
      %v4875 = vpop.f32.mrb[0].mxu0
      %4876 = vdwg.mxu0
      %v4879 = vunpack.c.l.b16 %v3404
      %v4880 = vunpack.c.l.b16 %v3405
      %v4881 = vpack.c.b16 %v4880, %v4879
      %v4884 = vunpack.c.l.b16 %v3406
      %v4885 = vpack.c.b16 %v4884, %v4884
      %v4887 = vshrl.u32 %v4881, 16
      %v4889 = vshll.u32 %v4881, 16
      %v4891 = vrot.slane %v4889, 1
      %v4892 = vor.u32 %v4887, %v4891
      %v4894 = vshll.u32 %v4885, 16
      %v4896 = vrot.slane %v4894, 1
      %v4897 = vsel %vm741, %v4892, %v4896
      %v4899 = vrot.slane %v4881, 1
      %v4900 = vrot.slane %v4885, 1
      %v4901 = vsel %vm950, %v4899, %v4900
      %v4903 = vld [vmem:[%s2096] sm:$0xf]
      %v4904 = vld [vmem:[%s2096 + $0x4] sm:$0xf]
      %v4905 = vld [vmem:[%s2096 + $0x8] sm:$0xf]
      %v4906 = vld [vmem:[%s2096 + $0xc] sm:$0xf]
      %v4907 = vld [vmem:[%s2096 + $0x10] sm:$0xf]
      %v4908 = vld [vmem:[%s2096 + $0x14] sm:$0xf]
      %v4909 = vld [vmem:[%s2096 + $0x18] sm:$0xf]
      %v4910 = vld [vmem:[%s2096 + $0x1c] sm:$0xf]
      %v4911 = vld [vmem:[%s2096 + $0x20] sm:$0xf]
      %v4912 = vld [vmem:[%s2096 + $0x24] sm:$0xf]
      %v4913 = vld [vmem:[%s2096 + $0x28] sm:$0xf]
      %v4914 = vld [vmem:[%s2096 + $0x2c] sm:$0xf]
      %v4915 = vld [vmem:[%s2096 + $0x30] sm:$0xf]
      %v4916 = vld [vmem:[%s2096 + $0x34] sm:$0xf]
      %v4917 = vld [vmem:[%s2096 + $0x38] sm:$0xf]
      %v4918 = vld [vmem:[%s2096 + $0x3c] sm:$0xf]
      %v4919 = vld [vmem:[%s2096 + $0x40] sm:$0xf]
      %v4920 = vld [vmem:[%s2096 + $0x44] sm:$0xf]
      %v4921 = vld [vmem:[%s2096 + $0x48] sm:$0xf]
      %v4922 = vld [vmem:[%s2096 + $0x4c] sm:$0xf]
      %v4923 = vld [vmem:[%s2096 + $0x50] sm:$0xf]
      %v4924 = vld [vmem:[%s2096 + $0x54] sm:$0xf]
      %v4925 = vld [vmem:[%s2096 + $0x58] sm:$0xf]
      %v4926 = vld [vmem:[%s2096 + $0x5c] sm:$0xf]
      %v4927 = vld [vmem:[%s2096 + $0x60] sm:$0xf]
      %v4928 = vld [vmem:[%s2096 + $0x64] sm:$0xf]
      %v4929 = vld [vmem:[%s2096 + $0x68] sm:$0xf]
      %v4930 = vld [vmem:[%s2096 + $0x6c] sm:$0xf]
      %v4931 = vld [vmem:[%s2096 + $0x70] sm:$0xf]
      %v4932 = vld [vmem:[%s2096 + $0x74] sm:$0xf]
      %v4933 = vld [vmem:[%s2096 + $0x78] sm:$0xf]
      %v4934 = vld [vmem:[%s2096 + $0x7c] sm:$0xf]
      %v4935 = vld [vmem:[%s2096 + $0x80] sm:$0xf]
      %v4936 = vld [vmem:[%s2096 + $0x84] sm:$0xf]
      %v4937 = vld [vmem:[%s2096 + $0x88] sm:$0xf]
      %v4938 = vld [vmem:[%s2096 + $0x8c] sm:$0xf]
      %v4939 = vld [vmem:[%s2096 + $0x90] sm:$0xf]
      %v4940 = vld [vmem:[%s2096 + $0x94] sm:$0xf]
      %v4941 = vld [vmem:[%s2096 + $0x98] sm:$0xf]
      %v4942 = vld [vmem:[%s2096 + $0x9c] sm:$0xf]
      %v4943 = vld [vmem:[%s2096 + $0xa0] sm:$0xf]
      %v4944 = vld [vmem:[%s2096 + $0xa4] sm:$0xf]
      %v4945 = vld [vmem:[%s2096 + $0xa8] sm:$0xf]
      %v4946 = vld [vmem:[%s2096 + $0xac] sm:$0xf]
      %v4947 = vld [vmem:[%s2096 + $0xb0] sm:$0xf]
      %v4948 = vld [vmem:[%s2096 + $0xb4] sm:$0xf]
      %v4949 = vld [vmem:[%s2096 + $0xb8] sm:$0xf]
      %v4950 = vld [vmem:[%s2096 + $0xbc] sm:$0xf]
      %v4999 = vunpack.c.l.b16 %v4903
      %v5000 = vunpack.c.l.b16 %v4904
      %v5001 = vunpack.c.l.b16 %v4905
      %v5002 = vunpack.c.l.b16 %v4906
      %v5003 = vunpack.c.l.b16 %v4907
      %v5004 = vunpack.c.l.b16 %v4908
      %v5005 = vunpack.c.l.b16 %v4909
      %v5006 = vunpack.c.l.b16 %v4910
      %v5007 = vunpack.c.l.b16 %v4911
      %v5008 = vunpack.c.l.b16 %v4912
      %v5009 = vunpack.c.l.b16 %v4913
      %v5010 = vunpack.c.l.b16 %v4914
      %v5011 = vunpack.c.l.b16 %v4915
      %v5012 = vunpack.c.l.b16 %v4916
      %v5013 = vunpack.c.l.b16 %v4917
      %v5014 = vunpack.c.l.b16 %v4918
      %v5015 = vunpack.c.l.b16 %v4919
      %v5016 = vunpack.c.l.b16 %v4920
      %v5017 = vunpack.c.l.b16 %v4921
      %v5018 = vunpack.c.l.b16 %v4922
      %v5019 = vunpack.c.l.b16 %v4923
      %v5020 = vunpack.c.l.b16 %v4924
      %v5021 = vunpack.c.l.b16 %v4925
      %v5022 = vunpack.c.l.b16 %v4926
      %v5023 = vunpack.c.l.b16 %v4927
      %v5024 = vunpack.c.l.b16 %v4928
      %v5025 = vunpack.c.l.b16 %v4929
      %v5026 = vunpack.c.l.b16 %v4930
      %v5027 = vunpack.c.l.b16 %v4931
      %v5028 = vunpack.c.l.b16 %v4932
      %v5029 = vunpack.c.l.b16 %v4933
      %v5030 = vunpack.c.l.b16 %v4934
      %v5031 = vunpack.c.l.b16 %v4935
      %v5032 = vunpack.c.l.b16 %v4936
      %v5033 = vunpack.c.l.b16 %v4937
      %v5034 = vunpack.c.l.b16 %v4938
      %v5035 = vunpack.c.l.b16 %v4939
      %v5036 = vunpack.c.l.b16 %v4940
      %v5037 = vunpack.c.l.b16 %v4941
      %v5038 = vunpack.c.l.b16 %v4942
      %v5039 = vunpack.c.l.b16 %v4943
      %v5040 = vunpack.c.l.b16 %v4944
      %v5041 = vunpack.c.l.b16 %v4945
      %v5042 = vunpack.c.l.b16 %v4946
      %v5043 = vunpack.c.l.b16 %v4947
      %v5044 = vunpack.c.l.b16 %v4948
      %v5045 = vunpack.c.l.b16 %v4949
      %v5046 = vunpack.c.l.b16 %v4950
      %v5047 = vpack.c.b16 %v5000, %v4999
      %v5048 = vpack.c.b16 %v5002, %v5001
      %v5049 = vpack.c.b16 %v5004, %v5003
      %v5050 = vpack.c.b16 %v5006, %v5005
      %v5051 = vpack.c.b16 %v5008, %v5007
      %v5052 = vpack.c.b16 %v5010, %v5009
      %v5053 = vpack.c.b16 %v5012, %v5011
      %v5054 = vpack.c.b16 %v5014, %v5013
      %v5055 = vpack.c.b16 %v5016, %v5015
      %v5056 = vpack.c.b16 %v5018, %v5017
      %v5057 = vpack.c.b16 %v5020, %v5019
      %v5058 = vpack.c.b16 %v5022, %v5021
      %v5059 = vpack.c.b16 %v5024, %v5023
      %v5060 = vpack.c.b16 %v5026, %v5025
      %v5061 = vpack.c.b16 %v5028, %v5027
      %v5062 = vpack.c.b16 %v5030, %v5029
      %v5063 = vpack.c.b16 %v5032, %v5031
      %v5064 = vpack.c.b16 %v5034, %v5033
      %v5065 = vpack.c.b16 %v5036, %v5035
      %v5066 = vpack.c.b16 %v5038, %v5037
      %v5067 = vpack.c.b16 %v5040, %v5039
      %v5068 = vpack.c.b16 %v5042, %v5041
      %v5069 = vpack.c.b16 %v5044, %v5043
      %v5070 = vpack.c.b16 %v5046, %v5045
      %5095 = vmatprep.subr.bf16.mxu0 0
      %5096 = vmatpush1.bf16.msra.mxu0 %v5047
      %5097 = vmatprep.subr.bf16.mxu0 0
      %5098 = vmatpush1.bf16.msra.mxu0 %v5048
      %5099 = vmatprep.subr.bf16.mxu0 0
      %5100 = vmatpush1.bf16.msra.mxu0 %v5049
      %5101 = vmatprep.subr.bf16.mxu0 0
      %5102 = vmatpush1.bf16.msra.mxu0 %v5050
      %5103 = vmatprep.subr.bf16.mxu0 0
      %5104 = vmatpush1.bf16.msra.mxu0 %v5051
      %5105 = vmatprep.subr.bf16.mxu0 0
      %5106 = vmatpush1.bf16.msra.mxu0 %v5052
      %5107 = vmatprep.subr.bf16.mxu0 0
      %5108 = vmatpush1.bf16.msra.mxu0 %v5053
      %5109 = vmatprep.subr.bf16.mxu0 0
      %5110 = vmatpush1.bf16.msra.mxu0 %v5054
      %5111 = vmatprep.subr.bf16.mxu0 0
      %5112 = vmatpush1.bf16.msra.mxu0 %v5055
      %5113 = vmatprep.subr.bf16.mxu0 0
      %5114 = vmatpush1.bf16.msra.mxu0 %v5056
      %5115 = vmatprep.subr.bf16.mxu0 0
      %5116 = vmatpush1.bf16.msra.mxu0 %v5057
      %5117 = vmatprep.subr.bf16.mxu0 0
      %5118 = vmatpush1.bf16.msra.mxu0 %v5058
      %5119 = vmatprep.subr.bf16.mxu0 0
      %5120 = vmatpush1.bf16.msra.mxu0 %v5059
      %5121 = vmatprep.subr.bf16.mxu0 0
      %5122 = vmatpush1.bf16.msra.mxu0 %v5060
      %5123 = vmatprep.subr.bf16.mxu0 0
      %5124 = vmatpush1.bf16.msra.mxu0 %v5061
      %5125 = vmatprep.subr.bf16.mxu0 0
      %5126 = vmatpush1.bf16.msra.mxu0 %v5062
      %5127 = vmatprep.mubr.bf16.mxu0 %v3586
      %5128 = vmatmul.mubr.bf16.gmra.mrb[0].mxu0 %v3473
      %v5129 = vpop.f32.mrb[0].mxu0
      %v5130 = vadd.f32 0.0, %v5129
      %v5131 = vpop.f32.mrb[0].mxu0
      %v5132 = vpop.f32.mrb[0].mxu0
      %v5133 = vadd.f32 0.0, %v5132
      %v5134 = vpop.f32.mrb[0].mxu0
      %5135 = vmatprep.mubr.bf16.mxu0 %v3598
      %5136 = vmatmul.mubr.bf16.gmra.mrb[0].mxu0 %v3474
      %v5137 = vpop.f32.mrb[0].mxu0
      %v5138 = vadd.f32 0.0, %v5137
      %v5139 = vpop.f32.mrb[0].mxu0
      %v5140 = vpop.f32.mrb[0].mxu0
      %v5141 = vadd.f32 0.0, %v5140
      %v5142 = vpop.f32.mrb[0].mxu0
      %5143 = vmatprep.mubr.bf16.mxu0 %v3610
      %5144 = vmatmul.mubr.bf16.gmra.mrb[0].mxu0 %v3475
      %v5145 = vpop.f32.mrb[0].mxu0
      %v5146 = vadd.f32 0.0, %v5145
      %v5147 = vpop.f32.mrb[0].mxu0
      %v5148 = vpop.f32.mrb[0].mxu0
      %v5149 = vadd.f32 0.0, %v5148
      %v5150 = vpop.f32.mrb[0].mxu0
      %5151 = vmatprep.mubr.bf16.mxu0 %v3622
      %5152 = vmatmul.mubr.bf16.gmra.mrb[0].mxu0 %v3476
      %v5153 = vpop.f32.mrb[0].mxu0
      %v5154 = vadd.f32 0.0, %v5153
      %v5155 = vpop.f32.mrb[0].mxu0
      %v5156 = vpop.f32.mrb[0].mxu0
      %v5157 = vadd.f32 0.0, %v5156
      %v5158 = vpop.f32.mrb[0].mxu0
      %5159 = vmatprep.mubr.bf16.mxu0 %v3634
      %5160 = vmatmul.mubr.bf16.gmra.mrb[0].mxu0 %v3477
      %v5161 = vpop.f32.mrb[0].mxu0
      %v5162 = vadd.f32 0.0, %v5161
      %v5163 = vpop.f32.mrb[0].mxu0
      %v5164 = vpop.f32.mrb[0].mxu0
      %v5165 = vadd.f32 0.0, %v5164
      %v5166 = vpop.f32.mrb[0].mxu0
      %5167 = vmatprep.mubr.bf16.mxu0 %v3646
      %5168 = vmatmul.mubr.bf16.gmra.mrb[0].mxu0 %v3478
      %v5169 = vpop.f32.mrb[0].mxu0
      %v5170 = vadd.f32 0.0, %v5169
      %v5171 = vpop.f32.mrb[0].mxu0
      %v5172 = vpop.f32.mrb[0].mxu0
      %v5173 = vadd.f32 0.0, %v5172
      %v5174 = vpop.f32.mrb[0].mxu0
      %5175 = vmatprep.mubr.bf16.mxu0 %v3658
      %5176 = vmatmul.mubr.bf16.gmra.mrb[0].mxu0 %v3479
      %v5177 = vpop.f32.mrb[0].mxu0
      %v5178 = vadd.f32 0.0, %v5177
      %v5179 = vpop.f32.mrb[0].mxu0
      %v5180 = vpop.f32.mrb[0].mxu0
      %v5181 = vadd.f32 0.0, %v5180
      %v5182 = vpop.f32.mrb[0].mxu0
      %5183 = vmatprep.mubr.bf16.mxu0 %v3670
      %5184 = vmatmul.mubr.bf16.gmra.mrb[0].mxu0 %v3480
      %v5185 = vpop.f32.mrb[0].mxu0
      %v5186 = vadd.f32 0.0, %v5185
      %v5187 = vpop.f32.mrb[0].mxu0
      %v5188 = vpop.f32.mrb[0].mxu0
      %v5189 = vadd.f32 0.0, %v5188
      %v5190 = vpop.f32.mrb[0].mxu0
      %5191 = vmatprep.mubr.bf16.mxu0 %v3682
      %5192 = vmatmul.mubr.bf16.gmra.mrb[0].mxu0 %v3481
      %v5193 = vpop.f32.mrb[0].mxu0
      %v5194 = vadd.f32 0.0, %v5193
      %v5195 = vpop.f32.mrb[0].mxu0
      %v5196 = vpop.f32.mrb[0].mxu0
      %v5197 = vadd.f32 0.0, %v5196
      %v5198 = vpop.f32.mrb[0].mxu0
      %5199 = vmatprep.mubr.bf16.mxu0 %v3694
      %5200 = vmatmul.mubr.bf16.gmra.mrb[0].mxu0 %v3482
      %v5201 = vpop.f32.mrb[0].mxu0
      %v5202 = vadd.f32 0.0, %v5201
      %v5203 = vpop.f32.mrb[0].mxu0
      %v5204 = vpop.f32.mrb[0].mxu0
      %v5205 = vadd.f32 0.0, %v5204
      %v5206 = vpop.f32.mrb[0].mxu0
      %5207 = vmatprep.mubr.bf16.mxu0 %v3706
      %5208 = vmatmul.mubr.bf16.gmra.mrb[0].mxu0 %v3483
      %v5209 = vpop.f32.mrb[0].mxu0
      %v5210 = vadd.f32 0.0, %v5209
      %v5211 = vpop.f32.mrb[0].mxu0
      %v5212 = vpop.f32.mrb[0].mxu0
      %v5213 = vadd.f32 0.0, %v5212
      %v5214 = vpop.f32.mrb[0].mxu0
      %5215 = vmatprep.mubr.bf16.mxu0 %v3718
      %5216 = vmatmul.mubr.bf16.gmra.mrb[0].mxu0 %v3484
      %v5217 = vpop.f32.mrb[0].mxu0
      %v5218 = vadd.f32 0.0, %v5217
      %v5219 = vpop.f32.mrb[0].mxu0
      %v5220 = vpop.f32.mrb[0].mxu0
      %v5221 = vadd.f32 0.0, %v5220
      %v5222 = vpop.f32.mrb[0].mxu0
      %5223 = vmatprep.mubr.bf16.mxu0 %v3730
      %5224 = vmatmul.mubr.bf16.gmra.mrb[0].mxu0 %v3485
      %v5225 = vpop.f32.mrb[0].mxu0
      %v5226 = vadd.f32 0.0, %v5225
      %v5227 = vpop.f32.mrb[0].mxu0
      %v5228 = vpop.f32.mrb[0].mxu0
      %v5229 = vadd.f32 0.0, %v5228
      %v5230 = vpop.f32.mrb[0].mxu0
      %5231 = vmatprep.mubr.bf16.mxu0 %v3742
      %5232 = vmatmul.mubr.bf16.gmra.mrb[0].mxu0 %v3486
      %v5233 = vpop.f32.mrb[0].mxu0
      %v5234 = vadd.f32 0.0, %v5233
      %v5235 = vpop.f32.mrb[0].mxu0
      %v5236 = vpop.f32.mrb[0].mxu0
      %v5237 = vadd.f32 0.0, %v5236
      %v5238 = vpop.f32.mrb[0].mxu0
      %5239 = vmatprep.mubr.bf16.mxu0 %v3891
      %5240 = vmatmul.mubr.bf16.gmra.mrb[0].mxu0 %v3875
      %v5241 = vpop.f32.mrb[0].mxu0
      %v5242 = vadd.f32 0.0, %v5241
      %v5243 = vpop.f32.mrb[0].mxu0
      %v5244 = vpop.f32.mrb[0].mxu0
      %v5245 = vadd.f32 0.0, %v5244
      %v5246 = vpop.f32.mrb[0].mxu0
      %5247 = vmatprep.mubr.bf16.mxu0 %v4897
      %5248 = vmatmul.mubr.bf16.gmra.mrb[0].mxu0 %v4881
      %v5249 = vpop.f32.mrb[0].mxu0
      %v5250 = vadd.f32 0.0, %v5249
      %v5251 = vpop.f32.mrb[0].mxu0
      %v5252 = vpop.f32.mrb[0].mxu0
      %v5253 = vadd.f32 0.0, %v5252
      %v5254 = vpop.f32.mrb[0].mxu0
      %5255 = vdwg.mxu0
      %5256 = vmatprep.subr.bf16.mxu0 0
      %5257 = vmatpush1.bf16.msra.mxu0 %v5063
      %5258 = vmatprep.subr.bf16.mxu0 0
      %5259 = vmatpush1.bf16.msra.mxu0 %v5064
      %5260 = vmatprep.subr.bf16.mxu0 0
      %5261 = vmatpush1.bf16.msra.mxu0 %v5065
      %5262 = vmatprep.subr.bf16.mxu0 0
      %5263 = vmatpush1.bf16.msra.mxu0 %v5066
      %5264 = vmatprep.subr.bf16.mxu0 0
      %5265 = vmatpush1.bf16.msra.mxu0 %v5067
      %5266 = vmatprep.subr.bf16.mxu0 0
      %5267 = vmatpush1.bf16.msra.mxu0 %v5068
      %5268 = vmatprep.subr.bf16.mxu0 0
      %5269 = vmatpush1.bf16.msra.mxu0 %v5069
      %5270 = vmatprep.subr.bf16.mxu0 0
      %5271 = vmatpush1.bf16.msra.mxu0 %v5070
      %5272 = vmatprep.subr.bf16.mxu0 0
      %5273 = vmatpush1.bf16.msra.mxu0 0
      %5274 = vmatprep.subr.bf16.mxu0 0
      %5275 = vmatpush1.bf16.msra.mxu0 0
      %5276 = vmatprep.subr.bf16.mxu0 0
      %5277 = vmatpush1.bf16.msra.mxu0 0
      %5278 = vmatprep.subr.bf16.mxu0 0
      %5279 = vmatpush1.bf16.msra.mxu0 0
      %5280 = vmatprep.subr.bf16.mxu0 0
      %5281 = vmatpush1.bf16.msra.mxu0 0
      %5282 = vmatprep.subr.bf16.mxu0 0
      %5283 = vmatpush1.bf16.msra.mxu0 0
      %5284 = vmatprep.subr.bf16.mxu0 0
      %5285 = vmatpush1.bf16.msra.mxu0 0
      %5286 = vmatprep.subr.bf16.mxu0 0
      %5287 = vmatpush1.bf16.msra.mxu0 0
      %5288 = vmatprep.mubr.bf16.mxu0 0
      %5289 = vmatmul.mubr.bf16.gmra.mrb[0].mxu0 %v3767
      %v5290 = vpop.f32.mrb[0].mxu0
      %v5291 = vadd.f32 %v5130, %v5290
      %v5292 = vpop.f32.mrb[0].mxu0
      %v5293 = vpop.f32.mrb[0].mxu0
      %v5294 = vadd.f32 %v5133, %v5293
      %v5295 = vpop.f32.mrb[0].mxu0
      %5296 = vmatprep.mubr.bf16.mxu0 0
      %5297 = vmatmul.mubr.bf16.gmra.mrb[0].mxu0 %v3770
      %v5298 = vpop.f32.mrb[0].mxu0
      %v5299 = vadd.f32 %v5138, %v5298
      %v5300 = vpop.f32.mrb[0].mxu0
      %v5301 = vpop.f32.mrb[0].mxu0
      %v5302 = vadd.f32 %v5141, %v5301
      %v5303 = vpop.f32.mrb[0].mxu0
      %5304 = vmatprep.mubr.bf16.mxu0 0
      %5305 = vmatmul.mubr.bf16.gmra.mrb[0].mxu0 %v3773
      %v5306 = vpop.f32.mrb[0].mxu0
      %v5307 = vadd.f32 %v5146, %v5306
      %v5308 = vpop.f32.mrb[0].mxu0
      %v5309 = vpop.f32.mrb[0].mxu0
      %v5310 = vadd.f32 %v5149, %v5309
      %v5311 = vpop.f32.mrb[0].mxu0
      %5312 = vmatprep.mubr.bf16.mxu0 0
      %5313 = vmatmul.mubr.bf16.gmra.mrb[0].mxu0 %v3776
      %v5314 = vpop.f32.mrb[0].mxu0
      %v5315 = vadd.f32 %v5154, %v5314
      %v5316 = vpop.f32.mrb[0].mxu0
      %v5317 = vpop.f32.mrb[0].mxu0
      %v5318 = vadd.f32 %v5157, %v5317
      %v5319 = vpop.f32.mrb[0].mxu0
      %5320 = vmatprep.mubr.bf16.mxu0 0
      %5321 = vmatmul.mubr.bf16.gmra.mrb[0].mxu0 %v3779
      %v5322 = vpop.f32.mrb[0].mxu0
      %v5323 = vadd.f32 %v5162, %v5322
      %v5324 = vpop.f32.mrb[0].mxu0
      %v5325 = vpop.f32.mrb[0].mxu0
      %v5326 = vadd.f32 %v5165, %v5325
      %v5327 = vpop.f32.mrb[0].mxu0
      %5328 = vmatprep.mubr.bf16.mxu0 0
      %5329 = vmatmul.mubr.bf16.gmra.mrb[0].mxu0 %v3782
      %v5330 = vpop.f32.mrb[0].mxu0
      %v5331 = vadd.f32 %v5170, %v5330
      %v5332 = vpop.f32.mrb[0].mxu0
      %v5333 = vpop.f32.mrb[0].mxu0
      %v5334 = vadd.f32 %v5173, %v5333
      %v5335 = vpop.f32.mrb[0].mxu0
      %5336 = vmatprep.mubr.bf16.mxu0 0
      %5337 = vmatmul.mubr.bf16.gmra.mrb[0].mxu0 %v3785
      %v5338 = vpop.f32.mrb[0].mxu0
      %v5339 = vadd.f32 %v5178, %v5338
      %v5340 = vpop.f32.mrb[0].mxu0
      %v5341 = vpop.f32.mrb[0].mxu0
      %v5342 = vadd.f32 %v5181, %v5341
      %v5343 = vpop.f32.mrb[0].mxu0
      %5344 = vmatprep.mubr.bf16.mxu0 0
      %5345 = vmatmul.mubr.bf16.gmra.mrb[0].mxu0 %v3788
      %v5346 = vpop.f32.mrb[0].mxu0
      %v5347 = vadd.f32 %v5186, %v5346
      %v5348 = vpop.f32.mrb[0].mxu0
      %v5349 = vpop.f32.mrb[0].mxu0
      %v5350 = vadd.f32 %v5189, %v5349
      %v5351 = vpop.f32.mrb[0].mxu0
      %5352 = vmatprep.mubr.bf16.mxu0 0
      %5353 = vmatmul.mubr.bf16.gmra.mrb[0].mxu0 %v3791
      %v5354 = vpop.f32.mrb[0].mxu0
      %v5355 = vadd.f32 %v5194, %v5354
      %v5356 = vpop.f32.mrb[0].mxu0
      %v5357 = vpop.f32.mrb[0].mxu0
      %v5358 = vadd.f32 %v5197, %v5357
      %v5359 = vpop.f32.mrb[0].mxu0
      %5360 = vmatprep.mubr.bf16.mxu0 0
      %5361 = vmatmul.mubr.bf16.gmra.mrb[0].mxu0 %v3794
      %v5362 = vpop.f32.mrb[0].mxu0
      %v5363 = vadd.f32 %v5202, %v5362
      %v5364 = vpop.f32.mrb[0].mxu0
      %v5365 = vpop.f32.mrb[0].mxu0
      %v5366 = vadd.f32 %v5205, %v5365
      %v5367 = vpop.f32.mrb[0].mxu0
      %5368 = vmatprep.mubr.bf16.mxu0 0
      %5369 = vmatmul.mubr.bf16.gmra.mrb[0].mxu0 %v3797
      %v5370 = vpop.f32.mrb[0].mxu0
      %v5371 = vadd.f32 %v5210, %v5370
      %v5372 = vpop.f32.mrb[0].mxu0
      %v5373 = vpop.f32.mrb[0].mxu0
      %v5374 = vadd.f32 %v5213, %v5373
      %v5375 = vpop.f32.mrb[0].mxu0
      %5376 = vmatprep.mubr.bf16.mxu0 0
      %5377 = vmatmul.mubr.bf16.gmra.mrb[0].mxu0 %v3800
      %v5378 = vpop.f32.mrb[0].mxu0
      %v5379 = vadd.f32 %v5218, %v5378
      %v5380 = vpop.f32.mrb[0].mxu0
      %v5381 = vpop.f32.mrb[0].mxu0
      %v5382 = vadd.f32 %v5221, %v5381
      %v5383 = vpop.f32.mrb[0].mxu0
      %5384 = vmatprep.mubr.bf16.mxu0 0
      %5385 = vmatmul.mubr.bf16.gmra.mrb[0].mxu0 %v3803
      %v5386 = vpop.f32.mrb[0].mxu0
      %v5387 = vadd.f32 %v5226, %v5386
      %v5388 = vpop.f32.mrb[0].mxu0
      %v5389 = vpop.f32.mrb[0].mxu0
      %v5390 = vadd.f32 %v5229, %v5389
      %v5391 = vpop.f32.mrb[0].mxu0
      %5392 = vmatprep.mubr.bf16.mxu0 0
      %5393 = vmatmul.mubr.bf16.gmra.mrb[0].mxu0 %v3806
      %v5394 = vpop.f32.mrb[0].mxu0
      %v5395 = vadd.f32 %v5234, %v5394
      %v5396 = vpop.f32.mrb[0].mxu0
      %v5397 = vpop.f32.mrb[0].mxu0
      %v5398 = vadd.f32 %v5237, %v5397
      %v5399 = vpop.f32.mrb[0].mxu0
      %5400 = vmatprep.mubr.bf16.mxu0 0
      %5401 = vmatmul.mubr.bf16.gmra.mrb[0].mxu0 %v3895
      %v5402 = vpop.f32.mrb[0].mxu0
      %v5403 = vadd.f32 %v5242, %v5402
      %v5404 = vpop.f32.mrb[0].mxu0
      %v5405 = vpop.f32.mrb[0].mxu0
      %v5406 = vadd.f32 %v5245, %v5405
      %v5407 = vpop.f32.mrb[0].mxu0
      %5408 = vmatprep.mubr.bf16.mxu0 0
      %5409 = vmatmul.mubr.bf16.gmra.mrb[0].mxu0 %v4901
      %v5410 = vpop.f32.mrb[0].mxu0
      %v5411 = vadd.f32 %v5250, %v5410
      %v5412 = vpop.f32.mrb[0].mxu0
      %v5413 = vpop.f32.mrb[0].mxu0
      %v5414 = vadd.f32 %v5253, %v5413
      %v5415 = vpop.f32.mrb[0].mxu0
      %5416 = vdwg.mxu0
      %v5417 = vadd.f32 %v4751, %v5291
      %v5418 = vadd.f32 %v4754, %v5294
      %v5419 = vadd.f32 %v4759, %v5299
      %v5420 = vadd.f32 %v4762, %v5302
      %v5421 = vadd.f32 %v4767, %v5307
      %v5422 = vadd.f32 %v4770, %v5310
      %v5423 = vadd.f32 %v4775, %v5315
      %v5424 = vadd.f32 %v4778, %v5318
      %v5425 = vadd.f32 %v4783, %v5323
      %v5426 = vadd.f32 %v4786, %v5326
      %v5427 = vadd.f32 %v4791, %v5331
      %v5428 = vadd.f32 %v4794, %v5334
      %v5429 = vadd.f32 %v4799, %v5339
      %v5430 = vadd.f32 %v4802, %v5342
      %v5431 = vadd.f32 %v4807, %v5347
      %v5432 = vadd.f32 %v4810, %v5350
      %v5433 = vadd.f32 %v4815, %v5355
      %v5434 = vadd.f32 %v4818, %v5358
      %v5435 = vadd.f32 %v4823, %v5363
      %v5436 = vadd.f32 %v4826, %v5366
      %v5437 = vadd.f32 %v4831, %v5371
      %v5438 = vadd.f32 %v4834, %v5374
      %v5439 = vadd.f32 %v4839, %v5379
      %v5440 = vadd.f32 %v4842, %v5382
      %v5441 = vadd.f32 %v4847, %v5387
      %v5442 = vadd.f32 %v4850, %v5390
      %v5443 = vadd.f32 %v4855, %v5395
      %v5444 = vadd.f32 %v4858, %v5398
      %v5445 = vadd.f32 %v4863, %v5403
      %v5446 = vadd.f32 %v4866, %v5406
      %v5447 = vadd.f32 %v4871, %v5411
      %v5448 = vadd.f32 %v4874, %v5414
      %v5449 = vmul.f32 %v5417, %v2647
      %v5450 = vmul.f32 %v5418, %v2647
      %v5451 = vmul.f32 %v5419, %v2647
      %v5452 = vmul.f32 %v5420, %v2647
      %v5453 = vmul.f32 %v5421, %v2647
      %v5454 = vmul.f32 %v5422, %v2647
      %v5455 = vmul.f32 %v5423, %v2647
      %v5456 = vmul.f32 %v5424, %v2647
      %v5457 = vmul.f32 %v5425, %v2647
      %v5458 = vmul.f32 %v5426, %v2647
      %v5459 = vmul.f32 %v5427, %v2647
      %v5460 = vmul.f32 %v5428, %v2647
      %v5461 = vmul.f32 %v5429, %v2647
      %v5462 = vmul.f32 %v5430, %v2647
      %v5463 = vmul.f32 %v5431, %v2647
      %v5464 = vmul.f32 %v5432, %v2647
      %v5465 = vmul.f32 %v5433, %v2647
      %v5466 = vmul.f32 %v5434, %v2647
      %v5467 = vmul.f32 %v5435, %v2647
      %v5468 = vmul.f32 %v5436, %v2647
      %v5469 = vmul.f32 %v5437, %v2647
      %v5470 = vmul.f32 %v5438, %v2647
      %v5471 = vmul.f32 %v5439, %v2647
      %v5472 = vmul.f32 %v5440, %v2647
      %v5473 = vmul.f32 %v5441, %v2647
      %v5474 = vmul.f32 %v5442, %v2647
      %v5475 = vmul.f32 %v5443, %v2647
      %v5476 = vmul.f32 %v5444, %v2647
      %v5477 = vmul.f32 %v5445, %v2647
      %v5478 = vmul.f32 %v5446, %v2647
      %v5479 = vmul.f32 %v5447, %v2647
      %v5480 = vmul.f32 %v5448, %v2647
      %v5481 = vadd.f32 %v5449, %v2685
      %v5482 = vadd.f32 %v5450, %v2685
      %v5483 = vadd.f32 %v5451, %v2685
      %v5484 = vadd.f32 %v5452, %v2685
      %v5485 = vadd.f32 %v5453, %v2685
      %v5486 = vadd.f32 %v5454, %v2685
      %v5487 = vadd.f32 %v5455, %v2685
      %v5488 = vadd.f32 %v5456, %v2685
      %v5489 = vadd.f32 %v5457, %v2685
      %v5490 = vadd.f32 %v5458, %v2685
      %v5491 = vadd.f32 %v5459, %v2685
      %v5492 = vadd.f32 %v5460, %v2685
      %v5493 = vadd.f32 %v5461, %v2685
      %v5494 = vadd.f32 %v5462, %v2685
      %v5495 = vadd.f32 %v5463, %v2685
      %v5496 = vadd.f32 %v5464, %v2685
      %v5497 = vadd.f32 %v5465, %v2685
      %v5498 = vadd.f32 %v5466, %v2685
      %v5499 = vadd.f32 %v5467, %v2685
      %v5500 = vadd.f32 %v5468, %v2685
      %v5501 = vadd.f32 %v5469, %v2685
      %v5502 = vadd.f32 %v5470, %v2685
      %v5503 = vadd.f32 %v5471, %v2685
      %v5504 = vadd.f32 %v5472, %v2685
      %v5505 = vadd.f32 %v5473, %v2685
      %v5506 = vadd.f32 %v5474, %v2685
      %v5507 = vadd.f32 %v5475, %v2685
      %v5508 = vadd.f32 %v5476, %v2685
      %v5509 = vadd.f32 %v5477, %v2685
      %v5510 = vadd.f32 %v5478, %v2685
      %v5511 = vadd.f32 %v5479, %v2685
      %v5512 = vadd.f32 %v5480, %v2685
      %v5513 = vmax.f32 %v5481, 0.0
      %v5514 = vmax.f32 %v5482, 0.0
      %v5515 = vmax.f32 %v5483, 0.0
      %v5516 = vmax.f32 %v5484, 0.0
      %v5517 = vmax.f32 %v5485, 0.0
      %v5518 = vmax.f32 %v5486, 0.0
      %v5519 = vmax.f32 %v5487, 0.0
      %v5520 = vmax.f32 %v5488, 0.0
      %v5521 = vmax.f32 %v5489, 0.0
      %v5522 = vmax.f32 %v5490, 0.0
      %v5523 = vmax.f32 %v5491, 0.0
      %v5524 = vmax.f32 %v5492, 0.0
      %v5525 = vmax.f32 %v5493, 0.0
      %v5526 = vmax.f32 %v5494, 0.0
      %v5527 = vmax.f32 %v5495, 0.0
      %v5528 = vmax.f32 %v5496, 0.0
      %v5529 = vmax.f32 %v5497, 0.0
      %v5530 = vmax.f32 %v5498, 0.0
      %v5531 = vmax.f32 %v5499, 0.0
      %v5532 = vmax.f32 %v5500, 0.0
      %v5533 = vmax.f32 %v5501, 0.0
      %v5534 = vmax.f32 %v5502, 0.0
      %v5535 = vmax.f32 %v5503, 0.0
      %v5536 = vmax.f32 %v5504, 0.0
      %v5537 = vmax.f32 %v5505, 0.0
      %v5538 = vmax.f32 %v5506, 0.0
      %v5539 = vmax.f32 %v5507, 0.0
      %v5540 = vmax.f32 %v5508, 0.0
      %v5541 = vmax.f32 %v5509, 0.0
      %v5542 = vmax.f32 %v5510, 0.0
      %v5543 = vmax.f32 %v5511, 0.0
      %v5544 = vmax.f32 %v5512, 0.0
      %v5545 = vld [vmem:[%s2751 + $0x1] sm:$0xff]
      %v5546 = vld [vmem:[%s2751 + $0x9] sm:$0xff]
      %v5547 = vld [vmem:[%s2751 + $0x19] sm:$0xff]
      %v5548 = vld [vmem:[%s2751 + $0x21] sm:$0xff]
      %v5549 = vld [vmem:[%s2751 + $0x31] sm:$0xff]
      %v5550 = vld [vmem:[%s2751 + $0x39] sm:$0xff]
      %v5551 = vld [vmem:[%s2751 + $0x49] sm:$0xff]
      %v5552 = vld [vmem:[%s2751 + $0x51] sm:$0xff]
      %v5553 = vld [vmem:[%s2751 + $0x61] sm:$0xff]
      %v5554 = vld [vmem:[%s2751 + $0x69] sm:$0xff]
      %v5555 = vld [vmem:[%s2751 + $0x79] sm:$0xff]
      %v5556 = vld [vmem:[%s2751 + $0x81] sm:$0xff]
      %v5557 = vld [vmem:[%s2751 + $0x91] sm:$0xff]
      %v5558 = vld [vmem:[%s2751 + $0x99] sm:$0xff]
      %v5559 = vld [vmem:[%s2751 + $0xa9] sm:$0xff]
      %v5560 = vld [vmem:[%s2751 + $0xb1] sm:$0xff]
      %v5561 = vld [vmem:[%s2751 + $0xc1] sm:$0xff]
      %v5562 = vld [vmem:[%s2751 + $0xc9] sm:$0xff]
      %v5563 = vld [vmem:[%s2751 + $0xd9] sm:$0xff]
      %v5564 = vld [vmem:[%s2751 + $0xe1] sm:$0xff]
      %v5565 = vld [vmem:[%s2751 + $0xf1] sm:$0xff]
      %v5566 = vld [vmem:[%s2751 + $0xf9] sm:$0xff]
      %v5567 = vld [vmem:[%s2751 + $0x109] sm:$0xff]
      %v5568 = vld [vmem:[%s2751 + $0x111] sm:$0xff]
      %v5569 = vld [vmem:[%s2751 + $0x121] sm:$0xff]
      %v5570 = vld [vmem:[%s2751 + $0x129] sm:$0xff]
      %v5571 = vld [vmem:[%s2751 + $0x139] sm:$0xff]
      %v5572 = vld [vmem:[%s2751 + $0x141] sm:$0xff]
      %v5573 = vld [vmem:[%s2751 + $0x151] sm:$0xff]
      %v5574 = vld [vmem:[%s2751 + $0x159] sm:$0xff]
      %v5575 = vld [vmem:[%s2751 + $0x169] sm:$0xff]
      %v5576 = vld [vmem:[%s2751 + $0x171] sm:$0xff]
      %v5577 = vadd.f32 %v5545, %v5513
      %v5578 = vadd.f32 %v5546, %v5514
      %v5579 = vadd.f32 %v5547, %v5515
      %v5580 = vadd.f32 %v5548, %v5516
      %v5581 = vadd.f32 %v5549, %v5517
      %v5582 = vadd.f32 %v5550, %v5518
      %v5583 = vadd.f32 %v5551, %v5519
      %v5584 = vadd.f32 %v5552, %v5520
      %v5585 = vadd.f32 %v5553, %v5521
      %v5586 = vadd.f32 %v5554, %v5522
      %v5587 = vadd.f32 %v5555, %v5523
      %v5588 = vadd.f32 %v5556, %v5524
      %v5589 = vadd.f32 %v5557, %v5525
      %v5590 = vadd.f32 %v5558, %v5526
      %v5591 = vadd.f32 %v5559, %v5527
      %v5592 = vadd.f32 %v5560, %v5528
      %v5593 = vadd.f32 %v5561, %v5529
      %v5594 = vadd.f32 %v5562, %v5530
      %v5595 = vadd.f32 %v5563, %v5531
      %v5596 = vadd.f32 %v5564, %v5532
      %v5597 = vadd.f32 %v5565, %v5533
      %v5598 = vadd.f32 %v5566, %v5534
      %v5599 = vadd.f32 %v5567, %v5535
      %v5600 = vadd.f32 %v5568, %v5536
      %v5601 = vadd.f32 %v5569, %v5537
      %v5602 = vadd.f32 %v5570, %v5538
      %v5603 = vadd.f32 %v5571, %v5539
      %v5604 = vadd.f32 %v5572, %v5540
      %v5605 = vadd.f32 %v5573, %v5541
      %v5606 = vadd.f32 %v5574, %v5542
      %v5607 = vadd.f32 %v5575, %v5543
      %v5608 = vadd.f32 %v5576, %v5544
      %v5609 = vpack.c.bf16 %v5578, %v5577
      %v5610 = vpack.c.bf16 %v5580, %v5579
      %v5611 = vpack.c.bf16 %v5582, %v5581
      %v5612 = vpack.c.bf16 %v5584, %v5583
      %v5613 = vpack.c.bf16 %v5586, %v5585
      %v5614 = vpack.c.bf16 %v5588, %v5587
      %v5615 = vpack.c.bf16 %v5590, %v5589
      %v5616 = vpack.c.bf16 %v5592, %v5591
      %v5617 = vpack.c.bf16 %v5594, %v5593
      %v5618 = vpack.c.bf16 %v5596, %v5595
      %v5619 = vpack.c.bf16 %v5598, %v5597
      %v5620 = vpack.c.bf16 %v5600, %v5599
      %v5621 = vpack.c.bf16 %v5602, %v5601
      %v5622 = vpack.c.bf16 %v5604, %v5603
      %v5623 = vpack.c.bf16 %v5606, %v5605
      %v5624 = vpack.c.bf16 %v5608, %v5607
      %v5641 = vunpack.c.l.b16 %v5609
      %v5642 = vunpack.c.h.b16 %v5609
      %v5643 = vunpack.c.l.b16 %v5610
      %v5644 = vunpack.c.h.b16 %v5610
      %v5645 = vunpack.c.l.b16 %v5611
      %v5646 = vunpack.c.h.b16 %v5611
      %v5647 = vunpack.c.l.b16 %v5612
      %v5648 = vunpack.c.h.b16 %v5612
      %v5649 = vunpack.c.l.b16 %v5613
      %v5650 = vunpack.c.h.b16 %v5613
      %v5651 = vunpack.c.l.b16 %v5614
      %v5652 = vunpack.c.h.b16 %v5614
      %v5653 = vunpack.c.l.b16 %v5615
      %v5654 = vunpack.c.h.b16 %v5615
      %v5655 = vunpack.c.l.b16 %v5616
      %v5656 = vunpack.c.h.b16 %v5616
      %v5657 = vunpack.c.l.b16 %v5617
      %v5658 = vunpack.c.h.b16 %v5617
      %v5659 = vunpack.c.l.b16 %v5618
      %v5660 = vunpack.c.h.b16 %v5618
      %v5661 = vunpack.c.l.b16 %v5619
      %v5662 = vunpack.c.h.b16 %v5619
      %v5663 = vunpack.c.l.b16 %v5620
      %v5664 = vunpack.c.h.b16 %v5620
      %v5665 = vunpack.c.l.b16 %v5621
      %v5666 = vunpack.c.h.b16 %v5621
      %v5667 = vunpack.c.l.b16 %v5622
      %v5668 = vunpack.c.h.b16 %v5622
      %v5669 = vunpack.c.l.b16 %v5623
      %v5670 = vunpack.c.h.b16 %v5623
      %v5671 = vunpack.c.l.b16 %v5624
      %v5672 = vunpack.c.h.b16 %v5624
      %v5673 = vpack.c.b16 %v5641, %v5641
      %v5674 = vpack.c.b16 %v5642, %v5642
      %v5675 = vpack.c.b16 %v5643, %v5643
      %v5676 = vpack.c.b16 %v5644, %v5644
      %v5677 = vpack.c.b16 %v5645, %v5645
      %v5678 = vpack.c.b16 %v5646, %v5646
      %v5679 = vpack.c.b16 %v5647, %v5647
      %v5680 = vpack.c.b16 %v5648, %v5648
      %v5681 = vpack.c.b16 %v5649, %v5649
      %v5682 = vpack.c.b16 %v5650, %v5650
      %v5683 = vpack.c.b16 %v5651, %v5651
      %v5684 = vpack.c.b16 %v5652, %v5652
      %v5685 = vpack.c.b16 %v5653, %v5653
      %v5686 = vpack.c.b16 %v5654, %v5654
      %v5687 = vpack.c.b16 %v5655, %v5655
      %v5688 = vpack.c.b16 %v5656, %v5656
      %v5689 = vpack.c.b16 %v5657, %v5657
      %v5690 = vpack.c.b16 %v5658, %v5658
      %v5691 = vpack.c.b16 %v5659, %v5659
      %v5692 = vpack.c.b16 %v5660, %v5660
      %v5693 = vpack.c.b16 %v5661, %v5661
      %v5694 = vpack.c.b16 %v5662, %v5662
      %v5695 = vpack.c.b16 %v5663, %v5663
      %v5696 = vpack.c.b16 %v5664, %v5664
      %v5697 = vpack.c.b16 %v5665, %v5665
      %v5698 = vpack.c.b16 %v5666, %v5666
      %v5699 = vpack.c.b16 %v5667, %v5667
      %v5700 = vpack.c.b16 %v5668, %v5668
      %v5701 = vpack.c.b16 %v5669, %v5669
      %v5702 = vpack.c.b16 %v5670, %v5670
      %v5703 = vpack.c.b16 %v5671, %v5671
      %v5704 = vpack.c.b16 %v5672, %v5672
      %v5706 = vshrl.u32 %v5673, 16
      %v5708 = vrot.slane %v5706, 7
      %v5709 = vshll.u32 %v5673, 16
      %v5711 = vor.u32 %v5708, %v5709
      %v5712 = vrot.slane %v5708, 4
      %v5714 = vshrl.u32 %v5674, 16
      %v5716 = vrot.slane %v5714, 7
      %v5717 = vshll.u32 %v5674, 16
      %v5719 = vor.u32 %v5716, %v5717
      %v5720 = vsel %vm2914, %v5712, %v5719
      %v5721 = vrot.slane %v5716, 4
      %v5723 = vshrl.u32 %v5675, 16
      %v5725 = vrot.slane %v5723, 7
      %v5726 = vshll.u32 %v5675, 16
      %v5728 = vor.u32 %v5725, %v5726
      %v5729 = vrot.slane %v5725, 4
      %v5731 = vshrl.u32 %v5676, 16
      %v5733 = vrot.slane %v5731, 7
      %v5734 = vshll.u32 %v5676, 16
      %v5736 = vor.u32 %v5733, %v5734
      %v5737 = vsel %vm2914, %v5729, %v5736
      %v5738 = vrot.slane %v5733, 4
      %v5740 = vshrl.u32 %v5677, 16
      %v5742 = vrot.slane %v5740, 7
      %v5743 = vshll.u32 %v5677, 16
      %v5745 = vor.u32 %v5742, %v5743
      %v5746 = vrot.slane %v5742, 4
      %v5748 = vshrl.u32 %v5678, 16
      %v5750 = vrot.slane %v5748, 7
      %v5751 = vshll.u32 %v5678, 16
      %v5753 = vor.u32 %v5750, %v5751
      %v5754 = vsel %vm2914, %v5746, %v5753
      %v5755 = vrot.slane %v5750, 4
      %v5757 = vshrl.u32 %v5679, 16
      %v5759 = vrot.slane %v5757, 7
      %v5760 = vshll.u32 %v5679, 16
      %v5762 = vor.u32 %v5759, %v5760
      %v5763 = vrot.slane %v5759, 4
      %v5765 = vshrl.u32 %v5680, 16
      %v5767 = vrot.slane %v5765, 7
      %v5768 = vshll.u32 %v5680, 16
      %v5770 = vor.u32 %v5767, %v5768
      %v5771 = vsel %vm2914, %v5763, %v5770
      %v5772 = vrot.slane %v5767, 4
      %v5774 = vshrl.u32 %v5681, 16
      %v5776 = vrot.slane %v5774, 7
      %v5777 = vshll.u32 %v5681, 16
      %v5779 = vor.u32 %v5776, %v5777
      %v5780 = vrot.slane %v5776, 4
      %v5782 = vshrl.u32 %v5682, 16
      %v5784 = vrot.slane %v5782, 7
      %v5785 = vshll.u32 %v5682, 16
      %v5787 = vor.u32 %v5784, %v5785
      %v5788 = vsel %vm2914, %v5780, %v5787
      %v5789 = vrot.slane %v5784, 4
      %v5791 = vshrl.u32 %v5683, 16
      %v5793 = vrot.slane %v5791, 7
      %v5794 = vshll.u32 %v5683, 16
      %v5796 = vor.u32 %v5793, %v5794
      %v5797 = vrot.slane %v5793, 4
      %v5799 = vshrl.u32 %v5684, 16
      %v5801 = vrot.slane %v5799, 7
      %v5802 = vshll.u32 %v5684, 16
      %v5804 = vor.u32 %v5801, %v5802
      %v5805 = vsel %vm2914, %v5797, %v5804
      %v5806 = vrot.slane %v5801, 4
      %v5808 = vshrl.u32 %v5685, 16
      %v5810 = vrot.slane %v5808, 7
      %v5811 = vshll.u32 %v5685, 16
      %v5813 = vor.u32 %v5810, %v5811
      %v5814 = vrot.slane %v5810, 4
      %v5816 = vshrl.u32 %v5686, 16
      %v5818 = vrot.slane %v5816, 7
      %v5819 = vshll.u32 %v5686, 16
      %v5821 = vor.u32 %v5818, %v5819
      %v5822 = vsel %vm2914, %v5814, %v5821
      %v5823 = vrot.slane %v5818, 4
      %v5825 = vshrl.u32 %v5687, 16
      %v5827 = vrot.slane %v5825, 7
      %v5828 = vshll.u32 %v5687, 16
      %v5830 = vor.u32 %v5827, %v5828
      %v5831 = vrot.slane %v5827, 4
      %v5833 = vshrl.u32 %v5688, 16
      %v5835 = vrot.slane %v5833, 7
      %v5836 = vshll.u32 %v5688, 16
      %v5838 = vor.u32 %v5835, %v5836
      %v5839 = vsel %vm2914, %v5831, %v5838
      %v5840 = vrot.slane %v5835, 4
      %v5842 = vshrl.u32 %v5689, 16
      %v5844 = vrot.slane %v5842, 7
      %v5845 = vshll.u32 %v5689, 16
      %v5847 = vor.u32 %v5844, %v5845
      %v5848 = vrot.slane %v5844, 4
      %v5850 = vshrl.u32 %v5690, 16
      %v5852 = vrot.slane %v5850, 7
      %v5853 = vshll.u32 %v5690, 16
      %v5855 = vor.u32 %v5852, %v5853
      %v5856 = vsel %vm2914, %v5848, %v5855
      %v5857 = vrot.slane %v5852, 4
      %v5859 = vshrl.u32 %v5691, 16
      %v5861 = vrot.slane %v5859, 7
      %v5862 = vshll.u32 %v5691, 16
      %v5864 = vor.u32 %v5861, %v5862
      %v5865 = vrot.slane %v5861, 4
      %v5867 = vshrl.u32 %v5692, 16
      %v5869 = vrot.slane %v5867, 7
      %v5870 = vshll.u32 %v5692, 16
      %v5872 = vor.u32 %v5869, %v5870
      %v5873 = vsel %vm2914, %v5865, %v5872
      %v5874 = vrot.slane %v5869, 4
      %v5876 = vshrl.u32 %v5693, 16
      %v5878 = vrot.slane %v5876, 7
      %v5879 = vshll.u32 %v5693, 16
      %v5881 = vor.u32 %v5878, %v5879
      %v5882 = vrot.slane %v5878, 4
      %v5884 = vshrl.u32 %v5694, 16
      %v5886 = vrot.slane %v5884, 7
      %v5887 = vshll.u32 %v5694, 16
      %v5889 = vor.u32 %v5886, %v5887
      %v5890 = vsel %vm2914, %v5882, %v5889
      %v5891 = vrot.slane %v5886, 4
      %v5893 = vshrl.u32 %v5695, 16
      %v5895 = vrot.slane %v5893, 7
      %v5896 = vshll.u32 %v5695, 16
      %v5898 = vor.u32 %v5895, %v5896
      %v5899 = vrot.slane %v5895, 4
      %v5901 = vshrl.u32 %v5696, 16
      %v5903 = vrot.slane %v5901, 7
      %v5904 = vshll.u32 %v5696, 16
      %v5906 = vor.u32 %v5903, %v5904
      %v5907 = vsel %vm2914, %v5899, %v5906
      %v5908 = vrot.slane %v5903, 4
      %v5910 = vshrl.u32 %v5697, 16
      %v5912 = vrot.slane %v5910, 7
      %v5913 = vshll.u32 %v5697, 16
      %v5915 = vor.u32 %v5912, %v5913
      %v5916 = vrot.slane %v5912, 4
      %v5918 = vshrl.u32 %v5698, 16
      %v5920 = vrot.slane %v5918, 7
      %v5921 = vshll.u32 %v5698, 16
      %v5923 = vor.u32 %v5920, %v5921
      %v5924 = vsel %vm2914, %v5916, %v5923
      %v5925 = vrot.slane %v5920, 4
      %v5927 = vshrl.u32 %v5699, 16
      %v5929 = vrot.slane %v5927, 7
      %v5930 = vshll.u32 %v5699, 16
      %v5932 = vor.u32 %v5929, %v5930
      %v5933 = vrot.slane %v5929, 4
      %v5935 = vshrl.u32 %v5700, 16
      %v5937 = vrot.slane %v5935, 7
      %v5938 = vshll.u32 %v5700, 16
      %v5940 = vor.u32 %v5937, %v5938
      %v5941 = vsel %vm2914, %v5933, %v5940
      %v5942 = vrot.slane %v5937, 4
      %v5944 = vshrl.u32 %v5701, 16
      %v5946 = vrot.slane %v5944, 7
      %v5947 = vshll.u32 %v5701, 16
      %v5949 = vor.u32 %v5946, %v5947
      %v5950 = vrot.slane %v5946, 4
      %v5952 = vshrl.u32 %v5702, 16
      %v5954 = vrot.slane %v5952, 7
      %v5955 = vshll.u32 %v5702, 16
      %v5957 = vor.u32 %v5954, %v5955
      %v5958 = vsel %vm2914, %v5950, %v5957
      %v5959 = vrot.slane %v5954, 4
      %v5961 = vshrl.u32 %v5703, 16
      %v5963 = vrot.slane %v5961, 7
      %v5964 = vshll.u32 %v5703, 16
      %v5966 = vor.u32 %v5963, %v5964
      %v5967 = vrot.slane %v5963, 4
      %v5969 = vshrl.u32 %v5704, 16
      %v5971 = vrot.slane %v5969, 7
      %v5972 = vshll.u32 %v5704, 16
      %v5974 = vor.u32 %v5971, %v5972
      %v5975 = vsel %vm2914, %v5967, %v5974
      %v5976 = vrot.slane %v5971, 4
      %v6025 = vld [vmem:[%s3235] sm:$0xf]
      %v6026 = vsel %vm3238, %v5711, %v6025
      %6027 = vst [vmem:[%s3235] sm:$0xf] %v6026
      %6028 = vst [vmem:[%s3235 + $0x4] sm:$0xf] %v5720
      %v6029 = vld [vmem:[%s3235 + $0x8] sm:$0x1]
      %v6030 = vsel %vm3244, %v5721, %v6029
      %6031 = vst [vmem:[%s3235 + $0x8] sm:$0x1] %v6030
      %v6032 = vld [vmem:[%s3235 + $0xc] sm:$0xf]
      %v6033 = vsel %vm3238, %v5728, %v6032
      %6034 = vst [vmem:[%s3235 + $0xc] sm:$0xf] %v6033
      %6035 = vst [vmem:[%s3235 + $0x10] sm:$0xf] %v5737
      %v6036 = vld [vmem:[%s3235 + $0x14] sm:$0x1]
      %v6037 = vsel %vm3244, %v5738, %v6036
      %6038 = vst [vmem:[%s3235 + $0x14] sm:$0x1] %v6037
      %v6039 = vld [vmem:[%s3235 + $0x18] sm:$0xf]
      %v6040 = vsel %vm3238, %v5745, %v6039
      %6041 = vst [vmem:[%s3235 + $0x18] sm:$0xf] %v6040
      %6042 = vst [vmem:[%s3235 + $0x1c] sm:$0xf] %v5754
      %v6043 = vld [vmem:[%s3235 + $0x20] sm:$0x1]
      %v6044 = vsel %vm3244, %v5755, %v6043
      %6045 = vst [vmem:[%s3235 + $0x20] sm:$0x1] %v6044
      %v6046 = vld [vmem:[%s3235 + $0x24] sm:$0xf]
      %v6047 = vsel %vm3238, %v5762, %v6046
      %6048 = vst [vmem:[%s3235 + $0x24] sm:$0xf] %v6047
      %6049 = vst [vmem:[%s3235 + $0x28] sm:$0xf] %v5771
      %v6050 = vld [vmem:[%s3235 + $0x2c] sm:$0x1]
      %v6051 = vsel %vm3244, %v5772, %v6050
      %6052 = vst [vmem:[%s3235 + $0x2c] sm:$0x1] %v6051
      %v6053 = vld [vmem:[%s3235 + $0x30] sm:$0xf]
      %v6054 = vsel %vm3238, %v5779, %v6053
      %6055 = vst [vmem:[%s3235 + $0x30] sm:$0xf] %v6054
      %6056 = vst [vmem:[%s3235 + $0x34] sm:$0xf] %v5788
      %v6057 = vld [vmem:[%s3235 + $0x38] sm:$0x1]
      %v6058 = vsel %vm3244, %v5789, %v6057
      %6059 = vst [vmem:[%s3235 + $0x38] sm:$0x1] %v6058
      %v6060 = vld [vmem:[%s3235 + $0x3c] sm:$0xf]
      %v6061 = vsel %vm3238, %v5796, %v6060
      %6062 = vst [vmem:[%s3235 + $0x3c] sm:$0xf] %v6061
      %6063 = vst [vmem:[%s3235 + $0x40] sm:$0xf] %v5805
      %v6064 = vld [vmem:[%s3235 + $0x44] sm:$0x1]
      %v6065 = vsel %vm3244, %v5806, %v6064
      %6066 = vst [vmem:[%s3235 + $0x44] sm:$0x1] %v6065
      %v6067 = vld [vmem:[%s3235 + $0x48] sm:$0xf]
      %v6068 = vsel %vm3238, %v5813, %v6067
      %6069 = vst [vmem:[%s3235 + $0x48] sm:$0xf] %v6068
      %6070 = vst [vmem:[%s3235 + $0x4c] sm:$0xf] %v5822
      %v6071 = vld [vmem:[%s3235 + $0x50] sm:$0x1]
      %v6072 = vsel %vm3244, %v5823, %v6071
      %6073 = vst [vmem:[%s3235 + $0x50] sm:$0x1] %v6072
      %v6074 = vld [vmem:[%s3235 + $0x54] sm:$0xf]
      %v6075 = vsel %vm3238, %v5830, %v6074
      %6076 = vst [vmem:[%s3235 + $0x54] sm:$0xf] %v6075
      %6077 = vst [vmem:[%s3235 + $0x58] sm:$0xf] %v5839
      %v6078 = vld [vmem:[%s3235 + $0x5c] sm:$0x1]
      %v6079 = vsel %vm3244, %v5840, %v6078
      %6080 = vst [vmem:[%s3235 + $0x5c] sm:$0x1] %v6079
      %v6081 = vld [vmem:[%s3235 + $0x60] sm:$0xf]
      %v6082 = vsel %vm3238, %v5847, %v6081
      %6083 = vst [vmem:[%s3235 + $0x60] sm:$0xf] %v6082
      %6084 = vst [vmem:[%s3235 + $0x64] sm:$0xf] %v5856
      %v6085 = vld [vmem:[%s3235 + $0x68] sm:$0x1]
      %v6086 = vsel %vm3244, %v5857, %v6085
      %6087 = vst [vmem:[%s3235 + $0x68] sm:$0x1] %v6086
      %v6088 = vld [vmem:[%s3235 + $0x6c] sm:$0xf]
      %v6089 = vsel %vm3238, %v5864, %v6088
      %6090 = vst [vmem:[%s3235 + $0x6c] sm:$0xf] %v6089
      %6091 = vst [vmem:[%s3235 + $0x70] sm:$0xf] %v5873
      %v6092 = vld [vmem:[%s3235 + $0x74] sm:$0x1]
      %v6093 = vsel %vm3244, %v5874, %v6092
      %6094 = vst [vmem:[%s3235 + $0x74] sm:$0x1] %v6093
      %v6095 = vld [vmem:[%s3235 + $0x78] sm:$0xf]
      %v6096 = vsel %vm3238, %v5881, %v6095
      %6097 = vst [vmem:[%s3235 + $0x78] sm:$0xf] %v6096
      %6098 = vst [vmem:[%s3235 + $0x7c] sm:$0xf] %v5890
      %v6099 = vld [vmem:[%s3235 + $0x80] sm:$0x1]
      %v6100 = vsel %vm3244, %v5891, %v6099
      %6101 = vst [vmem:[%s3235 + $0x80] sm:$0x1] %v6100
      %v6102 = vld [vmem:[%s3235 + $0x84] sm:$0xf]
      %v6103 = vsel %vm3238, %v5898, %v6102
      %6104 = vst [vmem:[%s3235 + $0x84] sm:$0xf] %v6103
      %6105 = vst [vmem:[%s3235 + $0x88] sm:$0xf] %v5907
      %v6106 = vld [vmem:[%s3235 + $0x8c] sm:$0x1]
      %v6107 = vsel %vm3244, %v5908, %v6106
      %6108 = vst [vmem:[%s3235 + $0x8c] sm:$0x1] %v6107
      %v6109 = vld [vmem:[%s3235 + $0x90] sm:$0xf]
      %v6110 = vsel %vm3238, %v5915, %v6109
      %6111 = vst [vmem:[%s3235 + $0x90] sm:$0xf] %v6110
      %6112 = vst [vmem:[%s3235 + $0x94] sm:$0xf] %v5924
      %v6113 = vld [vmem:[%s3235 + $0x98] sm:$0x1]
      %v6114 = vsel %vm3244, %v5925, %v6113
      %6115 = vst [vmem:[%s3235 + $0x98] sm:$0x1] %v6114
      %v6116 = vld [vmem:[%s3235 + $0x9c] sm:$0xf]
      %v6117 = vsel %vm3238, %v5932, %v6116
      %6118 = vst [vmem:[%s3235 + $0x9c] sm:$0xf] %v6117
      %6119 = vst [vmem:[%s3235 + $0xa0] sm:$0xf] %v5941
      %v6120 = vld [vmem:[%s3235 + $0xa4] sm:$0x1]
      %v6121 = vsel %vm3244, %v5942, %v6120
      %6122 = vst [vmem:[%s3235 + $0xa4] sm:$0x1] %v6121
      %v6123 = vld [vmem:[%s3235 + $0xa8] sm:$0xf]
      %v6124 = vsel %vm3238, %v5949, %v6123
      %6125 = vst [vmem:[%s3235 + $0xa8] sm:$0xf] %v6124
      %6126 = vst [vmem:[%s3235 + $0xac] sm:$0xf] %v5958
      %v6127 = vld [vmem:[%s3235 + $0xb0] sm:$0x1]
      %v6128 = vsel %vm3244, %v5959, %v6127
      %6129 = vst [vmem:[%s3235 + $0xb0] sm:$0x1] %v6128
      %v6130 = vld [vmem:[%s3235 + $0xb4] sm:$0xf]
      %v6131 = vsel %vm3238, %v5966, %v6130
      %6132 = vst [vmem:[%s3235 + $0xb4] sm:$0xf] %v6131
      %6133 = vst [vmem:[%s3235 + $0xb8] sm:$0xf] %v5975
      %v6134 = vld [vmem:[%s3235 + $0xbc] sm:$0x1]
      %v6135 = vsel %vm3244, %v5976, %v6134
      %6136 = vst [vmem:[%s3235 + $0xbc] sm:$0x1] %v6135
      %v6137 = vld [vmem:[#allocation2] sm:$0xf]
      %v6138 = vld [vmem:[#allocation2 + $0x4] sm:$0xf]
      %v6139 = vld [vmem:[#allocation2 + $0x8] sm:$0x1]
      %v6140 = vld [vmem:[#allocation2 + $0xc] sm:$0xf]
      %v6141 = vld [vmem:[#allocation2 + $0x10] sm:$0xf]
      %v6142 = vld [vmem:[#allocation2 + $0x14] sm:$0x1]
      %v6143 = vld [vmem:[#allocation2 + $0x18] sm:$0xf]
      %v6144 = vld [vmem:[#allocation2 + $0x1c] sm:$0xf]
      %v6145 = vld [vmem:[#allocation2 + $0x20] sm:$0x1]
      %v6146 = vld [vmem:[#allocation2 + $0x24] sm:$0xf]
      %v6147 = vld [vmem:[#allocation2 + $0x28] sm:$0xf]
      %v6148 = vld [vmem:[#allocation2 + $0x2c] sm:$0x1]
      %v6149 = vld [vmem:[#allocation2 + $0x30] sm:$0xf]
      %v6150 = vld [vmem:[#allocation2 + $0x34] sm:$0xf]
      %v6151 = vld [vmem:[#allocation2 + $0x38] sm:$0x1]
      %v6152 = vld [vmem:[#allocation2 + $0x3c] sm:$0xf]
      %v6153 = vld [vmem:[#allocation2 + $0x40] sm:$0xf]
      %v6154 = vld [vmem:[#allocation2 + $0x44] sm:$0x1]
      %v6155 = vld [vmem:[#allocation2 + $0x48] sm:$0xf]
      %v6156 = vld [vmem:[#allocation2 + $0x4c] sm:$0xf]
      %v6157 = vld [vmem:[#allocation2 + $0x50] sm:$0x1]
      %v6158 = vld [vmem:[#allocation2 + $0x54] sm:$0xf]
      %v6159 = vld [vmem:[#allocation2 + $0x58] sm:$0xf]
      %v6160 = vld [vmem:[#allocation2 + $0x5c] sm:$0x1]
      %v6161 = vld [vmem:[#allocation2 + $0x60] sm:$0xf]
      %v6162 = vld [vmem:[#allocation2 + $0x64] sm:$0xf]
      %v6163 = vld [vmem:[#allocation2 + $0x68] sm:$0x1]
      %v6164 = vld [vmem:[#allocation2 + $0x6c] sm:$0xf]
      %v6165 = vld [vmem:[#allocation2 + $0x70] sm:$0xf]
      %v6166 = vld [vmem:[#allocation2 + $0x74] sm:$0x1]
      %v6167 = vld [vmem:[#allocation2 + $0x78] sm:$0xf]
      %v6168 = vld [vmem:[#allocation2 + $0x7c] sm:$0xf]
      %v6169 = vld [vmem:[#allocation2 + $0x80] sm:$0x1]
      %v6170 = vld [vmem:[#allocation2 + $0x84] sm:$0xf]
      %v6171 = vld [vmem:[#allocation2 + $0x88] sm:$0xf]
      %v6172 = vld [vmem:[#allocation2 + $0x8c] sm:$0x1]
      %v6173 = vld [vmem:[#allocation2 + $0x90] sm:$0xf]
      %v6174 = vld [vmem:[#allocation2 + $0x94] sm:$0xf]
      %v6175 = vld [vmem:[#allocation2 + $0x98] sm:$0x1]
      %v6176 = vld [vmem:[#allocation2 + $0x9c] sm:$0xf]
      %v6177 = vld [vmem:[#allocation2 + $0xa0] sm:$0xf]
      %v6178 = vld [vmem:[#allocation2 + $0xa4] sm:$0x1]
      %v6179 = vld [vmem:[#allocation2 + $0xa8] sm:$0xf]
      %v6180 = vld [vmem:[#allocation2 + $0xac] sm:$0xf]
      %v6181 = vld [vmem:[#allocation2 + $0xb0] sm:$0x1]
      %v6182 = vld [vmem:[#allocation2 + $0xb4] sm:$0xf]
      %v6183 = vld [vmem:[#allocation2 + $0xb8] sm:$0xf]
      %v6184 = vld [vmem:[#allocation2 + $0xbc] sm:$0x1]
      %v6185 = vld [vmem:[#allocation2 + $0xc0] sm:$0xf]
      %v6186 = vld [vmem:[#allocation2 + $0xc4] sm:$0xf]
      %v6187 = vld [vmem:[#allocation2 + $0xc8] sm:$0x1]
      %v6188 = vld [vmem:[#allocation2 + $0xcc] sm:$0xf]
      %v6189 = vld [vmem:[#allocation2 + $0xd0] sm:$0xf]
      %v6190 = vld [vmem:[#allocation2 + $0xd4] sm:$0x1]
      %v6223 = vunpack.c.l.b16 %v6137
      %v6224 = vunpack.c.l.b16 %v6138
      %v6225 = vunpack.c.l.b16 %v6140
      %v6226 = vunpack.c.l.b16 %v6141
      %v6227 = vunpack.c.l.b16 %v6143
      %v6228 = vunpack.c.l.b16 %v6144
      %v6229 = vunpack.c.l.b16 %v6146
      %v6230 = vunpack.c.l.b16 %v6147
      %v6231 = vunpack.c.l.b16 %v6149
      %v6232 = vunpack.c.l.b16 %v6150
      %v6233 = vunpack.c.l.b16 %v6152
      %v6234 = vunpack.c.l.b16 %v6153
      %v6235 = vunpack.c.l.b16 %v6155
      %v6236 = vunpack.c.l.b16 %v6156
      %v6237 = vunpack.c.l.b16 %v6158
      %v6238 = vunpack.c.l.b16 %v6159
      %v6239 = vunpack.c.l.b16 %v6161
      %v6240 = vunpack.c.l.b16 %v6162
      %v6241 = vunpack.c.l.b16 %v6164
      %v6242 = vunpack.c.l.b16 %v6165
      %v6243 = vunpack.c.l.b16 %v6167
      %v6244 = vunpack.c.l.b16 %v6168
      %v6245 = vunpack.c.l.b16 %v6170
      %v6246 = vunpack.c.l.b16 %v6171
      %v6247 = vunpack.c.l.b16 %v6173
      %v6248 = vunpack.c.l.b16 %v6174
      %v6249 = vunpack.c.l.b16 %v6176
      %v6250 = vunpack.c.l.b16 %v6177
      %v6251 = vunpack.c.l.b16 %v6179
      %v6252 = vunpack.c.l.b16 %v6180
      %v6253 = vunpack.c.l.b16 %v6182
      %v6254 = vunpack.c.l.b16 %v6183
      %v6255 = vpack.c.b16 %v6224, %v6223
      %v6256 = vpack.c.b16 %v6226, %v6225
      %v6257 = vpack.c.b16 %v6228, %v6227
      %v6258 = vpack.c.b16 %v6230, %v6229
      %v6259 = vpack.c.b16 %v6232, %v6231
      %v6260 = vpack.c.b16 %v6234, %v6233
      %v6261 = vpack.c.b16 %v6236, %v6235
      %v6262 = vpack.c.b16 %v6238, %v6237
      %v6263 = vpack.c.b16 %v6240, %v6239
      %v6264 = vpack.c.b16 %v6242, %v6241
      %v6265 = vpack.c.b16 %v6244, %v6243
      %v6266 = vpack.c.b16 %v6246, %v6245
      %v6267 = vpack.c.b16 %v6248, %v6247
      %v6268 = vpack.c.b16 %v6250, %v6249
      %v6269 = vpack.c.b16 %v6252, %v6251
      %v6270 = vpack.c.b16 %v6254, %v6253
      %v6303 = vunpack.c.l.b16 %v6139
      %v6304 = vunpack.c.l.b16 %v6142
      %v6305 = vunpack.c.l.b16 %v6145
      %v6306 = vunpack.c.l.b16 %v6148
      %v6307 = vunpack.c.l.b16 %v6151
      %v6308 = vunpack.c.l.b16 %v6154
      %v6309 = vunpack.c.l.b16 %v6157
      %v6310 = vunpack.c.l.b16 %v6160
      %v6311 = vunpack.c.l.b16 %v6163
      %v6312 = vunpack.c.l.b16 %v6166
      %v6313 = vunpack.c.l.b16 %v6169
      %v6314 = vunpack.c.l.b16 %v6172
      %v6315 = vunpack.c.l.b16 %v6175
      %v6316 = vunpack.c.l.b16 %v6178
      %v6317 = vunpack.c.l.b16 %v6181
      %v6318 = vunpack.c.l.b16 %v6184
      %v6319 = vpack.c.b16 %v6303, %v6303
      %v6320 = vpack.c.b16 %v6304, %v6304
      %v6321 = vpack.c.b16 %v6305, %v6305
      %v6322 = vpack.c.b16 %v6306, %v6306
      %v6323 = vpack.c.b16 %v6307, %v6307
      %v6324 = vpack.c.b16 %v6308, %v6308
      %v6325 = vpack.c.b16 %v6309, %v6309
      %v6326 = vpack.c.b16 %v6310, %v6310
      %v6327 = vpack.c.b16 %v6311, %v6311
      %v6328 = vpack.c.b16 %v6312, %v6312
      %v6329 = vpack.c.b16 %v6313, %v6313
      %v6330 = vpack.c.b16 %v6314, %v6314
      %v6331 = vpack.c.b16 %v6315, %v6315
      %v6332 = vpack.c.b16 %v6316, %v6316
      %v6333 = vpack.c.b16 %v6317, %v6317
      %v6334 = vpack.c.b16 %v6318, %v6318
      %v6336 = vshrl.u32 %v6255, 16
      %v6338 = vshll.u32 %v6255, 16
      %v6340 = vrot.slane %v6338, 1
      %v6341 = vor.u32 %v6336, %v6340
      %v6343 = vshll.u32 %v6319, 16
      %v6345 = vrot.slane %v6343, 1
      %v6346 = vsel %vm741, %v6341, %v6345
      %v6348 = vshrl.u32 %v6256, 16
      %v6350 = vshll.u32 %v6256, 16
      %v6352 = vrot.slane %v6350, 1
      %v6353 = vor.u32 %v6348, %v6352
      %v6355 = vshll.u32 %v6320, 16
      %v6357 = vrot.slane %v6355, 1
      %v6358 = vsel %vm741, %v6353, %v6357
      %v6360 = vshrl.u32 %v6257, 16
      %v6362 = vshll.u32 %v6257, 16
      %v6364 = vrot.slane %v6362, 1
      %v6365 = vor.u32 %v6360, %v6364
      %v6367 = vshll.u32 %v6321, 16
      %v6369 = vrot.slane %v6367, 1
      %v6370 = vsel %vm741, %v6365, %v6369
      %v6372 = vshrl.u32 %v6258, 16
      %v6374 = vshll.u32 %v6258, 16
      %v6376 = vrot.slane %v6374, 1
      %v6377 = vor.u32 %v6372, %v6376
      %v6379 = vshll.u32 %v6322, 16
      %v6381 = vrot.slane %v6379, 1
      %v6382 = vsel %vm741, %v6377, %v6381
      %v6384 = vshrl.u32 %v6259, 16
      %v6386 = vshll.u32 %v6259, 16
      %v6388 = vrot.slane %v6386, 1
      %v6389 = vor.u32 %v6384, %v6388
      %v6391 = vshll.u32 %v6323, 16
      %v6393 = vrot.slane %v6391, 1
      %v6394 = vsel %vm741, %v6389, %v6393
      %v6396 = vshrl.u32 %v6260, 16
      %v6398 = vshll.u32 %v6260, 16
      %v6400 = vrot.slane %v6398, 1
      %v6401 = vor.u32 %v6396, %v6400
      %v6403 = vshll.u32 %v6324, 16
      %v6405 = vrot.slane %v6403, 1
      %v6406 = vsel %vm741, %v6401, %v6405
      %v6408 = vshrl.u32 %v6261, 16
      %v6410 = vshll.u32 %v6261, 16
      %v6412 = vrot.slane %v6410, 1
      %v6413 = vor.u32 %v6408, %v6412
      %v6415 = vshll.u32 %v6325, 16
      %v6417 = vrot.slane %v6415, 1
      %v6418 = vsel %vm741, %v6413, %v6417
      %v6420 = vshrl.u32 %v6262, 16
      %v6422 = vshll.u32 %v6262, 16
      %v6424 = vrot.slane %v6422, 1
      %v6425 = vor.u32 %v6420, %v6424
      %v6427 = vshll.u32 %v6326, 16
      %v6429 = vrot.slane %v6427, 1
      %v6430 = vsel %vm741, %v6425, %v6429
      %v6432 = vshrl.u32 %v6263, 16
      %v6434 = vshll.u32 %v6263, 16
      %v6436 = vrot.slane %v6434, 1
      %v6437 = vor.u32 %v6432, %v6436
      %v6439 = vshll.u32 %v6327, 16
      %v6441 = vrot.slane %v6439, 1
      %v6442 = vsel %vm741, %v6437, %v6441
      %v6444 = vshrl.u32 %v6264, 16
      %v6446 = vshll.u32 %v6264, 16
      %v6448 = vrot.slane %v6446, 1
      %v6449 = vor.u32 %v6444, %v6448
      %v6451 = vshll.u32 %v6328, 16
      %v6453 = vrot.slane %v6451, 1
      %v6454 = vsel %vm741, %v6449, %v6453
      %v6456 = vshrl.u32 %v6265, 16
      %v6458 = vshll.u32 %v6265, 16
      %v6460 = vrot.slane %v6458, 1
      %v6461 = vor.u32 %v6456, %v6460
      %v6463 = vshll.u32 %v6329, 16
      %v6465 = vrot.slane %v6463, 1
      %v6466 = vsel %vm741, %v6461, %v6465
      %v6468 = vshrl.u32 %v6266, 16
      %v6470 = vshll.u32 %v6266, 16
      %v6472 = vrot.slane %v6470, 1
      %v6473 = vor.u32 %v6468, %v6472
      %v6475 = vshll.u32 %v6330, 16
      %v6477 = vrot.slane %v6475, 1
      %v6478 = vsel %vm741, %v6473, %v6477
      %v6480 = vshrl.u32 %v6267, 16
      %v6482 = vshll.u32 %v6267, 16
      %v6484 = vrot.slane %v6482, 1
      %v6485 = vor.u32 %v6480, %v6484
      %v6487 = vshll.u32 %v6331, 16
      %v6489 = vrot.slane %v6487, 1
      %v6490 = vsel %vm741, %v6485, %v6489
      %v6492 = vshrl.u32 %v6268, 16
      %v6494 = vshll.u32 %v6268, 16
      %v6496 = vrot.slane %v6494, 1
      %v6497 = vor.u32 %v6492, %v6496
      %v6499 = vshll.u32 %v6332, 16
      %v6501 = vrot.slane %v6499, 1
      %v6502 = vsel %vm741, %v6497, %v6501
      %v6504 = vshrl.u32 %v6269, 16
      %v6506 = vshll.u32 %v6269, 16
      %v6508 = vrot.slane %v6506, 1
      %v6509 = vor.u32 %v6504, %v6508
      %v6511 = vshll.u32 %v6333, 16
      %v6513 = vrot.slane %v6511, 1
      %v6514 = vsel %vm741, %v6509, %v6513
      %v6516 = vshrl.u32 %v6270, 16
      %v6518 = vshll.u32 %v6270, 16
      %v6520 = vrot.slane %v6518, 1
      %v6521 = vor.u32 %v6516, %v6520
      %v6523 = vshll.u32 %v6334, 16
      %v6525 = vrot.slane %v6523, 1
      %v6526 = vsel %vm741, %v6521, %v6525
      %v6543 = vrot.slane %v6255, 1
      %v6544 = vrot.slane %v6319, 1
      %v6545 = vsel %vm950, %v6543, %v6544
      %v6546 = vrot.slane %v6256, 1
      %v6547 = vrot.slane %v6320, 1
      %v6548 = vsel %vm950, %v6546, %v6547
      %v6549 = vrot.slane %v6257, 1
      %v6550 = vrot.slane %v6321, 1
      %v6551 = vsel %vm950, %v6549, %v6550
      %v6552 = vrot.slane %v6258, 1
      %v6553 = vrot.slane %v6322, 1
      %v6554 = vsel %vm950, %v6552, %v6553
      %v6555 = vrot.slane %v6259, 1
      %v6556 = vrot.slane %v6323, 1
      %v6557 = vsel %vm950, %v6555, %v6556
      %v6558 = vrot.slane %v6260, 1
      %v6559 = vrot.slane %v6324, 1
      %v6560 = vsel %vm950, %v6558, %v6559
      %v6561 = vrot.slane %v6261, 1
      %v6562 = vrot.slane %v6325, 1
      %v6563 = vsel %vm950, %v6561, %v6562
      %v6564 = vrot.slane %v6262, 1
      %v6565 = vrot.slane %v6326, 1
      %v6566 = vsel %vm950, %v6564, %v6565
      %v6567 = vrot.slane %v6263, 1
      %v6568 = vrot.slane %v6327, 1
      %v6569 = vsel %vm950, %v6567, %v6568
      %v6570 = vrot.slane %v6264, 1
      %v6571 = vrot.slane %v6328, 1
      %v6572 = vsel %vm950, %v6570, %v6571
      %v6573 = vrot.slane %v6265, 1
      %v6574 = vrot.slane %v6329, 1
      %v6575 = vsel %vm950, %v6573, %v6574
      %v6576 = vrot.slane %v6266, 1
      %v6577 = vrot.slane %v6330, 1
      %v6578 = vsel %vm950, %v6576, %v6577
      %v6579 = vrot.slane %v6267, 1
      %v6580 = vrot.slane %v6331, 1
      %v6581 = vsel %vm950, %v6579, %v6580
      %v6582 = vrot.slane %v6268, 1
      %v6583 = vrot.slane %v6332, 1
      %v6584 = vsel %vm950, %v6582, %v6583
      %v6585 = vrot.slane %v6269, 1
      %v6586 = vrot.slane %v6333, 1
      %v6587 = vsel %vm950, %v6585, %v6586
      %v6588 = vrot.slane %v6270, 1
      %v6589 = vrot.slane %v6334, 1
      %v6590 = vsel %vm950, %v6588, %v6589
      %v6607 = vld [vmem:[%s1] sm:$0xf]
      %v6608 = vld [vmem:[%s1 + $0x4] sm:$0xf]
      %v6609 = vld [vmem:[%s1 + $0x8] sm:$0xf]
      %v6610 = vld [vmem:[%s1 + $0xc] sm:$0xf]
      %v6611 = vld [vmem:[%s1 + $0x10] sm:$0xf]
      %v6612 = vld [vmem:[%s1 + $0x14] sm:$0xf]
      %v6613 = vld [vmem:[%s1 + $0x18] sm:$0xf]
      %v6614 = vld [vmem:[%s1 + $0x1c] sm:$0xf]
      %v6615 = vld [vmem:[%s1 + $0x20] sm:$0xf]
      %v6616 = vld [vmem:[%s1 + $0x24] sm:$0xf]
      %v6617 = vld [vmem:[%s1 + $0x28] sm:$0xf]
      %v6618 = vld [vmem:[%s1 + $0x2c] sm:$0xf]
      %v6619 = vld [vmem:[%s1 + $0x30] sm:$0xf]
      %v6620 = vld [vmem:[%s1 + $0x34] sm:$0xf]
      %v6621 = vld [vmem:[%s1 + $0x38] sm:$0xf]
      %v6622 = vld [vmem:[%s1 + $0x3c] sm:$0xf]
      %v6623 = vld [vmem:[%s1 + $0x40] sm:$0xf]
      %v6624 = vld [vmem:[%s1 + $0x44] sm:$0xf]
      %v6625 = vld [vmem:[%s1 + $0x48] sm:$0xf]
      %v6626 = vld [vmem:[%s1 + $0x4c] sm:$0xf]
      %v6627 = vld [vmem:[%s1 + $0x50] sm:$0xf]
      %v6628 = vld [vmem:[%s1 + $0x54] sm:$0xf]
      %v6629 = vld [vmem:[%s1 + $0x58] sm:$0xf]
      %v6630 = vld [vmem:[%s1 + $0x5c] sm:$0xf]
      %v6631 = vld [vmem:[%s1 + $0x60] sm:$0xf]
      %v6632 = vld [vmem:[%s1 + $0x64] sm:$0xf]
      %v6633 = vld [vmem:[%s1 + $0x68] sm:$0xf]
      %v6634 = vld [vmem:[%s1 + $0x6c] sm:$0xf]
      %v6635 = vld [vmem:[%s1 + $0x70] sm:$0xf]
      %v6636 = vld [vmem:[%s1 + $0x74] sm:$0xf]
      %v6637 = vld [vmem:[%s1 + $0x78] sm:$0xf]
      %v6638 = vld [vmem:[%s1 + $0x7c] sm:$0xf]
      %v6639 = vld [vmem:[%s1 + $0x80] sm:$0xf]
      %v6640 = vld [vmem:[%s1 + $0x84] sm:$0xf]
      %v6641 = vld [vmem:[%s1 + $0x88] sm:$0xf]
      %v6642 = vld [vmem:[%s1 + $0x8c] sm:$0xf]
      %v6643 = vld [vmem:[%s1 + $0x90] sm:$0xf]
      %v6644 = vld [vmem:[%s1 + $0x94] sm:$0xf]
      %v6645 = vld [vmem:[%s1 + $0x98] sm:$0xf]
      %v6646 = vld [vmem:[%s1 + $0x9c] sm:$0xf]
      %v6647 = vld [vmem:[%s1 + $0xa0] sm:$0xf]
      %v6648 = vld [vmem:[%s1 + $0xa4] sm:$0xf]
      %v6649 = vld [vmem:[%s1 + $0xa8] sm:$0xf]
      %v6650 = vld [vmem:[%s1 + $0xac] sm:$0xf]
      %v6651 = vld [vmem:[%s1 + $0xb0] sm:$0xf]
      %v6652 = vld [vmem:[%s1 + $0xb4] sm:$0xf]
      %v6653 = vld [vmem:[%s1 + $0xb8] sm:$0xf]
      %v6654 = vld [vmem:[%s1 + $0xbc] sm:$0xf]
      %v6657 = vunpack.c.l.b16 %v6185
      %v6658 = vunpack.c.l.b16 %v6186
      %v6659 = vpack.c.b16 %v6658, %v6657
      %v6662 = vunpack.c.l.b16 %v6187
      %v6663 = vpack.c.b16 %v6662, %v6662
      %v6665 = vshrl.u32 %v6659, 16
      %v6667 = vshll.u32 %v6659, 16
      %v6669 = vrot.slane %v6667, 1
      %v6670 = vor.u32 %v6665, %v6669
      %v6672 = vshll.u32 %v6663, 16
      %v6674 = vrot.slane %v6672, 1
      %v6675 = vsel %vm741, %v6670, %v6674
      %v6677 = vrot.slane %v6659, 1
      %v6678 = vrot.slane %v6663, 1
      %v6679 = vsel %vm950, %v6677, %v6678
      %v6681 = vld [vmem:[%s1089] sm:$0xf]
      %v6682 = vld [vmem:[%s1089 + $0x4] sm:$0xf]
      %v6683 = vld [vmem:[%s1089 + $0x8] sm:$0xf]
      %v6684 = vld [vmem:[%s1089 + $0xc] sm:$0xf]
      %v6685 = vld [vmem:[%s1089 + $0x10] sm:$0xf]
      %v6686 = vld [vmem:[%s1089 + $0x14] sm:$0xf]
      %v6687 = vld [vmem:[%s1089 + $0x18] sm:$0xf]
      %v6688 = vld [vmem:[%s1089 + $0x1c] sm:$0xf]
      %v6689 = vld [vmem:[%s1089 + $0x20] sm:$0xf]
      %v6690 = vld [vmem:[%s1089 + $0x24] sm:$0xf]
      %v6691 = vld [vmem:[%s1089 + $0x28] sm:$0xf]
      %v6692 = vld [vmem:[%s1089 + $0x2c] sm:$0xf]
      %v6693 = vld [vmem:[%s1089 + $0x30] sm:$0xf]
      %v6694 = vld [vmem:[%s1089 + $0x34] sm:$0xf]
      %v6695 = vld [vmem:[%s1089 + $0x38] sm:$0xf]
      %v6696 = vld [vmem:[%s1089 + $0x3c] sm:$0xf]
      %v6697 = vld [vmem:[%s1089 + $0x40] sm:$0xf]
      %v6698 = vld [vmem:[%s1089 + $0x44] sm:$0xf]
      %v6699 = vld [vmem:[%s1089 + $0x48] sm:$0xf]
      %v6700 = vld [vmem:[%s1089 + $0x4c] sm:$0xf]
      %v6701 = vld [vmem:[%s1089 + $0x50] sm:$0xf]
      %v6702 = vld [vmem:[%s1089 + $0x54] sm:$0xf]
      %v6703 = vld [vmem:[%s1089 + $0x58] sm:$0xf]
      %v6704 = vld [vmem:[%s1089 + $0x5c] sm:$0xf]
      %v6705 = vld [vmem:[%s1089 + $0x60] sm:$0xf]
      %v6706 = vld [vmem:[%s1089 + $0x64] sm:$0xf]
      %v6707 = vld [vmem:[%s1089 + $0x68] sm:$0xf]
      %v6708 = vld [vmem:[%s1089 + $0x6c] sm:$0xf]
      %v6709 = vld [vmem:[%s1089 + $0x70] sm:$0xf]
      %v6710 = vld [vmem:[%s1089 + $0x74] sm:$0xf]
      %v6711 = vld [vmem:[%s1089 + $0x78] sm:$0xf]
      %v6712 = vld [vmem:[%s1089 + $0x7c] sm:$0xf]
      %v6713 = vld [vmem:[%s1089 + $0x80] sm:$0xf]
      %v6714 = vld [vmem:[%s1089 + $0x84] sm:$0xf]
      %v6715 = vld [vmem:[%s1089 + $0x88] sm:$0xf]
      %v6716 = vld [vmem:[%s1089 + $0x8c] sm:$0xf]
      %v6717 = vld [vmem:[%s1089 + $0x90] sm:$0xf]
      %v6718 = vld [vmem:[%s1089 + $0x94] sm:$0xf]
      %v6719 = vld [vmem:[%s1089 + $0x98] sm:$0xf]
      %v6720 = vld [vmem:[%s1089 + $0x9c] sm:$0xf]
      %v6721 = vld [vmem:[%s1089 + $0xa0] sm:$0xf]
      %v6722 = vld [vmem:[%s1089 + $0xa4] sm:$0xf]
      %v6723 = vld [vmem:[%s1089 + $0xa8] sm:$0xf]
      %v6724 = vld [vmem:[%s1089 + $0xac] sm:$0xf]
      %v6725 = vld [vmem:[%s1089 + $0xb0] sm:$0xf]
      %v6726 = vld [vmem:[%s1089 + $0xb4] sm:$0xf]
      %v6727 = vld [vmem:[%s1089 + $0xb8] sm:$0xf]
      %v6728 = vld [vmem:[%s1089 + $0xbc] sm:$0xf]
      %v6777 = vunpack.c.l.b16 %v6681
      %v6778 = vunpack.c.l.b16 %v6682
      %v6779 = vunpack.c.l.b16 %v6683
      %v6780 = vunpack.c.l.b16 %v6684
      %v6781 = vunpack.c.l.b16 %v6685
      %v6782 = vunpack.c.l.b16 %v6686
      %v6783 = vunpack.c.l.b16 %v6687
      %v6784 = vunpack.c.l.b16 %v6688
      %v6785 = vunpack.c.l.b16 %v6689
      %v6786 = vunpack.c.l.b16 %v6690
      %v6787 = vunpack.c.l.b16 %v6691
      %v6788 = vunpack.c.l.b16 %v6692
      %v6789 = vunpack.c.l.b16 %v6693
      %v6790 = vunpack.c.l.b16 %v6694
      %v6791 = vunpack.c.l.b16 %v6695
      %v6792 = vunpack.c.l.b16 %v6696
      %v6793 = vunpack.c.l.b16 %v6697
      %v6794 = vunpack.c.l.b16 %v6698
      %v6795 = vunpack.c.l.b16 %v6699
      %v6796 = vunpack.c.l.b16 %v6700
      %v6797 = vunpack.c.l.b16 %v6701
      %v6798 = vunpack.c.l.b16 %v6702
      %v6799 = vunpack.c.l.b16 %v6703
      %v6800 = vunpack.c.l.b16 %v6704
      %v6801 = vunpack.c.l.b16 %v6705
      %v6802 = vunpack.c.l.b16 %v6706
      %v6803 = vunpack.c.l.b16 %v6707
      %v6804 = vunpack.c.l.b16 %v6708
      %v6805 = vunpack.c.l.b16 %v6709
      %v6806 = vunpack.c.l.b16 %v6710
      %v6807 = vunpack.c.l.b16 %v6711
      %v6808 = vunpack.c.l.b16 %v6712
      %v6809 = vunpack.c.l.b16 %v6713
      %v6810 = vunpack.c.l.b16 %v6714
      %v6811 = vunpack.c.l.b16 %v6715
      %v6812 = vunpack.c.l.b16 %v6716
      %v6813 = vunpack.c.l.b16 %v6717
      %v6814 = vunpack.c.l.b16 %v6718
      %v6815 = vunpack.c.l.b16 %v6719
      %v6816 = vunpack.c.l.b16 %v6720
      %v6817 = vunpack.c.l.b16 %v6721
      %v6818 = vunpack.c.l.b16 %v6722
      %v6819 = vunpack.c.l.b16 %v6723
      %v6820 = vunpack.c.l.b16 %v6724
      %v6821 = vunpack.c.l.b16 %v6725
      %v6822 = vunpack.c.l.b16 %v6726
      %v6823 = vunpack.c.l.b16 %v6727
      %v6824 = vunpack.c.l.b16 %v6728
      %v6825 = vpack.c.b16 %v6778, %v6777
      %v6826 = vpack.c.b16 %v6780, %v6779
      %v6827 = vpack.c.b16 %v6782, %v6781
      %v6828 = vpack.c.b16 %v6784, %v6783
      %v6829 = vpack.c.b16 %v6786, %v6785
      %v6830 = vpack.c.b16 %v6788, %v6787
      %v6831 = vpack.c.b16 %v6790, %v6789
      %v6832 = vpack.c.b16 %v6792, %v6791
      %v6833 = vpack.c.b16 %v6794, %v6793
      %v6834 = vpack.c.b16 %v6796, %v6795
      %v6835 = vpack.c.b16 %v6798, %v6797
      %v6836 = vpack.c.b16 %v6800, %v6799
      %v6837 = vpack.c.b16 %v6802, %v6801
      %v6838 = vpack.c.b16 %v6804, %v6803
      %v6839 = vpack.c.b16 %v6806, %v6805
      %v6840 = vpack.c.b16 %v6808, %v6807
      %v6841 = vpack.c.b16 %v6810, %v6809
      %v6842 = vpack.c.b16 %v6812, %v6811
      %v6843 = vpack.c.b16 %v6814, %v6813
      %v6844 = vpack.c.b16 %v6816, %v6815
      %v6845 = vpack.c.b16 %v6818, %v6817
      %v6846 = vpack.c.b16 %v6820, %v6819
      %v6847 = vpack.c.b16 %v6822, %v6821
      %v6848 = vpack.c.b16 %v6824, %v6823
      %6873 = vmatprep.subr.bf16.mxu0 0
      %6874 = vmatpush1.bf16.msra.mxu0 %v6825
      %6875 = vmatprep.subr.bf16.mxu0 0
      %6876 = vmatpush1.bf16.msra.mxu0 %v6826
      %6877 = vmatprep.subr.bf16.mxu0 0
      %6878 = vmatpush1.bf16.msra.mxu0 %v6827
      %6879 = vmatprep.subr.bf16.mxu0 0
      %6880 = vmatpush1.bf16.msra.mxu0 %v6828
      %6881 = vmatprep.subr.bf16.mxu0 0
      %6882 = vmatpush1.bf16.msra.mxu0 %v6829
      %6883 = vmatprep.subr.bf16.mxu0 0
      %6884 = vmatpush1.bf16.msra.mxu0 %v6830
      %6885 = vmatprep.subr.bf16.mxu0 0
      %6886 = vmatpush1.bf16.msra.mxu0 %v6831
      %6887 = vmatprep.subr.bf16.mxu0 0
      %6888 = vmatpush1.bf16.msra.mxu0 %v6832
      %6889 = vmatprep.subr.bf16.mxu0 0
      %6890 = vmatpush1.bf16.msra.mxu0 %v6833
      %6891 = vmatprep.subr.bf16.mxu0 0
      %6892 = vmatpush1.bf16.msra.mxu0 %v6834
      %6893 = vmatprep.subr.bf16.mxu0 0
      %6894 = vmatpush1.bf16.msra.mxu0 %v6835
      %6895 = vmatprep.subr.bf16.mxu0 0
      %6896 = vmatpush1.bf16.msra.mxu0 %v6836
      %6897 = vmatprep.subr.bf16.mxu0 0
      %6898 = vmatpush1.bf16.msra.mxu0 %v6837
      %6899 = vmatprep.subr.bf16.mxu0 0
      %6900 = vmatpush1.bf16.msra.mxu0 %v6838
      %6901 = vmatprep.subr.bf16.mxu0 0
      %6902 = vmatpush1.bf16.msra.mxu0 %v6839
      %6903 = vmatprep.subr.bf16.mxu0 0
      %6904 = vmatpush1.bf16.msra.mxu0 %v6840
      %6905 = vmatprep.mubr.bf16.mxu0 %v6358
      %6906 = vmatmul.mubr.bf16.gmra.mrb[0].mxu0 %v6256
      %v6907 = vpop.f32.mrb[0].mxu0
      %v6908 = vadd.f32 0.0, %v6907
      %v6909 = vpop.f32.mrb[0].mxu0
      %v6910 = vpop.f32.mrb[0].mxu0
      %v6911 = vadd.f32 0.0, %v6910
      %v6912 = vpop.f32.mrb[0].mxu0
      %6913 = vmatprep.mubr.bf16.mxu0 %v6370
      %6914 = vmatmul.mubr.bf16.gmra.mrb[0].mxu0 %v6257
      %v6915 = vpop.f32.mrb[0].mxu0
      %v6916 = vadd.f32 0.0, %v6915
      %v6917 = vpop.f32.mrb[0].mxu0
      %v6918 = vpop.f32.mrb[0].mxu0
      %v6919 = vadd.f32 0.0, %v6918
      %v6920 = vpop.f32.mrb[0].mxu0
      %6921 = vmatprep.mubr.bf16.mxu0 %v6382
      %6922 = vmatmul.mubr.bf16.gmra.mrb[0].mxu0 %v6258
      %v6923 = vpop.f32.mrb[0].mxu0
      %v6924 = vadd.f32 0.0, %v6923
      %v6925 = vpop.f32.mrb[0].mxu0
      %v6926 = vpop.f32.mrb[0].mxu0
      %v6927 = vadd.f32 0.0, %v6926
      %v6928 = vpop.f32.mrb[0].mxu0
      %6929 = vmatprep.mubr.bf16.mxu0 %v6394
      %6930 = vmatmul.mubr.bf16.gmra.mrb[0].mxu0 %v6259
      %v6931 = vpop.f32.mrb[0].mxu0
      %v6932 = vadd.f32 0.0, %v6931
      %v6933 = vpop.f32.mrb[0].mxu0
      %v6934 = vpop.f32.mrb[0].mxu0
      %v6935 = vadd.f32 0.0, %v6934
      %v6936 = vpop.f32.mrb[0].mxu0
      %6937 = vmatprep.mubr.bf16.mxu0 %v6406
      %6938 = vmatmul.mubr.bf16.gmra.mrb[0].mxu0 %v6260
      %v6939 = vpop.f32.mrb[0].mxu0
      %v6940 = vadd.f32 0.0, %v6939
      %v6941 = vpop.f32.mrb[0].mxu0
      %v6942 = vpop.f32.mrb[0].mxu0
      %v6943 = vadd.f32 0.0, %v6942
      %v6944 = vpop.f32.mrb[0].mxu0
      %6945 = vmatprep.mubr.bf16.mxu0 %v6418
      %6946 = vmatmul.mubr.bf16.gmra.mrb[0].mxu0 %v6261
      %v6947 = vpop.f32.mrb[0].mxu0
      %v6948 = vadd.f32 0.0, %v6947
      %v6949 = vpop.f32.mrb[0].mxu0
      %v6950 = vpop.f32.mrb[0].mxu0
      %v6951 = vadd.f32 0.0, %v6950
      %v6952 = vpop.f32.mrb[0].mxu0
      %6953 = vmatprep.mubr.bf16.mxu0 %v6430
      %6954 = vmatmul.mubr.bf16.gmra.mrb[0].mxu0 %v6262
      %v6955 = vpop.f32.mrb[0].mxu0
      %v6956 = vadd.f32 0.0, %v6955
      %v6957 = vpop.f32.mrb[0].mxu0
      %v6958 = vpop.f32.mrb[0].mxu0
      %v6959 = vadd.f32 0.0, %v6958
      %v6960 = vpop.f32.mrb[0].mxu0
      %6961 = vmatprep.mubr.bf16.mxu0 %v6442
      %6962 = vmatmul.mubr.bf16.gmra.mrb[0].mxu0 %v6263
      %v6963 = vpop.f32.mrb[0].mxu0
      %v6964 = vadd.f32 0.0, %v6963
      %v6965 = vpop.f32.mrb[0].mxu0
      %v6966 = vpop.f32.mrb[0].mxu0
      %v6967 = vadd.f32 0.0, %v6966
      %v6968 = vpop.f32.mrb[0].mxu0
      %6969 = vmatprep.mubr.bf16.mxu0 %v6454
      %6970 = vmatmul.mubr.bf16.gmra.mrb[0].mxu0 %v6264
      %v6971 = vpop.f32.mrb[0].mxu0
      %v6972 = vadd.f32 0.0, %v6971
      %v6973 = vpop.f32.mrb[0].mxu0
      %v6974 = vpop.f32.mrb[0].mxu0
      %v6975 = vadd.f32 0.0, %v6974
      %v6976 = vpop.f32.mrb[0].mxu0
      %6977 = vmatprep.mubr.bf16.mxu0 %v6466
      %6978 = vmatmul.mubr.bf16.gmra.mrb[0].mxu0 %v6265
      %v6979 = vpop.f32.mrb[0].mxu0
      %v6980 = vadd.f32 0.0, %v6979
      %v6981 = vpop.f32.mrb[0].mxu0
      %v6982 = vpop.f32.mrb[0].mxu0
      %v6983 = vadd.f32 0.0, %v6982
      %v6984 = vpop.f32.mrb[0].mxu0
      %6985 = vmatprep.mubr.bf16.mxu0 %v6478
      %6986 = vmatmul.mubr.bf16.gmra.mrb[0].mxu0 %v6266
      %v6987 = vpop.f32.mrb[0].mxu0
      %v6988 = vadd.f32 0.0, %v6987
      %v6989 = vpop.f32.mrb[0].mxu0
      %v6990 = vpop.f32.mrb[0].mxu0
      %v6991 = vadd.f32 0.0, %v6990
      %v6992 = vpop.f32.mrb[0].mxu0
      %6993 = vmatprep.mubr.bf16.mxu0 %v6490
      %6994 = vmatmul.mubr.bf16.gmra.mrb[0].mxu0 %v6267
      %v6995 = vpop.f32.mrb[0].mxu0
      %v6996 = vadd.f32 0.0, %v6995
      %v6997 = vpop.f32.mrb[0].mxu0
      %v6998 = vpop.f32.mrb[0].mxu0
      %v6999 = vadd.f32 0.0, %v6998
      %v7000 = vpop.f32.mrb[0].mxu0
      %7001 = vmatprep.mubr.bf16.mxu0 %v6502
      %7002 = vmatmul.mubr.bf16.gmra.mrb[0].mxu0 %v6268
      %v7003 = vpop.f32.mrb[0].mxu0
      %v7004 = vadd.f32 0.0, %v7003
      %v7005 = vpop.f32.mrb[0].mxu0
      %v7006 = vpop.f32.mrb[0].mxu0
      %v7007 = vadd.f32 0.0, %v7006
      %v7008 = vpop.f32.mrb[0].mxu0
      %7009 = vmatprep.mubr.bf16.mxu0 %v6514
      %7010 = vmatmul.mubr.bf16.gmra.mrb[0].mxu0 %v6269
      %v7011 = vpop.f32.mrb[0].mxu0
      %v7012 = vadd.f32 0.0, %v7011
      %v7013 = vpop.f32.mrb[0].mxu0
      %v7014 = vpop.f32.mrb[0].mxu0
      %v7015 = vadd.f32 0.0, %v7014
      %v7016 = vpop.f32.mrb[0].mxu0
      %7017 = vmatprep.mubr.bf16.mxu0 %v6526
      %7018 = vmatmul.mubr.bf16.gmra.mrb[0].mxu0 %v6270
      %v7019 = vpop.f32.mrb[0].mxu0
      %v7020 = vadd.f32 0.0, %v7019
      %v7021 = vpop.f32.mrb[0].mxu0
      %v7022 = vpop.f32.mrb[0].mxu0
      %v7023 = vadd.f32 0.0, %v7022
      %v7024 = vpop.f32.mrb[0].mxu0
      %7025 = vmatprep.mubr.bf16.mxu0 %v6675
      %7026 = vmatmul.mubr.bf16.gmra.mrb[0].mxu0 %v6659
      %v7027 = vpop.f32.mrb[0].mxu0
      %v7028 = vadd.f32 0.0, %v7027
      %v7029 = vpop.f32.mrb[0].mxu0
      %v7030 = vpop.f32.mrb[0].mxu0
      %v7031 = vadd.f32 0.0, %v7030
      %v7032 = vpop.f32.mrb[0].mxu0
      %7033 = vdwg.mxu0
      %7034 = vmatprep.subr.bf16.mxu0 0
      %7035 = vmatpush1.bf16.msra.mxu0 %v6841
      %7036 = vmatprep.subr.bf16.mxu0 0
      %7037 = vmatpush1.bf16.msra.mxu0 %v6842
      %7038 = vmatprep.subr.bf16.mxu0 0
      %7039 = vmatpush1.bf16.msra.mxu0 %v6843
      %7040 = vmatprep.subr.bf16.mxu0 0
      %7041 = vmatpush1.bf16.msra.mxu0 %v6844
      %7042 = vmatprep.subr.bf16.mxu0 0
      %7043 = vmatpush1.bf16.msra.mxu0 %v6845
      %7044 = vmatprep.subr.bf16.mxu0 0
      %7045 = vmatpush1.bf16.msra.mxu0 %v6846
      %7046 = vmatprep.subr.bf16.mxu0 0
      %7047 = vmatpush1.bf16.msra.mxu0 %v6847
      %7048 = vmatprep.subr.bf16.mxu0 0
      %7049 = vmatpush1.bf16.msra.mxu0 %v6848
      %7050 = vmatprep.subr.bf16.mxu0 0
      %7051 = vmatpush1.bf16.msra.mxu0 0
      %7052 = vmatprep.subr.bf16.mxu0 0
      %7053 = vmatpush1.bf16.msra.mxu0 0
      %7054 = vmatprep.subr.bf16.mxu0 0
      %7055 = vmatpush1.bf16.msra.mxu0 0
      %7056 = vmatprep.subr.bf16.mxu0 0
      %7057 = vmatpush1.bf16.msra.mxu0 0
      %7058 = vmatprep.subr.bf16.mxu0 0
      %7059 = vmatpush1.bf16.msra.mxu0 0
      %7060 = vmatprep.subr.bf16.mxu0 0
      %7061 = vmatpush1.bf16.msra.mxu0 0
      %7062 = vmatprep.subr.bf16.mxu0 0
      %7063 = vmatpush1.bf16.msra.mxu0 0
      %7064 = vmatprep.subr.bf16.mxu0 0
      %7065 = vmatpush1.bf16.msra.mxu0 0
      %7066 = vmatprep.mubr.bf16.mxu0 0
      %7067 = vmatmul.mubr.bf16.gmra.mrb[0].mxu0 %v6548
      %v7068 = vpop.f32.mrb[0].mxu0
      %v7069 = vadd.f32 %v6908, %v7068
      %v7070 = vpop.f32.mrb[0].mxu0
      %v7071 = vpop.f32.mrb[0].mxu0
      %v7072 = vadd.f32 %v6911, %v7071
      %v7073 = vpop.f32.mrb[0].mxu0
      %7074 = vmatprep.mubr.bf16.mxu0 0
      %7075 = vmatmul.mubr.bf16.gmra.mrb[0].mxu0 %v6551
      %v7076 = vpop.f32.mrb[0].mxu0
      %v7077 = vadd.f32 %v6916, %v7076
      %v7078 = vpop.f32.mrb[0].mxu0
      %v7079 = vpop.f32.mrb[0].mxu0
      %v7080 = vadd.f32 %v6919, %v7079
      %v7081 = vpop.f32.mrb[0].mxu0
      %7082 = vmatprep.mubr.bf16.mxu0 0
      %7083 = vmatmul.mubr.bf16.gmra.mrb[0].mxu0 %v6554
      %v7084 = vpop.f32.mrb[0].mxu0
      %v7085 = vadd.f32 %v6924, %v7084
      %v7086 = vpop.f32.mrb[0].mxu0
      %v7087 = vpop.f32.mrb[0].mxu0
      %v7088 = vadd.f32 %v6927, %v7087
      %v7089 = vpop.f32.mrb[0].mxu0
      %7090 = vmatprep.mubr.bf16.mxu0 0
      %7091 = vmatmul.mubr.bf16.gmra.mrb[0].mxu0 %v6557
      %v7092 = vpop.f32.mrb[0].mxu0
      %v7093 = vadd.f32 %v6932, %v7092
      %v7094 = vpop.f32.mrb[0].mxu0
      %v7095 = vpop.f32.mrb[0].mxu0
      %v7096 = vadd.f32 %v6935, %v7095
      %v7097 = vpop.f32.mrb[0].mxu0
      %7098 = vmatprep.mubr.bf16.mxu0 0
      %7099 = vmatmul.mubr.bf16.gmra.mrb[0].mxu0 %v6560
      %v7100 = vpop.f32.mrb[0].mxu0
      %v7101 = vadd.f32 %v6940, %v7100
      %v7102 = vpop.f32.mrb[0].mxu0
      %v7103 = vpop.f32.mrb[0].mxu0
      %v7104 = vadd.f32 %v6943, %v7103
      %v7105 = vpop.f32.mrb[0].mxu0
      %7106 = vmatprep.mubr.bf16.mxu0 0
      %7107 = vmatmul.mubr.bf16.gmra.mrb[0].mxu0 %v6563
      %v7108 = vpop.f32.mrb[0].mxu0
      %v7109 = vadd.f32 %v6948, %v7108
      %v7110 = vpop.f32.mrb[0].mxu0
      %v7111 = vpop.f32.mrb[0].mxu0
      %v7112 = vadd.f32 %v6951, %v7111
      %v7113 = vpop.f32.mrb[0].mxu0
      %7114 = vmatprep.mubr.bf16.mxu0 0
      %7115 = vmatmul.mubr.bf16.gmra.mrb[0].mxu0 %v6566
      %v7116 = vpop.f32.mrb[0].mxu0
      %v7117 = vadd.f32 %v6956, %v7116
      %v7118 = vpop.f32.mrb[0].mxu0
      %v7119 = vpop.f32.mrb[0].mxu0
      %v7120 = vadd.f32 %v6959, %v7119
      %v7121 = vpop.f32.mrb[0].mxu0
      %7122 = vmatprep.mubr.bf16.mxu0 0
      %7123 = vmatmul.mubr.bf16.gmra.mrb[0].mxu0 %v6569
      %v7124 = vpop.f32.mrb[0].mxu0
      %v7125 = vadd.f32 %v6964, %v7124
      %v7126 = vpop.f32.mrb[0].mxu0
      %v7127 = vpop.f32.mrb[0].mxu0
      %v7128 = vadd.f32 %v6967, %v7127
      %v7129 = vpop.f32.mrb[0].mxu0
      %7130 = vmatprep.mubr.bf16.mxu0 0
      %7131 = vmatmul.mubr.bf16.gmra.mrb[0].mxu0 %v6572
      %v7132 = vpop.f32.mrb[0].mxu0
      %v7133 = vadd.f32 %v6972, %v7132
      %v7134 = vpop.f32.mrb[0].mxu0
      %v7135 = vpop.f32.mrb[0].mxu0
      %v7136 = vadd.f32 %v6975, %v7135
      %v7137 = vpop.f32.mrb[0].mxu0
      %7138 = vmatprep.mubr.bf16.mxu0 0
      %7139 = vmatmul.mubr.bf16.gmra.mrb[0].mxu0 %v6575
      %v7140 = vpop.f32.mrb[0].mxu0
      %v7141 = vadd.f32 %v6980, %v7140
      %v7142 = vpop.f32.mrb[0].mxu0
      %v7143 = vpop.f32.mrb[0].mxu0
      %v7144 = vadd.f32 %v6983, %v7143
      %v7145 = vpop.f32.mrb[0].mxu0
      %7146 = vmatprep.mubr.bf16.mxu0 0
      %7147 = vmatmul.mubr.bf16.gmra.mrb[0].mxu0 %v6578
      %v7148 = vpop.f32.mrb[0].mxu0
      %v7149 = vadd.f32 %v6988, %v7148
      %v7150 = vpop.f32.mrb[0].mxu0
      %v7151 = vpop.f32.mrb[0].mxu0
      %v7152 = vadd.f32 %v6991, %v7151
      %v7153 = vpop.f32.mrb[0].mxu0
      %7154 = vmatprep.mubr.bf16.mxu0 0
      %7155 = vmatmul.mubr.bf16.gmra.mrb[0].mxu0 %v6581
      %v7156 = vpop.f32.mrb[0].mxu0
      %v7157 = vadd.f32 %v6996, %v7156
      %v7158 = vpop.f32.mrb[0].mxu0
      %v7159 = vpop.f32.mrb[0].mxu0
      %v7160 = vadd.f32 %v6999, %v7159
      %v7161 = vpop.f32.mrb[0].mxu0
      %7162 = vmatprep.mubr.bf16.mxu0 0
      %7163 = vmatmul.mubr.bf16.gmra.mrb[0].mxu0 %v6584
      %v7164 = vpop.f32.mrb[0].mxu0
      %v7165 = vadd.f32 %v7004, %v7164
      %v7166 = vpop.f32.mrb[0].mxu0
      %v7167 = vpop.f32.mrb[0].mxu0
      %v7168 = vadd.f32 %v7007, %v7167
      %v7169 = vpop.f32.mrb[0].mxu0
      %7170 = vmatprep.mubr.bf16.mxu0 0
      %7171 = vmatmul.mubr.bf16.gmra.mrb[0].mxu0 %v6587
      %v7172 = vpop.f32.mrb[0].mxu0
      %v7173 = vadd.f32 %v7012, %v7172
      %v7174 = vpop.f32.mrb[0].mxu0
      %v7175 = vpop.f32.mrb[0].mxu0
      %v7176 = vadd.f32 %v7015, %v7175
      %v7177 = vpop.f32.mrb[0].mxu0
      %7178 = vmatprep.mubr.bf16.mxu0 0
      %7179 = vmatmul.mubr.bf16.gmra.mrb[0].mxu0 %v6590
      %v7180 = vpop.f32.mrb[0].mxu0
      %v7181 = vadd.f32 %v7020, %v7180
      %v7182 = vpop.f32.mrb[0].mxu0
      %v7183 = vpop.f32.mrb[0].mxu0
      %v7184 = vadd.f32 %v7023, %v7183
      %v7185 = vpop.f32.mrb[0].mxu0
      %7186 = vmatprep.mubr.bf16.mxu0 0
      %7187 = vmatmul.mubr.bf16.gmra.mrb[0].mxu0 %v6679
      %v7188 = vpop.f32.mrb[0].mxu0
      %v7189 = vadd.f32 %v7028, %v7188
      %v7190 = vpop.f32.mrb[0].mxu0
      %v7191 = vpop.f32.mrb[0].mxu0
      %v7192 = vadd.f32 %v7031, %v7191
      %v7193 = vpop.f32.mrb[0].mxu0
      %7194 = vdwg.mxu0
      %v7243 = vunpack.c.l.b16 %v6607
      %v7244 = vunpack.c.l.b16 %v6608
      %v7245 = vunpack.c.l.b16 %v6609
      %v7246 = vunpack.c.l.b16 %v6610
      %v7247 = vunpack.c.l.b16 %v6611
      %v7248 = vunpack.c.l.b16 %v6612
      %v7249 = vunpack.c.l.b16 %v6613
      %v7250 = vunpack.c.l.b16 %v6614
      %v7251 = vunpack.c.l.b16 %v6615
      %v7252 = vunpack.c.l.b16 %v6616
      %v7253 = vunpack.c.l.b16 %v6617
      %v7254 = vunpack.c.l.b16 %v6618
      %v7255 = vunpack.c.l.b16 %v6619
      %v7256 = vunpack.c.l.b16 %v6620
      %v7257 = vunpack.c.l.b16 %v6621
      %v7258 = vunpack.c.l.b16 %v6622
      %v7259 = vunpack.c.l.b16 %v6623
      %v7260 = vunpack.c.l.b16 %v6624
      %v7261 = vunpack.c.l.b16 %v6625
      %v7262 = vunpack.c.l.b16 %v6626
      %v7263 = vunpack.c.l.b16 %v6627
      %v7264 = vunpack.c.l.b16 %v6628
      %v7265 = vunpack.c.l.b16 %v6629
      %v7266 = vunpack.c.l.b16 %v6630
      %v7267 = vunpack.c.l.b16 %v6631
      %v7268 = vunpack.c.l.b16 %v6632
      %v7269 = vunpack.c.l.b16 %v6633
      %v7270 = vunpack.c.l.b16 %v6634
      %v7271 = vunpack.c.l.b16 %v6635
      %v7272 = vunpack.c.l.b16 %v6636
      %v7273 = vunpack.c.l.b16 %v6637
      %v7274 = vunpack.c.l.b16 %v6638
      %v7275 = vunpack.c.l.b16 %v6639
      %v7276 = vunpack.c.l.b16 %v6640
      %v7277 = vunpack.c.l.b16 %v6641
      %v7278 = vunpack.c.l.b16 %v6642
      %v7279 = vunpack.c.l.b16 %v6643
      %v7280 = vunpack.c.l.b16 %v6644
      %v7281 = vunpack.c.l.b16 %v6645
      %v7282 = vunpack.c.l.b16 %v6646
      %v7283 = vunpack.c.l.b16 %v6647
      %v7284 = vunpack.c.l.b16 %v6648
      %v7285 = vunpack.c.l.b16 %v6649
      %v7286 = vunpack.c.l.b16 %v6650
      %v7287 = vunpack.c.l.b16 %v6651
      %v7288 = vunpack.c.l.b16 %v6652
      %v7289 = vunpack.c.l.b16 %v6653
      %v7290 = vunpack.c.l.b16 %v6654
      %v7291 = vpack.c.b16 %v7244, %v7243
      %v7292 = vpack.c.b16 %v7246, %v7245
      %v7293 = vpack.c.b16 %v7248, %v7247
      %v7294 = vpack.c.b16 %v7250, %v7249
      %v7295 = vpack.c.b16 %v7252, %v7251
      %v7296 = vpack.c.b16 %v7254, %v7253
      %v7297 = vpack.c.b16 %v7256, %v7255
      %v7298 = vpack.c.b16 %v7258, %v7257
      %v7299 = vpack.c.b16 %v7260, %v7259
      %v7300 = vpack.c.b16 %v7262, %v7261
      %v7301 = vpack.c.b16 %v7264, %v7263
      %v7302 = vpack.c.b16 %v7266, %v7265
      %v7303 = vpack.c.b16 %v7268, %v7267
      %v7304 = vpack.c.b16 %v7270, %v7269
      %v7305 = vpack.c.b16 %v7272, %v7271
      %v7306 = vpack.c.b16 %v7274, %v7273
      %v7307 = vpack.c.b16 %v7276, %v7275
      %v7308 = vpack.c.b16 %v7278, %v7277
      %v7309 = vpack.c.b16 %v7280, %v7279
      %v7310 = vpack.c.b16 %v7282, %v7281
      %v7311 = vpack.c.b16 %v7284, %v7283
      %v7312 = vpack.c.b16 %v7286, %v7285
      %v7313 = vpack.c.b16 %v7288, %v7287
      %v7314 = vpack.c.b16 %v7290, %v7289
      %7339 = vmatprep.subr.bf16.mxu0 0
      %7340 = vmatpush1.bf16.msra.mxu0 %v7291
      %7341 = vmatprep.subr.bf16.mxu0 0
      %7342 = vmatpush1.bf16.msra.mxu0 %v7292
      %7343 = vmatprep.subr.bf16.mxu0 0
      %7344 = vmatpush1.bf16.msra.mxu0 %v7293
      %7345 = vmatprep.subr.bf16.mxu0 0
      %7346 = vmatpush1.bf16.msra.mxu0 %v7294
      %7347 = vmatprep.subr.bf16.mxu0 0
      %7348 = vmatpush1.bf16.msra.mxu0 %v7295
      %7349 = vmatprep.subr.bf16.mxu0 0
      %7350 = vmatpush1.bf16.msra.mxu0 %v7296
      %7351 = vmatprep.subr.bf16.mxu0 0
      %7352 = vmatpush1.bf16.msra.mxu0 %v7297
      %7353 = vmatprep.subr.bf16.mxu0 0
      %7354 = vmatpush1.bf16.msra.mxu0 %v7298
      %7355 = vmatprep.subr.bf16.mxu0 0
      %7356 = vmatpush1.bf16.msra.mxu0 %v7299
      %7357 = vmatprep.subr.bf16.mxu0 0
      %7358 = vmatpush1.bf16.msra.mxu0 %v7300
      %7359 = vmatprep.subr.bf16.mxu0 0
      %7360 = vmatpush1.bf16.msra.mxu0 %v7301
      %7361 = vmatprep.subr.bf16.mxu0 0
      %7362 = vmatpush1.bf16.msra.mxu0 %v7302
      %7363 = vmatprep.subr.bf16.mxu0 0
      %7364 = vmatpush1.bf16.msra.mxu0 %v7303
      %7365 = vmatprep.subr.bf16.mxu0 0
      %7366 = vmatpush1.bf16.msra.mxu0 %v7304
      %7367 = vmatprep.subr.bf16.mxu0 0
      %7368 = vmatpush1.bf16.msra.mxu0 %v7305
      %7369 = vmatprep.subr.bf16.mxu0 0
      %7370 = vmatpush1.bf16.msra.mxu0 %v7306
      %7371 = vmatprep.mubr.bf16.mxu0 %v6346
      %7372 = vmatmul.mubr.bf16.gmra.mrb[0].mxu0 %v6255
      %v7373 = vpop.f32.mrb[0].mxu0
      %v7374 = vadd.f32 %v7069, %v7373
      %v7375 = vpop.f32.mrb[0].mxu0
      %v7376 = vpop.f32.mrb[0].mxu0
      %v7377 = vadd.f32 %v7072, %v7376
      %v7378 = vpop.f32.mrb[0].mxu0
      %7379 = vmatprep.mubr.bf16.mxu0 %v6358
      %7380 = vmatmul.mubr.bf16.gmra.mrb[0].mxu0 %v6256
      %v7381 = vpop.f32.mrb[0].mxu0
      %v7382 = vadd.f32 %v7077, %v7381
      %v7383 = vpop.f32.mrb[0].mxu0
      %v7384 = vpop.f32.mrb[0].mxu0
      %v7385 = vadd.f32 %v7080, %v7384
      %v7386 = vpop.f32.mrb[0].mxu0
      %7387 = vmatprep.mubr.bf16.mxu0 %v6370
      %7388 = vmatmul.mubr.bf16.gmra.mrb[0].mxu0 %v6257
      %v7389 = vpop.f32.mrb[0].mxu0
      %v7390 = vadd.f32 %v7085, %v7389
      %v7391 = vpop.f32.mrb[0].mxu0
      %v7392 = vpop.f32.mrb[0].mxu0
      %v7393 = vadd.f32 %v7088, %v7392
      %v7394 = vpop.f32.mrb[0].mxu0
      %7395 = vmatprep.mubr.bf16.mxu0 %v6382
      %7396 = vmatmul.mubr.bf16.gmra.mrb[0].mxu0 %v6258
      %v7397 = vpop.f32.mrb[0].mxu0
      %v7398 = vadd.f32 %v7093, %v7397
      %v7399 = vpop.f32.mrb[0].mxu0
      %v7400 = vpop.f32.mrb[0].mxu0
      %v7401 = vadd.f32 %v7096, %v7400
      %v7402 = vpop.f32.mrb[0].mxu0
      %7403 = vmatprep.mubr.bf16.mxu0 %v6394
      %7404 = vmatmul.mubr.bf16.gmra.mrb[0].mxu0 %v6259
      %v7405 = vpop.f32.mrb[0].mxu0
      %v7406 = vadd.f32 %v7101, %v7405
      %v7407 = vpop.f32.mrb[0].mxu0
      %v7408 = vpop.f32.mrb[0].mxu0
      %v7409 = vadd.f32 %v7104, %v7408
      %v7410 = vpop.f32.mrb[0].mxu0
      %7411 = vmatprep.mubr.bf16.mxu0 %v6406
      %7412 = vmatmul.mubr.bf16.gmra.mrb[0].mxu0 %v6260
      %v7413 = vpop.f32.mrb[0].mxu0
      %v7414 = vadd.f32 %v7109, %v7413
      %v7415 = vpop.f32.mrb[0].mxu0
      %v7416 = vpop.f32.mrb[0].mxu0
      %v7417 = vadd.f32 %v7112, %v7416
      %v7418 = vpop.f32.mrb[0].mxu0
      %7419 = vmatprep.mubr.bf16.mxu0 %v6418
      %7420 = vmatmul.mubr.bf16.gmra.mrb[0].mxu0 %v6261
      %v7421 = vpop.f32.mrb[0].mxu0
      %v7422 = vadd.f32 %v7117, %v7421
      %v7423 = vpop.f32.mrb[0].mxu0
      %v7424 = vpop.f32.mrb[0].mxu0
      %v7425 = vadd.f32 %v7120, %v7424
      %v7426 = vpop.f32.mrb[0].mxu0
      %7427 = vmatprep.mubr.bf16.mxu0 %v6430
      %7428 = vmatmul.mubr.bf16.gmra.mrb[0].mxu0 %v6262
      %v7429 = vpop.f32.mrb[0].mxu0
      %v7430 = vadd.f32 %v7125, %v7429
      %v7431 = vpop.f32.mrb[0].mxu0
      %v7432 = vpop.f32.mrb[0].mxu0
      %v7433 = vadd.f32 %v7128, %v7432
      %v7434 = vpop.f32.mrb[0].mxu0
      %7435 = vmatprep.mubr.bf16.mxu0 %v6442
      %7436 = vmatmul.mubr.bf16.gmra.mrb[0].mxu0 %v6263
      %v7437 = vpop.f32.mrb[0].mxu0
      %v7438 = vadd.f32 %v7133, %v7437
      %v7439 = vpop.f32.mrb[0].mxu0
      %v7440 = vpop.f32.mrb[0].mxu0
      %v7441 = vadd.f32 %v7136, %v7440
      %v7442 = vpop.f32.mrb[0].mxu0
      %7443 = vmatprep.mubr.bf16.mxu0 %v6454
      %7444 = vmatmul.mubr.bf16.gmra.mrb[0].mxu0 %v6264
      %v7445 = vpop.f32.mrb[0].mxu0
      %v7446 = vadd.f32 %v7141, %v7445
      %v7447 = vpop.f32.mrb[0].mxu0
      %v7448 = vpop.f32.mrb[0].mxu0
      %v7449 = vadd.f32 %v7144, %v7448
      %v7450 = vpop.f32.mrb[0].mxu0
      %7451 = vmatprep.mubr.bf16.mxu0 %v6466
      %7452 = vmatmul.mubr.bf16.gmra.mrb[0].mxu0 %v6265
      %v7453 = vpop.f32.mrb[0].mxu0
      %v7454 = vadd.f32 %v7149, %v7453
      %v7455 = vpop.f32.mrb[0].mxu0
      %v7456 = vpop.f32.mrb[0].mxu0
      %v7457 = vadd.f32 %v7152, %v7456
      %v7458 = vpop.f32.mrb[0].mxu0
      %7459 = vmatprep.mubr.bf16.mxu0 %v6478
      %7460 = vmatmul.mubr.bf16.gmra.mrb[0].mxu0 %v6266
      %v7461 = vpop.f32.mrb[0].mxu0
      %v7462 = vadd.f32 %v7157, %v7461
      %v7463 = vpop.f32.mrb[0].mxu0
      %v7464 = vpop.f32.mrb[0].mxu0
      %v7465 = vadd.f32 %v7160, %v7464
      %v7466 = vpop.f32.mrb[0].mxu0
      %7467 = vmatprep.mubr.bf16.mxu0 %v6490
      %7468 = vmatmul.mubr.bf16.gmra.mrb[0].mxu0 %v6267
      %v7469 = vpop.f32.mrb[0].mxu0
      %v7470 = vadd.f32 %v7165, %v7469
      %v7471 = vpop.f32.mrb[0].mxu0
      %v7472 = vpop.f32.mrb[0].mxu0
      %v7473 = vadd.f32 %v7168, %v7472
      %v7474 = vpop.f32.mrb[0].mxu0
      %7475 = vmatprep.mubr.bf16.mxu0 %v6502
      %7476 = vmatmul.mubr.bf16.gmra.mrb[0].mxu0 %v6268
      %v7477 = vpop.f32.mrb[0].mxu0
      %v7478 = vadd.f32 %v7173, %v7477
      %v7479 = vpop.f32.mrb[0].mxu0
      %v7480 = vpop.f32.mrb[0].mxu0
      %v7481 = vadd.f32 %v7176, %v7480
      %v7482 = vpop.f32.mrb[0].mxu0
      %7483 = vmatprep.mubr.bf16.mxu0 %v6514
      %7484 = vmatmul.mubr.bf16.gmra.mrb[0].mxu0 %v6269
      %v7485 = vpop.f32.mrb[0].mxu0
      %v7486 = vadd.f32 %v7181, %v7485
      %v7487 = vpop.f32.mrb[0].mxu0
      %v7488 = vpop.f32.mrb[0].mxu0
      %v7489 = vadd.f32 %v7184, %v7488
      %v7490 = vpop.f32.mrb[0].mxu0
      %7491 = vmatprep.mubr.bf16.mxu0 %v6526
      %7492 = vmatmul.mubr.bf16.gmra.mrb[0].mxu0 %v6270
      %v7493 = vpop.f32.mrb[0].mxu0
      %v7494 = vadd.f32 %v7189, %v7493
      %v7495 = vpop.f32.mrb[0].mxu0
      %v7496 = vpop.f32.mrb[0].mxu0
      %v7497 = vadd.f32 %v7192, %v7496
      %v7498 = vpop.f32.mrb[0].mxu0
      %7499 = vdwg.mxu0
      %7500 = vmatprep.subr.bf16.mxu0 0
      %7501 = vmatpush1.bf16.msra.mxu0 %v7307
      %7502 = vmatprep.subr.bf16.mxu0 0
      %7503 = vmatpush1.bf16.msra.mxu0 %v7308
      %7504 = vmatprep.subr.bf16.mxu0 0
      %7505 = vmatpush1.bf16.msra.mxu0 %v7309
      %7506 = vmatprep.subr.bf16.mxu0 0
      %7507 = vmatpush1.bf16.msra.mxu0 %v7310
      %7508 = vmatprep.subr.bf16.mxu0 0
      %7509 = vmatpush1.bf16.msra.mxu0 %v7311
      %7510 = vmatprep.subr.bf16.mxu0 0
      %7511 = vmatpush1.bf16.msra.mxu0 %v7312
      %7512 = vmatprep.subr.bf16.mxu0 0
      %7513 = vmatpush1.bf16.msra.mxu0 %v7313
      %7514 = vmatprep.subr.bf16.mxu0 0
      %7515 = vmatpush1.bf16.msra.mxu0 %v7314
      %7516 = vmatprep.subr.bf16.mxu0 0
      %7517 = vmatpush1.bf16.msra.mxu0 0
      %7518 = vmatprep.subr.bf16.mxu0 0
      %7519 = vmatpush1.bf16.msra.mxu0 0
      %7520 = vmatprep.subr.bf16.mxu0 0
      %7521 = vmatpush1.bf16.msra.mxu0 0
      %7522 = vmatprep.subr.bf16.mxu0 0
      %7523 = vmatpush1.bf16.msra.mxu0 0
      %7524 = vmatprep.subr.bf16.mxu0 0
      %7525 = vmatpush1.bf16.msra.mxu0 0
      %7526 = vmatprep.subr.bf16.mxu0 0
      %7527 = vmatpush1.bf16.msra.mxu0 0
      %7528 = vmatprep.subr.bf16.mxu0 0
      %7529 = vmatpush1.bf16.msra.mxu0 0
      %7530 = vmatprep.subr.bf16.mxu0 0
      %7531 = vmatpush1.bf16.msra.mxu0 0
      %7532 = vmatprep.mubr.bf16.mxu0 0
      %7533 = vmatmul.mubr.bf16.gmra.mrb[0].mxu0 %v6545
      %v7534 = vpop.f32.mrb[0].mxu0
      %v7535 = vadd.f32 %v7374, %v7534
      %v7536 = vpop.f32.mrb[0].mxu0
      %v7537 = vpop.f32.mrb[0].mxu0
      %v7538 = vadd.f32 %v7377, %v7537
      %v7539 = vpop.f32.mrb[0].mxu0
      %7540 = vmatprep.mubr.bf16.mxu0 0
      %7541 = vmatmul.mubr.bf16.gmra.mrb[0].mxu0 %v6548
      %v7542 = vpop.f32.mrb[0].mxu0
      %v7543 = vadd.f32 %v7382, %v7542
      %v7544 = vpop.f32.mrb[0].mxu0
      %v7545 = vpop.f32.mrb[0].mxu0
      %v7546 = vadd.f32 %v7385, %v7545
      %v7547 = vpop.f32.mrb[0].mxu0
      %7548 = vmatprep.mubr.bf16.mxu0 0
      %7549 = vmatmul.mubr.bf16.gmra.mrb[0].mxu0 %v6551
      %v7550 = vpop.f32.mrb[0].mxu0
      %v7551 = vadd.f32 %v7390, %v7550
      %v7552 = vpop.f32.mrb[0].mxu0
      %v7553 = vpop.f32.mrb[0].mxu0
      %v7554 = vadd.f32 %v7393, %v7553
      %v7555 = vpop.f32.mrb[0].mxu0
      %7556 = vmatprep.mubr.bf16.mxu0 0
      %7557 = vmatmul.mubr.bf16.gmra.mrb[0].mxu0 %v6554
      %v7558 = vpop.f32.mrb[0].mxu0
      %v7559 = vadd.f32 %v7398, %v7558
      %v7560 = vpop.f32.mrb[0].mxu0
      %v7561 = vpop.f32.mrb[0].mxu0
      %v7562 = vadd.f32 %v7401, %v7561
      %v7563 = vpop.f32.mrb[0].mxu0
      %7564 = vmatprep.mubr.bf16.mxu0 0
      %7565 = vmatmul.mubr.bf16.gmra.mrb[0].mxu0 %v6557
      %v7566 = vpop.f32.mrb[0].mxu0
      %v7567 = vadd.f32 %v7406, %v7566
      %v7568 = vpop.f32.mrb[0].mxu0
      %v7569 = vpop.f32.mrb[0].mxu0
      %v7570 = vadd.f32 %v7409, %v7569
      %v7571 = vpop.f32.mrb[0].mxu0
      %7572 = vmatprep.mubr.bf16.mxu0 0
      %7573 = vmatmul.mubr.bf16.gmra.mrb[0].mxu0 %v6560
      %v7574 = vpop.f32.mrb[0].mxu0
      %v7575 = vadd.f32 %v7414, %v7574
      %v7576 = vpop.f32.mrb[0].mxu0
      %v7577 = vpop.f32.mrb[0].mxu0
      %v7578 = vadd.f32 %v7417, %v7577
      %v7579 = vpop.f32.mrb[0].mxu0
      %7580 = vmatprep.mubr.bf16.mxu0 0
      %7581 = vmatmul.mubr.bf16.gmra.mrb[0].mxu0 %v6563
      %v7582 = vpop.f32.mrb[0].mxu0
      %v7583 = vadd.f32 %v7422, %v7582
      %v7584 = vpop.f32.mrb[0].mxu0
      %v7585 = vpop.f32.mrb[0].mxu0
      %v7586 = vadd.f32 %v7425, %v7585
      %v7587 = vpop.f32.mrb[0].mxu0
      %7588 = vmatprep.mubr.bf16.mxu0 0
      %7589 = vmatmul.mubr.bf16.gmra.mrb[0].mxu0 %v6566
      %v7590 = vpop.f32.mrb[0].mxu0
      %v7591 = vadd.f32 %v7430, %v7590
      %v7592 = vpop.f32.mrb[0].mxu0
      %v7593 = vpop.f32.mrb[0].mxu0
      %v7594 = vadd.f32 %v7433, %v7593
      %v7595 = vpop.f32.mrb[0].mxu0
      %7596 = vmatprep.mubr.bf16.mxu0 0
      %7597 = vmatmul.mubr.bf16.gmra.mrb[0].mxu0 %v6569
      %v7598 = vpop.f32.mrb[0].mxu0
      %v7599 = vadd.f32 %v7438, %v7598
      %v7600 = vpop.f32.mrb[0].mxu0
      %v7601 = vpop.f32.mrb[0].mxu0
      %v7602 = vadd.f32 %v7441, %v7601
      %v7603 = vpop.f32.mrb[0].mxu0
      %7604 = vmatprep.mubr.bf16.mxu0 0
      %7605 = vmatmul.mubr.bf16.gmra.mrb[0].mxu0 %v6572
      %v7606 = vpop.f32.mrb[0].mxu0
      %v7607 = vadd.f32 %v7446, %v7606
      %v7608 = vpop.f32.mrb[0].mxu0
      %v7609 = vpop.f32.mrb[0].mxu0
      %v7610 = vadd.f32 %v7449, %v7609
      %v7611 = vpop.f32.mrb[0].mxu0
      %7612 = vmatprep.mubr.bf16.mxu0 0
      %7613 = vmatmul.mubr.bf16.gmra.mrb[0].mxu0 %v6575
      %v7614 = vpop.f32.mrb[0].mxu0
      %v7615 = vadd.f32 %v7454, %v7614
      %v7616 = vpop.f32.mrb[0].mxu0
      %v7617 = vpop.f32.mrb[0].mxu0
      %v7618 = vadd.f32 %v7457, %v7617
      %v7619 = vpop.f32.mrb[0].mxu0
      %7620 = vmatprep.mubr.bf16.mxu0 0
      %7621 = vmatmul.mubr.bf16.gmra.mrb[0].mxu0 %v6578
      %v7622 = vpop.f32.mrb[0].mxu0
      %v7623 = vadd.f32 %v7462, %v7622
      %v7624 = vpop.f32.mrb[0].mxu0
      %v7625 = vpop.f32.mrb[0].mxu0
      %v7626 = vadd.f32 %v7465, %v7625
      %v7627 = vpop.f32.mrb[0].mxu0
      %7628 = vmatprep.mubr.bf16.mxu0 0
      %7629 = vmatmul.mubr.bf16.gmra.mrb[0].mxu0 %v6581
      %v7630 = vpop.f32.mrb[0].mxu0
      %v7631 = vadd.f32 %v7470, %v7630
      %v7632 = vpop.f32.mrb[0].mxu0
      %v7633 = vpop.f32.mrb[0].mxu0
      %v7634 = vadd.f32 %v7473, %v7633
      %v7635 = vpop.f32.mrb[0].mxu0
      %7636 = vmatprep.mubr.bf16.mxu0 0
      %7637 = vmatmul.mubr.bf16.gmra.mrb[0].mxu0 %v6584
      %v7638 = vpop.f32.mrb[0].mxu0
      %v7639 = vadd.f32 %v7478, %v7638
      %v7640 = vpop.f32.mrb[0].mxu0
      %v7641 = vpop.f32.mrb[0].mxu0
      %v7642 = vadd.f32 %v7481, %v7641
      %v7643 = vpop.f32.mrb[0].mxu0
      %7644 = vmatprep.mubr.bf16.mxu0 0
      %7645 = vmatmul.mubr.bf16.gmra.mrb[0].mxu0 %v6587
      %v7646 = vpop.f32.mrb[0].mxu0
      %v7647 = vadd.f32 %v7486, %v7646
      %v7648 = vpop.f32.mrb[0].mxu0
      %v7649 = vpop.f32.mrb[0].mxu0
      %v7650 = vadd.f32 %v7489, %v7649
      %v7651 = vpop.f32.mrb[0].mxu0
      %7652 = vmatprep.mubr.bf16.mxu0 0
      %7653 = vmatmul.mubr.bf16.gmra.mrb[0].mxu0 %v6590
      %v7654 = vpop.f32.mrb[0].mxu0
      %v7655 = vadd.f32 %v7494, %v7654
      %v7656 = vpop.f32.mrb[0].mxu0
      %v7657 = vpop.f32.mrb[0].mxu0
      %v7658 = vadd.f32 %v7497, %v7657
      %v7659 = vpop.f32.mrb[0].mxu0
      %7660 = vdwg.mxu0
      %v7663 = vunpack.c.l.b16 %v6188
      %v7664 = vunpack.c.l.b16 %v6189
      %v7665 = vpack.c.b16 %v7664, %v7663
      %v7668 = vunpack.c.l.b16 %v6190
      %v7669 = vpack.c.b16 %v7668, %v7668
      %v7671 = vshrl.u32 %v7665, 16
      %v7673 = vshll.u32 %v7665, 16
      %v7675 = vrot.slane %v7673, 1
      %v7676 = vor.u32 %v7671, %v7675
      %v7678 = vshll.u32 %v7669, 16
      %v7680 = vrot.slane %v7678, 1
      %v7681 = vsel %vm741, %v7676, %v7680
      %v7683 = vrot.slane %v7665, 1
      %v7684 = vrot.slane %v7669, 1
      %v7685 = vsel %vm950, %v7683, %v7684
      %v7687 = vld [vmem:[%s2096] sm:$0xf]
      %v7688 = vld [vmem:[%s2096 + $0x4] sm:$0xf]
      %v7689 = vld [vmem:[%s2096 + $0x8] sm:$0xf]
      %v7690 = vld [vmem:[%s2096 + $0xc] sm:$0xf]
      %v7691 = vld [vmem:[%s2096 + $0x10] sm:$0xf]
      %v7692 = vld [vmem:[%s2096 + $0x14] sm:$0xf]
      %v7693 = vld [vmem:[%s2096 + $0x18] sm:$0xf]
      %v7694 = vld [vmem:[%s2096 + $0x1c] sm:$0xf]
      %v7695 = vld [vmem:[%s2096 + $0x20] sm:$0xf]
      %v7696 = vld [vmem:[%s2096 + $0x24] sm:$0xf]
      %v7697 = vld [vmem:[%s2096 + $0x28] sm:$0xf]
      %v7698 = vld [vmem:[%s2096 + $0x2c] sm:$0xf]
      %v7699 = vld [vmem:[%s2096 + $0x30] sm:$0xf]
      %v7700 = vld [vmem:[%s2096 + $0x34] sm:$0xf]
      %v7701 = vld [vmem:[%s2096 + $0x38] sm:$0xf]
      %v7702 = vld [vmem:[%s2096 + $0x3c] sm:$0xf]
      %v7703 = vld [vmem:[%s2096 + $0x40] sm:$0xf]
      %v7704 = vld [vmem:[%s2096 + $0x44] sm:$0xf]
      %v7705 = vld [vmem:[%s2096 + $0x48] sm:$0xf]
      %v7706 = vld [vmem:[%s2096 + $0x4c] sm:$0xf]
      %v7707 = vld [vmem:[%s2096 + $0x50] sm:$0xf]
      %v7708 = vld [vmem:[%s2096 + $0x54] sm:$0xf]
      %v7709 = vld [vmem:[%s2096 + $0x58] sm:$0xf]
      %v7710 = vld [vmem:[%s2096 + $0x5c] sm:$0xf]
      %v7711 = vld [vmem:[%s2096 + $0x60] sm:$0xf]
      %v7712 = vld [vmem:[%s2096 + $0x64] sm:$0xf]
      %v7713 = vld [vmem:[%s2096 + $0x68] sm:$0xf]
      %v7714 = vld [vmem:[%s2096 + $0x6c] sm:$0xf]
      %v7715 = vld [vmem:[%s2096 + $0x70] sm:$0xf]
      %v7716 = vld [vmem:[%s2096 + $0x74] sm:$0xf]
      %v7717 = vld [vmem:[%s2096 + $0x78] sm:$0xf]
      %v7718 = vld [vmem:[%s2096 + $0x7c] sm:$0xf]
      %v7719 = vld [vmem:[%s2096 + $0x80] sm:$0xf]
      %v7720 = vld [vmem:[%s2096 + $0x84] sm:$0xf]
      %v7721 = vld [vmem:[%s2096 + $0x88] sm:$0xf]
      %v7722 = vld [vmem:[%s2096 + $0x8c] sm:$0xf]
      %v7723 = vld [vmem:[%s2096 + $0x90] sm:$0xf]
      %v7724 = vld [vmem:[%s2096 + $0x94] sm:$0xf]
      %v7725 = vld [vmem:[%s2096 + $0x98] sm:$0xf]
      %v7726 = vld [vmem:[%s2096 + $0x9c] sm:$0xf]
      %v7727 = vld [vmem:[%s2096 + $0xa0] sm:$0xf]
      %v7728 = vld [vmem:[%s2096 + $0xa4] sm:$0xf]
      %v7729 = vld [vmem:[%s2096 + $0xa8] sm:$0xf]
      %v7730 = vld [vmem:[%s2096 + $0xac] sm:$0xf]
      %v7731 = vld [vmem:[%s2096 + $0xb0] sm:$0xf]
      %v7732 = vld [vmem:[%s2096 + $0xb4] sm:$0xf]
      %v7733 = vld [vmem:[%s2096 + $0xb8] sm:$0xf]
      %v7734 = vld [vmem:[%s2096 + $0xbc] sm:$0xf]
      %v7783 = vunpack.c.l.b16 %v7687
      %v7784 = vunpack.c.l.b16 %v7688
      %v7785 = vunpack.c.l.b16 %v7689
      %v7786 = vunpack.c.l.b16 %v7690
      %v7787 = vunpack.c.l.b16 %v7691
      %v7788 = vunpack.c.l.b16 %v7692
      %v7789 = vunpack.c.l.b16 %v7693
      %v7790 = vunpack.c.l.b16 %v7694
      %v7791 = vunpack.c.l.b16 %v7695
      %v7792 = vunpack.c.l.b16 %v7696
      %v7793 = vunpack.c.l.b16 %v7697
      %v7794 = vunpack.c.l.b16 %v7698
      %v7795 = vunpack.c.l.b16 %v7699
      %v7796 = vunpack.c.l.b16 %v7700
      %v7797 = vunpack.c.l.b16 %v7701
      %v7798 = vunpack.c.l.b16 %v7702
      %v7799 = vunpack.c.l.b16 %v7703
      %v7800 = vunpack.c.l.b16 %v7704
      %v7801 = vunpack.c.l.b16 %v7705
      %v7802 = vunpack.c.l.b16 %v7706
      %v7803 = vunpack.c.l.b16 %v7707
      %v7804 = vunpack.c.l.b16 %v7708
      %v7805 = vunpack.c.l.b16 %v7709
      %v7806 = vunpack.c.l.b16 %v7710
      %v7807 = vunpack.c.l.b16 %v7711
      %v7808 = vunpack.c.l.b16 %v7712
      %v7809 = vunpack.c.l.b16 %v7713
      %v7810 = vunpack.c.l.b16 %v7714
      %v7811 = vunpack.c.l.b16 %v7715
      %v7812 = vunpack.c.l.b16 %v7716
      %v7813 = vunpack.c.l.b16 %v7717
      %v7814 = vunpack.c.l.b16 %v7718
      %v7815 = vunpack.c.l.b16 %v7719
      %v7816 = vunpack.c.l.b16 %v7720
      %v7817 = vunpack.c.l.b16 %v7721
      %v7818 = vunpack.c.l.b16 %v7722
      %v7819 = vunpack.c.l.b16 %v7723
      %v7820 = vunpack.c.l.b16 %v7724
      %v7821 = vunpack.c.l.b16 %v7725
      %v7822 = vunpack.c.l.b16 %v7726
      %v7823 = vunpack.c.l.b16 %v7727
      %v7824 = vunpack.c.l.b16 %v7728
      %v7825 = vunpack.c.l.b16 %v7729
      %v7826 = vunpack.c.l.b16 %v7730
      %v7827 = vunpack.c.l.b16 %v7731
      %v7828 = vunpack.c.l.b16 %v7732
      %v7829 = vunpack.c.l.b16 %v7733
      %v7830 = vunpack.c.l.b16 %v7734
      %v7831 = vpack.c.b16 %v7784, %v7783
      %v7832 = vpack.c.b16 %v7786, %v7785
      %v7833 = vpack.c.b16 %v7788, %v7787
      %v7834 = vpack.c.b16 %v7790, %v7789
      %v7835 = vpack.c.b16 %v7792, %v7791
      %v7836 = vpack.c.b16 %v7794, %v7793
      %v7837 = vpack.c.b16 %v7796, %v7795
      %v7838 = vpack.c.b16 %v7798, %v7797
      %v7839 = vpack.c.b16 %v7800, %v7799
      %v7840 = vpack.c.b16 %v7802, %v7801
      %v7841 = vpack.c.b16 %v7804, %v7803
      %v7842 = vpack.c.b16 %v7806, %v7805
      %v7843 = vpack.c.b16 %v7808, %v7807
      %v7844 = vpack.c.b16 %v7810, %v7809
      %v7845 = vpack.c.b16 %v7812, %v7811
      %v7846 = vpack.c.b16 %v7814, %v7813
      %v7847 = vpack.c.b16 %v7816, %v7815
      %v7848 = vpack.c.b16 %v7818, %v7817
      %v7849 = vpack.c.b16 %v7820, %v7819
      %v7850 = vpack.c.b16 %v7822, %v7821
      %v7851 = vpack.c.b16 %v7824, %v7823
      %v7852 = vpack.c.b16 %v7826, %v7825
      %v7853 = vpack.c.b16 %v7828, %v7827
      %v7854 = vpack.c.b16 %v7830, %v7829
      %7879 = vmatprep.subr.bf16.mxu0 0
      %7880 = vmatpush1.bf16.msra.mxu0 %v7831
      %7881 = vmatprep.subr.bf16.mxu0 0
      %7882 = vmatpush1.bf16.msra.mxu0 %v7832
      %7883 = vmatprep.subr.bf16.mxu0 0
      %7884 = vmatpush1.bf16.msra.mxu0 %v7833
      %7885 = vmatprep.subr.bf16.mxu0 0
      %7886 = vmatpush1.bf16.msra.mxu0 %v7834
      %7887 = vmatprep.subr.bf16.mxu0 0
      %7888 = vmatpush1.bf16.msra.mxu0 %v7835
      %7889 = vmatprep.subr.bf16.mxu0 0
      %7890 = vmatpush1.bf16.msra.mxu0 %v7836
      %7891 = vmatprep.subr.bf16.mxu0 0
      %7892 = vmatpush1.bf16.msra.mxu0 %v7837
      %7893 = vmatprep.subr.bf16.mxu0 0
      %7894 = vmatpush1.bf16.msra.mxu0 %v7838
      %7895 = vmatprep.subr.bf16.mxu0 0
      %7896 = vmatpush1.bf16.msra.mxu0 %v7839
      %7897 = vmatprep.subr.bf16.mxu0 0
      %7898 = vmatpush1.bf16.msra.mxu0 %v7840
      %7899 = vmatprep.subr.bf16.mxu0 0
      %7900 = vmatpush1.bf16.msra.mxu0 %v7841
      %7901 = vmatprep.subr.bf16.mxu0 0
      %7902 = vmatpush1.bf16.msra.mxu0 %v7842
      %7903 = vmatprep.subr.bf16.mxu0 0
      %7904 = vmatpush1.bf16.msra.mxu0 %v7843
      %7905 = vmatprep.subr.bf16.mxu0 0
      %7906 = vmatpush1.bf16.msra.mxu0 %v7844
      %7907 = vmatprep.subr.bf16.mxu0 0
      %7908 = vmatpush1.bf16.msra.mxu0 %v7845
      %7909 = vmatprep.subr.bf16.mxu0 0
      %7910 = vmatpush1.bf16.msra.mxu0 %v7846
      %7911 = vmatprep.mubr.bf16.mxu0 %v6370
      %7912 = vmatmul.mubr.bf16.gmra.mrb[0].mxu0 %v6257
      %v7913 = vpop.f32.mrb[0].mxu0
      %v7914 = vadd.f32 0.0, %v7913
      %v7915 = vpop.f32.mrb[0].mxu0
      %v7916 = vpop.f32.mrb[0].mxu0
      %v7917 = vadd.f32 0.0, %v7916
      %v7918 = vpop.f32.mrb[0].mxu0
      %7919 = vmatprep.mubr.bf16.mxu0 %v6382
      %7920 = vmatmul.mubr.bf16.gmra.mrb[0].mxu0 %v6258
      %v7921 = vpop.f32.mrb[0].mxu0
      %v7922 = vadd.f32 0.0, %v7921
      %v7923 = vpop.f32.mrb[0].mxu0
      %v7924 = vpop.f32.mrb[0].mxu0
      %v7925 = vadd.f32 0.0, %v7924
      %v7926 = vpop.f32.mrb[0].mxu0
      %7927 = vmatprep.mubr.bf16.mxu0 %v6394
      %7928 = vmatmul.mubr.bf16.gmra.mrb[0].mxu0 %v6259
      %v7929 = vpop.f32.mrb[0].mxu0
      %v7930 = vadd.f32 0.0, %v7929
      %v7931 = vpop.f32.mrb[0].mxu0
      %v7932 = vpop.f32.mrb[0].mxu0
      %v7933 = vadd.f32 0.0, %v7932
      %v7934 = vpop.f32.mrb[0].mxu0
      %7935 = vmatprep.mubr.bf16.mxu0 %v6406
      %7936 = vmatmul.mubr.bf16.gmra.mrb[0].mxu0 %v6260
      %v7937 = vpop.f32.mrb[0].mxu0
      %v7938 = vadd.f32 0.0, %v7937
      %v7939 = vpop.f32.mrb[0].mxu0
      %v7940 = vpop.f32.mrb[0].mxu0
      %v7941 = vadd.f32 0.0, %v7940
      %v7942 = vpop.f32.mrb[0].mxu0
      %7943 = vmatprep.mubr.bf16.mxu0 %v6418
      %7944 = vmatmul.mubr.bf16.gmra.mrb[0].mxu0 %v6261
      %v7945 = vpop.f32.mrb[0].mxu0
      %v7946 = vadd.f32 0.0, %v7945
      %v7947 = vpop.f32.mrb[0].mxu0
      %v7948 = vpop.f32.mrb[0].mxu0
      %v7949 = vadd.f32 0.0, %v7948
      %v7950 = vpop.f32.mrb[0].mxu0
      %7951 = vmatprep.mubr.bf16.mxu0 %v6430
      %7952 = vmatmul.mubr.bf16.gmra.mrb[0].mxu0 %v6262
      %v7953 = vpop.f32.mrb[0].mxu0
      %v7954 = vadd.f32 0.0, %v7953
      %v7955 = vpop.f32.mrb[0].mxu0
      %v7956 = vpop.f32.mrb[0].mxu0
      %v7957 = vadd.f32 0.0, %v7956
      %v7958 = vpop.f32.mrb[0].mxu0
      %7959 = vmatprep.mubr.bf16.mxu0 %v6442
      %7960 = vmatmul.mubr.bf16.gmra.mrb[0].mxu0 %v6263
      %v7961 = vpop.f32.mrb[0].mxu0
      %v7962 = vadd.f32 0.0, %v7961
      %v7963 = vpop.f32.mrb[0].mxu0
      %v7964 = vpop.f32.mrb[0].mxu0
      %v7965 = vadd.f32 0.0, %v7964
      %v7966 = vpop.f32.mrb[0].mxu0
      %7967 = vmatprep.mubr.bf16.mxu0 %v6454
      %7968 = vmatmul.mubr.bf16.gmra.mrb[0].mxu0 %v6264
      %v7969 = vpop.f32.mrb[0].mxu0
      %v7970 = vadd.f32 0.0, %v7969
      %v7971 = vpop.f32.mrb[0].mxu0
      %v7972 = vpop.f32.mrb[0].mxu0
      %v7973 = vadd.f32 0.0, %v7972
      %v7974 = vpop.f32.mrb[0].mxu0
      %7975 = vmatprep.mubr.bf16.mxu0 %v6466
      %7976 = vmatmul.mubr.bf16.gmra.mrb[0].mxu0 %v6265
      %v7977 = vpop.f32.mrb[0].mxu0
      %v7978 = vadd.f32 0.0, %v7977
      %v7979 = vpop.f32.mrb[0].mxu0
      %v7980 = vpop.f32.mrb[0].mxu0
      %v7981 = vadd.f32 0.0, %v7980
      %v7982 = vpop.f32.mrb[0].mxu0
      %7983 = vmatprep.mubr.bf16.mxu0 %v6478
      %7984 = vmatmul.mubr.bf16.gmra.mrb[0].mxu0 %v6266
      %v7985 = vpop.f32.mrb[0].mxu0
      %v7986 = vadd.f32 0.0, %v7985
      %v7987 = vpop.f32.mrb[0].mxu0
      %v7988 = vpop.f32.mrb[0].mxu0
      %v7989 = vadd.f32 0.0, %v7988
      %v7990 = vpop.f32.mrb[0].mxu0
      %7991 = vmatprep.mubr.bf16.mxu0 %v6490
      %7992 = vmatmul.mubr.bf16.gmra.mrb[0].mxu0 %v6267
      %v7993 = vpop.f32.mrb[0].mxu0
      %v7994 = vadd.f32 0.0, %v7993
      %v7995 = vpop.f32.mrb[0].mxu0
      %v7996 = vpop.f32.mrb[0].mxu0
      %v7997 = vadd.f32 0.0, %v7996
      %v7998 = vpop.f32.mrb[0].mxu0
      %7999 = vmatprep.mubr.bf16.mxu0 %v6502
      %8000 = vmatmul.mubr.bf16.gmra.mrb[0].mxu0 %v6268
      %v8001 = vpop.f32.mrb[0].mxu0
      %v8002 = vadd.f32 0.0, %v8001
      %v8003 = vpop.f32.mrb[0].mxu0
      %v8004 = vpop.f32.mrb[0].mxu0
      %v8005 = vadd.f32 0.0, %v8004
      %v8006 = vpop.f32.mrb[0].mxu0
      %8007 = vmatprep.mubr.bf16.mxu0 %v6514
      %8008 = vmatmul.mubr.bf16.gmra.mrb[0].mxu0 %v6269
      %v8009 = vpop.f32.mrb[0].mxu0
      %v8010 = vadd.f32 0.0, %v8009
      %v8011 = vpop.f32.mrb[0].mxu0
      %v8012 = vpop.f32.mrb[0].mxu0
      %v8013 = vadd.f32 0.0, %v8012
      %v8014 = vpop.f32.mrb[0].mxu0
      %8015 = vmatprep.mubr.bf16.mxu0 %v6526
      %8016 = vmatmul.mubr.bf16.gmra.mrb[0].mxu0 %v6270
      %v8017 = vpop.f32.mrb[0].mxu0
      %v8018 = vadd.f32 0.0, %v8017
      %v8019 = vpop.f32.mrb[0].mxu0
      %v8020 = vpop.f32.mrb[0].mxu0
      %v8021 = vadd.f32 0.0, %v8020
      %v8022 = vpop.f32.mrb[0].mxu0
      %8023 = vmatprep.mubr.bf16.mxu0 %v6675
      %8024 = vmatmul.mubr.bf16.gmra.mrb[0].mxu0 %v6659
      %v8025 = vpop.f32.mrb[0].mxu0
      %v8026 = vadd.f32 0.0, %v8025
      %v8027 = vpop.f32.mrb[0].mxu0
      %v8028 = vpop.f32.mrb[0].mxu0
      %v8029 = vadd.f32 0.0, %v8028
      %v8030 = vpop.f32.mrb[0].mxu0
      %8031 = vmatprep.mubr.bf16.mxu0 %v7681
      %8032 = vmatmul.mubr.bf16.gmra.mrb[0].mxu0 %v7665
      %v8033 = vpop.f32.mrb[0].mxu0
      %v8034 = vadd.f32 0.0, %v8033
      %v8035 = vpop.f32.mrb[0].mxu0
      %v8036 = vpop.f32.mrb[0].mxu0
      %v8037 = vadd.f32 0.0, %v8036
      %v8038 = vpop.f32.mrb[0].mxu0
      %8039 = vdwg.mxu0
      %8040 = vmatprep.subr.bf16.mxu0 0
      %8041 = vmatpush1.bf16.msra.mxu0 %v7847
      %8042 = vmatprep.subr.bf16.mxu0 0
      %8043 = vmatpush1.bf16.msra.mxu0 %v7848
      %8044 = vmatprep.subr.bf16.mxu0 0
      %8045 = vmatpush1.bf16.msra.mxu0 %v7849
      %8046 = vmatprep.subr.bf16.mxu0 0
      %8047 = vmatpush1.bf16.msra.mxu0 %v7850
      %8048 = vmatprep.subr.bf16.mxu0 0
      %8049 = vmatpush1.bf16.msra.mxu0 %v7851
      %8050 = vmatprep.subr.bf16.mxu0 0
      %8051 = vmatpush1.bf16.msra.mxu0 %v7852
      %8052 = vmatprep.subr.bf16.mxu0 0
      %8053 = vmatpush1.bf16.msra.mxu0 %v7853
      %8054 = vmatprep.subr.bf16.mxu0 0
      %8055 = vmatpush1.bf16.msra.mxu0 %v7854
      %8056 = vmatprep.subr.bf16.mxu0 0
      %8057 = vmatpush1.bf16.msra.mxu0 0
      %8058 = vmatprep.subr.bf16.mxu0 0
      %8059 = vmatpush1.bf16.msra.mxu0 0
      %8060 = vmatprep.subr.bf16.mxu0 0
      %8061 = vmatpush1.bf16.msra.mxu0 0
      %8062 = vmatprep.subr.bf16.mxu0 0
      %8063 = vmatpush1.bf16.msra.mxu0 0
      %8064 = vmatprep.subr.bf16.mxu0 0
      %8065 = vmatpush1.bf16.msra.mxu0 0
      %8066 = vmatprep.subr.bf16.mxu0 0
      %8067 = vmatpush1.bf16.msra.mxu0 0
      %8068 = vmatprep.subr.bf16.mxu0 0
      %8069 = vmatpush1.bf16.msra.mxu0 0
      %8070 = vmatprep.subr.bf16.mxu0 0
      %8071 = vmatpush1.bf16.msra.mxu0 0
      %8072 = vmatprep.mubr.bf16.mxu0 0
      %8073 = vmatmul.mubr.bf16.gmra.mrb[0].mxu0 %v6551
      %v8074 = vpop.f32.mrb[0].mxu0
      %v8075 = vadd.f32 %v7914, %v8074
      %v8076 = vpop.f32.mrb[0].mxu0
      %v8077 = vpop.f32.mrb[0].mxu0
      %v8078 = vadd.f32 %v7917, %v8077
      %v8079 = vpop.f32.mrb[0].mxu0
      %8080 = vmatprep.mubr.bf16.mxu0 0
      %8081 = vmatmul.mubr.bf16.gmra.mrb[0].mxu0 %v6554
      %v8082 = vpop.f32.mrb[0].mxu0
      %v8083 = vadd.f32 %v7922, %v8082
      %v8084 = vpop.f32.mrb[0].mxu0
      %v8085 = vpop.f32.mrb[0].mxu0
      %v8086 = vadd.f32 %v7925, %v8085
      %v8087 = vpop.f32.mrb[0].mxu0
      %8088 = vmatprep.mubr.bf16.mxu0 0
      %8089 = vmatmul.mubr.bf16.gmra.mrb[0].mxu0 %v6557
      %v8090 = vpop.f32.mrb[0].mxu0
      %v8091 = vadd.f32 %v7930, %v8090
      %v8092 = vpop.f32.mrb[0].mxu0
      %v8093 = vpop.f32.mrb[0].mxu0
      %v8094 = vadd.f32 %v7933, %v8093
      %v8095 = vpop.f32.mrb[0].mxu0
      %8096 = vmatprep.mubr.bf16.mxu0 0
      %8097 = vmatmul.mubr.bf16.gmra.mrb[0].mxu0 %v6560
      %v8098 = vpop.f32.mrb[0].mxu0
      %v8099 = vadd.f32 %v7938, %v8098
      %v8100 = vpop.f32.mrb[0].mxu0
      %v8101 = vpop.f32.mrb[0].mxu0
      %v8102 = vadd.f32 %v7941, %v8101
      %v8103 = vpop.f32.mrb[0].mxu0
      %8104 = vmatprep.mubr.bf16.mxu0 0
      %8105 = vmatmul.mubr.bf16.gmra.mrb[0].mxu0 %v6563
      %v8106 = vpop.f32.mrb[0].mxu0
      %v8107 = vadd.f32 %v7946, %v8106
      %v8108 = vpop.f32.mrb[0].mxu0
      %v8109 = vpop.f32.mrb[0].mxu0
      %v8110 = vadd.f32 %v7949, %v8109
      %v8111 = vpop.f32.mrb[0].mxu0
      %8112 = vmatprep.mubr.bf16.mxu0 0
      %8113 = vmatmul.mubr.bf16.gmra.mrb[0].mxu0 %v6566
      %v8114 = vpop.f32.mrb[0].mxu0
      %v8115 = vadd.f32 %v7954, %v8114
      %v8116 = vpop.f32.mrb[0].mxu0
      %v8117 = vpop.f32.mrb[0].mxu0
      %v8118 = vadd.f32 %v7957, %v8117
      %v8119 = vpop.f32.mrb[0].mxu0
      %8120 = vmatprep.mubr.bf16.mxu0 0
      %8121 = vmatmul.mubr.bf16.gmra.mrb[0].mxu0 %v6569
      %v8122 = vpop.f32.mrb[0].mxu0
      %v8123 = vadd.f32 %v7962, %v8122
      %v8124 = vpop.f32.mrb[0].mxu0
      %v8125 = vpop.f32.mrb[0].mxu0
      %v8126 = vadd.f32 %v7965, %v8125
      %v8127 = vpop.f32.mrb[0].mxu0
      %8128 = vmatprep.mubr.bf16.mxu0 0
      %8129 = vmatmul.mubr.bf16.gmra.mrb[0].mxu0 %v6572
      %v8130 = vpop.f32.mrb[0].mxu0
      %v8131 = vadd.f32 %v7970, %v8130
      %v8132 = vpop.f32.mrb[0].mxu0
      %v8133 = vpop.f32.mrb[0].mxu0
      %v8134 = vadd.f32 %v7973, %v8133
      %v8135 = vpop.f32.mrb[0].mxu0
      %8136 = vmatprep.mubr.bf16.mxu0 0
      %8137 = vmatmul.mubr.bf16.gmra.mrb[0].mxu0 %v6575
      %v8138 = vpop.f32.mrb[0].mxu0
      %v8139 = vadd.f32 %v7978, %v8138
      %v8140 = vpop.f32.mrb[0].mxu0
      %v8141 = vpop.f32.mrb[0].mxu0
      %v8142 = vadd.f32 %v7981, %v8141
      %v8143 = vpop.f32.mrb[0].mxu0
      %8144 = vmatprep.mubr.bf16.mxu0 0
      %8145 = vmatmul.mubr.bf16.gmra.mrb[0].mxu0 %v6578
      %v8146 = vpop.f32.mrb[0].mxu0
      %v8147 = vadd.f32 %v7986, %v8146
      %v8148 = vpop.f32.mrb[0].mxu0
      %v8149 = vpop.f32.mrb[0].mxu0
      %v8150 = vadd.f32 %v7989, %v8149
      %v8151 = vpop.f32.mrb[0].mxu0
      %8152 = vmatprep.mubr.bf16.mxu0 0
      %8153 = vmatmul.mubr.bf16.gmra.mrb[0].mxu0 %v6581
      %v8154 = vpop.f32.mrb[0].mxu0
      %v8155 = vadd.f32 %v7994, %v8154
      %v8156 = vpop.f32.mrb[0].mxu0
      %v8157 = vpop.f32.mrb[0].mxu0
      %v8158 = vadd.f32 %v7997, %v8157
      %v8159 = vpop.f32.mrb[0].mxu0
      %8160 = vmatprep.mubr.bf16.mxu0 0
      %8161 = vmatmul.mubr.bf16.gmra.mrb[0].mxu0 %v6584
      %v8162 = vpop.f32.mrb[0].mxu0
      %v8163 = vadd.f32 %v8002, %v8162
      %v8164 = vpop.f32.mrb[0].mxu0
      %v8165 = vpop.f32.mrb[0].mxu0
      %v8166 = vadd.f32 %v8005, %v8165
      %v8167 = vpop.f32.mrb[0].mxu0
      %8168 = vmatprep.mubr.bf16.mxu0 0
      %8169 = vmatmul.mubr.bf16.gmra.mrb[0].mxu0 %v6587
      %v8170 = vpop.f32.mrb[0].mxu0
      %v8171 = vadd.f32 %v8010, %v8170
      %v8172 = vpop.f32.mrb[0].mxu0
      %v8173 = vpop.f32.mrb[0].mxu0
      %v8174 = vadd.f32 %v8013, %v8173
      %v8175 = vpop.f32.mrb[0].mxu0
      %8176 = vmatprep.mubr.bf16.mxu0 0
      %8177 = vmatmul.mubr.bf16.gmra.mrb[0].mxu0 %v6590
      %v8178 = vpop.f32.mrb[0].mxu0
      %v8179 = vadd.f32 %v8018, %v8178
      %v8180 = vpop.f32.mrb[0].mxu0
      %v8181 = vpop.f32.mrb[0].mxu0
      %v8182 = vadd.f32 %v8021, %v8181
      %v8183 = vpop.f32.mrb[0].mxu0
      %8184 = vmatprep.mubr.bf16.mxu0 0
      %8185 = vmatmul.mubr.bf16.gmra.mrb[0].mxu0 %v6679
      %v8186 = vpop.f32.mrb[0].mxu0
      %v8187 = vadd.f32 %v8026, %v8186
      %v8188 = vpop.f32.mrb[0].mxu0
      %v8189 = vpop.f32.mrb[0].mxu0
      %v8190 = vadd.f32 %v8029, %v8189
      %v8191 = vpop.f32.mrb[0].mxu0
      %8192 = vmatprep.mubr.bf16.mxu0 0
      %8193 = vmatmul.mubr.bf16.gmra.mrb[0].mxu0 %v7685
      %v8194 = vpop.f32.mrb[0].mxu0
      %v8195 = vadd.f32 %v8034, %v8194
      %v8196 = vpop.f32.mrb[0].mxu0
      %v8197 = vpop.f32.mrb[0].mxu0
      %v8198 = vadd.f32 %v8037, %v8197
      %v8199 = vpop.f32.mrb[0].mxu0
      %8200 = vdwg.mxu0
      %v8201 = vadd.f32 %v7535, %v8075
      %v8202 = vadd.f32 %v7538, %v8078
      %v8203 = vadd.f32 %v7543, %v8083
      %v8204 = vadd.f32 %v7546, %v8086
      %v8205 = vadd.f32 %v7551, %v8091
      %v8206 = vadd.f32 %v7554, %v8094
      %v8207 = vadd.f32 %v7559, %v8099
      %v8208 = vadd.f32 %v7562, %v8102
      %v8209 = vadd.f32 %v7567, %v8107
      %v8210 = vadd.f32 %v7570, %v8110
      %v8211 = vadd.f32 %v7575, %v8115
      %v8212 = vadd.f32 %v7578, %v8118
      %v8213 = vadd.f32 %v7583, %v8123
      %v8214 = vadd.f32 %v7586, %v8126
      %v8215 = vadd.f32 %v7591, %v8131
      %v8216 = vadd.f32 %v7594, %v8134
      %v8217 = vadd.f32 %v7599, %v8139
      %v8218 = vadd.f32 %v7602, %v8142
      %v8219 = vadd.f32 %v7607, %v8147
      %v8220 = vadd.f32 %v7610, %v8150
      %v8221 = vadd.f32 %v7615, %v8155
      %v8222 = vadd.f32 %v7618, %v8158
      %v8223 = vadd.f32 %v7623, %v8163
      %v8224 = vadd.f32 %v7626, %v8166
      %v8225 = vadd.f32 %v7631, %v8171
      %v8226 = vadd.f32 %v7634, %v8174
      %v8227 = vadd.f32 %v7639, %v8179
      %v8228 = vadd.f32 %v7642, %v8182
      %v8229 = vadd.f32 %v7647, %v8187
      %v8230 = vadd.f32 %v7650, %v8190
      %v8231 = vadd.f32 %v7655, %v8195
      %v8232 = vadd.f32 %v7658, %v8198
      %v8233 = vmul.f32 %v8201, %v2647
      %v8234 = vmul.f32 %v8202, %v2647
      %v8235 = vmul.f32 %v8203, %v2647
      %v8236 = vmul.f32 %v8204, %v2647
      %v8237 = vmul.f32 %v8205, %v2647
      %v8238 = vmul.f32 %v8206, %v2647
      %v8239 = vmul.f32 %v8207, %v2647
      %v8240 = vmul.f32 %v8208, %v2647
      %v8241 = vmul.f32 %v8209, %v2647
      %v8242 = vmul.f32 %v8210, %v2647
      %v8243 = vmul.f32 %v8211, %v2647
      %v8244 = vmul.f32 %v8212, %v2647
      %v8245 = vmul.f32 %v8213, %v2647
      %v8246 = vmul.f32 %v8214, %v2647
      %v8247 = vmul.f32 %v8215, %v2647
      %v8248 = vmul.f32 %v8216, %v2647
      %v8249 = vmul.f32 %v8217, %v2647
      %v8250 = vmul.f32 %v8218, %v2647
      %v8251 = vmul.f32 %v8219, %v2647
      %v8252 = vmul.f32 %v8220, %v2647
      %v8253 = vmul.f32 %v8221, %v2647
      %v8254 = vmul.f32 %v8222, %v2647
      %v8255 = vmul.f32 %v8223, %v2647
      %v8256 = vmul.f32 %v8224, %v2647
      %v8257 = vmul.f32 %v8225, %v2647
      %v8258 = vmul.f32 %v8226, %v2647
      %v8259 = vmul.f32 %v8227, %v2647
      %v8260 = vmul.f32 %v8228, %v2647
      %v8261 = vmul.f32 %v8229, %v2647
      %v8262 = vmul.f32 %v8230, %v2647
      %v8263 = vmul.f32 %v8231, %v2647
      %v8264 = vmul.f32 %v8232, %v2647
      %v8265 = vadd.f32 %v8233, %v2685
      %v8266 = vadd.f32 %v8234, %v2685
      %v8267 = vadd.f32 %v8235, %v2685
      %v8268 = vadd.f32 %v8236, %v2685
      %v8269 = vadd.f32 %v8237, %v2685
      %v8270 = vadd.f32 %v8238, %v2685
      %v8271 = vadd.f32 %v8239, %v2685
      %v8272 = vadd.f32 %v8240, %v2685
      %v8273 = vadd.f32 %v8241, %v2685
      %v8274 = vadd.f32 %v8242, %v2685
      %v8275 = vadd.f32 %v8243, %v2685
      %v8276 = vadd.f32 %v8244, %v2685
      %v8277 = vadd.f32 %v8245, %v2685
      %v8278 = vadd.f32 %v8246, %v2685
      %v8279 = vadd.f32 %v8247, %v2685
      %v8280 = vadd.f32 %v8248, %v2685
      %v8281 = vadd.f32 %v8249, %v2685
      %v8282 = vadd.f32 %v8250, %v2685
      %v8283 = vadd.f32 %v8251, %v2685
      %v8284 = vadd.f32 %v8252, %v2685
      %v8285 = vadd.f32 %v8253, %v2685
      %v8286 = vadd.f32 %v8254, %v2685
      %v8287 = vadd.f32 %v8255, %v2685
      %v8288 = vadd.f32 %v8256, %v2685
      %v8289 = vadd.f32 %v8257, %v2685
      %v8290 = vadd.f32 %v8258, %v2685
      %v8291 = vadd.f32 %v8259, %v2685
      %v8292 = vadd.f32 %v8260, %v2685
      %v8293 = vadd.f32 %v8261, %v2685
      %v8294 = vadd.f32 %v8262, %v2685
      %v8295 = vadd.f32 %v8263, %v2685
      %v8296 = vadd.f32 %v8264, %v2685
      %v8297 = vmax.f32 %v8265, 0.0
      %v8298 = vmax.f32 %v8266, 0.0
      %v8299 = vmax.f32 %v8267, 0.0
      %v8300 = vmax.f32 %v8268, 0.0
      %v8301 = vmax.f32 %v8269, 0.0
      %v8302 = vmax.f32 %v8270, 0.0
      %v8303 = vmax.f32 %v8271, 0.0
      %v8304 = vmax.f32 %v8272, 0.0
      %v8305 = vmax.f32 %v8273, 0.0
      %v8306 = vmax.f32 %v8274, 0.0
      %v8307 = vmax.f32 %v8275, 0.0
      %v8308 = vmax.f32 %v8276, 0.0
      %v8309 = vmax.f32 %v8277, 0.0
      %v8310 = vmax.f32 %v8278, 0.0
      %v8311 = vmax.f32 %v8279, 0.0
      %v8312 = vmax.f32 %v8280, 0.0
      %v8313 = vmax.f32 %v8281, 0.0
      %v8314 = vmax.f32 %v8282, 0.0
      %v8315 = vmax.f32 %v8283, 0.0
      %v8316 = vmax.f32 %v8284, 0.0
      %v8317 = vmax.f32 %v8285, 0.0
      %v8318 = vmax.f32 %v8286, 0.0
      %v8319 = vmax.f32 %v8287, 0.0
      %v8320 = vmax.f32 %v8288, 0.0
      %v8321 = vmax.f32 %v8289, 0.0
      %v8322 = vmax.f32 %v8290, 0.0
      %v8323 = vmax.f32 %v8291, 0.0
      %v8324 = vmax.f32 %v8292, 0.0
      %v8325 = vmax.f32 %v8293, 0.0
      %v8326 = vmax.f32 %v8294, 0.0
      %v8327 = vmax.f32 %v8295, 0.0
      %v8328 = vmax.f32 %v8296, 0.0
      %8329 = vst [vmem:[%s197] sm:$0xff] %v8297
      %8330 = vst [vmem:[%s197 + $0x8] sm:$0xff] %v8298
      %8331 = vst [vmem:[%s197 + $0x10] sm:$0xff] %v8299
      %8332 = vst [vmem:[%s197 + $0x18] sm:$0xff] %v8300
      %8333 = vst [vmem:[%s197 + $0x20] sm:$0xff] %v8301
      %8334 = vst [vmem:[%s197 + $0x28] sm:$0xff] %v8302
      %8335 = vst [vmem:[%s197 + $0x30] sm:$0xff] %v8303
      %8336 = vst [vmem:[%s197 + $0x38] sm:$0xff] %v8304
      %8337 = vst [vmem:[%s197 + $0x40] sm:$0xff] %v8305
      %8338 = vst [vmem:[%s197 + $0x48] sm:$0xff] %v8306
      %8339 = vst [vmem:[%s197 + $0x50] sm:$0xff] %v8307
      %8340 = vst [vmem:[%s197 + $0x58] sm:$0xff] %v8308
      %8341 = vst [vmem:[%s197 + $0x60] sm:$0xff] %v8309
      %8342 = vst [vmem:[%s197 + $0x68] sm:$0xff] %v8310
      %8343 = vst [vmem:[%s197 + $0x70] sm:$0xff] %v8311
      %8344 = vst [vmem:[%s197 + $0x78] sm:$0xff] %v8312
      %8345 = vst [vmem:[%s197 + $0x80] sm:$0xff] %v8313
      %8346 = vst [vmem:[%s197 + $0x88] sm:$0xff] %v8314
      %8347 = vst [vmem:[%s197 + $0x90] sm:$0xff] %v8315
      %8348 = vst [vmem:[%s197 + $0x98] sm:$0xff] %v8316
      %8349 = vst [vmem:[%s197 + $0xa0] sm:$0xff] %v8317
      %8350 = vst [vmem:[%s197 + $0xa8] sm:$0xff] %v8318
      %8351 = vst [vmem:[%s197 + $0xb0] sm:$0xff] %v8319
      %8352 = vst [vmem:[%s197 + $0xb8] sm:$0xff] %v8320
      %8353 = vst [vmem:[%s197 + $0xc0] sm:$0xff] %v8321
      %8354 = vst [vmem:[%s197 + $0xc8] sm:$0xff] %v8322
      %8355 = vst [vmem:[%s197 + $0xd0] sm:$0xff] %v8323
      %8356 = vst [vmem:[%s197 + $0xd8] sm:$0xff] %v8324
      %8357 = vst [vmem:[%s197 + $0xe0] sm:$0xff] %v8325
      %8358 = vst [vmem:[%s197 + $0xe8] sm:$0xff] %v8326
      %8359 = vst [vmem:[%s197 + $0xf0] sm:$0xff] %v8327
      %8360 = vst [vmem:[%s197 + $0xf8] sm:$0xff] %v8328
      %p8361 = scmp.lt.s32.totalorder %s15, 1
      %s8362 = scalar_select %p8361, %s15, 1
      %s8363 = smul.addr %s8362, 32
      %s8364 = smul.addr %s8363, 8
      %s8365 = scalar_lea.vmem %s4, %s8364
      // Predicated region
      $region37: #{recurrent_block_forward.1} parent=35 // pred_check
        %p8366 = pneg %p122
      $region38: #{recurrent_block_forward.1} parent=35 // pred_check_branch
        %8368 = sbr.rel (%p8366) target = $region40
      $region39: #{recurrent_block_forward.1} parent=35 // pred_region
        _
      $region40: #{recurrent_block_forward.1} parent=35 // pred_fallthru
        _
    $region36: #{recurrent_block_forward.1} parent=5 // pred_fallthru
      _
    %p8369 = scmp.le.s32.totalorder 2, %s10
    // Predicated region
    $region41: #{recurrent_block_forward.1} parent=5 // pred_check
      %p8370 = pneg %p8369
    $region42: #{recurrent_block_forward.1} parent=5 // pred_check_branch
      %8372 = sbr.rel (%p8370) target = $region44
    $region43: #{recurrent_block_forward.1} parent=5 // pred_region
      %s8373 = ssub.s32 %s10, 2
      // Predicated region
      $region45: #{recurrent_block_forward.1} parent=43 // pred_check
        %p8374 = pneg %p128
      $region46: #{recurrent_block_forward.1} parent=43 // pred_check_branch
        %8376 = sbr.rel (%p8374) target = $region48
      $region47: #{recurrent_block_forward.1} parent=43 // pred_region
        %p8377 = scmp.lt.s32.totalorder %s16, 1
        %s8378 = scalar_select %p8377, %s16, 1
        %s8379 = smul.addr %s8378, 32
        %s8380 = smul.addr %s8379, 8
        %s8381 = scalar_lea.vmem %s4, %s8380
      $region48: #{recurrent_block_forward.1} parent=43 // pred_fallthru
        _
    $region44: #{recurrent_block_forward.1} parent=5 // pred_fallthru
      _
  $region6: #{recurrent_block_forward.1} parent=0 // loop_footer
    %s14 = sadd.s32 1, %s10
  $region7: #{recurrent_block_forward.1} parent=0 // loop_footer_branch
    %9 = sbr.rel target = $region3
  $region8: #{recurrent_block_forward.1} parent=0 // loop_exit
    _

</llo_original>
